<compile_context>
chip_gen: v5e
topology: v5e:2x2
jax: 0.10.0
libtpu: 0.0.40
codegen_flags: <defaults>
</compile_context>

<pallas_src>
import functools

import jax
import jax.numpy as jnp
from jax.experimental import pallas as pl
from jax.experimental.pallas import tpu as pltpu

# MXU operand dtype (im2col slab + weights).  Accumulation is always f32
# (preferred_element_type), and all BN/ReLU elementwise math is f32.
MATMUL_DTYPE = jnp.bfloat16

BN_EPS = 1e-5

# Sublane-aligned column at which the image interior is placed inside the
# padded VMEM scratch, so the interior store is an aligned store.
_PAD_LEFT = 8


def _round_up(x, m):
    return (x + m - 1) // m * m


def _vmem_limit_bytes():
    """~3/4 of this generation's per-core VMEM (96 MiB on v5e/v6e, 48 on v7x)."""
    try:
        cap = int(pltpu.get_tpu_info().vmem_capacity_bytes)
        if cap <= 0:
            raise ValueError(cap)
    except Exception:            # conservative fallback (v7x-sized per-TC VMEM)
        cap = 64 * 1024 * 1024
    return (cap * 3) // 4


def _select_row_tile(H, W, Cin, Cout, K_pad, budget):
    """Largest divisor of H whose per-step VMEM working set fits `budget`.

    Lane/sublane padding is ignored in the estimate; at the channel counts
    where tiling actually matters, Cin/Cout are already >=128 so it is accurate.
    """
    mm = jnp.dtype(MATMUL_DTYPE).itemsize
    for th in sorted((d for d in range(1, H + 1) if H % d == 0), reverse=True):
        if th != H and (th * W) % 8 != 0:
            continue
        est = (2 * H * W * Cin * 4                               # input image (x2 buffers)
               + 2 * K_pad * Cout * mm                           # weight block (x2 buffers)
               + 2 * th * W * Cout * 4                           # conv output  (x2 buffers)
               + (th + 2) * (W + 2 * _PAD_LEFT) * Cin * mm       # padded scratch
               + th * W * K_pad * mm)                            # im2col slab
        if est <= budget:
            return th
    return 1


def _largest_p_tile(P, cap=2048):
    """Pixel-tile for the epilogue: divides P and is 128-aligned (or == P)."""
    if P <= cap:
        return P
    for d in range(cap, 0, -1):
        if P % d == 0 and d % 128 == 0:
            return d
    return P


# ----------------------------------------------------------------------------
# Kernels
# ----------------------------------------------------------------------------
def conv3x3_kernel(x_ref, w_ref, scale_ref, shift_ref, y_ref, stats_ref,
                   xpad_ref, cols_ref, *, TH, W, Cin, K, K_pad, n_h,
                   fuse_input_bnrelu):
    """3x3 / pad=1 convolution of one TH-row band of one image per grid step.

    x_ref     : (1, H, W, Cin)      whole input image (fetched once per image)
    w_ref     : (K_pad, Cout)       weights, rows (dy, dx, cin), zero K-padding
    scale_ref : (1, Cin)            folded BN scale of the *previous* block
    shift_ref : (1, Cin)            folded BN shift of the *previous* block
    y_ref     : (1, TH*W, Cout)     pre-BN conv output for this band
    stats_ref : (1, 1, 2, Cout)     [sum(y), sum(y^2)] over the band's pixels
    xpad_ref  : VMEM (TH+2, W+16, Cin)  zero-padded band scratch (MATMUL_DTYPE)
    cols_ref  : VMEM (TH*W, K_pad)      im2col slab scratch      (MATMUL_DTYPE)
    """
    h = pl.program_id(1)
    r0 = h * TH

    if fuse_input_bnrelu:
        scale = scale_ref[...].reshape(1, 1, Cin)
        shift = shift_ref[...].reshape(1, 1, Cin)

    def prep(rows):
        # Previous block's BatchNorm+ReLU fused into the load (VPU work hidden
        # under the MXU matmul); elementwise math stays f32.
        r = rows.astype(jnp.float32)
        if fuse_input_bnrelu:
            r = jnp.maximum(r * scale + shift, 0.0)
        return r.astype(xpad_ref.dtype)

    # --- Border-only zeroing of the padded scratch (NOT the whole scratch).
    # Must happen every step: scratch persists per-core and the grid axes are
    # 'parallel', so a program_id==0 guard would leave cores uninitialized.
    zrow = jnp.zeros((1, W + 2 * _PAD_LEFT, Cin), xpad_ref.dtype)
    zcol = jnp.zeros((TH + 2, _PAD_LEFT, Cin), xpad_ref.dtype)
    xpad_ref[0:1, :, :] = zrow
    xpad_ref[TH + 1:TH + 2, :, :] = zrow
    xpad_ref[:, 0:_PAD_LEFT, :] = zcol
    xpad_ref[:, _PAD_LEFT + W:, :] = zcol

    # Interior rows of this band (aligned store at sublane offset _PAD_LEFT).
    band = x_ref[0, pl.ds(r0, TH), :, :]                       # (TH, W, Cin)
    xpad_ref[1:TH + 1, _PAD_LEFT:_PAD_LEFT + W, :] = prep(band)

    # Halo rows: real image rows when the band is not at the image edge,
    # otherwise they stay zero (the conv's zero padding).
    @pl.when(h > 0)
    def _():
        top = x_ref[0, pl.ds(r0 - 1, 1), :, :]                 # (1, W, Cin)
        xpad_ref[0:1, _PAD_LEFT:_PAD_LEFT + W, :] = prep(top)

    @pl.when(h < n_h - 1)
    def _():
        bot = x_ref[0, pl.ds(r0 + TH, 1), :, :]
        xpad_ref[TH + 1:TH + 2, _PAD_LEFT:_PAD_LEFT + W, :] = prep(bot)

    # Zero the K-padding columns of the slab (padded weight rows are zero too,
    # but stale VMEM could hold NaNs and NaN*0 != 0).
    if K_pad > K:
        cols_ref[:, K:] = jnp.zeros((TH * W, K_pad - K), cols_ref.dtype)

    # im2col: build the (TH*W, K_pad) slab, then ONE MXU matmul with K=9*Cin
    # instead of nine K=Cin matmuls.
    # TODO(synk): produce the dx=+-1 taps with pltpu.roll on the XLU instead of
    # sublane-offset reads to cut vld pressure during the slab build.
    for dy in range(3):
        for dx in range(3):
            tap = dy * 3 + dx
            c0 = _PAD_LEFT - 1 + dx
            patch = xpad_ref[dy:dy + TH, c0:c0 + W, :]         # (TH, W, Cin)
            cols_ref[:, tap * Cin:(tap + 1) * Cin] = patch.reshape(TH * W, Cin)

    acc = jnp.dot(cols_ref[...], w_ref[...],
                  preferred_element_type=jnp.float32)          # (TH*W, Cout) f32

    # NOTE: no conv bias -- it is exactly cancelled by the following BatchNorm.
    y_ref[...] = acc[None].astype(y_ref.dtype)

    # Per-band BN partial statistics, packed into one small output block.
    ssum = acc.sum(axis=0, keepdims=True)                      # (1, Cout)
    ssq = (acc * acc).sum(axis=0, keepdims=True)               # (1, Cout)
    stats_ref[...] = jnp.concatenate([ssum, ssq], axis=0)[None, None]


def bnrelu_nchw_kernel(y_ref, scale_ref, shift_ref, o_ref):
    """y -> relu(y*scale+shift), with the NHWC->NCHW transpose fused in.

    y_ref: (1, Pt, C), o_ref: (1, C, Pt) -- the (C, Pt) store is lane-dense.
    """
    y = y_ref[0].astype(jnp.float32)                           # (Pt, C)
    o = jnp.maximum(y * scale_ref[...] + shift_ref[...], 0.0)
    pt, c = o.shape
    # Pad channels to a 128-lane multiple so the XLU transpose is tile-aligned.
    c_pad = _round_up(max(c, 128), 128)
    if c_pad != c:
        o = jnp.concatenate([o, jnp.zeros((pt, c_pad - c), o.dtype)], axis=1)
    o_t = jnp.transpose(o, (1, 0))                             # (c_pad, Pt)
    o_ref[0] = o_t[:c].astype(o_ref.dtype)


# ----------------------------------------------------------------------------
# Wrappers
# ----------------------------------------------------------------------------
def _conv3x3(x_nhwc, w_mat, scale=None, shift=None, row_tile=None):
    """One 3x3/pad=1 conv over the batch; returns (y, packed BN stats).

    x_nhwc : (N, H, W, Cin) f32
    w_mat  : (9*Cin, Cout)  rows ordered (dy, dx, cin)
    scale, shift : optional (Cin,) folded BN affine of the previous block; if
        given, relu(x*scale+shift) is applied inside the kernel (fusion).
    Returns y: (N, H*W, Cout) f32, stats: (N, n_h, 2, Cout) f32 ([sum, sumsq]).
    """
    N, H, W, Cin = x_nhwc.shape
    K, Cout = w_mat.shape
    assert K == 9 * Cin

    # Pad K for full-width MXU passes (256 granularity once K is large on
    # v6e/v7x; 128 otherwise).  Padded weight rows are zero and the padded slab
    # columns are zeroed in-kernel, so the matmul result is unchanged.
    # Cout is intentionally NOT padded (it would inflate output HBM traffic).
    K_pad = _round_up(K, 128) if K <= 256 else _round_up(K, 256)

    limit = _vmem_limit_bytes()
    TH = row_tile if row_tile is not None else _select_row_tile(
        H, W, Cin, Cout, K_pad, budget=(limit * 3) // 5)
    assert H % TH == 0 and ((TH * W) % 8 == 0 or TH == H), (H, W, TH)
    n_h = H // TH

    fuse = scale is not None
    if not fuse:
        scale = jnp.zeros((Cin,), jnp.float32)
        shift = jnp.zeros((Cin,), jnp.float32)
    scale2d = scale.reshape(1, Cin).astype(jnp.float32)
    shift2d = shift.reshape(1, Cin).astype(jnp.float32)

    w_pad = jnp.pad(w_mat.astype(MATMUL_DTYPE), ((0, K_pad - K), (0, 0)))

    kernel = functools.partial(conv3x3_kernel, TH=TH, W=W, Cin=Cin,
                               K=K, K_pad=K_pad, n_h=n_h,
                               fuse_input_bnrelu=fuse)

    y, stats = pl.pallas_call(
        kernel,
        out_shape=(
            jax.ShapeDtypeStruct((N, H * W, Cout), jnp.float32),
            jax.ShapeDtypeStruct((N, n_h, 2, Cout), jnp.float32),
        ),
        grid_spec=pltpu.PrefetchScalarGridSpec(
            num_scalar_prefetch=0,
            grid=(N, n_h),
            in_specs=[
                # Whole image per image-index; re-DMA'd only when n changes.
                pl.BlockSpec((1, H, W, Cin), lambda n, h: (n, 0, 0, 0)),
                # Constant weight block (fetched once).
                pl.BlockSpec((K_pad, Cout), lambda n, h: (0, 0)),
                pl.BlockSpec((1, Cin), lambda n, h: (0, 0)),
                pl.BlockSpec((1, Cin), lambda n, h: (0, 0)),
            ],
            out_specs=(
                pl.BlockSpec((1, TH * W, Cout), lambda n, h: (n, h, 0)),
                pl.BlockSpec((1, 1, 2, Cout), lambda n, h: (n, h, 0, 0)),
            ),
            scratch_shapes=[
                pltpu.VMEM((TH + 2, W + 2 * _PAD_LEFT, Cin), MATMUL_DTYPE),
                pltpu.VMEM((TH * W, K_pad), MATMUL_DTYPE),
            ],
        ),
        compiler_params=pltpu.CompilerParams(
            dimension_semantics=("parallel", "parallel"),
            vmem_limit_bytes=limit,
        ),
    )(x_nhwc.astype(jnp.float32), w_pad, scale2d, shift2d)
    return y, stats


def _fold_bn(stats, gamma, beta, count, eps=BN_EPS):
    """Fold training-mode BatchNorm into per-channel scale/shift.

    stats: (N, n_h, 2, C) per-band [sum, sumsq] partials from the conv kernel.
    NOTE: var = E[x^2] - E[x]^2 in f32 is adequate for these conv outputs
    (mean << std); use a two-pass / shifted scheme for mean-dominated data.
    """
    s = stats[:, :, 0, :].sum(axis=(0, 1))
    q = stats[:, :, 1, :].sum(axis=(0, 1))
    mean = s / count
    var = q / count - mean * mean        # biased, as BN uses for normalization
    scale = gamma / jnp.sqrt(var + eps)
    shift = beta - mean * scale
    return scale.astype(jnp.float32), shift.astype(jnp.float32)


def _bn_relu_nchw(y, scale, shift):
    """Final BN+ReLU with the NHWC->NCHW transpose fused in.

    y: (N, P, C) f32  ->  out: (N, C, P) f32  (reshape to (N, C, H, W) is free).
    """
    N, P, C = y.shape
    Pt = _largest_p_tile(P)
    n_p = P // Pt
    return pl.pallas_call(
        bnrelu_nchw_kernel,
        out_shape=jax.ShapeDtypeStruct((N, C, P), jnp.float32),
        grid_spec=pltpu.PrefetchScalarGridSpec(
            num_scalar_prefetch=0,
            grid=(N, n_p),
            in_specs=[
                pl.BlockSpec((1, Pt, C), lambda n, p: (n, p, 0)),
                pl.BlockSpec((1, C), lambda n, p: (0, 0)),
                pl.BlockSpec((1, C), lambda n, p: (0, 0)),
            ],
            out_specs=pl.BlockSpec((1, C, Pt), lambda n, p: (n, 0, p)),
        ),
        compiler_params=pltpu.CompilerParams(
            dimension_semantics=("parallel", "parallel"),
            vmem_limit_bytes=_vmem_limit_bytes(),
        ),
    )(y, scale.reshape(1, C).astype(jnp.float32),
      shift.reshape(1, C).astype(jnp.float32))


def double_conv(x_nchw, params, row_tile=None):
    """DoubleConv forward: (N, Cin, H, W) -> (N, Cout, H, W).

    Matches PyTorch's freshly constructed module called in training mode:
    Conv2d(3x3, pad=1) -> BatchNorm2d(batch stats, eps=1e-5) -> ReLU, twice.
    Conv biases in `params` are accepted but unused (cancelled by train-mode BN).
    """
    N, Cin, H, W = x_nchw.shape
    C1 = params["w1"].shape[-1]
    C2 = params["w2"].shape[-1]

    x = jnp.transpose(x_nchw, (0, 2, 3, 1)).astype(jnp.float32)    # NCHW -> NHWC
    w1 = params["w1"].reshape(9 * Cin, C1)
    w2 = params["w2"].reshape(9 * C1, C2)

    # Block 1: conv (BN statistics come out of the same pass).
    y1, st1 = _conv3x3(x, w1, row_tile=row_tile)
    scale1, shift1 = _fold_bn(st1, params["gamma1"], params["beta1"], N * H * W)

    # Block 2: conv with block-1's BN+ReLU fused into the input load.
    y2, st2 = _conv3x3(y1.reshape(N, H, W, C1), w2, scale1, shift1,
                       row_tile=row_tile)
    scale2, shift2 = _fold_bn(st2, params["gamma2"], params["beta2"], N * H * W)

    out = _bn_relu_nchw(y2, scale2, shift2)                 # (N, C2, H*W) NCHW
    return out.reshape(N, C2, H, W)


def init_params(key, in_ch, out_ch):
    """Synthetic params.  Conv weights are (KH, KW, Cin, Cout); a PyTorch
    weight (Cout, Cin, KH, KW) maps via transpose(2, 3, 1, 0)."""
    k1, k2, k3, k4 = jax.random.split(key, 4)
    w1 = 0.1 * jax.random.normal(k1, (3, 3, in_ch, out_ch), jnp.float32)
    b1 = 0.1 * jax.random.normal(k2, (out_ch,), jnp.float32)   # cancelled by BN
    w2 = 0.1 * jax.random.normal(k3, (3, 3, out_ch, out_ch), jnp.float32)
    b2 = 0.1 * jax.random.normal(k4, (out_ch,), jnp.float32)   # cancelled by BN
    return {
        "w1": w1, "b1": b1,
        "gamma1": jnp.ones((out_ch,), jnp.float32),
        "beta1": jnp.zeros((out_ch,), jnp.float32),
        "w2": w2, "b2": b2,
        "gamma2": jnp.ones((out_ch,), jnp.float32),
        "beta2": jnp.zeros((out_ch,), jnp.float32),
    }


def _reference(x_nchw, params, eps=BN_EPS):
    """Pure-JAX f32 reference of the PyTorch module (training-mode BN), WITH the
    conv bias -- demonstrating that dropping it in the kernel is a no-op."""
    def block(x, w, b, gamma, beta):
        w_oihw = jnp.transpose(w, (3, 2, 0, 1))             # (Cout, Cin, 3, 3)
        y = jax.lax.conv_general_dilated(
            x, w_oihw, window_strides=(1, 1), padding=((1, 1), (1, 1)),
            dimension_numbers=("NCHW", "OIHW", "NCHW"))
        y = y + b.reshape(1, -1, 1, 1)
        mean = y.mean(axis=(0, 2, 3), keepdims=True)
        var = y.var(axis=(0, 2, 3), keepdims=True)
        yhat = (y - mean) / jnp.sqrt(var + eps)
        return jnp.maximum(yhat * gamma.reshape(1, -1, 1, 1)
                           + beta.reshape(1, -1, 1, 1), 0.0)

    a1 = block(x_nchw, params["w1"], params["b1"],
               params["gamma1"], params["beta1"])
    return block(a1, params["w2"], params["b2"],
                 params["gamma2"], params["beta2"])


if __name__ == "__main__":
    key = jax.random.PRNGKey(0)
    kx, kp = jax.random.split(key)

    N, IN_CH, OUT_CH, H, W = 2, 4, 8, 16, 16
    x = jax.random.normal(kx, (N, IN_CH, H, W), jnp.float32)   # NCHW, as PyTorch
    params = init_params(kp, IN_CH, OUT_CH)

    out = jax.jit(double_conv)(x, params)
    jax.block_until_ready(out)
    assert out.shape == (N, OUT_CH, H, W), out.shape
    assert bool(jnp.all(out >= 0.0)), "ReLU output must be non-negative"

    # f32 PyTorch-equivalent reference; tolerances account for bf16 MXU
    # operands (accumulation and BN math are f32).
    ref = _reference(x, params)

    def _check(o, tag):
        err = jnp.abs(o - ref)
        mx = float(err.max())
        rms = float(jnp.sqrt(jnp.mean(err * err)))
        assert mx < 1e-1 and rms < 3e-2, (tag, mx, rms)

    _check(out, "whole-image path")

    # Also exercise the H-band-tiled (halo) path explicitly.
    out_t = jax.jit(functools.partial(double_conv, row_tile=8))(x, params)
    jax.block_until_ready(out_t)
    _check(out_t, "row_tile=8 path")

    print("KERNEL_OK")
</pallas_src>

<mosaic_0001>
module attributes {stable_mosaic.version = 11 : i64} {
  func.func @bnrelu_nchw_kernel(%arg0: i32, %arg1: i32, %arg2: memref<1x256x8xf32, #tpu.memory_space<vmem>>, %arg3: memref<1x8xf32, #tpu.memory_space<vmem>>, %arg4: memref<1x8xf32, #tpu.memory_space<vmem>>, %arg5: memref<1x8x256xf32, #tpu.memory_space<vmem>>) attributes {dimension_semantics = [#tpu.dimension_semantics<parallel>, #tpu.dimension_semantics<parallel>], iteration_bounds = array<i64: 2, 1>, scalar_prefetch = 0 : i64, scratch_operands = 0 : i64, tpu.core_type = #tpu.core_type<tc>, window_params = [{transform_indices = @transform_0, window_bounds = array<i64: 1, 256, 8>}, {pipeline_mode = #tpu.pipeline_mode<synchronous>, transform_indices = @transform_1, window_bounds = array<i64: 1, 8>}, {pipeline_mode = #tpu.pipeline_mode<synchronous>, transform_indices = @transform_2, window_bounds = array<i64: 1, 8>}, {transform_indices = @transform_3, window_bounds = array<i64: 1, 8, 256>}]} {
    %c0 = arith.constant 0 : index
    %c0_0 = arith.constant 0 : index
    %c0_1 = arith.constant 0 : index
    %0 = vector.load %arg2[%c0, %c0_0, %c0_1] : memref<1x256x8xf32, #tpu.memory_space<vmem>>, vector<1x256x8xf32>
    %1 = vector.shape_cast %0 : vector<1x256x8xf32> to vector<256x8xf32>
    %c0_2 = arith.constant 0 : index
    %c0_3 = arith.constant 0 : index
    %2 = vector.load %arg3[%c0_2, %c0_3] : memref<1x8xf32, #tpu.memory_space<vmem>>, vector<1x8xf32>
    %3 = vector.broadcast %2 : vector<1x8xf32> to vector<256x8xf32>
    %4 = arith.mulf %1, %3 : vector<256x8xf32>
    %c0_4 = arith.constant 0 : index
    %c0_5 = arith.constant 0 : index
    %5 = vector.load %arg4[%c0_4, %c0_5] : memref<1x8xf32, #tpu.memory_space<vmem>>, vector<1x8xf32>
    %6 = vector.broadcast %5 : vector<1x8xf32> to vector<256x8xf32>
    %7 = arith.addf %4, %6 : vector<256x8xf32>
    %cst = arith.constant 0.000000e+00 : f32
    %8 = vector.broadcast %cst : f32 to vector<256x8xf32>
    %9 = arith.maximumf %7, %8 : vector<256x8xf32>
    %cst_6 = arith.constant 0.000000e+00 : f32
    %10 = vector.broadcast %cst_6 : f32 to vector<256x120xf32>
    %11 = tpu.concatenate %9, %10 in 1 : vector<256x8xf32>, vector<256x120xf32> -> vector<256x128xf32>
    %12 = tpu.transpose %11, [1, 0] : vector<256x128xf32> -> vector<128x256xf32>
    %13 = vector.extract_strided_slice %12 {offsets = [0, 0], sizes = [8, 256], strides = [1, 1]} : vector<128x256xf32> to vector<8x256xf32>
    %c0_7 = arith.constant 0 : index
    %c0_8 = arith.constant 0 : index
    %c0_9 = arith.constant 0 : index
    %14 = vector.load %arg5[%c0_7, %c0_8, %c0_9] : memref<1x8x256xf32, #tpu.memory_space<vmem>>, vector<1x8x256xf32>
    %15 = vector.shape_cast %14 : vector<1x8x256xf32> to vector<8x256xf32>
    %16 = vector.shape_cast %13 : vector<8x256xf32> to vector<1x8x256xf32>
    tpu.vector_store %arg5[%c0_7, %c0_8, %c0_9], %16 {strides = array<i32>} : memref<1x8x256xf32, #tpu.memory_space<vmem>>, vector<1x8x256xf32>,
    return
  }
  func.func @transform_0(%arg0: i32, %arg1: i32) -> (i32, i32, i32) {
    %c0_i32 = arith.constant 0 : i32
    %c0_i32_0 = arith.constant 0 : i32
    return %arg0, %arg1, %c0_i32 : i32, i32, i32
  }
  func.func @transform_1(%arg0: i32, %arg1: i32) -> (i32, i32) {
    %c0_i32 = arith.constant 0 : i32
    %c0_i32_0 = arith.constant 0 : i32
    %c0_i32_1 = arith.constant 0 : i32
    return %c0_i32, %c0_i32_0 : i32, i32
  }
  func.func @transform_2(%arg0: i32, %arg1: i32) -> (i32, i32) {
    %c0_i32 = arith.constant 0 : i32
    %c0_i32_0 = arith.constant 0 : i32
    %c0_i32_1 = arith.constant 0 : i32
    return %c0_i32, %c0_i32_0 : i32, i32
  }
  func.func @transform_3(%arg0: i32, %arg1: i32) -> (i32, i32, i32) {
    %c0_i32 = arith.constant 0 : i32
    %c0_i32_0 = arith.constant 0 : i32
    return %arg0, %c0_i32, %arg1 : i32, i32, i32
  }
}

module attributes {stable_mosaic.version = 11 : i64} {
  func.func @conv3x3_kernel(%arg0: i32, %arg1: i32, %arg2: memref<1x16x16x8xf32, #tpu.memory_space<vmem>>, %arg3: memref<128x8xbf16, #tpu.memory_space<vmem>>, %arg4: memref<1x8xf32, #tpu.memory_space<vmem>>, %arg5: memref<1x8xf32, #tpu.memory_space<vmem>>, %arg6: memref<1x256x8xf32, #tpu.memory_space<vmem>>, %arg7: memref<1x1x2x8xf32, #tpu.memory_space<vmem>>, %arg8: memref<18x32x8xbf16, #tpu.memory_space<vmem>>, %arg9: memref<256x128xbf16, #tpu.memory_space<vmem>>) attributes {dimension_semantics = [#tpu.dimension_semantics<parallel>, #tpu.dimension_semantics<parallel>], iteration_bounds = array<i64: 2, 1>, scalar_prefetch = 0 : i64, scratch_operands = 2 : i64, tpu.core_type = #tpu.core_type<tc>, window_params = [{transform_indices = @transform_0, window_bounds = array<i64: 1, 16, 16, 8>}, {pipeline_mode = #tpu.pipeline_mode<synchronous>, transform_indices = @transform_1, window_bounds = array<i64: 128, 8>}, {pipeline_mode = #tpu.pipeline_mode<synchronous>, transform_indices = @transform_2, window_bounds = array<i64: 1, 8>}, {pipeline_mode = #tpu.pipeline_mode<synchronous>, transform_indices = @transform_3, window_bounds = array<i64: 1, 8>}, {transform_indices = @transform_4, window_bounds = array<i64: 1, 256, 8>}, {transform_indices = @transform_5, window_bounds = array<i64: 1, 1, 2, 8>}]} {
    %c16_i32 = arith.constant 16 : i32
    %0 = arith.muli %arg1, %c16_i32 : i32
    %c0 = arith.constant 0 : index
    %c0_0 = arith.constant 0 : index
    %1 = vector.load %arg4[%c0, %c0_0] : memref<1x8xf32, #tpu.memory_space<vmem>>, vector<1x8xf32>
    %2 = vector.shape_cast %1 : vector<1x8xf32> to vector<1x1x8xf32>
    %c0_1 = arith.constant 0 : index
    %c0_2 = arith.constant 0 : index
    %3 = vector.load %arg5[%c0_1, %c0_2] : memref<1x8xf32, #tpu.memory_space<vmem>>, vector<1x8xf32>
    %4 = vector.shape_cast %3 : vector<1x8xf32> to vector<1x1x8xf32>
    %cst = arith.constant 0.000000e+00 : bf16
    %5 = vector.broadcast %cst : bf16 to vector<1x32x8xbf16>
    %cst_3 = arith.constant 0.000000e+00 : bf16
    %6 = vector.broadcast %cst_3 : bf16 to vector<18x8x8xbf16>
    %c0_4 = arith.constant 0 : index
    %c0_5 = arith.constant 0 : index
    %c0_6 = arith.constant 0 : index
    %7 = vector.load %arg8[%c0_4, %c0_5, %c0_6] : memref<18x32x8xbf16, #tpu.memory_space<vmem>>, vector<1x32x8xbf16>
    tpu.vector_store %arg8[%c0_4, %c0_5, %c0_6], %5 {strides = array<i32>} : memref<18x32x8xbf16, #tpu.memory_space<vmem>>, vector<1x32x8xbf16>,
    %c17 = arith.constant 17 : index
    %c0_7 = arith.constant 0 : index
    %c0_8 = arith.constant 0 : index
    %8 = vector.load %arg8[%c17, %c0_7, %c0_8] : memref<18x32x8xbf16, #tpu.memory_space<vmem>>, vector<1x32x8xbf16>
    tpu.vector_store %arg8[%c17, %c0_7, %c0_8], %5 {strides = array<i32>} : memref<18x32x8xbf16, #tpu.memory_space<vmem>>, vector<1x32x8xbf16>,
    %c0_9 = arith.constant 0 : index
    %c0_10 = arith.constant 0 : index
    %c0_11 = arith.constant 0 : index
    %9 = vector.load %arg8[%c0_9, %c0_10, %c0_11] : memref<18x32x8xbf16, #tpu.memory_space<vmem>>, vector<18x8x8xbf16>
    tpu.vector_store %arg8[%c0_9, %c0_10, %c0_11], %6 {strides = array<i32>} : memref<18x32x8xbf16, #tpu.memory_space<vmem>>, vector<18x8x8xbf16>,
    %c0_12 = arith.constant 0 : index
    %c24 = arith.constant 24 : index
    %c0_13 = arith.constant 0 : index
    %10 = vector.load %arg8[%c0_12, %c24, %c0_13] : memref<18x32x8xbf16, #tpu.memory_space<vmem>>, vector<18x8x8xbf16>
    tpu.vector_store %arg8[%c0_12, %c24, %c0_13], %6 {strides = array<i32>} : memref<18x32x8xbf16, #tpu.memory_space<vmem>>, vector<18x8x8xbf16>,
    %c0_14 = arith.constant 0 : index
    %11 = arith.index_cast %0 : i32 to index
    %c0_15 = arith.constant 0 : index
    %c0_16 = arith.constant 0 : index
    %12 = vector.load %arg2[%c0_14, %11, %c0_15, %c0_16] : memref<1x16x16x8xf32, #tpu.memory_space<vmem>>, vector<1x16x16x8xf32>
    %13 = vector.shape_cast %12 : vector<1x16x16x8xf32> to vector<16x16x8xf32>
    %14 = vector.broadcast %2 : vector<1x1x8xf32> to vector<16x16x8xf32>
    %15 = arith.mulf %13, %14 : vector<16x16x8xf32>
    %16 = vector.broadcast %4 : vector<1x1x8xf32> to vector<16x16x8xf32>
    %17 = arith.addf %15, %16 : vector<16x16x8xf32>
    %cst_17 = arith.constant 0.000000e+00 : f32
    %18 = vector.broadcast %cst_17 : f32 to vector<16x16x8xf32>
    %19 = arith.maximumf %17, %18 : vector<16x16x8xf32>
    %20 = arith.truncf %19 : vector<16x16x8xf32> to vector<16x16x8xbf16>
    %c1 = arith.constant 1 : index
    %c8 = arith.constant 8 : index
    %c0_18 = arith.constant 0 : index
    %21 = vector.load %arg8[%c1, %c8, %c0_18] : memref<18x32x8xbf16, #tpu.memory_space<vmem>>, vector<16x16x8xbf16>
    tpu.vector_store %arg8[%c1, %c8, %c0_18], %20 {strides = array<i32>} : memref<18x32x8xbf16, #tpu.memory_space<vmem>>, vector<16x16x8xbf16>,
    %c0_i32 = arith.constant 0 : i32
    %22 = arith.cmpi sgt, %arg1, %c0_i32 : i32
    %23 = arith.extui %22 : i1 to i32
    %c0_i32_19 = arith.constant 0 : i32
    %24 = arith.cmpi ne, %23, %c0_i32_19 : i32
    scf.if %24 {
      %c1_i32 = arith.constant 1 : i32
      %70 = arith.subi %0, %c1_i32 : i32
      %c0_74 = arith.constant 0 : index
      %71 = arith.index_cast %70 : i32 to index
      %c0_75 = arith.constant 0 : index
      %c0_76 = arith.constant 0 : index
      %72 = vector.load %arg2[%c0_74, %71, %c0_75, %c0_76] : memref<1x16x16x8xf32, #tpu.memory_space<vmem>>, vector<1x1x16x8xf32>
      %73 = vector.shape_cast %72 : vector<1x1x16x8xf32> to vector<1x16x8xf32>
      %74 = vector.broadcast %2 : vector<1x1x8xf32> to vector<1x16x8xf32>
      %75 = arith.mulf %73, %74 : vector<1x16x8xf32>
      %76 = vector.broadcast %4 : vector<1x1x8xf32> to vector<1x16x8xf32>
      %77 = arith.addf %75, %76 : vector<1x16x8xf32>
      %cst_77 = arith.constant 0.000000e+00 : f32
      %78 = vector.broadcast %cst_77 : f32 to vector<1x16x8xf32>
      %79 = arith.maximumf %77, %78 : vector<1x16x8xf32>
      %80 = arith.truncf %79 : vector<1x16x8xf32> to vector<1x16x8xbf16>
      %c0_78 = arith.constant 0 : index
      %c8_79 = arith.constant 8 : index
      %c0_80 = arith.constant 0 : index
      %81 = vector.load %arg8[%c0_78, %c8_79, %c0_80] : memref<18x32x8xbf16, #tpu.memory_space<vmem>>, vector<1x16x8xbf16>
      tpu.vector_store %arg8[%c0_78, %c8_79, %c0_80], %80 {strides = array<i32>} : memref<18x32x8xbf16, #tpu.memory_space<vmem>>, vector<1x16x8xbf16>,
    } else {
    }
    %c0_i32_20 = arith.constant 0 : i32
    %25 = arith.cmpi slt, %arg1, %c0_i32_20 : i32
    %26 = arith.extui %25 : i1 to i32
    %c0_i32_21 = arith.constant 0 : i32
    %27 = arith.cmpi ne, %26, %c0_i32_21 : i32
    scf.if %27 {
      %c16_i32_74 = arith.constant 16 : i32
      %70 = arith.addi %0, %c16_i32_74 : i32
      %c0_75 = arith.constant 0 : index
      %71 = arith.index_cast %70 : i32 to index
      %c0_76 = arith.constant 0 : index
      %c0_77 = arith.constant 0 : index
      %72 = vector.load %arg2[%c0_75, %71, %c0_76, %c0_77] : memref<1x16x16x8xf32, #tpu.memory_space<vmem>>, vector<1x1x16x8xf32>
      %73 = vector.shape_cast %72 : vector<1x1x16x8xf32> to vector<1x16x8xf32>
      %74 = vector.broadcast %2 : vector<1x1x8xf32> to vector<1x16x8xf32>
      %75 = arith.mulf %73, %74 : vector<1x16x8xf32>
      %76 = vector.broadcast %4 : vector<1x1x8xf32> to vector<1x16x8xf32>
      %77 = arith.addf %75, %76 : vector<1x16x8xf32>
      %cst_78 = arith.constant 0.000000e+00 : f32
      %78 = vector.broadcast %cst_78 : f32 to vector<1x16x8xf32>
      %79 = arith.maximumf %77, %78 : vector<1x16x8xf32>
      %80 = arith.truncf %79 : vector<1x16x8xf32> to vector<1x16x8xbf16>
      %c17_79 = arith.constant 17 : index
      %c8_80 = arith.constant 8 : index
      %c0_81 = arith.constant 0 : index
      %81 = vector.load %arg8[%c17_79, %c8_80, %c0_81] : memref<18x32x8xbf16, #tpu.memory_space<vmem>>, vector<1x16x8xbf16>
      tpu.vector_store %arg8[%c17_79, %c8_80, %c0_81], %80 {strides = array<i32>} : memref<18x32x8xbf16, #tpu.memory_space<vmem>>, vector<1x16x8xbf16>,
    } else {
    }
    %cst_22 = arith.constant 0.000000e+00 : bf16
    %28 = vector.broadcast %cst_22 : bf16 to vector<256x56xbf16>
    %c0_23 = arith.constant 0 : index
    %c72 = arith.constant 72 : index
    %29 = vector.load %arg9[%c0_23, %c72] : memref<256x128xbf16, #tpu.memory_space<vmem>>, vector<256x56xbf16>
    tpu.vector_store %arg9[%c0_23, %c72], %28 {strides = array<i32>} : memref<256x128xbf16, #tpu.memory_space<vmem>>, vector<256x56xbf16>,
    %c0_24 = arith.constant 0 : index
    %c7 = arith.constant 7 : index
    %c0_25 = arith.constant 0 : index
    %30 = vector.load %arg8[%c0_24, %c7, %c0_25] : memref<18x32x8xbf16, #tpu.memory_space<vmem>>, vector<16x16x8xbf16>
    %31 = vector.shape_cast %30 : vector<16x16x8xbf16> to vector<256x8xbf16>
    %c0_26 = arith.constant 0 : index
    %c0_27 = arith.constant 0 : index
    %32 = vector.load %arg9[%c0_26, %c0_27] : memref<256x128xbf16, #tpu.memory_space<vmem>>, vector<256x8xbf16>
    tpu.vector_store %arg9[%c0_26, %c0_27], %31 {strides = array<i32>} : memref<256x128xbf16, #tpu.memory_space<vmem>>, vector<256x8xbf16>,
    %c0_28 = arith.constant 0 : index
    %c8_29 = arith.constant 8 : index
    %c0_30 = arith.constant 0 : index
    %33 = vector.load %arg8[%c0_28, %c8_29, %c0_30] : memref<18x32x8xbf16, #tpu.memory_space<vmem>>, vector<16x16x8xbf16>
    %34 = vector.shape_cast %33 : vector<16x16x8xbf16> to vector<256x8xbf16>
    %c0_31 = arith.constant 0 : index
    %c8_32 = arith.constant 8 : index
    %35 = vector.load %arg9[%c0_31, %c8_32] : memref<256x128xbf16, #tpu.memory_space<vmem>>, vector<256x8xbf16>
    tpu.vector_store %arg9[%c0_31, %c8_32], %34 {strides = array<i32>} : memref<256x128xbf16, #tpu.memory_space<vmem>>, vector<256x8xbf16>,
    %c0_33 = arith.constant 0 : index
    %c9 = arith.constant 9 : index
    %c0_34 = arith.constant 0 : index
    %36 = vector.load %arg8[%c0_33, %c9, %c0_34] : memref<18x32x8xbf16, #tpu.memory_space<vmem>>, vector<16x16x8xbf16>
    %37 = vector.shape_cast %36 : vector<16x16x8xbf16> to vector<256x8xbf16>
    %c0_35 = arith.constant 0 : index
    %c16 = arith.constant 16 : index
    %38 = vector.load %arg9[%c0_35, %c16] : memref<256x128xbf16, #tpu.memory_space<vmem>>, vector<256x8xbf16>
    tpu.vector_store %arg9[%c0_35, %c16], %37 {strides = array<i32>} : memref<256x128xbf16, #tpu.memory_space<vmem>>, vector<256x8xbf16>,
    %c1_36 = arith.constant 1 : index
    %c7_37 = arith.constant 7 : index
    %c0_38 = arith.constant 0 : index
    %39 = vector.load %arg8[%c1_36, %c7_37, %c0_38] : memref<18x32x8xbf16, #tpu.memory_space<vmem>>, vector<16x16x8xbf16>
    %40 = vector.shape_cast %39 : vector<16x16x8xbf16> to vector<256x8xbf16>
    %c0_39 = arith.constant 0 : index
    %c24_40 = arith.constant 24 : index
    %41 = vector.load %arg9[%c0_39, %c24_40] : memref<256x128xbf16, #tpu.memory_space<vmem>>, vector<256x8xbf16>
    tpu.vector_store %arg9[%c0_39, %c24_40], %40 {strides = array<i32>} : memref<256x128xbf16, #tpu.memory_space<vmem>>, vector<256x8xbf16>,
    %c1_41 = arith.constant 1 : index
    %c8_42 = arith.constant 8 : index
    %c0_43 = arith.constant 0 : index
    %42 = vector.load %arg8[%c1_41, %c8_42, %c0_43] : memref<18x32x8xbf16, #tpu.memory_space<vmem>>, vector<16x16x8xbf16>
    %43 = vector.shape_cast %42 : vector<16x16x8xbf16> to vector<256x8xbf16>
    %c0_44 = arith.constant 0 : index
    %c32 = arith.constant 32 : index
    %44 = vector.load %arg9[%c0_44, %c32] : memref<256x128xbf16, #tpu.memory_space<vmem>>, vector<256x8xbf16>
    tpu.vector_store %arg9[%c0_44, %c32], %43 {strides = array<i32>} : memref<256x128xbf16, #tpu.memory_space<vmem>>, vector<256x8xbf16>,
    %c1_45 = arith.constant 1 : index
    %c9_46 = arith.constant 9 : index
    %c0_47 = arith.constant 0 : index
    %45 = vector.load %arg8[%c1_45, %c9_46, %c0_47] : memref<18x32x8xbf16, #tpu.memory_space<vmem>>, vector<16x16x8xbf16>
    %46 = vector.shape_cast %45 : vector<16x16x8xbf16> to vector<256x8xbf16>
    %c0_48 = arith.constant 0 : index
    %c40 = arith.constant 40 : index
    %47 = vector.load %arg9[%c0_48, %c40] : memref<256x128xbf16, #tpu.memory_space<vmem>>, vector<256x8xbf16>
    tpu.vector_store %arg9[%c0_48, %c40], %46 {strides = array<i32>} : memref<256x128xbf16, #tpu.memory_space<vmem>>, vector<256x8xbf16>,
    %c2 = arith.constant 2 : index
    %c7_49 = arith.constant 7 : index
    %c0_50 = arith.constant 0 : index
    %48 = vector.load %arg8[%c2, %c7_49, %c0_50] : memref<18x32x8xbf16, #tpu.memory_space<vmem>>, vector<16x16x8xbf16>
    %49 = vector.shape_cast %48 : vector<16x16x8xbf16> to vector<256x8xbf16>
    %c0_51 = arith.constant 0 : index
    %c48 = arith.constant 48 : index
    %50 = vector.load %arg9[%c0_51, %c48] : memref<256x128xbf16, #tpu.memory_space<vmem>>, vector<256x8xbf16>
    tpu.vector_store %arg9[%c0_51, %c48], %49 {strides = array<i32>} : memref<256x128xbf16, #tpu.memory_space<vmem>>, vector<256x8xbf16>,
    %c2_52 = arith.constant 2 : index
    %c8_53 = arith.constant 8 : index
    %c0_54 = arith.constant 0 : index
    %51 = vector.load %arg8[%c2_52, %c8_53, %c0_54] : memref<18x32x8xbf16, #tpu.memory_space<vmem>>, vector<16x16x8xbf16>
    %52 = vector.shape_cast %51 : vector<16x16x8xbf16> to vector<256x8xbf16>
    %c0_55 = arith.constant 0 : index
    %c56 = arith.constant 56 : index
    %53 = vector.load %arg9[%c0_55, %c56] : memref<256x128xbf16, #tpu.memory_space<vmem>>, vector<256x8xbf16>
    tpu.vector_store %arg9[%c0_55, %c56], %52 {strides = array<i32>} : memref<256x128xbf16, #tpu.memory_space<vmem>>, vector<256x8xbf16>,
    %c2_56 = arith.constant 2 : index
    %c9_57 = arith.constant 9 : index
    %c0_58 = arith.constant 0 : index
    %54 = vector.load %arg8[%c2_56, %c9_57, %c0_58] : memref<18x32x8xbf16, #tpu.memory_space<vmem>>, vector<16x16x8xbf16>
    %55 = vector.shape_cast %54 : vector<16x16x8xbf16> to vector<256x8xbf16>
    %c0_59 = arith.constant 0 : index
    %c64 = arith.constant 64 : index
    %56 = vector.load %arg9[%c0_59, %c64] : memref<256x128xbf16, #tpu.memory_space<vmem>>, vector<256x8xbf16>
    tpu.vector_store %arg9[%c0_59, %c64], %55 {strides = array<i32>} : memref<256x128xbf16, #tpu.memory_space<vmem>>, vector<256x8xbf16>,
    %c0_60 = arith.constant 0 : index
    %c0_61 = arith.constant 0 : index
    %57 = vector.load %arg9[%c0_60, %c0_61] : memref<256x128xbf16, #tpu.memory_space<vmem>>, vector<256x128xbf16>
    %c0_62 = arith.constant 0 : index
    %c0_63 = arith.constant 0 : index
    %58 = vector.load %arg3[%c0_62, %c0_63] : memref<128x8xbf16, #tpu.memory_space<vmem>>, vector<128x8xbf16>
    %cst_64 = arith.constant dense<0.000000e+00> : vector<256x8xf32>
    %59 = tpu.matmul %57, %58, %cst_64 {dimension_numbers = #tpu.dot_dimension_numbers<[1], [0], [0], [1], [0, 0, 1, 1], [], []>} : vector<256x128xbf16>, vector<128x8xbf16>, vector<256x8xf32> -> vector<256x8xf32>
    %60 = vector.shape_cast %59 : vector<256x8xf32> to vector<1x256x8xf32>
    %c0_65 = arith.constant 0 : index
    %c0_66 = arith.constant 0 : index
    %c0_67 = arith.constant 0 : index
    %61 = vector.load %arg6[%c0_65, %c0_66, %c0_67] : memref<1x256x8xf32, #tpu.memory_space<vmem>>, vector<1x256x8xf32>
    tpu.vector_store %arg6[%c0_65, %c0_66, %c0_67], %60 {strides = array<i32>} : memref<1x256x8xf32, #tpu.memory_space<vmem>>, vector<1x256x8xf32>,
    %cst_68 = arith.constant dense<0.000000e+00> : vector<8xf32>
    %62 = vector.multi_reduction <add>, %59, %cst_68 [0] : vector<256x8xf32> to vector<8xf32>
    %63 = vector.shape_cast %62 : vector<8xf32> to vector<1x8xf32>
    %64 = arith.mulf %59, %59 : vector<256x8xf32>
    %cst_69 = arith.constant dense<0.000000e+00> : vector<8xf32>
    %65 = vector.multi_reduction <add>, %64, %cst_69 [0] : vector<256x8xf32> to vector<8xf32>
    %66 = vector.shape_cast %65 : vector<8xf32> to vector<1x8xf32>
    %67 = tpu.concatenate %63, %66 in 0 : vector<1x8xf32>, vector<1x8xf32> -> vector<2x8xf32>
    %68 = vector.shape_cast %67 : vector<2x8xf32> to vector<1x1x2x8xf32>
    %c0_70 = arith.constant 0 : index
    %c0_71 = arith.constant 0 : index
    %c0_72 = arith.constant 0 : index
    %c0_73 = arith.constant 0 : index
    %69 = vector.load %arg7[%c0_70, %c0_71, %c0_72, %c0_73] : memref<1x1x2x8xf32, #tpu.memory_space<vmem>>, vector<1x1x2x8xf32>
    tpu.vector_store %arg7[%c0_70, %c0_71, %c0_72, %c0_73], %68 {strides = array<i32>} : memref<1x1x2x8xf32, #tpu.memory_space<vmem>>, vector<1x1x2x8xf32>,
    return
  }
  func.func @transform_0(%arg0: i32, %arg1: i32) -> (i32, i32, i32, i32) {
    %c0_i32 = arith.constant 0 : i32
    %c0_i32_0 = arith.constant 0 : i32
    %c0_i32_1 = arith.constant 0 : i32
    %c0_i32_2 = arith.constant 0 : i32
    return %arg0, %c0_i32, %c0_i32_0, %c0_i32_1 : i32, i32, i32, i32
  }
  func.func @transform_1(%arg0: i32, %arg1: i32) -> (i32, i32) {
    %c0_i32 = arith.constant 0 : i32
    %c0_i32_0 = arith.constant 0 : i32
    %c0_i32_1 = arith.constant 0 : i32
    return %c0_i32, %c0_i32_0 : i32, i32
  }
  func.func @transform_2(%arg0: i32, %arg1: i32) -> (i32, i32) {
    %c0_i32 = arith.constant 0 : i32
    %c0_i32_0 = arith.constant 0 : i32
    %c0_i32_1 = arith.constant 0 : i32
    return %c0_i32, %c0_i32_0 : i32, i32
  }
  func.func @transform_3(%arg0: i32, %arg1: i32) -> (i32, i32) {
    %c0_i32 = arith.constant 0 : i32
    %c0_i32_0 = arith.constant 0 : i32
    %c0_i32_1 = arith.constant 0 : i32
    return %c0_i32, %c0_i32_0 : i32, i32
  }
  func.func @transform_4(%arg0: i32, %arg1: i32) -> (i32, i32, i32) {
    %c0_i32 = arith.constant 0 : i32
    %c0_i32_0 = arith.constant 0 : i32
    return %arg0, %arg1, %c0_i32 : i32, i32, i32
  }
  func.func @transform_5(%arg0: i32, %arg1: i32) -> (i32, i32, i32, i32) {
    %c0_i32 = arith.constant 0 : i32
    %c0_i32_0 = arith.constant 0 : i32
    %c0_i32_1 = arith.constant 0 : i32
    return %arg0, %arg1, %c0_i32, %c0_i32_0 : i32, i32, i32, i32
  }
}

module attributes {stable_mosaic.version = 11 : i64} {
  func.func @conv3x3_kernel(%arg0: i32, %arg1: i32, %arg2: memref<1x16x16x4xf32, #tpu.memory_space<vmem>>, %arg3: memref<128x8xbf16, #tpu.memory_space<vmem>>, %arg4: memref<1x4xf32, #tpu.memory_space<vmem>>, %arg5: memref<1x4xf32, #tpu.memory_space<vmem>>, %arg6: memref<1x256x8xf32, #tpu.memory_space<vmem>>, %arg7: memref<1x1x2x8xf32, #tpu.memory_space<vmem>>, %arg8: memref<18x32x4xbf16, #tpu.memory_space<vmem>>, %arg9: memref<256x128xbf16, #tpu.memory_space<vmem>>) attributes {dimension_semantics = [#tpu.dimension_semantics<parallel>, #tpu.dimension_semantics<parallel>], iteration_bounds = array<i64: 2, 1>, scalar_prefetch = 0 : i64, scratch_operands = 2 : i64, tpu.core_type = #tpu.core_type<tc>, window_params = [{transform_indices = @transform_0, window_bounds = array<i64: 1, 16, 16, 4>}, {pipeline_mode = #tpu.pipeline_mode<synchronous>, transform_indices = @transform_1, window_bounds = array<i64: 128, 8>}, {pipeline_mode = #tpu.pipeline_mode<synchronous>, transform_indices = @transform_2, window_bounds = array<i64: 1, 4>}, {pipeline_mode = #tpu.pipeline_mode<synchronous>, transform_indices = @transform_3, window_bounds = array<i64: 1, 4>}, {transform_indices = @transform_4, window_bounds = array<i64: 1, 256, 8>}, {transform_indices = @transform_5, window_bounds = array<i64: 1, 1, 2, 8>}]} {
    %c16_i32 = arith.constant 16 : i32
    %0 = arith.muli %arg1, %c16_i32 : i32
    %cst = arith.constant 0.000000e+00 : bf16
    %1 = vector.broadcast %cst : bf16 to vector<1x32x4xbf16>
    %cst_0 = arith.constant 0.000000e+00 : bf16
    %2 = vector.broadcast %cst_0 : bf16 to vector<18x8x4xbf16>
    %c0 = arith.constant 0 : index
    %c0_1 = arith.constant 0 : index
    %c0_2 = arith.constant 0 : index
    %3 = vector.load %arg8[%c0, %c0_1, %c0_2] : memref<18x32x4xbf16, #tpu.memory_space<vmem>>, vector<1x32x4xbf16>
    tpu.vector_store %arg8[%c0, %c0_1, %c0_2], %1 {strides = array<i32>} : memref<18x32x4xbf16, #tpu.memory_space<vmem>>, vector<1x32x4xbf16>,
    %c17 = arith.constant 17 : index
    %c0_3 = arith.constant 0 : index
    %c0_4 = arith.constant 0 : index
    %4 = vector.load %arg8[%c17, %c0_3, %c0_4] : memref<18x32x4xbf16, #tpu.memory_space<vmem>>, vector<1x32x4xbf16>
    tpu.vector_store %arg8[%c17, %c0_3, %c0_4], %1 {strides = array<i32>} : memref<18x32x4xbf16, #tpu.memory_space<vmem>>, vector<1x32x4xbf16>,
    %c0_5 = arith.constant 0 : index
    %c0_6 = arith.constant 0 : index
    %c0_7 = arith.constant 0 : index
    %5 = vector.load %arg8[%c0_5, %c0_6, %c0_7] : memref<18x32x4xbf16, #tpu.memory_space<vmem>>, vector<18x8x4xbf16>
    tpu.vector_store %arg8[%c0_5, %c0_6, %c0_7], %2 {strides = array<i32>} : memref<18x32x4xbf16, #tpu.memory_space<vmem>>, vector<18x8x4xbf16>,
    %c0_8 = arith.constant 0 : index
    %c24 = arith.constant 24 : index
    %c0_9 = arith.constant 0 : index
    %6 = vector.load %arg8[%c0_8, %c24, %c0_9] : memref<18x32x4xbf16, #tpu.memory_space<vmem>>, vector<18x8x4xbf16>
    tpu.vector_store %arg8[%c0_8, %c24, %c0_9], %2 {strides = array<i32>} : memref<18x32x4xbf16, #tpu.memory_space<vmem>>, vector<18x8x4xbf16>,
    %c0_10 = arith.constant 0 : index
    %7 = arith.index_cast %0 : i32 to index
    %c0_11 = arith.constant 0 : index
    %c0_12 = arith.constant 0 : index
    %8 = vector.load %arg2[%c0_10, %7, %c0_11, %c0_12] : memref<1x16x16x4xf32, #tpu.memory_space<vmem>>, vector<1x16x16x4xf32>
    %9 = vector.shape_cast %8 : vector<1x16x16x4xf32> to vector<16x16x4xf32>
    %10 = arith.truncf %9 : vector<16x16x4xf32> to vector<16x16x4xbf16>
    %c1 = arith.constant 1 : index
    %c8 = arith.constant 8 : index
    %c0_13 = arith.constant 0 : index
    %11 = vector.load %arg8[%c1, %c8, %c0_13] : memref<18x32x4xbf16, #tpu.memory_space<vmem>>, vector<16x16x4xbf16>
    tpu.vector_store %arg8[%c1, %c8, %c0_13], %10 {strides = array<i32>} : memref<18x32x4xbf16, #tpu.memory_space<vmem>>, vector<16x16x4xbf16>,
    %c0_i32 = arith.constant 0 : i32
    %12 = arith.cmpi sgt, %arg1, %c0_i32 : i32
    %13 = arith.extui %12 : i1 to i32
    %c0_i32_14 = arith.constant 0 : i32
    %14 = arith.cmpi ne, %13, %c0_i32_14 : i32
    scf.if %14 {
      %c1_i32 = arith.constant 1 : i32
      %60 = arith.subi %0, %c1_i32 : i32
      %c0_69 = arith.constant 0 : index
      %61 = arith.index_cast %60 : i32 to index
      %c0_70 = arith.constant 0 : index
      %c0_71 = arith.constant 0 : index
      %62 = vector.load %arg2[%c0_69, %61, %c0_70, %c0_71] : memref<1x16x16x4xf32, #tpu.memory_space<vmem>>, vector<1x1x16x4xf32>
      %63 = vector.shape_cast %62 : vector<1x1x16x4xf32> to vector<1x16x4xf32>
      %64 = arith.truncf %63 : vector<1x16x4xf32> to vector<1x16x4xbf16>
      %c0_72 = arith.constant 0 : index
      %c8_73 = arith.constant 8 : index
      %c0_74 = arith.constant 0 : index
      %65 = vector.load %arg8[%c0_72, %c8_73, %c0_74] : memref<18x32x4xbf16, #tpu.memory_space<vmem>>, vector<1x16x4xbf16>
      tpu.vector_store %arg8[%c0_72, %c8_73, %c0_74], %64 {strides = array<i32>} : memref<18x32x4xbf16, #tpu.memory_space<vmem>>, vector<1x16x4xbf16>,
    } else {
    }
    %c0_i32_15 = arith.constant 0 : i32
    %15 = arith.cmpi slt, %arg1, %c0_i32_15 : i32
    %16 = arith.extui %15 : i1 to i32
    %c0_i32_16 = arith.constant 0 : i32
    %17 = arith.cmpi ne, %16, %c0_i32_16 : i32
    scf.if %17 {
      %c16_i32_69 = arith.constant 16 : i32
      %60 = arith.addi %0, %c16_i32_69 : i32
      %c0_70 = arith.constant 0 : index
      %61 = arith.index_cast %60 : i32 to index
      %c0_71 = arith.constant 0 : index
      %c0_72 = arith.constant 0 : index
      %62 = vector.load %arg2[%c0_70, %61, %c0_71, %c0_72] : memref<1x16x16x4xf32, #tpu.memory_space<vmem>>, vector<1x1x16x4xf32>
      %63 = vector.shape_cast %62 : vector<1x1x16x4xf32> to vector<1x16x4xf32>
      %64 = arith.truncf %63 : vector<1x16x4xf32> to vector<1x16x4xbf16>
      %c17_73 = arith.constant 17 : index
      %c8_74 = arith.constant 8 : index
      %c0_75 = arith.constant 0 : index
      %65 = vector.load %arg8[%c17_73, %c8_74, %c0_75] : memref<18x32x4xbf16, #tpu.memory_space<vmem>>, vector<1x16x4xbf16>
      tpu.vector_store %arg8[%c17_73, %c8_74, %c0_75], %64 {strides = array<i32>} : memref<18x32x4xbf16, #tpu.memory_space<vmem>>, vector<1x16x4xbf16>,
    } else {
    }
    %cst_17 = arith.constant 0.000000e+00 : bf16
    %18 = vector.broadcast %cst_17 : bf16 to vector<256x92xbf16>
    %c0_18 = arith.constant 0 : index
    %c36 = arith.constant 36 : index
    %19 = vector.load %arg9[%c0_18, %c36] : memref<256x128xbf16, #tpu.memory_space<vmem>>, vector<256x92xbf16>
    tpu.vector_store %arg9[%c0_18, %c36], %18 {strides = array<i32>} : memref<256x128xbf16, #tpu.memory_space<vmem>>, vector<256x92xbf16>,
    %c0_19 = arith.constant 0 : index
    %c7 = arith.constant 7 : index
    %c0_20 = arith.constant 0 : index
    %20 = vector.load %arg8[%c0_19, %c7, %c0_20] : memref<18x32x4xbf16, #tpu.memory_space<vmem>>, vector<16x16x4xbf16>
    %21 = vector.shape_cast %20 : vector<16x16x4xbf16> to vector<256x4xbf16>
    %c0_21 = arith.constant 0 : index
    %c0_22 = arith.constant 0 : index
    %22 = vector.load %arg9[%c0_21, %c0_22] : memref<256x128xbf16, #tpu.memory_space<vmem>>, vector<256x4xbf16>
    tpu.vector_store %arg9[%c0_21, %c0_22], %21 {strides = array<i32>} : memref<256x128xbf16, #tpu.memory_space<vmem>>, vector<256x4xbf16>,
    %c0_23 = arith.constant 0 : index
    %c8_24 = arith.constant 8 : index
    %c0_25 = arith.constant 0 : index
    %23 = vector.load %arg8[%c0_23, %c8_24, %c0_25] : memref<18x32x4xbf16, #tpu.memory_space<vmem>>, vector<16x16x4xbf16>
    %24 = vector.shape_cast %23 : vector<16x16x4xbf16> to vector<256x4xbf16>
    %c0_26 = arith.constant 0 : index
    %c4 = arith.constant 4 : index
    %25 = vector.load %arg9[%c0_26, %c4] : memref<256x128xbf16, #tpu.memory_space<vmem>>, vector<256x4xbf16>
    tpu.vector_store %arg9[%c0_26, %c4], %24 {strides = array<i32>} : memref<256x128xbf16, #tpu.memory_space<vmem>>, vector<256x4xbf16>,
    %c0_27 = arith.constant 0 : index
    %c9 = arith.constant 9 : index
    %c0_28 = arith.constant 0 : index
    %26 = vector.load %arg8[%c0_27, %c9, %c0_28] : memref<18x32x4xbf16, #tpu.memory_space<vmem>>, vector<16x16x4xbf16>
    %27 = vector.shape_cast %26 : vector<16x16x4xbf16> to vector<256x4xbf16>
    %c0_29 = arith.constant 0 : index
    %c8_30 = arith.constant 8 : index
    %28 = vector.load %arg9[%c0_29, %c8_30] : memref<256x128xbf16, #tpu.memory_space<vmem>>, vector<256x4xbf16>
    tpu.vector_store %arg9[%c0_29, %c8_30], %27 {strides = array<i32>} : memref<256x128xbf16, #tpu.memory_space<vmem>>, vector<256x4xbf16>,
    %c1_31 = arith.constant 1 : index
    %c7_32 = arith.constant 7 : index
    %c0_33 = arith.constant 0 : index
    %29 = vector.load %arg8[%c1_31, %c7_32, %c0_33] : memref<18x32x4xbf16, #tpu.memory_space<vmem>>, vector<16x16x4xbf16>
    %30 = vector.shape_cast %29 : vector<16x16x4xbf16> to vector<256x4xbf16>
    %c0_34 = arith.constant 0 : index
    %c12 = arith.constant 12 : index
    %31 = vector.load %arg9[%c0_34, %c12] : memref<256x128xbf16, #tpu.memory_space<vmem>>, vector<256x4xbf16>
    tpu.vector_store %arg9[%c0_34, %c12], %30 {strides = array<i32>} : memref<256x128xbf16, #tpu.memory_space<vmem>>, vector<256x4xbf16>,
    %c1_35 = arith.constant 1 : index
    %c8_36 = arith.constant 8 : index
    %c0_37 = arith.constant 0 : index
    %32 = vector.load %arg8[%c1_35, %c8_36, %c0_37] : memref<18x32x4xbf16, #tpu.memory_space<vmem>>, vector<16x16x4xbf16>
    %33 = vector.shape_cast %32 : vector<16x16x4xbf16> to vector<256x4xbf16>
    %c0_38 = arith.constant 0 : index
    %c16 = arith.constant 16 : index
    %34 = vector.load %arg9[%c0_38, %c16] : memref<256x128xbf16, #tpu.memory_space<vmem>>, vector<256x4xbf16>
    tpu.vector_store %arg9[%c0_38, %c16], %33 {strides = array<i32>} : memref<256x128xbf16, #tpu.memory_space<vmem>>, vector<256x4xbf16>,
    %c1_39 = arith.constant 1 : index
    %c9_40 = arith.constant 9 : index
    %c0_41 = arith.constant 0 : index
    %35 = vector.load %arg8[%c1_39, %c9_40, %c0_41] : memref<18x32x4xbf16, #tpu.memory_space<vmem>>, vector<16x16x4xbf16>
    %36 = vector.shape_cast %35 : vector<16x16x4xbf16> to vector<256x4xbf16>
    %c0_42 = arith.constant 0 : index
    %c20 = arith.constant 20 : index
    %37 = vector.load %arg9[%c0_42, %c20] : memref<256x128xbf16, #tpu.memory_space<vmem>>, vector<256x4xbf16>
    tpu.vector_store %arg9[%c0_42, %c20], %36 {strides = array<i32>} : memref<256x128xbf16, #tpu.memory_space<vmem>>, vector<256x4xbf16>,
    %c2 = arith.constant 2 : index
    %c7_43 = arith.constant 7 : index
    %c0_44 = arith.constant 0 : index
    %38 = vector.load %arg8[%c2, %c7_43, %c0_44] : memref<18x32x4xbf16, #tpu.memory_space<vmem>>, vector<16x16x4xbf16>
    %39 = vector.shape_cast %38 : vector<16x16x4xbf16> to vector<256x4xbf16>
    %c0_45 = arith.constant 0 : index
    %c24_46 = arith.constant 24 : index
    %40 = vector.load %arg9[%c0_45, %c24_46] : memref<256x128xbf16, #tpu.memory_space<vmem>>, vector<256x4xbf16>
    tpu.vector_store %arg9[%c0_45, %c24_46], %39 {strides = array<i32>} : memref<256x128xbf16, #tpu.memory_space<vmem>>, vector<256x4xbf16>,
    %c2_47 = arith.constant 2 : index
    %c8_48 = arith.constant 8 : index
    %c0_49 = arith.constant 0 : index
    %41 = vector.load %arg8[%c2_47, %c8_48, %c0_49] : memref<18x32x4xbf16, #tpu.memory_space<vmem>>, vector<16x16x4xbf16>
    %42 = vector.shape_cast %41 : vector<16x16x4xbf16> to vector<256x4xbf16>
    %c0_50 = arith.constant 0 : index
    %c28 = arith.constant 28 : index
    %43 = vector.load %arg9[%c0_50, %c28] : memref<256x128xbf16, #tpu.memory_space<vmem>>, vector<256x4xbf16>
    tpu.vector_store %arg9[%c0_50, %c28], %42 {strides = array<i32>} : memref<256x128xbf16, #tpu.memory_space<vmem>>, vector<256x4xbf16>,
    %c2_51 = arith.constant 2 : index
    %c9_52 = arith.constant 9 : index
    %c0_53 = arith.constant 0 : index
    %44 = vector.load %arg8[%c2_51, %c9_52, %c0_53] : memref<18x32x4xbf16, #tpu.memory_space<vmem>>, vector<16x16x4xbf16>
    %45 = vector.shape_cast %44 : vector<16x16x4xbf16> to vector<256x4xbf16>
    %c0_54 = arith.constant 0 : index
    %c32 = arith.constant 32 : index
    %46 = vector.load %arg9[%c0_54, %c32] : memref<256x128xbf16, #tpu.memory_space<vmem>>, vector<256x4xbf16>
    tpu.vector_store %arg9[%c0_54, %c32], %45 {strides = array<i32>} : memref<256x128xbf16, #tpu.memory_space<vmem>>, vector<256x4xbf16>,
    %c0_55 = arith.constant 0 : index
    %c0_56 = arith.constant 0 : index
    %47 = vector.load %arg9[%c0_55, %c0_56] : memref<256x128xbf16, #tpu.memory_space<vmem>>, vector<256x128xbf16>
    %c0_57 = arith.constant 0 : index
    %c0_58 = arith.constant 0 : index
    %48 = vector.load %arg3[%c0_57, %c0_58] : memref<128x8xbf16, #tpu.memory_space<vmem>>, vector<128x8xbf16>
    %cst_59 = arith.constant dense<0.000000e+00> : vector<256x8xf32>
    %49 = tpu.matmul %47, %48, %cst_59 {dimension_numbers = #tpu.dot_dimension_numbers<[1], [0], [0], [1], [0, 0, 1, 1], [], []>} : vector<256x128xbf16>, vector<128x8xbf16>, vector<256x8xf32> -> vector<256x8xf32>
    %50 = vector.shape_cast %49 : vector<256x8xf32> to vector<1x256x8xf32>
    %c0_60 = arith.constant 0 : index
    %c0_61 = arith.constant 0 : index
    %c0_62 = arith.constant 0 : index
    %51 = vector.load %arg6[%c0_60, %c0_61, %c0_62] : memref<1x256x8xf32, #tpu.memory_space<vmem>>, vector<1x256x8xf32>
    tpu.vector_store %arg6[%c0_60, %c0_61, %c0_62], %50 {strides = array<i32>} : memref<1x256x8xf32, #tpu.memory_space<vmem>>, vector<1x256x8xf32>,
    %cst_63 = arith.constant dense<0.000000e+00> : vector<8xf32>
    %52 = vector.multi_reduction <add>, %49, %cst_63 [0] : vector<256x8xf32> to vector<8xf32>
    %53 = vector.shape_cast %52 : vector<8xf32> to vector<1x8xf32>
    %54 = arith.mulf %49, %49 : vector<256x8xf32>
    %cst_64 = arith.constant dense<0.000000e+00> : vector<8xf32>
    %55 = vector.multi_reduction <add>, %54, %cst_64 [0] : vector<256x8xf32> to vector<8xf32>
    %56 = vector.shape_cast %55 : vector<8xf32> to vector<1x8xf32>
    %57 = tpu.concatenate %53, %56 in 0 : vector<1x8xf32>, vector<1x8xf32> -> vector<2x8xf32>
    %58 = vector.shape_cast %57 : vector<2x8xf32> to vector<1x1x2x8xf32>
    %c0_65 = arith.constant 0 : index
    %c0_66 = arith.constant 0 : index
    %c0_67 = arith.constant 0 : index
    %c0_68 = arith.constant 0 : index
    %59 = vector.load %arg7[%c0_65, %c0_66, %c0_67, %c0_68] : memref<1x1x2x8xf32, #tpu.memory_space<vmem>>, vector<1x1x2x8xf32>
    tpu.vector_store %arg7[%c0_65, %c0_66, %c0_67, %c0_68], %58 {strides = array<i32>} : memref<1x1x2x8xf32, #tpu.memory_space<vmem>>, vector<1x1x2x8xf32>,
    return
  }
  func.func @transform_0(%arg0: i32, %arg1: i32) -> (i32, i32, i32, i32) {
    %c0_i32 = arith.constant 0 : i32
    %c0_i32_0 = arith.constant 0 : i32
    %c0_i32_1 = arith.constant 0 : i32
    %c0_i32_2 = arith.constant 0 : i32
    return %arg0, %c0_i32, %c0_i32_0, %c0_i32_1 : i32, i32, i32, i32
  }
  func.func @transform_1(%arg0: i32, %arg1: i32) -> (i32, i32) {
    %c0_i32 = arith.constant 0 : i32
    %c0_i32_0 = arith.constant 0 : i32
    %c0_i32_1 = arith.constant 0 : i32
    return %c0_i32, %c0_i32_0 : i32, i32
  }
  func.func @transform_2(%arg0: i32, %arg1: i32) -> (i32, i32) {
    %c0_i32 = arith.constant 0 : i32
    %c0_i32_0 = arith.constant 0 : i32
    %c0_i32_1 = arith.constant 0 : i32
    return %c0_i32, %c0_i32_0 : i32, i32
  }
  func.func @transform_3(%arg0: i32, %arg1: i32) -> (i32, i32) {
    %c0_i32 = arith.constant 0 : i32
    %c0_i32_0 = arith.constant 0 : i32
    %c0_i32_1 = arith.constant 0 : i32
    return %c0_i32, %c0_i32_0 : i32, i32
  }
  func.func @transform_4(%arg0: i32, %arg1: i32) -> (i32, i32, i32) {
    %c0_i32 = arith.constant 0 : i32
    %c0_i32_0 = arith.constant 0 : i32
    return %arg0, %arg1, %c0_i32 : i32, i32, i32
  }
  func.func @transform_5(%arg0: i32, %arg1: i32) -> (i32, i32, i32, i32) {
    %c0_i32 = arith.constant 0 : i32
    %c0_i32_0 = arith.constant 0 : i32
    %c0_i32_1 = arith.constant 0 : i32
    return %arg0, %arg1, %c0_i32, %c0_i32_0 : i32, i32, i32, i32
  }
}

</mosaic_0001>

<llo_original>
// kernel: double_conv.5
$region0: #{double_conv.5}
  #allocation0 [shape = 'u32[]', space=smem, size = 0x4, offset = 0x4, fixed_abs, tag = 'smem constant byte address 0x4 - core index']
  #allocation1 [shape = 'u32[72,128]{1,0:T(1,128)}', space=vmem, size = 0x9000, scoped, tag = 'internal scratch']
  %s0 = inlined_call_operand.vmem [shape: f32[2,256,8], index: 0, kind: input, shape index: {}]
  %s1 = inlined_call_operand.vmem [shape: f32[1,8], index: 1, kind: input, shape index: {}]
  %s2 = inlined_call_operand.vmem [shape: f32[1,8], index: 2, kind: input, shape index: {}]
  %s3 = inlined_call_operand.vmem [shape: f32[2,8,256], index: 3, kind: output, shape index: {}]
  %s4 = sld [smem:[#allocation0]]
  $region45: #{double_conv.5} parent=0
    _
  %s6 = ssub.s32 1, %s4
  %s7 = scalar_select 0, %s6, %s4
  loop: start=0, step=1, limit=4
  $region2: #{double_conv.5} parent=0 // loop_pre_header
    _
  $region3: #{double_conv.5} parent=0 // loop_header
    %s9 = sphi 0, %s13
    %p10 = scmp.ge.s32.totalorder %s9, 4
    %s16 = sphi 0, %s28
    %s17 = sphi 0, %s24
    %s18 = sphi 0, %s16
    %s19 = sphi 0, %s17
    %s20 = sphi 0, %s18
    %s21 = sphi 0, %s19
    %s33 = sphi 0, %s35
    %s36 = sphi 0, %s33
    %s37 = sphi 0, %s36
    %s53 = sphi 0, %s37
    %s57 = sphi 0, %s57
    %s59 = sphi 0, %s57
    %s60 = sphi 0, %s59
    %s74 = sphi 0, %s60
    %s78 = sphi 0, %s78
    %s80 = sphi 0, %s78
    %s81 = sphi 0, %s80
    %s95 = sphi 0, %s81
    %s103 = sphi 0, %s105
    %s106 = sphi 0, %s103
    %s107 = sphi 0, %s106
    %s123 = sphi 0, %s107
  $region4: #{double_conv.5} parent=0 // loop_header_branch
    %12 = sbr.rel (%p10) target = $region8
  $region5: #{double_conv.5} parent=0 // loop_body
    %s14 = ssub.s32 %s9, 1
    %s15 = ssub.s32 %s9, 2
    %s22 = sadd.s32 1, %s17
    %p23 = scmp.ge.s32.totalorder %s22, 1
    %s24 = scalar_select %p23, 0, %s22
    %s25 = sadd.s32 1, %s16
    %s26 = scalar_select %p23, %s25, %s16
    %p27 = scmp.ge.s32.totalorder %s26, 2
    %s28 = scalar_select %p27, 0, %s26
    %s29 = ssub.s32 %s16, %s28
    %s30 = ssub.s32 %s17, %s24
    %s31 = sor.u32 %s29, %s30
    %p32 = scmp.eq.s32.totalorder %s31, 0
    %s34 = sadd.s32 %s33, 1
    %s35 = scalar_select %p32, %s33, %s34
    %p38 = pneg %p32
    %p39 = scmp.eq.s32.totalorder %s9, 1
    %p40 = por %p38, %p39
    %p41 = scmp.ne.s32.totalorder %s33, %s36
    %p42 = scmp.eq.s32.totalorder %s9, 0
    %p43 = por %p41, %p42
    %p44 = scmp.ne.s32.totalorder %s33, %s36
    %p45 = scmp.eq.s32.totalorder %s14, 1
    %p46 = por %p44, %p45
    %p47 = scmp.ne.s32.totalorder %s36, %s37
    %p48 = scmp.eq.s32.totalorder %s14, 0
    %p49 = por %p47, %p48
    %p50 = scmp.ne.s32.totalorder %s36, %s37
    %p51 = scmp.eq.s32.totalorder %s15, 1
    %p52 = por %p50, %p51
    %p54 = scmp.ne.s32.totalorder %s37, %s53
    %p55 = scmp.eq.s32.totalorder %s15, 0
    %p56 = por %p54, %p55
    %s58 = sadd.s32 %s57, 1
    %p61 = scmp.eq.s32.totalorder %s9, 1
    %p62 = scmp.ne.s32.totalorder %s57, %s59
    %p63 = scmp.eq.s32.totalorder %s9, 0
    %p64 = por %p62, %p63
    %p65 = scmp.ne.s32.totalorder %s57, %s59
    %p66 = scmp.eq.s32.totalorder %s14, 1
    %p67 = por %p65, %p66
    %p68 = scmp.ne.s32.totalorder %s59, %s60
    %p69 = scmp.eq.s32.totalorder %s14, 0
    %p70 = por %p68, %p69
    %p71 = scmp.ne.s32.totalorder %s59, %s60
    %p72 = scmp.eq.s32.totalorder %s15, 1
    %p73 = por %p71, %p72
    %p75 = scmp.ne.s32.totalorder %s60, %s74
    %p76 = scmp.eq.s32.totalorder %s15, 0
    %p77 = por %p75, %p76
    %s79 = sadd.s32 %s78, 1
    %p82 = scmp.eq.s32.totalorder %s9, 1
    %p83 = scmp.ne.s32.totalorder %s78, %s80
    %p84 = scmp.eq.s32.totalorder %s9, 0
    %p85 = por %p83, %p84
    %p86 = scmp.ne.s32.totalorder %s78, %s80
    %p87 = scmp.eq.s32.totalorder %s14, 1
    %p88 = por %p86, %p87
    %p89 = scmp.ne.s32.totalorder %s80, %s81
    %p90 = scmp.eq.s32.totalorder %s14, 0
    %p91 = por %p89, %p90
    %p92 = scmp.ne.s32.totalorder %s80, %s81
    %p93 = scmp.eq.s32.totalorder %s15, 1
    %p94 = por %p92, %p93
    %p96 = scmp.ne.s32.totalorder %s81, %s95
    %p97 = scmp.eq.s32.totalorder %s15, 0
    %p98 = por %p96, %p97
    %s99 = ssub.s32 %s16, %s28
    %s100 = ssub.s32 %s17, %s24
    %s101 = sor.u32 %s99, %s100
    %p102 = scmp.eq.s32.totalorder %s101, 0
    %s104 = sadd.s32 %s103, 1
    %s105 = scalar_select %p102, %s103, %s104
    %p108 = pneg %p102
    %p109 = scmp.eq.s32.totalorder %s9, 1
    %p110 = por %p108, %p109
    %p111 = scmp.ne.s32.totalorder %s103, %s106
    %p112 = scmp.eq.s32.totalorder %s9, 0
    %p113 = por %p111, %p112
    %p114 = scmp.ne.s32.totalorder %s103, %s106
    %p115 = scmp.eq.s32.totalorder %s14, 1
    %p116 = por %p114, %p115
    %p117 = scmp.ne.s32.totalorder %s106, %s107
    %p118 = scmp.eq.s32.totalorder %s14, 0
    %p119 = por %p117, %p118
    %p120 = scmp.ne.s32.totalorder %s106, %s107
    %p121 = scmp.eq.s32.totalorder %s15, 1
    %p122 = por %p120, %p121
    %p124 = scmp.ne.s32.totalorder %s107, %s123
    %p125 = scmp.eq.s32.totalorder %s15, 0
    %p126 = por %p124, %p125
    %p127 = scmp.le.s32.totalorder 1, %s9
    %p128 = scmp.lt.s32.totalorder %s9, 3
    %p129 = pnand %p127, %p128
    %p130 = pneg %p129
    // Predicated region
    $region9: #{double_conv.5} parent=5 // pred_check
      _
    $region10: #{double_conv.5} parent=5 // pred_check_branch
      %132 = sbr.rel (%p129) target = $region12
    $region11: #{double_conv.5} parent=5 // pred_region
      %s133 = ssub.s32 %s9, 1
      // Predicated region
      $region13: #{double_conv.5} parent=11 // pred_check
        %p134 = pneg %p70
      $region14: #{double_conv.5} parent=11 // pred_check_branch
        %136 = sbr.rel (%p134) target = $region16
      $region15: #{double_conv.5} parent=11 // pred_region
        _
      $region16: #{double_conv.5} parent=11 // pred_fallthru
        _
      // Predicated region
      $region17: #{double_conv.5} parent=11 // pred_check
        %p137 = pneg %p91
      $region18: #{double_conv.5} parent=11 // pred_check_branch
        %139 = sbr.rel (%p137) target = $region20
      $region19: #{double_conv.5} parent=11 // pred_region
        _
      $region20: #{double_conv.5} parent=11 // pred_fallthru
        _
    $region12: #{double_conv.5} parent=5 // pred_fallthru
      _
    %p140 = scmp.lt.s32.totalorder %s9, 2
    // Predicated region
    $region21: #{double_conv.5} parent=5 // pred_check
      %p141 = pneg %p140
    $region22: #{double_conv.5} parent=5 // pred_check_branch
      %143 = sbr.rel (%p141) target = $region24
    $region23: #{double_conv.5} parent=5 // pred_region
      // Predicated region
      $region25: #{double_conv.5} parent=23 // pred_check
        %p144 = pneg %p43
      $region26: #{double_conv.5} parent=23 // pred_check_branch
        %146 = sbr.rel (%p144) target = $region28
      $region27: #{double_conv.5} parent=23 // pred_region
        %s147 = smul.u32 32, %s17
        %p148 = scmp.lt.s32.totalorder %s16, 1
        %s149 = scalar_select %p148, %s16, 1
        %p150 = scmp.lt.s32.totalorder %s147, 31
        %s151 = scalar_select %p150, %s147, 31
        %s152 = smul.addr %s149, 32
        %s153 = sadd.s32 %s151, %s152
        %s154 = smul.addr %s153, 8
        %s155 = scalar_lea.vmem %s0, %s154
        %s156 = smul.u32 32, %s17
      $region28: #{double_conv.5} parent=23 // pred_fallthru
        _
    $region24: #{double_conv.5} parent=5 // pred_fallthru
      _
    %p157 = scmp.le.s32.totalorder 1, %s9
    %p158 = scmp.lt.s32.totalorder %s9, 3
    %p159 = pnand %p157, %p158
    %p160 = pneg %p159
    // Predicated region
    $region29: #{double_conv.5} parent=5 // pred_check
      _
    $region30: #{double_conv.5} parent=5 // pred_check_branch
      %162 = sbr.rel (%p159) target = $region32
    $region31: #{double_conv.5} parent=5 // pred_region
      %s163 = ssub.s32 %s9, 1
      %s164 = smul.u32 32, %s19
      %p165 = scmp.lt.s32.totalorder %s18, 1
      %s166 = scalar_select %p165, %s18, 1
      %p167 = scmp.lt.s32.totalorder %s164, 31
      %s168 = scalar_select %p167, %s164, 31
      %s169 = smul.addr %s166, 32
      %s170 = sadd.s32 %s168, %s169
      %s171 = smul.addr %s170, 8
      %s172 = scalar_lea.vmem %s0, %s171
      %p173 = pneg %p49
      %p174 = pneg %p46
      %p175 = pneg %p70
      %p176 = pneg %p67
      %p177 = pneg %p91
      %p178 = pneg %p88
      %p179 = pneg %p119
      %p180 = pneg %p116
      %s181 = smul.u32 2, %s19
      %p182 = scmp.lt.s32.totalorder %s18, 1
      %s183 = scalar_select %p182, %s18, 1
      %p184 = scmp.lt.s32.totalorder %s181, 1
      %s185 = scalar_select %p184, %s181, 1
      %s186 = smul.addr %s183, 2
      %s187 = sadd.s32 %s185, %s186
      %s188 = smul.addr %s187, 8
      %s189 = scalar_lea.vmem %s3, %s188
      %s190 = smul.u32 32, %s19
      %p191 = scmp.lt.s32.totalorder %s18, 1
      %s192 = scalar_select %p191, %s18, 1
      %p193 = scmp.lt.s32.totalorder %s190, 31
      %s194 = scalar_select %p193, %s190, 31
      %s195 = smul.addr %s192, 32
      %s196 = sadd.s32 %s194, %s195
      %s197 = smul.addr %s196, 8
      %s198 = scalar_lea.vmem %s0, %s197
      %s199 = smul.u32 32, %s19
      %s200 = smul.u32 2, %s19
      %p201 = scmp.lt.s32.totalorder %s18, 1
      %s202 = scalar_select %p201, %s18, 1
      %p203 = scmp.lt.s32.totalorder %s200, 1
      %s204 = scalar_select %p203, %s200, 1
      %s205 = smul.addr %s202, 2
      %s206 = sadd.s32 %s204, %s205
      %s207 = smul.addr %s206, 8
      %s208 = scalar_lea.vmem %s3, %s207
      %s209 = smul.u32 2, %s19
      %v210 = vld [vmem:[%s198] sm:$0xff]
      %v211 = vld [vmem:[%s198 + $0x8] sm:$0xff]
      %v212 = vld [vmem:[%s198 + $0x10] sm:$0xff]
      %v213 = vld [vmem:[%s198 + $0x18] sm:$0xff]
      %v214 = vld [vmem:[%s198 + $0x20] sm:$0xff]
      %v215 = vld [vmem:[%s198 + $0x28] sm:$0xff]
      %v216 = vld [vmem:[%s198 + $0x30] sm:$0xff]
      %v217 = vld [vmem:[%s198 + $0x38] sm:$0xff]
      %v218 = vld [vmem:[%s198 + $0x40] sm:$0xff]
      %v219 = vld [vmem:[%s198 + $0x48] sm:$0xff]
      %v220 = vld [vmem:[%s198 + $0x50] sm:$0xff]
      %v221 = vld [vmem:[%s198 + $0x58] sm:$0xff]
      %v222 = vld [vmem:[%s198 + $0x60] sm:$0xff]
      %v223 = vld [vmem:[%s198 + $0x68] sm:$0xff]
      %v224 = vld [vmem:[%s198 + $0x70] sm:$0xff]
      %v225 = vld [vmem:[%s198 + $0x78] sm:$0xff]
      %v226 = vld [vmem:[%s198 + $0x80] sm:$0xff]
      %v227 = vld [vmem:[%s198 + $0x88] sm:$0xff]
      %v228 = vld [vmem:[%s198 + $0x90] sm:$0xff]
      %v229 = vld [vmem:[%s198 + $0x98] sm:$0xff]
      %v230 = vld [vmem:[%s198 + $0xa0] sm:$0xff]
      %v231 = vld [vmem:[%s198 + $0xa8] sm:$0xff]
      %v232 = vld [vmem:[%s198 + $0xb0] sm:$0xff]
      %v233 = vld [vmem:[%s198 + $0xb8] sm:$0xff]
      %v234 = vld [vmem:[%s198 + $0xc0] sm:$0xff]
      %v235 = vld [vmem:[%s198 + $0xc8] sm:$0xff]
      %v236 = vld [vmem:[%s198 + $0xd0] sm:$0xff]
      %v237 = vld [vmem:[%s198 + $0xd8] sm:$0xff]
      %v238 = vld [vmem:[%s198 + $0xe0] sm:$0xff]
      %v239 = vld [vmem:[%s198 + $0xe8] sm:$0xff]
      %v240 = vld [vmem:[%s198 + $0xf0] sm:$0xff]
      %v241 = vld [vmem:[%s198 + $0xf8] sm:$0xff]
      %v242 = vld [vmem:[%s1] sm:$0x1]
      %v244 = vperm.slane %v242, 0
      %v246 = vmul.f32 %v210, %v244
      %v247 = vmul.f32 %v211, %v244
      %v248 = vmul.f32 %v212, %v244
      %v249 = vmul.f32 %v213, %v244
      %v250 = vmul.f32 %v214, %v244
      %v251 = vmul.f32 %v215, %v244
      %v252 = vmul.f32 %v216, %v244
      %v253 = vmul.f32 %v217, %v244
      %v254 = vmul.f32 %v218, %v244
      %v255 = vmul.f32 %v219, %v244
      %v256 = vmul.f32 %v220, %v244
      %v257 = vmul.f32 %v221, %v244
      %v258 = vmul.f32 %v222, %v244
      %v259 = vmul.f32 %v223, %v244
      %v260 = vmul.f32 %v224, %v244
      %v261 = vmul.f32 %v225, %v244
      %v262 = vmul.f32 %v226, %v244
      %v263 = vmul.f32 %v227, %v244
      %v264 = vmul.f32 %v228, %v244
      %v265 = vmul.f32 %v229, %v244
      %v266 = vmul.f32 %v230, %v244
      %v267 = vmul.f32 %v231, %v244
      %v268 = vmul.f32 %v232, %v244
      %v269 = vmul.f32 %v233, %v244
      %v270 = vmul.f32 %v234, %v244
      %v271 = vmul.f32 %v235, %v244
      %v272 = vmul.f32 %v236, %v244
      %v273 = vmul.f32 %v237, %v244
      %v274 = vmul.f32 %v238, %v244
      %v275 = vmul.f32 %v239, %v244
      %v276 = vmul.f32 %v240, %v244
      %v277 = vmul.f32 %v241, %v244
      %v278 = vld [vmem:[%s2] sm:$0x1]
      %v280 = vperm.slane %v278, 0
      %v282 = vadd.f32 %v246, %v280
      %v283 = vadd.f32 %v247, %v280
      %v284 = vadd.f32 %v248, %v280
      %v285 = vadd.f32 %v249, %v280
      %v286 = vadd.f32 %v250, %v280
      %v287 = vadd.f32 %v251, %v280
      %v288 = vadd.f32 %v252, %v280
      %v289 = vadd.f32 %v253, %v280
      %v290 = vadd.f32 %v254, %v280
      %v291 = vadd.f32 %v255, %v280
      %v292 = vadd.f32 %v256, %v280
      %v293 = vadd.f32 %v257, %v280
      %v294 = vadd.f32 %v258, %v280
      %v295 = vadd.f32 %v259, %v280
      %v296 = vadd.f32 %v260, %v280
      %v297 = vadd.f32 %v261, %v280
      %v298 = vadd.f32 %v262, %v280
      %v299 = vadd.f32 %v263, %v280
      %v300 = vadd.f32 %v264, %v280
      %v301 = vadd.f32 %v265, %v280
      %v302 = vadd.f32 %v266, %v280
      %v303 = vadd.f32 %v267, %v280
      %v304 = vadd.f32 %v268, %v280
      %v305 = vadd.f32 %v269, %v280
      %v306 = vadd.f32 %v270, %v280
      %v307 = vadd.f32 %v271, %v280
      %v308 = vadd.f32 %v272, %v280
      %v309 = vadd.f32 %v273, %v280
      %v310 = vadd.f32 %v274, %v280
      %v311 = vadd.f32 %v275, %v280
      %v312 = vadd.f32 %v276, %v280
      %v313 = vadd.f32 %v277, %v280
      %v314 = vmax.f32 %v282, 0.0
      %v315 = vmax.f32 %v283, 0.0
      %v316 = vmax.f32 %v284, 0.0
      %v317 = vmax.f32 %v285, 0.0
      %v318 = vmax.f32 %v286, 0.0
      %v319 = vmax.f32 %v287, 0.0
      %v320 = vmax.f32 %v288, 0.0
      %v321 = vmax.f32 %v289, 0.0
      %v322 = vmax.f32 %v290, 0.0
      %v323 = vmax.f32 %v291, 0.0
      %v324 = vmax.f32 %v292, 0.0
      %v325 = vmax.f32 %v293, 0.0
      %v326 = vmax.f32 %v294, 0.0
      %v327 = vmax.f32 %v295, 0.0
      %v328 = vmax.f32 %v296, 0.0
      %v329 = vmax.f32 %v297, 0.0
      %v330 = vmax.f32 %v298, 0.0
      %v331 = vmax.f32 %v299, 0.0
      %v332 = vmax.f32 %v300, 0.0
      %v333 = vmax.f32 %v301, 0.0
      %v334 = vmax.f32 %v302, 0.0
      %v335 = vmax.f32 %v303, 0.0
      %v336 = vmax.f32 %v304, 0.0
      %v337 = vmax.f32 %v305, 0.0
      %v338 = vmax.f32 %v306, 0.0
      %v339 = vmax.f32 %v307, 0.0
      %v340 = vmax.f32 %v308, 0.0
      %v341 = vmax.f32 %v309, 0.0
      %v342 = vmax.f32 %v310, 0.0
      %v343 = vmax.f32 %v311, 0.0
      %v344 = vmax.f32 %v312, 0.0
      %v345 = vmax.f32 %v313, 0.0
      %vm346 = vcmask 64512
      %v347 = vsel %vm346, %v314, 0.0
      %v348 = vsel %vm346, %v315, 0.0
      %v349 = vsel %vm346, %v316, 0.0
      %v350 = vsel %vm346, %v317, 0.0
      %v351 = vsel %vm346, %v318, 0.0
      %v352 = vsel %vm346, %v319, 0.0
      %v353 = vsel %vm346, %v320, 0.0
      %v354 = vsel %vm346, %v321, 0.0
      %v355 = vsel %vm346, %v322, 0.0
      %v356 = vsel %vm346, %v323, 0.0
      %v357 = vsel %vm346, %v324, 0.0
      %v358 = vsel %vm346, %v325, 0.0
      %v359 = vsel %vm346, %v326, 0.0
      %v360 = vsel %vm346, %v327, 0.0
      %v361 = vsel %vm346, %v328, 0.0
      %v362 = vsel %vm346, %v329, 0.0
      %v363 = vsel %vm346, %v330, 0.0
      %v364 = vsel %vm346, %v331, 0.0
      %v365 = vsel %vm346, %v332, 0.0
      %v366 = vsel %vm346, %v333, 0.0
      %v367 = vsel %vm346, %v334, 0.0
      %v368 = vsel %vm346, %v335, 0.0
      %v369 = vsel %vm346, %v336, 0.0
      %v370 = vsel %vm346, %v337, 0.0
      %v371 = vsel %vm346, %v338, 0.0
      %v372 = vsel %vm346, %v339, 0.0
      %v373 = vsel %vm346, %v340, 0.0
      %v374 = vsel %vm346, %v341, 0.0
      %v375 = vsel %vm346, %v342, 0.0
      %v376 = vsel %vm346, %v343, 0.0
      %v377 = vsel %vm346, %v344, 0.0
      %v378 = vsel %vm346, %v345, 0.0
      %379 = vxpose.xlu0.b32.start [1/16] %v347, 128
      %380 = vxpose.xlu0.b32.cont [2/16] %v348, 128
      %381 = vxpose.xlu0.b32.cont [3/16] %v349, 128
      %382 = vxpose.xlu0.b32.cont [4/16] %v350, 128
      %383 = vxpose.xlu0.b32.cont [5/16] %v351, 128
      %384 = vxpose.xlu0.b32.cont [6/16] %v352, 128
      %385 = vxpose.xlu0.b32.cont [7/16] %v353, 128
      %386 = vxpose.xlu0.b32.cont [8/16] %v354, 128
      %387 = vxpose.xlu0.b32.cont [9/16] %v355, 128
      %388 = vxpose.xlu0.b32.cont [10/16] %v356, 128
      %389 = vxpose.xlu0.b32.cont [11/16] %v357, 128
      %390 = vxpose.xlu0.b32.cont [12/16] %v358, 128
      %391 = vxpose.xlu0.b32.cont [13/16] %v359, 128
      %392 = vxpose.xlu0.b32.cont [14/16] %v360, 128
      %393 = vxpose.xlu0.b32.cont [15/16] %v361, 128
      %394 = vxpose.xlu0.b32.end [16/16] %v362, 128
      %v395 = vpop.trf.xlu0
      %v396 = vpop.trf.xlu0
      %v397 = vpop.trf.xlu0
      %v398 = vpop.trf.xlu0
      %v399 = vpop.trf.xlu0
      %v400 = vpop.trf.xlu0
      %v401 = vpop.trf.xlu0
      %v402 = vpop.trf.xlu0
      %v403 = vpop.trf.xlu0
      %v404 = vpop.trf.xlu0
      %v405 = vpop.trf.xlu0
      %v406 = vpop.trf.xlu0
      %v407 = vpop.trf.xlu0
      %v408 = vpop.trf.xlu0
      %v409 = vpop.trf.xlu0
      %v410 = vpop.trf.xlu0
      %411 = vxpose.xlu0.b32.start [1/16] %v363, 128
      %412 = vxpose.xlu0.b32.cont [2/16] %v364, 128
      %413 = vxpose.xlu0.b32.cont [3/16] %v365, 128
      %414 = vxpose.xlu0.b32.cont [4/16] %v366, 128
      %415 = vxpose.xlu0.b32.cont [5/16] %v367, 128
      %416 = vxpose.xlu0.b32.cont [6/16] %v368, 128
      %417 = vxpose.xlu0.b32.cont [7/16] %v369, 128
      %418 = vxpose.xlu0.b32.cont [8/16] %v370, 128
      %419 = vxpose.xlu0.b32.cont [9/16] %v371, 128
      %420 = vxpose.xlu0.b32.cont [10/16] %v372, 128
      %421 = vxpose.xlu0.b32.cont [11/16] %v373, 128
      %422 = vxpose.xlu0.b32.cont [12/16] %v374, 128
      %423 = vxpose.xlu0.b32.cont [13/16] %v375, 128
      %424 = vxpose.xlu0.b32.cont [14/16] %v376, 128
      %425 = vxpose.xlu0.b32.cont [15/16] %v377, 128
      %426 = vxpose.xlu0.b32.end [16/16] %v378, 128
      %v427 = vpop.trf.xlu0
      %v428 = vpop.trf.xlu0
      %v429 = vpop.trf.xlu0
      %v430 = vpop.trf.xlu0
      %v431 = vpop.trf.xlu0
      %v432 = vpop.trf.xlu0
      %v433 = vpop.trf.xlu0
      %v434 = vpop.trf.xlu0
      %v435 = vpop.trf.xlu0
      %v436 = vpop.trf.xlu0
      %v437 = vpop.trf.xlu0
      %v438 = vpop.trf.xlu0
      %v439 = vpop.trf.xlu0
      %v440 = vpop.trf.xlu0
      %v441 = vpop.trf.xlu0
      %v442 = vpop.trf.xlu0
      %443 = vst [vmem:[%s208] sm:$0xff] %v395
      %444 = vst [vmem:[%s208 + $0x8] sm:$0xff] %v427
      %s445 = smul.u32 2, %s19
      %p446 = scmp.lt.s32.totalorder %s18, 1
      %s447 = scalar_select %p446, %s18, 1
      %p448 = scmp.lt.s32.totalorder %s445, 1
      %s449 = scalar_select %p448, %s445, 1
      %s450 = smul.addr %s447, 2
      %s451 = sadd.s32 %s449, %s450
      %s452 = smul.addr %s451, 8
      %s453 = scalar_lea.vmem %s3, %s452
      // Predicated region
      $region33: #{double_conv.5} parent=31 // pred_check
        %p454 = pneg %p116
      $region34: #{double_conv.5} parent=31 // pred_check_branch
        %456 = sbr.rel (%p454) target = $region36
      $region35: #{double_conv.5} parent=31 // pred_region
        %s457 = smul.u32 2, %s19
      $region36: #{double_conv.5} parent=31 // pred_fallthru
        _
    $region32: #{double_conv.5} parent=5 // pred_fallthru
      _
    %p458 = scmp.le.s32.totalorder 2, %s9
    // Predicated region
    $region37: #{double_conv.5} parent=5 // pred_check
      %p459 = pneg %p458
    $region38: #{double_conv.5} parent=5 // pred_check_branch
      %461 = sbr.rel (%p459) target = $region40
    $region39: #{double_conv.5} parent=5 // pred_region
      %s462 = ssub.s32 %s9, 2
      // Predicated region
      $region41: #{double_conv.5} parent=39 // pred_check
        %p463 = pneg %p122
      $region42: #{double_conv.5} parent=39 // pred_check_branch
        %465 = sbr.rel (%p463) target = $region44
      $region43: #{double_conv.5} parent=39 // pred_region
        %s466 = smul.u32 2, %s21
        %p467 = scmp.lt.s32.totalorder %s20, 1
        %s468 = scalar_select %p467, %s20, 1
        %p469 = scmp.lt.s32.totalorder %s466, 1
        %s470 = scalar_select %p469, %s466, 1
        %s471 = smul.addr %s468, 2
        %s472 = sadd.s32 %s470, %s471
        %s473 = smul.addr %s472, 8
        %s474 = scalar_lea.vmem %s3, %s473
      $region44: #{double_conv.5} parent=39 // pred_fallthru
        _
    $region40: #{double_conv.5} parent=5 // pred_fallthru
      _
  $region6: #{double_conv.5} parent=0 // loop_footer
    %s13 = sadd.s32 1, %s9
  $region7: #{double_conv.5} parent=0 // loop_footer_branch
    %8 = sbr.rel target = $region3
  $region8: #{double_conv.5} parent=0 // loop_exit
    _

// kernel: double_conv.4
$region0: #{double_conv.4}
  #allocation0 [shape = 'u32[]', space=smem, size = 0x4, offset = 0x4, fixed_abs, tag = 'smem constant byte address 0x4 - core index']
  #allocation1 [shape = 'u32[72,128]{1,0:T(1,128)}', space=vmem, size = 0x9000, scoped, tag = 'internal scratch']
  #allocation2 [shape = 'bf16[18,32,8]{2,1,0:T(8,128)(2,1)}', space=vmem, size = 0x24000, scoped, tag = 'scratch operand']
  #allocation3 [shape = 'bf16[256,128]{1,0:T(8,128)(2,1)}', space=vmem, size = 0x10000, scoped, tag = 'scratch operand']
  %s0 = inlined_call_operand.vmem [shape: f32[2,16,16,8], index: 0, kind: input, shape index: {}]
  %s1 = inlined_call_operand.vmem [shape: bf16[128,8], index: 1, kind: input, shape index: {}]
  %s2 = inlined_call_operand.vmem [shape: f32[1,8], index: 2, kind: input, shape index: {}]
  %s3 = inlined_call_operand.vmem [shape: f32[1,8], index: 3, kind: input, shape index: {}]
  %s4 = inlined_call_operand.vmem [shape: f32[2,256,8], index: 4, kind: output, shape index: {0}]
  %s5 = inlined_call_operand.vmem [shape: f32[2,1,2,8], index: 5, kind: output, shape index: {1}]
  %6 = xla_tuple %s4, %s5
  %s7 = sld [smem:[#allocation0]]
  $region65: #{double_conv.4} parent=0
    _
  %s9 = ssub.s32 1, %s7
  %s10 = scalar_select 0, %s9, %s7
  loop: start=0, step=1, limit=4
  $region2: #{double_conv.4} parent=0 // loop_pre_header
    _
  $region3: #{double_conv.4} parent=0 // loop_header
    %s12 = sphi 0, %s16
    %p13 = scmp.ge.s32.totalorder %s12, 4
    %s19 = sphi 0, %s31
    %s20 = sphi 0, %s27
    %s21 = sphi 0, %s19
    %s22 = sphi 0, %s20
    %s23 = sphi 0, %s21
    %s24 = sphi 0, %s22
    %s34 = sphi 0, %s36
    %s37 = sphi 0, %s34
    %s38 = sphi 0, %s37
    %s54 = sphi 0, %s38
    %s58 = sphi 0, %s58
    %s60 = sphi 0, %s58
    %s61 = sphi 0, %s60
    %s75 = sphi 0, %s61
    %s79 = sphi 0, %s79
    %s81 = sphi 0, %s79
    %s82 = sphi 0, %s81
    %s96 = sphi 0, %s82
    %s100 = sphi 0, %s100
    %s102 = sphi 0, %s100
    %s103 = sphi 0, %s102
    %s117 = sphi 0, %s103
    %s125 = sphi 0, %s127
    %s128 = sphi 0, %s125
    %s129 = sphi 0, %s128
    %s145 = sphi 0, %s129
    %s153 = sphi 0, %s155
    %s156 = sphi 0, %s153
    %s157 = sphi 0, %s156
    %s173 = sphi 0, %s157
  $region4: #{double_conv.4} parent=0 // loop_header_branch
    %15 = sbr.rel (%p13) target = $region8
  $region5: #{double_conv.4} parent=0 // loop_body
    %s17 = ssub.s32 %s12, 1
    %s18 = ssub.s32 %s12, 2
    %s25 = sadd.s32 1, %s20
    %p26 = scmp.ge.s32.totalorder %s25, 1
    %s27 = scalar_select %p26, 0, %s25
    %s28 = sadd.s32 1, %s19
    %s29 = scalar_select %p26, %s28, %s19
    %p30 = scmp.ge.s32.totalorder %s29, 2
    %s31 = scalar_select %p30, 0, %s29
    %s32 = ssub.s32 %s19, %s31
    %p33 = scmp.eq.s32.totalorder %s32, 0
    %s35 = sadd.s32 %s34, 1
    %s36 = scalar_select %p33, %s34, %s35
    %p39 = pneg %p33
    %p40 = scmp.eq.s32.totalorder %s12, 1
    %p41 = por %p39, %p40
    %p42 = scmp.ne.s32.totalorder %s34, %s37
    %p43 = scmp.eq.s32.totalorder %s12, 0
    %p44 = por %p42, %p43
    %p45 = scmp.ne.s32.totalorder %s34, %s37
    %p46 = scmp.eq.s32.totalorder %s17, 1
    %p47 = por %p45, %p46
    %p48 = scmp.ne.s32.totalorder %s37, %s38
    %p49 = scmp.eq.s32.totalorder %s17, 0
    %p50 = por %p48, %p49
    %p51 = scmp.ne.s32.totalorder %s37, %s38
    %p52 = scmp.eq.s32.totalorder %s18, 1
    %p53 = por %p51, %p52
    %p55 = scmp.ne.s32.totalorder %s38, %s54
    %p56 = scmp.eq.s32.totalorder %s18, 0
    %p57 = por %p55, %p56
    %s59 = sadd.s32 %s58, 1
    %p62 = scmp.eq.s32.totalorder %s12, 1
    %p63 = scmp.ne.s32.totalorder %s58, %s60
    %p64 = scmp.eq.s32.totalorder %s12, 0
    %p65 = por %p63, %p64
    %p66 = scmp.ne.s32.totalorder %s58, %s60
    %p67 = scmp.eq.s32.totalorder %s17, 1
    %p68 = por %p66, %p67
    %p69 = scmp.ne.s32.totalorder %s60, %s61
    %p70 = scmp.eq.s32.totalorder %s17, 0
    %p71 = por %p69, %p70
    %p72 = scmp.ne.s32.totalorder %s60, %s61
    %p73 = scmp.eq.s32.totalorder %s18, 1
    %p74 = por %p72, %p73
    %p76 = scmp.ne.s32.totalorder %s61, %s75
    %p77 = scmp.eq.s32.totalorder %s18, 0
    %p78 = por %p76, %p77
    %s80 = sadd.s32 %s79, 1
    %p83 = scmp.eq.s32.totalorder %s12, 1
    %p84 = scmp.ne.s32.totalorder %s79, %s81
    %p85 = scmp.eq.s32.totalorder %s12, 0
    %p86 = por %p84, %p85
    %p87 = scmp.ne.s32.totalorder %s79, %s81
    %p88 = scmp.eq.s32.totalorder %s17, 1
    %p89 = por %p87, %p88
    %p90 = scmp.ne.s32.totalorder %s81, %s82
    %p91 = scmp.eq.s32.totalorder %s17, 0
    %p92 = por %p90, %p91
    %p93 = scmp.ne.s32.totalorder %s81, %s82
    %p94 = scmp.eq.s32.totalorder %s18, 1
    %p95 = por %p93, %p94
    %p97 = scmp.ne.s32.totalorder %s82, %s96
    %p98 = scmp.eq.s32.totalorder %s18, 0
    %p99 = por %p97, %p98
    %s101 = sadd.s32 %s100, 1
    %p104 = scmp.eq.s32.totalorder %s12, 1
    %p105 = scmp.ne.s32.totalorder %s100, %s102
    %p106 = scmp.eq.s32.totalorder %s12, 0
    %p107 = por %p105, %p106
    %p108 = scmp.ne.s32.totalorder %s100, %s102
    %p109 = scmp.eq.s32.totalorder %s17, 1
    %p110 = por %p108, %p109
    %p111 = scmp.ne.s32.totalorder %s102, %s103
    %p112 = scmp.eq.s32.totalorder %s17, 0
    %p113 = por %p111, %p112
    %p114 = scmp.ne.s32.totalorder %s102, %s103
    %p115 = scmp.eq.s32.totalorder %s18, 1
    %p116 = por %p114, %p115
    %p118 = scmp.ne.s32.totalorder %s103, %s117
    %p119 = scmp.eq.s32.totalorder %s18, 0
    %p120 = por %p118, %p119
    %s121 = ssub.s32 %s19, %s31
    %s122 = ssub.s32 %s20, %s27
    %s123 = sor.u32 %s121, %s122
    %p124 = scmp.eq.s32.totalorder %s123, 0
    %s126 = sadd.s32 %s125, 1
    %s127 = scalar_select %p124, %s125, %s126
    %p130 = pneg %p124
    %p131 = scmp.eq.s32.totalorder %s12, 1
    %p132 = por %p130, %p131
    %p133 = scmp.ne.s32.totalorder %s125, %s128
    %p134 = scmp.eq.s32.totalorder %s12, 0
    %p135 = por %p133, %p134
    %p136 = scmp.ne.s32.totalorder %s125, %s128
    %p137 = scmp.eq.s32.totalorder %s17, 1
    %p138 = por %p136, %p137
    %p139 = scmp.ne.s32.totalorder %s128, %s129
    %p140 = scmp.eq.s32.totalorder %s17, 0
    %p141 = por %p139, %p140
    %p142 = scmp.ne.s32.totalorder %s128, %s129
    %p143 = scmp.eq.s32.totalorder %s18, 1
    %p144 = por %p142, %p143
    %p146 = scmp.ne.s32.totalorder %s129, %s145
    %p147 = scmp.eq.s32.totalorder %s18, 0
    %p148 = por %p146, %p147
    %s149 = ssub.s32 %s19, %s31
    %s150 = ssub.s32 %s20, %s27
    %s151 = sor.u32 %s149, %s150
    %p152 = scmp.eq.s32.totalorder %s151, 0
    %s154 = sadd.s32 %s153, 1
    %s155 = scalar_select %p152, %s153, %s154
    %p158 = pneg %p152
    %p159 = scmp.eq.s32.totalorder %s12, 1
    %p160 = por %p158, %p159
    %p161 = scmp.ne.s32.totalorder %s153, %s156
    %p162 = scmp.eq.s32.totalorder %s12, 0
    %p163 = por %p161, %p162
    %p164 = scmp.ne.s32.totalorder %s153, %s156
    %p165 = scmp.eq.s32.totalorder %s17, 1
    %p166 = por %p164, %p165
    %p167 = scmp.ne.s32.totalorder %s156, %s157
    %p168 = scmp.eq.s32.totalorder %s17, 0
    %p169 = por %p167, %p168
    %p170 = scmp.ne.s32.totalorder %s156, %s157
    %p171 = scmp.eq.s32.totalorder %s18, 1
    %p172 = por %p170, %p171
    %p174 = scmp.ne.s32.totalorder %s157, %s173
    %p175 = scmp.eq.s32.totalorder %s18, 0
    %p176 = por %p174, %p175
    %p177 = scmp.le.s32.totalorder 1, %s12
    %p178 = scmp.lt.s32.totalorder %s12, 3
    %p179 = pnand %p177, %p178
    %p180 = pneg %p179
    // Predicated region
    $region9: #{double_conv.4} parent=5 // pred_check
      _
    $region10: #{double_conv.4} parent=5 // pred_check_branch
      %182 = sbr.rel (%p179) target = $region12
    $region11: #{double_conv.4} parent=5 // pred_region
      %s183 = ssub.s32 %s12, 1
      // Predicated region
      $region13: #{double_conv.4} parent=11 // pred_check
        %p184 = pneg %p71
      $region14: #{double_conv.4} parent=11 // pred_check_branch
        %186 = sbr.rel (%p184) target = $region16
      $region15: #{double_conv.4} parent=11 // pred_region
        _
      $region16: #{double_conv.4} parent=11 // pred_fallthru
        _
      // Predicated region
      $region17: #{double_conv.4} parent=11 // pred_check
        %p187 = pneg %p92
      $region18: #{double_conv.4} parent=11 // pred_check_branch
        %189 = sbr.rel (%p187) target = $region20
      $region19: #{double_conv.4} parent=11 // pred_region
        _
      $region20: #{double_conv.4} parent=11 // pred_fallthru
        _
      // Predicated region
      $region21: #{double_conv.4} parent=11 // pred_check
        %p190 = pneg %p113
      $region22: #{double_conv.4} parent=11 // pred_check_branch
        %192 = sbr.rel (%p190) target = $region24
      $region23: #{double_conv.4} parent=11 // pred_region
        _
      $region24: #{double_conv.4} parent=11 // pred_fallthru
        _
    $region12: #{double_conv.4} parent=5 // pred_fallthru
      _
    %p193 = scmp.lt.s32.totalorder %s12, 2
    // Predicated region
    $region25: #{double_conv.4} parent=5 // pred_check
      %p194 = pneg %p193
    $region26: #{double_conv.4} parent=5 // pred_check_branch
      %196 = sbr.rel (%p194) target = $region28
    $region27: #{double_conv.4} parent=5 // pred_region
      // Predicated region
      $region29: #{double_conv.4} parent=27 // pred_check
        %p197 = pneg %p44
      $region30: #{double_conv.4} parent=27 // pred_check_branch
        %199 = sbr.rel (%p197) target = $region32
      $region31: #{double_conv.4} parent=27 // pred_region
        %p200 = scmp.lt.s32.totalorder %s19, 1
        %s201 = scalar_select %p200, %s19, 1
        %s202 = smul.addr %s201, 32
        %s203 = smul.addr %s202, 8
        %s204 = scalar_lea.vmem %s0, %s203
      $region32: #{double_conv.4} parent=27 // pred_fallthru
        _
    $region28: #{double_conv.4} parent=5 // pred_fallthru
      _
    %p205 = scmp.le.s32.totalorder 1, %s12
    %p206 = scmp.lt.s32.totalorder %s12, 3
    %p207 = pnand %p205, %p206
    %p208 = pneg %p207
    // Predicated region
    $region33: #{double_conv.4} parent=5 // pred_check
      _
    $region34: #{double_conv.4} parent=5 // pred_check_branch
      %210 = sbr.rel (%p207) target = $region36
    $region35: #{double_conv.4} parent=5 // pred_region
      %s211 = ssub.s32 %s12, 1
      %p212 = scmp.lt.s32.totalorder %s21, 1
      %s213 = scalar_select %p212, %s21, 1
      %s214 = smul.addr %s213, 32
      %s215 = smul.addr %s214, 8
      %s216 = scalar_lea.vmem %s0, %s215
      %p217 = pneg %p50
      %p218 = pneg %p47
      %p219 = pneg %p71
      %p220 = pneg %p68
      %p221 = pneg %p92
      %p222 = pneg %p89
      %p223 = pneg %p113
      %p224 = pneg %p110
      %p225 = pneg %p141
      %p226 = pneg %p138
      %s227 = smul.u32 32, %s22
      %p228 = scmp.lt.s32.totalorder %s21, 1
      %s229 = scalar_select %p228, %s21, 1
      %p230 = scmp.lt.s32.totalorder %s227, 31
      %s231 = scalar_select %p230, %s227, 31
      %s232 = smul.addr %s229, 32
      %s233 = sadd.s32 %s231, %s232
      %s234 = smul.addr %s233, 8
      %s235 = scalar_lea.vmem %s4, %s234
      %p236 = pneg %p169
      %p237 = pneg %p166
      %p238 = scmp.lt.s32.totalorder %s21, 1
      %s239 = scalar_select %p238, %s21, 1
      %p240 = scmp.lt.s32.totalorder %s22, 0
      %s241 = scalar_select %p240, %s22, 0
      %s242 = sadd.s32 %s241, %s239
      %s243 = smul.addr %s242, 2
      %s244 = scalar_lea.vmem %s5, %s243
      %p245 = scmp.lt.s32.totalorder %s21, 1
      %s246 = scalar_select %p245, %s21, 1
      %s247 = smul.addr %s246, 32
      %s248 = smul.addr %s247, 8
      %s249 = scalar_lea.vmem %s0, %s248
      %s250 = smul.u32 32, %s22
      %p251 = scmp.lt.s32.totalorder %s21, 1
      %s252 = scalar_select %p251, %s21, 1
      %p253 = scmp.lt.s32.totalorder %s250, 31
      %s254 = scalar_select %p253, %s250, 31
      %s255 = smul.addr %s252, 32
      %s256 = sadd.s32 %s254, %s255
      %s257 = smul.addr %s256, 8
      %s258 = scalar_lea.vmem %s4, %s257
      %s259 = smul.u32 32, %s22
      %p260 = scmp.lt.s32.totalorder %s21, 1
      %s261 = scalar_select %p260, %s21, 1
      %p262 = scmp.lt.s32.totalorder %s22, 0
      %s263 = scalar_select %p262, %s22, 0
      %s264 = sadd.s32 %s263, %s261
      %s265 = smul.addr %s264, 2
      %s266 = scalar_lea.vmem %s5, %s265
      %s268 = smul.u32 %s22, 16
      %v269 = vld [vmem:[%s2] sm:$0x1]
      %v270 = vld [vmem:[%s3] sm:$0x1]
      %vm271 = vcmask 60416
      %272 = vst.msk [vmem:[#allocation2] sm:$0xf] %vm271, 0
      %273 = vst.msk [vmem:[#allocation2 + $0x4] sm:$0xf] %vm271, 0
      %274 = vst.msk [vmem:[#allocation2 + $0x8] sm:$0xf] %vm271, 0
      %275 = vst.msk [vmem:[#allocation2 + $0xc] sm:$0xf] %vm271, 0
      %s276 = scalar_lea.vmem [#allocation2], 272
      %277 = vst.msk [vmem:[%s276] sm:$0xf] %vm271, 0
      %278 = vst.msk [vmem:[%s276 + $0x4] sm:$0xf] %vm271, 0
      %279 = vst.msk [vmem:[%s276 + $0x8] sm:$0xf] %vm271, 0
      %280 = vst.msk [vmem:[%s276 + $0xc] sm:$0xf] %vm271, 0
      %281 = vst.msk [vmem:[#allocation2] sm:$0xf] %vm271, 0
      %282 = vst.msk [vmem:[#allocation2 + $0x10] sm:$0xf] %vm271, 0
      %283 = vst.msk [vmem:[#allocation2 + $0x20] sm:$0xf] %vm271, 0
      %284 = vst.msk [vmem:[#allocation2 + $0x30] sm:$0xf] %vm271, 0
      %285 = vst.msk [vmem:[#allocation2 + $0x40] sm:$0xf] %vm271, 0
      %286 = vst.msk [vmem:[#allocation2 + $0x50] sm:$0xf] %vm271, 0
      %287 = vst.msk [vmem:[#allocation2 + $0x60] sm:$0xf] %vm271, 0
      %288 = vst.msk [vmem:[#allocation2 + $0x70] sm:$0xf] %vm271, 0
      %289 = vst.msk [vmem:[#allocation2 + $0x80] sm:$0xf] %vm271, 0
      %290 = vst.msk [vmem:[#allocation2 + $0x90] sm:$0xf] %vm271, 0
      %291 = vst.msk [vmem:[#allocation2 + $0xa0] sm:$0xf] %vm271, 0
      %292 = vst.msk [vmem:[#allocation2 + $0xb0] sm:$0xf] %vm271, 0
      %293 = vst.msk [vmem:[#allocation2 + $0xc0] sm:$0xf] %vm271, 0
      %294 = vst.msk [vmem:[#allocation2 + $0xd0] sm:$0xf] %vm271, 0
      %295 = vst.msk [vmem:[#allocation2 + $0xe0] sm:$0xf] %vm271, 0
      %296 = vst.msk [vmem:[#allocation2 + $0xf0] sm:$0xf] %vm271, 0
      %297 = vst.msk [vmem:[#allocation2 + $0x100] sm:$0xf] %vm271, 0
      %298 = vst.msk [vmem:[#allocation2 + $0x110] sm:$0xf] %vm271, 0
      %299 = vst.msk [vmem:[#allocation2 + $0xc] sm:$0xf] %vm271, 0
      %300 = vst.msk [vmem:[#allocation2 + $0x1c] sm:$0xf] %vm271, 0
      %301 = vst.msk [vmem:[#allocation2 + $0x2c] sm:$0xf] %vm271, 0
      %302 = vst.msk [vmem:[#allocation2 + $0x3c] sm:$0xf] %vm271, 0
      %303 = vst.msk [vmem:[#allocation2 + $0x4c] sm:$0xf] %vm271, 0
      %304 = vst.msk [vmem:[#allocation2 + $0x5c] sm:$0xf] %vm271, 0
      %305 = vst.msk [vmem:[#allocation2 + $0x6c] sm:$0xf] %vm271, 0
      %306 = vst.msk [vmem:[#allocation2 + $0x7c] sm:$0xf] %vm271, 0
      %307 = vst.msk [vmem:[#allocation2 + $0x8c] sm:$0xf] %vm271, 0
      %308 = vst.msk [vmem:[#allocation2 + $0x9c] sm:$0xf] %vm271, 0
      %309 = vst.msk [vmem:[#allocation2 + $0xac] sm:$0xf] %vm271, 0
      %310 = vst.msk [vmem:[#allocation2 + $0xbc] sm:$0xf] %vm271, 0
      %311 = vst.msk [vmem:[#allocation2 + $0xcc] sm:$0xf] %vm271, 0
      %312 = vst.msk [vmem:[#allocation2 + $0xdc] sm:$0xf] %vm271, 0
      %313 = vst.msk [vmem:[#allocation2 + $0xec] sm:$0xf] %vm271, 0
      %314 = vst.msk [vmem:[#allocation2 + $0xfc] sm:$0xf] %vm271, 0
      %315 = vst.msk [vmem:[#allocation2 + $0x10c] sm:$0xf] %vm271, 0
      %316 = vst.msk [vmem:[#allocation2 + $0x11c] sm:$0xf] %vm271, 0
      %s317 = smul.u32 %s268, 16
      %s318 = scalar_lea.vmem %s249, %s317
      %v319 = vld [vmem:[%s318] sm:$0xff]
      %v320 = vld [vmem:[%s318 + $0x8] sm:$0xff]
      %v321 = vld [vmem:[%s318 + $0x10] sm:$0xff]
      %v322 = vld [vmem:[%s318 + $0x18] sm:$0xff]
      %v323 = vld [vmem:[%s318 + $0x20] sm:$0xff]
      %v324 = vld [vmem:[%s318 + $0x28] sm:$0xff]
      %v325 = vld [vmem:[%s318 + $0x30] sm:$0xff]
      %v326 = vld [vmem:[%s318 + $0x38] sm:$0xff]
      %v327 = vld [vmem:[%s318 + $0x40] sm:$0xff]
      %v328 = vld [vmem:[%s318 + $0x48] sm:$0xff]
      %v329 = vld [vmem:[%s318 + $0x50] sm:$0xff]
      %v330 = vld [vmem:[%s318 + $0x58] sm:$0xff]
      %v331 = vld [vmem:[%s318 + $0x60] sm:$0xff]
      %v332 = vld [vmem:[%s318 + $0x68] sm:$0xff]
      %v333 = vld [vmem:[%s318 + $0x70] sm:$0xff]
      %v334 = vld [vmem:[%s318 + $0x78] sm:$0xff]
      %v335 = vld [vmem:[%s318 + $0x80] sm:$0xff]
      %v336 = vld [vmem:[%s318 + $0x88] sm:$0xff]
      %v337 = vld [vmem:[%s318 + $0x90] sm:$0xff]
      %v338 = vld [vmem:[%s318 + $0x98] sm:$0xff]
      %v339 = vld [vmem:[%s318 + $0xa0] sm:$0xff]
      %v340 = vld [vmem:[%s318 + $0xa8] sm:$0xff]
      %v341 = vld [vmem:[%s318 + $0xb0] sm:$0xff]
      %v342 = vld [vmem:[%s318 + $0xb8] sm:$0xff]
      %v343 = vld [vmem:[%s318 + $0xc0] sm:$0xff]
      %v344 = vld [vmem:[%s318 + $0xc8] sm:$0xff]
      %v345 = vld [vmem:[%s318 + $0xd0] sm:$0xff]
      %v346 = vld [vmem:[%s318 + $0xd8] sm:$0xff]
      %v347 = vld [vmem:[%s318 + $0xe0] sm:$0xff]
      %v348 = vld [vmem:[%s318 + $0xe8] sm:$0xff]
      %v349 = vld [vmem:[%s318 + $0xf0] sm:$0xff]
      %v350 = vld [vmem:[%s318 + $0xf8] sm:$0xff]
      %v352 = vperm.slane %v269, 0
      %v354 = vmul.f32 %v319, %v352
      %v355 = vmul.f32 %v320, %v352
      %v356 = vmul.f32 %v321, %v352
      %v357 = vmul.f32 %v322, %v352
      %v358 = vmul.f32 %v323, %v352
      %v359 = vmul.f32 %v324, %v352
      %v360 = vmul.f32 %v325, %v352
      %v361 = vmul.f32 %v326, %v352
      %v362 = vmul.f32 %v327, %v352
      %v363 = vmul.f32 %v328, %v352
      %v364 = vmul.f32 %v329, %v352
      %v365 = vmul.f32 %v330, %v352
      %v366 = vmul.f32 %v331, %v352
      %v367 = vmul.f32 %v332, %v352
      %v368 = vmul.f32 %v333, %v352
      %v369 = vmul.f32 %v334, %v352
      %v370 = vmul.f32 %v335, %v352
      %v371 = vmul.f32 %v336, %v352
      %v372 = vmul.f32 %v337, %v352
      %v373 = vmul.f32 %v338, %v352
      %v374 = vmul.f32 %v339, %v352
      %v375 = vmul.f32 %v340, %v352
      %v376 = vmul.f32 %v341, %v352
      %v377 = vmul.f32 %v342, %v352
      %v378 = vmul.f32 %v343, %v352
      %v379 = vmul.f32 %v344, %v352
      %v380 = vmul.f32 %v345, %v352
      %v381 = vmul.f32 %v346, %v352
      %v382 = vmul.f32 %v347, %v352
      %v383 = vmul.f32 %v348, %v352
      %v384 = vmul.f32 %v349, %v352
      %v385 = vmul.f32 %v350, %v352
      %v387 = vperm.slane %v270, 0
      %v389 = vadd.f32 %v354, %v387
      %v390 = vadd.f32 %v355, %v387
      %v391 = vadd.f32 %v356, %v387
      %v392 = vadd.f32 %v357, %v387
      %v393 = vadd.f32 %v358, %v387
      %v394 = vadd.f32 %v359, %v387
      %v395 = vadd.f32 %v360, %v387
      %v396 = vadd.f32 %v361, %v387
      %v397 = vadd.f32 %v362, %v387
      %v398 = vadd.f32 %v363, %v387
      %v399 = vadd.f32 %v364, %v387
      %v400 = vadd.f32 %v365, %v387
      %v401 = vadd.f32 %v366, %v387
      %v402 = vadd.f32 %v367, %v387
      %v403 = vadd.f32 %v368, %v387
      %v404 = vadd.f32 %v369, %v387
      %v405 = vadd.f32 %v370, %v387
      %v406 = vadd.f32 %v371, %v387
      %v407 = vadd.f32 %v372, %v387
      %v408 = vadd.f32 %v373, %v387
      %v409 = vadd.f32 %v374, %v387
      %v410 = vadd.f32 %v375, %v387
      %v411 = vadd.f32 %v376, %v387
      %v412 = vadd.f32 %v377, %v387
      %v413 = vadd.f32 %v378, %v387
      %v414 = vadd.f32 %v379, %v387
      %v415 = vadd.f32 %v380, %v387
      %v416 = vadd.f32 %v381, %v387
      %v417 = vadd.f32 %v382, %v387
      %v418 = vadd.f32 %v383, %v387
      %v419 = vadd.f32 %v384, %v387
      %v420 = vadd.f32 %v385, %v387
      %v421 = vmax.f32 %v389, 0.0
      %v422 = vmax.f32 %v390, 0.0
      %v423 = vmax.f32 %v391, 0.0
      %v424 = vmax.f32 %v392, 0.0
      %v425 = vmax.f32 %v393, 0.0
      %v426 = vmax.f32 %v394, 0.0
      %v427 = vmax.f32 %v395, 0.0
      %v428 = vmax.f32 %v396, 0.0
      %v429 = vmax.f32 %v397, 0.0
      %v430 = vmax.f32 %v398, 0.0
      %v431 = vmax.f32 %v399, 0.0
      %v432 = vmax.f32 %v400, 0.0
      %v433 = vmax.f32 %v401, 0.0
      %v434 = vmax.f32 %v402, 0.0
      %v435 = vmax.f32 %v403, 0.0
      %v436 = vmax.f32 %v404, 0.0
      %v437 = vmax.f32 %v405, 0.0
      %v438 = vmax.f32 %v406, 0.0
      %v439 = vmax.f32 %v407, 0.0
      %v440 = vmax.f32 %v408, 0.0
      %v441 = vmax.f32 %v409, 0.0
      %v442 = vmax.f32 %v410, 0.0
      %v443 = vmax.f32 %v411, 0.0
      %v444 = vmax.f32 %v412, 0.0
      %v445 = vmax.f32 %v413, 0.0
      %v446 = vmax.f32 %v414, 0.0
      %v447 = vmax.f32 %v415, 0.0
      %v448 = vmax.f32 %v416, 0.0
      %v449 = vmax.f32 %v417, 0.0
      %v450 = vmax.f32 %v418, 0.0
      %v451 = vmax.f32 %v419, 0.0
      %v452 = vmax.f32 %v420, 0.0
      %v453 = vpack.c.bf16 %v421, %v421
      %v454 = vpack.c.bf16 %v422, %v422
      %v455 = vpack.c.bf16 %v423, %v423
      %v456 = vpack.c.bf16 %v424, %v424
      %v457 = vpack.c.bf16 %v425, %v425
      %v458 = vpack.c.bf16 %v426, %v426
      %v459 = vpack.c.bf16 %v427, %v427
      %v460 = vpack.c.bf16 %v428, %v428
      %v461 = vpack.c.bf16 %v429, %v429
      %v462 = vpack.c.bf16 %v430, %v430
      %v463 = vpack.c.bf16 %v431, %v431
      %v464 = vpack.c.bf16 %v432, %v432
      %v465 = vpack.c.bf16 %v433, %v433
      %v466 = vpack.c.bf16 %v434, %v434
      %v467 = vpack.c.bf16 %v435, %v435
      %v468 = vpack.c.bf16 %v436, %v436
      %v469 = vpack.c.bf16 %v437, %v437
      %v470 = vpack.c.bf16 %v438, %v438
      %v471 = vpack.c.bf16 %v439, %v439
      %v472 = vpack.c.bf16 %v440, %v440
      %v473 = vpack.c.bf16 %v441, %v441
      %v474 = vpack.c.bf16 %v442, %v442
      %v475 = vpack.c.bf16 %v443, %v443
      %v476 = vpack.c.bf16 %v444, %v444
      %v477 = vpack.c.bf16 %v445, %v445
      %v478 = vpack.c.bf16 %v446, %v446
      %v479 = vpack.c.bf16 %v447, %v447
      %v480 = vpack.c.bf16 %v448, %v448
      %v481 = vpack.c.bf16 %v449, %v449
      %v482 = vpack.c.bf16 %v450, %v450
      %v483 = vpack.c.bf16 %v451, %v451
      %v484 = vpack.c.bf16 %v452, %v452
      %s485 = scalar_lea.vmem [#allocation2], 16
      %486 = vst.msk [vmem:[%s485 + $0x4] sm:$0xf] %vm271, %v453
      %487 = vst.msk [vmem:[%s485 + $0x8] sm:$0xf] %vm271, %v454
      %488 = vst.msk [vmem:[%s485 + $0x14] sm:$0xf] %vm271, %v455
      %489 = vst.msk [vmem:[%s485 + $0x18] sm:$0xf] %vm271, %v456
      %490 = vst.msk [vmem:[%s485 + $0x24] sm:$0xf] %vm271, %v457
      %491 = vst.msk [vmem:[%s485 + $0x28] sm:$0xf] %vm271, %v458
      %492 = vst.msk [vmem:[%s485 + $0x34] sm:$0xf] %vm271, %v459
      %493 = vst.msk [vmem:[%s485 + $0x38] sm:$0xf] %vm271, %v460
      %494 = vst.msk [vmem:[%s485 + $0x44] sm:$0xf] %vm271, %v461
      %495 = vst.msk [vmem:[%s485 + $0x48] sm:$0xf] %vm271, %v462
      %496 = vst.msk [vmem:[%s485 + $0x54] sm:$0xf] %vm271, %v463
      %497 = vst.msk [vmem:[%s485 + $0x58] sm:$0xf] %vm271, %v464
      %498 = vst.msk [vmem:[%s485 + $0x64] sm:$0xf] %vm271, %v465
      %499 = vst.msk [vmem:[%s485 + $0x68] sm:$0xf] %vm271, %v466
      %500 = vst.msk [vmem:[%s485 + $0x74] sm:$0xf] %vm271, %v467
      %501 = vst.msk [vmem:[%s485 + $0x78] sm:$0xf] %vm271, %v468
      %502 = vst.msk [vmem:[%s485 + $0x84] sm:$0xf] %vm271, %v469
      %503 = vst.msk [vmem:[%s485 + $0x88] sm:$0xf] %vm271, %v470
      %504 = vst.msk [vmem:[%s485 + $0x94] sm:$0xf] %vm271, %v471
      %505 = vst.msk [vmem:[%s485 + $0x98] sm:$0xf] %vm271, %v472
      %506 = vst.msk [vmem:[%s485 + $0xa4] sm:$0xf] %vm271, %v473
      %507 = vst.msk [vmem:[%s485 + $0xa8] sm:$0xf] %vm271, %v474
      %508 = vst.msk [vmem:[%s485 + $0xb4] sm:$0xf] %vm271, %v475
      %509 = vst.msk [vmem:[%s485 + $0xb8] sm:$0xf] %vm271, %v476
      %510 = vst.msk [vmem:[%s485 + $0xc4] sm:$0xf] %vm271, %v477
      %511 = vst.msk [vmem:[%s485 + $0xc8] sm:$0xf] %vm271, %v478
      %512 = vst.msk [vmem:[%s485 + $0xd4] sm:$0xf] %vm271, %v479
      %513 = vst.msk [vmem:[%s485 + $0xd8] sm:$0xf] %vm271, %v480
      %514 = vst.msk [vmem:[%s485 + $0xe4] sm:$0xf] %vm271, %v481
      %515 = vst.msk [vmem:[%s485 + $0xe8] sm:$0xf] %vm271, %v482
      %516 = vst.msk [vmem:[%s485 + $0xf4] sm:$0xf] %vm271, %v483
      %517 = vst.msk [vmem:[%s485 + $0xf8] sm:$0xf] %vm271, %v484
      %p518 = scmp.gt.s32.totalorder %s22, 0
      // Predicated region
      $region37: #{double_conv.4} parent=35 // pred_check
        %p519 = pneg %p518
      $region38: #{double_conv.4} parent=35 // pred_check_branch
        %521 = sbr.rel (%p519) target = $region40
      $region39: #{double_conv.4} parent=35 // pred_region
        %s522 = ssub.s32 %s268, 1
        %s523 = smul.u32 %s522, 16
        %s524 = scalar_lea.vmem %s249, %s523
        %v525 = vld [vmem:[%s524] sm:$0xff]
        %v526 = vld [vmem:[%s524 + $0x8] sm:$0xff]
        %v527 = vmul.f32 %v525, %v352
        %v528 = vmul.f32 %v526, %v352
        %v529 = vadd.f32 %v527, %v387
        %v530 = vadd.f32 %v528, %v387
        %v531 = vmax.f32 %v529, 0.0
        %v532 = vmax.f32 %v530, 0.0
        %v533 = vpack.c.bf16 %v531, %v531
        %v534 = vpack.c.bf16 %v532, %v532
        %535 = vst.msk [vmem:[#allocation2 + $0x4] sm:$0xf] %vm271, %v533
        %536 = vst.msk [vmem:[#allocation2 + $0x8] sm:$0xf] %vm271, %v534
      $region40: #{double_conv.4} parent=35 // pred_fallthru
        _
      %p537 = scmp.lt.s32.totalorder %s22, 0
      // Predicated region
      $region41: #{double_conv.4} parent=35 // pred_check
        %p538 = pneg %p537
      $region42: #{double_conv.4} parent=35 // pred_check_branch
        %540 = sbr.rel (%p538) target = $region44
      $region43: #{double_conv.4} parent=35 // pred_region
        %s541 = sadd.s32 %s268, 16
        %s542 = smul.u32 %s541, 16
        %s543 = scalar_lea.vmem %s249, %s542
        %v544 = vld [vmem:[%s543] sm:$0xff]
        %v545 = vld [vmem:[%s543 + $0x8] sm:$0xff]
        %v546 = vmul.f32 %v544, %v352
        %v547 = vmul.f32 %v545, %v352
        %v548 = vadd.f32 %v546, %v387
        %v549 = vadd.f32 %v547, %v387
        %v550 = vmax.f32 %v548, 0.0
        %v551 = vmax.f32 %v549, 0.0
        %v552 = vpack.c.bf16 %v550, %v550
        %v553 = vpack.c.bf16 %v551, %v551
        %554 = vst.msk [vmem:[%s276 + $0x4] sm:$0xf] %vm271, %v552
        %555 = vst.msk [vmem:[%s276 + $0x8] sm:$0xf] %vm271, %v553
      $region44: #{double_conv.4} parent=35 // pred_fallthru
        _
      %vm556 = vcmask 1044032
      %557 = vst.msk [vmem:[#allocation3] sm:$0xf] %vm556, 0
      %558 = vst.msk [vmem:[#allocation3 + $0x4] sm:$0xf] %vm556, 0
      %559 = vst.msk [vmem:[#allocation3 + $0x8] sm:$0xf] %vm556, 0
      %560 = vst.msk [vmem:[#allocation3 + $0xc] sm:$0xf] %vm556, 0
      %561 = vst.msk [vmem:[#allocation3 + $0x10] sm:$0xf] %vm556, 0
      %562 = vst.msk [vmem:[#allocation3 + $0x14] sm:$0xf] %vm556, 0
      %563 = vst.msk [vmem:[#allocation3 + $0x18] sm:$0xf] %vm556, 0
      %564 = vst.msk [vmem:[#allocation3 + $0x1c] sm:$0xf] %vm556, 0
      %565 = vst.msk [vmem:[#allocation3 + $0x20] sm:$0xf] %vm556, 0
      %566 = vst.msk [vmem:[#allocation3 + $0x24] sm:$0xf] %vm556, 0
      %567 = vst.msk [vmem:[#allocation3 + $0x28] sm:$0xf] %vm556, 0
      %568 = vst.msk [vmem:[#allocation3 + $0x2c] sm:$0xf] %vm556, 0
      %569 = vst.msk [vmem:[#allocation3 + $0x30] sm:$0xf] %vm556, 0
      %570 = vst.msk [vmem:[#allocation3 + $0x34] sm:$0xf] %vm556, 0
      %571 = vst.msk [vmem:[#allocation3 + $0x38] sm:$0xf] %vm556, 0
      %572 = vst.msk [vmem:[#allocation3 + $0x3c] sm:$0xf] %vm556, 0
      %573 = vst.msk [vmem:[#allocation3 + $0x40] sm:$0xf] %vm556, 0
      %574 = vst.msk [vmem:[#allocation3 + $0x44] sm:$0xf] %vm556, 0
      %575 = vst.msk [vmem:[#allocation3 + $0x48] sm:$0xf] %vm556, 0
      %576 = vst.msk [vmem:[#allocation3 + $0x4c] sm:$0xf] %vm556, 0
      %577 = vst.msk [vmem:[#allocation3 + $0x50] sm:$0xf] %vm556, 0
      %578 = vst.msk [vmem:[#allocation3 + $0x54] sm:$0xf] %vm556, 0
      %579 = vst.msk [vmem:[#allocation3 + $0x58] sm:$0xf] %vm556, 0
      %580 = vst.msk [vmem:[#allocation3 + $0x5c] sm:$0xf] %vm556, 0
      %581 = vst.msk [vmem:[#allocation3 + $0x60] sm:$0xf] %vm556, 0
      %582 = vst.msk [vmem:[#allocation3 + $0x64] sm:$0xf] %vm556, 0
      %583 = vst.msk [vmem:[#allocation3 + $0x68] sm:$0xf] %vm556, 0
      %584 = vst.msk [vmem:[#allocation3 + $0x6c] sm:$0xf] %vm556, 0
      %585 = vst.msk [vmem:[#allocation3 + $0x70] sm:$0xf] %vm556, 0
      %586 = vst.msk [vmem:[#allocation3 + $0x74] sm:$0xf] %vm556, 0
      %587 = vst.msk [vmem:[#allocation3 + $0x78] sm:$0xf] %vm556, 0
      %588 = vst.msk [vmem:[#allocation3 + $0x7c] sm:$0xf] %vm556, 0
      %v589 = vld [vmem:[#allocation2] sm:$0x8]
      %v590 = vld [vmem:[#allocation2 + $0x4] sm:$0xf]
      %v591 = vld [vmem:[#allocation2 + $0x8] sm:$0xf]
      %v592 = vld [vmem:[#allocation2 + $0x10] sm:$0x8]
      %v593 = vld [vmem:[#allocation2 + $0x14] sm:$0xf]
      %v594 = vld [vmem:[#allocation2 + $0x18] sm:$0xf]
      %v595 = vld [vmem:[#allocation2 + $0x20] sm:$0x8]
      %v596 = vld [vmem:[#allocation2 + $0x24] sm:$0xf]
      %v597 = vld [vmem:[#allocation2 + $0x28] sm:$0xf]
      %v598 = vld [vmem:[#allocation2 + $0x30] sm:$0x8]
      %v599 = vld [vmem:[#allocation2 + $0x34] sm:$0xf]
      %v600 = vld [vmem:[#allocation2 + $0x38] sm:$0xf]
      %v601 = vld [vmem:[#allocation2 + $0x40] sm:$0x8]
      %v602 = vld [vmem:[#allocation2 + $0x44] sm:$0xf]
      %v603 = vld [vmem:[#allocation2 + $0x48] sm:$0xf]
      %v604 = vld [vmem:[#allocation2 + $0x50] sm:$0x8]
      %v605 = vld [vmem:[#allocation2 + $0x54] sm:$0xf]
      %v606 = vld [vmem:[#allocation2 + $0x58] sm:$0xf]
      %v607 = vld [vmem:[#allocation2 + $0x60] sm:$0x8]
      %v608 = vld [vmem:[#allocation2 + $0x64] sm:$0xf]
      %v609 = vld [vmem:[#allocation2 + $0x68] sm:$0xf]
      %v610 = vld [vmem:[#allocation2 + $0x70] sm:$0x8]
      %v611 = vld [vmem:[#allocation2 + $0x74] sm:$0xf]
      %v612 = vld [vmem:[#allocation2 + $0x78] sm:$0xf]
      %v613 = vld [vmem:[#allocation2 + $0x80] sm:$0x8]
      %v614 = vld [vmem:[#allocation2 + $0x84] sm:$0xf]
      %v615 = vld [vmem:[#allocation2 + $0x88] sm:$0xf]
      %v616 = vld [vmem:[#allocation2 + $0x90] sm:$0x8]
      %v617 = vld [vmem:[#allocation2 + $0x94] sm:$0xf]
      %v618 = vld [vmem:[#allocation2 + $0x98] sm:$0xf]
      %v619 = vld [vmem:[#allocation2 + $0xa0] sm:$0x8]
      %v620 = vld [vmem:[#allocation2 + $0xa4] sm:$0xf]
      %v621 = vld [vmem:[#allocation2 + $0xa8] sm:$0xf]
      %v622 = vld [vmem:[#allocation2 + $0xb0] sm:$0x8]
      %v623 = vld [vmem:[#allocation2 + $0xb4] sm:$0xf]
      %v624 = vld [vmem:[#allocation2 + $0xb8] sm:$0xf]
      %v625 = vld [vmem:[#allocation2 + $0xc0] sm:$0x8]
      %v626 = vld [vmem:[#allocation2 + $0xc4] sm:$0xf]
      %v627 = vld [vmem:[#allocation2 + $0xc8] sm:$0xf]
      %v628 = vld [vmem:[#allocation2 + $0xd0] sm:$0x8]
      %v629 = vld [vmem:[#allocation2 + $0xd4] sm:$0xf]
      %v630 = vld [vmem:[#allocation2 + $0xd8] sm:$0xf]
      %v631 = vld [vmem:[#allocation2 + $0xe0] sm:$0x8]
      %v632 = vld [vmem:[#allocation2 + $0xe4] sm:$0xf]
      %v633 = vld [vmem:[#allocation2 + $0xe8] sm:$0xf]
      %v634 = vld [vmem:[#allocation2 + $0xf0] sm:$0x8]
      %v635 = vld [vmem:[#allocation2 + $0xf4] sm:$0xf]
      %v636 = vld [vmem:[#allocation2 + $0xf8] sm:$0xf]
      %vm637 = vsmask.f32 256
      %vm638 = vsmask.f32 4368
      %vm639 = vmor %vm637, %vm638
      %v641 = vshrl.u32 %v589, 16
      %v643 = vrot.slane %v641, 7
      %v644 = vrot.slane %v643, 4
      %v646 = vshrl.u32 %v590, 16
      %v648 = vrot.slane %v646, 7
      %v649 = vshll.u32 %v590, 16
      %v651 = vor.u32 %v648, %v649
      %v652 = vsel %vm639, %v644, %v651
      %v653 = vrot.slane %v648, 4
      %v655 = vshrl.u32 %v591, 16
      %v657 = vrot.slane %v655, 7
      %v658 = vshll.u32 %v591, 16
      %v660 = vor.u32 %v657, %v658
      %v661 = vsel %vm639, %v653, %v660
      %v663 = vshrl.u32 %v592, 16
      %v665 = vrot.slane %v663, 7
      %v666 = vrot.slane %v665, 4
      %v668 = vshrl.u32 %v593, 16
      %v670 = vrot.slane %v668, 7
      %v671 = vshll.u32 %v593, 16
      %v673 = vor.u32 %v670, %v671
      %v674 = vsel %vm639, %v666, %v673
      %v675 = vrot.slane %v670, 4
      %v677 = vshrl.u32 %v594, 16
      %v679 = vrot.slane %v677, 7
      %v680 = vshll.u32 %v594, 16
      %v682 = vor.u32 %v679, %v680
      %v683 = vsel %vm639, %v675, %v682
      %v685 = vshrl.u32 %v595, 16
      %v687 = vrot.slane %v685, 7
      %v688 = vrot.slane %v687, 4
      %v690 = vshrl.u32 %v596, 16
      %v692 = vrot.slane %v690, 7
      %v693 = vshll.u32 %v596, 16
      %v695 = vor.u32 %v692, %v693
      %v696 = vsel %vm639, %v688, %v695
      %v697 = vrot.slane %v692, 4
      %v699 = vshrl.u32 %v597, 16
      %v701 = vrot.slane %v699, 7
      %v702 = vshll.u32 %v597, 16
      %v704 = vor.u32 %v701, %v702
      %v705 = vsel %vm639, %v697, %v704
      %v707 = vshrl.u32 %v598, 16
      %v709 = vrot.slane %v707, 7
      %v710 = vrot.slane %v709, 4
      %v712 = vshrl.u32 %v599, 16
      %v714 = vrot.slane %v712, 7
      %v715 = vshll.u32 %v599, 16
      %v717 = vor.u32 %v714, %v715
      %v718 = vsel %vm639, %v710, %v717
      %v719 = vrot.slane %v714, 4
      %v721 = vshrl.u32 %v600, 16
      %v723 = vrot.slane %v721, 7
      %v724 = vshll.u32 %v600, 16
      %v726 = vor.u32 %v723, %v724
      %v727 = vsel %vm639, %v719, %v726
      %v729 = vshrl.u32 %v601, 16
      %v731 = vrot.slane %v729, 7
      %v732 = vrot.slane %v731, 4
      %v734 = vshrl.u32 %v602, 16
      %v736 = vrot.slane %v734, 7
      %v737 = vshll.u32 %v602, 16
      %v739 = vor.u32 %v736, %v737
      %v740 = vsel %vm639, %v732, %v739
      %v741 = vrot.slane %v736, 4
      %v743 = vshrl.u32 %v603, 16
      %v745 = vrot.slane %v743, 7
      %v746 = vshll.u32 %v603, 16
      %v748 = vor.u32 %v745, %v746
      %v749 = vsel %vm639, %v741, %v748
      %v751 = vshrl.u32 %v604, 16
      %v753 = vrot.slane %v751, 7
      %v754 = vrot.slane %v753, 4
      %v756 = vshrl.u32 %v605, 16
      %v758 = vrot.slane %v756, 7
      %v759 = vshll.u32 %v605, 16
      %v761 = vor.u32 %v758, %v759
      %v762 = vsel %vm639, %v754, %v761
      %v763 = vrot.slane %v758, 4
      %v765 = vshrl.u32 %v606, 16
      %v767 = vrot.slane %v765, 7
      %v768 = vshll.u32 %v606, 16
      %v770 = vor.u32 %v767, %v768
      %v771 = vsel %vm639, %v763, %v770
      %v773 = vshrl.u32 %v607, 16
      %v775 = vrot.slane %v773, 7
      %v776 = vrot.slane %v775, 4
      %v778 = vshrl.u32 %v608, 16
      %v780 = vrot.slane %v778, 7
      %v781 = vshll.u32 %v608, 16
      %v783 = vor.u32 %v780, %v781
      %v784 = vsel %vm639, %v776, %v783
      %v785 = vrot.slane %v780, 4
      %v787 = vshrl.u32 %v609, 16
      %v789 = vrot.slane %v787, 7
      %v790 = vshll.u32 %v609, 16
      %v792 = vor.u32 %v789, %v790
      %v793 = vsel %vm639, %v785, %v792
      %v795 = vshrl.u32 %v610, 16
      %v797 = vrot.slane %v795, 7
      %v798 = vrot.slane %v797, 4
      %v800 = vshrl.u32 %v611, 16
      %v802 = vrot.slane %v800, 7
      %v803 = vshll.u32 %v611, 16
      %v805 = vor.u32 %v802, %v803
      %v806 = vsel %vm639, %v798, %v805
      %v807 = vrot.slane %v802, 4
      %v809 = vshrl.u32 %v612, 16
      %v811 = vrot.slane %v809, 7
      %v812 = vshll.u32 %v612, 16
      %v814 = vor.u32 %v811, %v812
      %v815 = vsel %vm639, %v807, %v814
      %v817 = vshrl.u32 %v613, 16
      %v819 = vrot.slane %v817, 7
      %v820 = vrot.slane %v819, 4
      %v822 = vshrl.u32 %v614, 16
      %v824 = vrot.slane %v822, 7
      %v825 = vshll.u32 %v614, 16
      %v827 = vor.u32 %v824, %v825
      %v828 = vsel %vm639, %v820, %v827
      %v829 = vrot.slane %v824, 4
      %v831 = vshrl.u32 %v615, 16
      %v833 = vrot.slane %v831, 7
      %v834 = vshll.u32 %v615, 16
      %v836 = vor.u32 %v833, %v834
      %v837 = vsel %vm639, %v829, %v836
      %v839 = vshrl.u32 %v616, 16
      %v841 = vrot.slane %v839, 7
      %v842 = vrot.slane %v841, 4
      %v844 = vshrl.u32 %v617, 16
      %v846 = vrot.slane %v844, 7
      %v847 = vshll.u32 %v617, 16
      %v849 = vor.u32 %v846, %v847
      %v850 = vsel %vm639, %v842, %v849
      %v851 = vrot.slane %v846, 4
      %v853 = vshrl.u32 %v618, 16
      %v855 = vrot.slane %v853, 7
      %v856 = vshll.u32 %v618, 16
      %v858 = vor.u32 %v855, %v856
      %v859 = vsel %vm639, %v851, %v858
      %v861 = vshrl.u32 %v619, 16
      %v863 = vrot.slane %v861, 7
      %v864 = vrot.slane %v863, 4
      %v866 = vshrl.u32 %v620, 16
      %v868 = vrot.slane %v866, 7
      %v869 = vshll.u32 %v620, 16
      %v871 = vor.u32 %v868, %v869
      %v872 = vsel %vm639, %v864, %v871
      %v873 = vrot.slane %v868, 4
      %v875 = vshrl.u32 %v621, 16
      %v877 = vrot.slane %v875, 7
      %v878 = vshll.u32 %v621, 16
      %v880 = vor.u32 %v877, %v878
      %v881 = vsel %vm639, %v873, %v880
      %v883 = vshrl.u32 %v622, 16
      %v885 = vrot.slane %v883, 7
      %v886 = vrot.slane %v885, 4
      %v888 = vshrl.u32 %v623, 16
      %v890 = vrot.slane %v888, 7
      %v891 = vshll.u32 %v623, 16
      %v893 = vor.u32 %v890, %v891
      %v894 = vsel %vm639, %v886, %v893
      %v895 = vrot.slane %v890, 4
      %v897 = vshrl.u32 %v624, 16
      %v899 = vrot.slane %v897, 7
      %v900 = vshll.u32 %v624, 16
      %v902 = vor.u32 %v899, %v900
      %v903 = vsel %vm639, %v895, %v902
      %v905 = vshrl.u32 %v625, 16
      %v907 = vrot.slane %v905, 7
      %v908 = vrot.slane %v907, 4
      %v910 = vshrl.u32 %v626, 16
      %v912 = vrot.slane %v910, 7
      %v913 = vshll.u32 %v626, 16
      %v915 = vor.u32 %v912, %v913
      %v916 = vsel %vm639, %v908, %v915
      %v917 = vrot.slane %v912, 4
      %v919 = vshrl.u32 %v627, 16
      %v921 = vrot.slane %v919, 7
      %v922 = vshll.u32 %v627, 16
      %v924 = vor.u32 %v921, %v922
      %v925 = vsel %vm639, %v917, %v924
      %v927 = vshrl.u32 %v628, 16
      %v929 = vrot.slane %v927, 7
      %v930 = vrot.slane %v929, 4
      %v932 = vshrl.u32 %v629, 16
      %v934 = vrot.slane %v932, 7
      %v935 = vshll.u32 %v629, 16
      %v937 = vor.u32 %v934, %v935
      %v938 = vsel %vm639, %v930, %v937
      %v939 = vrot.slane %v934, 4
      %v941 = vshrl.u32 %v630, 16
      %v943 = vrot.slane %v941, 7
      %v944 = vshll.u32 %v630, 16
      %v946 = vor.u32 %v943, %v944
      %v947 = vsel %vm639, %v939, %v946
      %v949 = vshrl.u32 %v631, 16
      %v951 = vrot.slane %v949, 7
      %v952 = vrot.slane %v951, 4
      %v954 = vshrl.u32 %v632, 16
      %v956 = vrot.slane %v954, 7
      %v957 = vshll.u32 %v632, 16
      %v959 = vor.u32 %v956, %v957
      %v960 = vsel %vm639, %v952, %v959
      %v961 = vrot.slane %v956, 4
      %v963 = vshrl.u32 %v633, 16
      %v965 = vrot.slane %v963, 7
      %v966 = vshll.u32 %v633, 16
      %v968 = vor.u32 %v965, %v966
      %v969 = vsel %vm639, %v961, %v968
      %v971 = vshrl.u32 %v634, 16
      %v973 = vrot.slane %v971, 7
      %v974 = vrot.slane %v973, 4
      %v976 = vshrl.u32 %v635, 16
      %v978 = vrot.slane %v976, 7
      %v979 = vshll.u32 %v635, 16
      %v981 = vor.u32 %v978, %v979
      %v982 = vsel %vm639, %v974, %v981
      %v983 = vrot.slane %v978, 4
      %v985 = vshrl.u32 %v636, 16
      %v987 = vrot.slane %v985, 7
      %v988 = vshll.u32 %v636, 16
      %v990 = vor.u32 %v987, %v988
      %v991 = vsel %vm639, %v983, %v990
      %1024 = vst.msk [vmem:[#allocation3] sm:$0xf] %vm271, %v652
      %1025 = vst.msk [vmem:[#allocation3 + $0x4] sm:$0xf] %vm271, %v661
      %1026 = vst.msk [vmem:[#allocation3 + $0x8] sm:$0xf] %vm271, %v674
      %1027 = vst.msk [vmem:[#allocation3 + $0xc] sm:$0xf] %vm271, %v683
      %1028 = vst.msk [vmem:[#allocation3 + $0x10] sm:$0xf] %vm271, %v696
      %1029 = vst.msk [vmem:[#allocation3 + $0x14] sm:$0xf] %vm271, %v705
      %1030 = vst.msk [vmem:[#allocation3 + $0x18] sm:$0xf] %vm271, %v718
      %1031 = vst.msk [vmem:[#allocation3 + $0x1c] sm:$0xf] %vm271, %v727
      %1032 = vst.msk [vmem:[#allocation3 + $0x20] sm:$0xf] %vm271, %v740
      %1033 = vst.msk [vmem:[#allocation3 + $0x24] sm:$0xf] %vm271, %v749
      %1034 = vst.msk [vmem:[#allocation3 + $0x28] sm:$0xf] %vm271, %v762
      %1035 = vst.msk [vmem:[#allocation3 + $0x2c] sm:$0xf] %vm271, %v771
      %1036 = vst.msk [vmem:[#allocation3 + $0x30] sm:$0xf] %vm271, %v784
      %1037 = vst.msk [vmem:[#allocation3 + $0x34] sm:$0xf] %vm271, %v793
      %1038 = vst.msk [vmem:[#allocation3 + $0x38] sm:$0xf] %vm271, %v806
      %1039 = vst.msk [vmem:[#allocation3 + $0x3c] sm:$0xf] %vm271, %v815
      %1040 = vst.msk [vmem:[#allocation3 + $0x40] sm:$0xf] %vm271, %v828
      %1041 = vst.msk [vmem:[#allocation3 + $0x44] sm:$0xf] %vm271, %v837
      %1042 = vst.msk [vmem:[#allocation3 + $0x48] sm:$0xf] %vm271, %v850
      %1043 = vst.msk [vmem:[#allocation3 + $0x4c] sm:$0xf] %vm271, %v859
      %1044 = vst.msk [vmem:[#allocation3 + $0x50] sm:$0xf] %vm271, %v872
      %1045 = vst.msk [vmem:[#allocation3 + $0x54] sm:$0xf] %vm271, %v881
      %1046 = vst.msk [vmem:[#allocation3 + $0x58] sm:$0xf] %vm271, %v894
      %1047 = vst.msk [vmem:[#allocation3 + $0x5c] sm:$0xf] %vm271, %v903
      %1048 = vst.msk [vmem:[#allocation3 + $0x60] sm:$0xf] %vm271, %v916
      %1049 = vst.msk [vmem:[#allocation3 + $0x64] sm:$0xf] %vm271, %v925
      %1050 = vst.msk [vmem:[#allocation3 + $0x68] sm:$0xf] %vm271, %v938
      %1051 = vst.msk [vmem:[#allocation3 + $0x6c] sm:$0xf] %vm271, %v947
      %1052 = vst.msk [vmem:[#allocation3 + $0x70] sm:$0xf] %vm271, %v960
      %1053 = vst.msk [vmem:[#allocation3 + $0x74] sm:$0xf] %vm271, %v969
      %1054 = vst.msk [vmem:[#allocation3 + $0x78] sm:$0xf] %vm271, %v982
      %1055 = vst.msk [vmem:[#allocation3 + $0x7c] sm:$0xf] %vm271, %v991
      %v1056 = vld [vmem:[#allocation2 + $0x4] sm:$0xf]
      %v1057 = vld [vmem:[#allocation2 + $0x8] sm:$0xf]
      %v1058 = vld [vmem:[#allocation2 + $0x14] sm:$0xf]
      %v1059 = vld [vmem:[#allocation2 + $0x18] sm:$0xf]
      %v1060 = vld [vmem:[#allocation2 + $0x24] sm:$0xf]
      %v1061 = vld [vmem:[#allocation2 + $0x28] sm:$0xf]
      %v1062 = vld [vmem:[#allocation2 + $0x34] sm:$0xf]
      %v1063 = vld [vmem:[#allocation2 + $0x38] sm:$0xf]
      %v1064 = vld [vmem:[#allocation2 + $0x44] sm:$0xf]
      %v1065 = vld [vmem:[#allocation2 + $0x48] sm:$0xf]
      %v1066 = vld [vmem:[#allocation2 + $0x54] sm:$0xf]
      %v1067 = vld [vmem:[#allocation2 + $0x58] sm:$0xf]
      %v1068 = vld [vmem:[#allocation2 + $0x64] sm:$0xf]
      %v1069 = vld [vmem:[#allocation2 + $0x68] sm:$0xf]
      %v1070 = vld [vmem:[#allocation2 + $0x74] sm:$0xf]
      %v1071 = vld [vmem:[#allocation2 + $0x78] sm:$0xf]
      %v1072 = vld [vmem:[#allocation2 + $0x84] sm:$0xf]
      %v1073 = vld [vmem:[#allocation2 + $0x88] sm:$0xf]
      %v1074 = vld [vmem:[#allocation2 + $0x94] sm:$0xf]
      %v1075 = vld [vmem:[#allocation2 + $0x98] sm:$0xf]
      %v1076 = vld [vmem:[#allocation2 + $0xa4] sm:$0xf]
      %v1077 = vld [vmem:[#allocation2 + $0xa8] sm:$0xf]
      %v1078 = vld [vmem:[#allocation2 + $0xb4] sm:$0xf]
      %v1079 = vld [vmem:[#allocation2 + $0xb8] sm:$0xf]
      %v1080 = vld [vmem:[#allocation2 + $0xc4] sm:$0xf]
      %v1081 = vld [vmem:[#allocation2 + $0xc8] sm:$0xf]
      %v1082 = vld [vmem:[#allocation2 + $0xd4] sm:$0xf]
      %v1083 = vld [vmem:[#allocation2 + $0xd8] sm:$0xf]
      %v1084 = vld [vmem:[#allocation2 + $0xe4] sm:$0xf]
      %v1085 = vld [vmem:[#allocation2 + $0xe8] sm:$0xf]
      %v1086 = vld [vmem:[#allocation2 + $0xf4] sm:$0xf]
      %v1087 = vld [vmem:[#allocation2 + $0xf8] sm:$0xf]
      %1120 = vrot.lane.b32.xlu0 %v1056, 8
      %v1121 = vpop.permute.xlu0 %1120
      %1122 = vrot.lane.b32.xlu0 %v1057, 8
      %v1123 = vpop.permute.xlu0 %1122
      %1124 = vrot.lane.b32.xlu0 %v1058, 8
      %v1125 = vpop.permute.xlu0 %1124
      %1126 = vrot.lane.b32.xlu0 %v1059, 8
      %v1127 = vpop.permute.xlu0 %1126
      %1128 = vrot.lane.b32.xlu0 %v1060, 8
      %v1129 = vpop.permute.xlu0 %1128
      %1130 = vrot.lane.b32.xlu0 %v1061, 8
      %v1131 = vpop.permute.xlu0 %1130
      %1132 = vrot.lane.b32.xlu0 %v1062, 8
      %v1133 = vpop.permute.xlu0 %1132
      %1134 = vrot.lane.b32.xlu0 %v1063, 8
      %v1135 = vpop.permute.xlu0 %1134
      %1136 = vrot.lane.b32.xlu0 %v1064, 8
      %v1137 = vpop.permute.xlu0 %1136
      %1138 = vrot.lane.b32.xlu0 %v1065, 8
      %v1139 = vpop.permute.xlu0 %1138
      %1140 = vrot.lane.b32.xlu0 %v1066, 8
      %v1141 = vpop.permute.xlu0 %1140
      %1142 = vrot.lane.b32.xlu0 %v1067, 8
      %v1143 = vpop.permute.xlu0 %1142
      %1144 = vrot.lane.b32.xlu0 %v1068, 8
      %v1145 = vpop.permute.xlu0 %1144
      %1146 = vrot.lane.b32.xlu0 %v1069, 8
      %v1147 = vpop.permute.xlu0 %1146
      %1148 = vrot.lane.b32.xlu0 %v1070, 8
      %v1149 = vpop.permute.xlu0 %1148
      %1150 = vrot.lane.b32.xlu0 %v1071, 8
      %v1151 = vpop.permute.xlu0 %1150
      %1152 = vrot.lane.b32.xlu0 %v1072, 8
      %v1153 = vpop.permute.xlu0 %1152
      %1154 = vrot.lane.b32.xlu0 %v1073, 8
      %v1155 = vpop.permute.xlu0 %1154
      %1156 = vrot.lane.b32.xlu0 %v1074, 8
      %v1157 = vpop.permute.xlu0 %1156
      %1158 = vrot.lane.b32.xlu0 %v1075, 8
      %v1159 = vpop.permute.xlu0 %1158
      %1160 = vrot.lane.b32.xlu0 %v1076, 8
      %v1161 = vpop.permute.xlu0 %1160
      %1162 = vrot.lane.b32.xlu0 %v1077, 8
      %v1163 = vpop.permute.xlu0 %1162
      %1164 = vrot.lane.b32.xlu0 %v1078, 8
      %v1165 = vpop.permute.xlu0 %1164
      %1166 = vrot.lane.b32.xlu0 %v1079, 8
      %v1167 = vpop.permute.xlu0 %1166
      %1168 = vrot.lane.b32.xlu0 %v1080, 8
      %v1169 = vpop.permute.xlu0 %1168
      %1170 = vrot.lane.b32.xlu0 %v1081, 8
      %v1171 = vpop.permute.xlu0 %1170
      %1172 = vrot.lane.b32.xlu0 %v1082, 8
      %v1173 = vpop.permute.xlu0 %1172
      %1174 = vrot.lane.b32.xlu0 %v1083, 8
      %v1175 = vpop.permute.xlu0 %1174
      %1176 = vrot.lane.b32.xlu0 %v1084, 8
      %v1177 = vpop.permute.xlu0 %1176
      %1178 = vrot.lane.b32.xlu0 %v1085, 8
      %v1179 = vpop.permute.xlu0 %1178
      %1180 = vrot.lane.b32.xlu0 %v1086, 8
      %v1181 = vpop.permute.xlu0 %1180
      %1182 = vrot.lane.b32.xlu0 %v1087, 8
      %v1183 = vpop.permute.xlu0 %1182
      %vm1216 = vcmask 126016
      %1217 = vst.msk [vmem:[#allocation3] sm:$0xf] %vm1216, %v1121
      %1218 = vst.msk [vmem:[#allocation3 + $0x4] sm:$0xf] %vm1216, %v1123
      %1219 = vst.msk [vmem:[#allocation3 + $0x8] sm:$0xf] %vm1216, %v1125
      %1220 = vst.msk [vmem:[#allocation3 + $0xc] sm:$0xf] %vm1216, %v1127
      %1221 = vst.msk [vmem:[#allocation3 + $0x10] sm:$0xf] %vm1216, %v1129
      %1222 = vst.msk [vmem:[#allocation3 + $0x14] sm:$0xf] %vm1216, %v1131
      %1223 = vst.msk [vmem:[#allocation3 + $0x18] sm:$0xf] %vm1216, %v1133
      %1224 = vst.msk [vmem:[#allocation3 + $0x1c] sm:$0xf] %vm1216, %v1135
      %1225 = vst.msk [vmem:[#allocation3 + $0x20] sm:$0xf] %vm1216, %v1137
      %1226 = vst.msk [vmem:[#allocation3 + $0x24] sm:$0xf] %vm1216, %v1139
      %1227 = vst.msk [vmem:[#allocation3 + $0x28] sm:$0xf] %vm1216, %v1141
      %1228 = vst.msk [vmem:[#allocation3 + $0x2c] sm:$0xf] %vm1216, %v1143
      %1229 = vst.msk [vmem:[#allocation3 + $0x30] sm:$0xf] %vm1216, %v1145
      %1230 = vst.msk [vmem:[#allocation3 + $0x34] sm:$0xf] %vm1216, %v1147
      %1231 = vst.msk [vmem:[#allocation3 + $0x38] sm:$0xf] %vm1216, %v1149
      %1232 = vst.msk [vmem:[#allocation3 + $0x3c] sm:$0xf] %vm1216, %v1151
      %1233 = vst.msk [vmem:[#allocation3 + $0x40] sm:$0xf] %vm1216, %v1153
      %1234 = vst.msk [vmem:[#allocation3 + $0x44] sm:$0xf] %vm1216, %v1155
      %1235 = vst.msk [vmem:[#allocation3 + $0x48] sm:$0xf] %vm1216, %v1157
      %1236 = vst.msk [vmem:[#allocation3 + $0x4c] sm:$0xf] %vm1216, %v1159
      %1237 = vst.msk [vmem:[#allocation3 + $0x50] sm:$0xf] %vm1216, %v1161
      %1238 = vst.msk [vmem:[#allocation3 + $0x54] sm:$0xf] %vm1216, %v1163
      %1239 = vst.msk [vmem:[#allocation3 + $0x58] sm:$0xf] %vm1216, %v1165
      %1240 = vst.msk [vmem:[#allocation3 + $0x5c] sm:$0xf] %vm1216, %v1167
      %1241 = vst.msk [vmem:[#allocation3 + $0x60] sm:$0xf] %vm1216, %v1169
      %1242 = vst.msk [vmem:[#allocation3 + $0x64] sm:$0xf] %vm1216, %v1171
      %1243 = vst.msk [vmem:[#allocation3 + $0x68] sm:$0xf] %vm1216, %v1173
      %1244 = vst.msk [vmem:[#allocation3 + $0x6c] sm:$0xf] %vm1216, %v1175
      %1245 = vst.msk [vmem:[#allocation3 + $0x70] sm:$0xf] %vm1216, %v1177
      %1246 = vst.msk [vmem:[#allocation3 + $0x74] sm:$0xf] %vm1216, %v1179
      %1247 = vst.msk [vmem:[#allocation3 + $0x78] sm:$0xf] %vm1216, %v1181
      %1248 = vst.msk [vmem:[#allocation3 + $0x7c] sm:$0xf] %vm1216, %v1183
      %v1249 = vld [vmem:[#allocation2 + $0x4] sm:$0xf]
      %v1250 = vld [vmem:[#allocation2 + $0x8] sm:$0xf]
      %v1251 = vld [vmem:[#allocation2 + $0xc] sm:$0x1]
      %v1252 = vld [vmem:[#allocation2 + $0x14] sm:$0xf]
      %v1253 = vld [vmem:[#allocation2 + $0x18] sm:$0xf]
      %v1254 = vld [vmem:[#allocation2 + $0x1c] sm:$0x1]
      %v1255 = vld [vmem:[#allocation2 + $0x24] sm:$0xf]
      %v1256 = vld [vmem:[#allocation2 + $0x28] sm:$0xf]
      %v1257 = vld [vmem:[#allocation2 + $0x2c] sm:$0x1]
      %v1258 = vld [vmem:[#allocation2 + $0x34] sm:$0xf]
      %v1259 = vld [vmem:[#allocation2 + $0x38] sm:$0xf]
      %v1260 = vld [vmem:[#allocation2 + $0x3c] sm:$0x1]
      %v1261 = vld [vmem:[#allocation2 + $0x44] sm:$0xf]
      %v1262 = vld [vmem:[#allocation2 + $0x48] sm:$0xf]
      %v1263 = vld [vmem:[#allocation2 + $0x4c] sm:$0x1]
      %v1264 = vld [vmem:[#allocation2 + $0x54] sm:$0xf]
      %v1265 = vld [vmem:[#allocation2 + $0x58] sm:$0xf]
      %v1266 = vld [vmem:[#allocation2 + $0x5c] sm:$0x1]
      %v1267 = vld [vmem:[#allocation2 + $0x64] sm:$0xf]
      %v1268 = vld [vmem:[#allocation2 + $0x68] sm:$0xf]
      %v1269 = vld [vmem:[#allocation2 + $0x6c] sm:$0x1]
      %v1270 = vld [vmem:[#allocation2 + $0x74] sm:$0xf]
      %v1271 = vld [vmem:[#allocation2 + $0x78] sm:$0xf]
      %v1272 = vld [vmem:[#allocation2 + $0x7c] sm:$0x1]
      %v1273 = vld [vmem:[#allocation2 + $0x84] sm:$0xf]
      %v1274 = vld [vmem:[#allocation2 + $0x88] sm:$0xf]
      %v1275 = vld [vmem:[#allocation2 + $0x8c] sm:$0x1]
      %v1276 = vld [vmem:[#allocation2 + $0x94] sm:$0xf]
      %v1277 = vld [vmem:[#allocation2 + $0x98] sm:$0xf]
      %v1278 = vld [vmem:[#allocation2 + $0x9c] sm:$0x1]
      %v1279 = vld [vmem:[#allocation2 + $0xa4] sm:$0xf]
      %v1280 = vld [vmem:[#allocation2 + $0xa8] sm:$0xf]
      %v1281 = vld [vmem:[#allocation2 + $0xac] sm:$0x1]
      %v1282 = vld [vmem:[#allocation2 + $0xb4] sm:$0xf]
      %v1283 = vld [vmem:[#allocation2 + $0xb8] sm:$0xf]
      %v1284 = vld [vmem:[#allocation2 + $0xbc] sm:$0x1]
      %v1285 = vld [vmem:[#allocation2 + $0xc4] sm:$0xf]
      %v1286 = vld [vmem:[#allocation2 + $0xc8] sm:$0xf]
      %v1287 = vld [vmem:[#allocation2 + $0xcc] sm:$0x1]
      %v1288 = vld [vmem:[#allocation2 + $0xd4] sm:$0xf]
      %v1289 = vld [vmem:[#allocation2 + $0xd8] sm:$0xf]
      %v1290 = vld [vmem:[#allocation2 + $0xdc] sm:$0x1]
      %v1291 = vld [vmem:[#allocation2 + $0xe4] sm:$0xf]
      %v1292 = vld [vmem:[#allocation2 + $0xe8] sm:$0xf]
      %v1293 = vld [vmem:[#allocation2 + $0xec] sm:$0x1]
      %v1294 = vld [vmem:[#allocation2 + $0xf4] sm:$0xf]
      %v1295 = vld [vmem:[#allocation2 + $0xf8] sm:$0xf]
      %v1296 = vld [vmem:[#allocation2 + $0xfc] sm:$0x1]
      %vm1297 = vsmask.f32 3328
      %vm1298 = vsmask.f32 7440
      %vm1299 = vmor %vm1297, %vm1298
      %v1301 = vshrl.u32 %v1249, 16
      %v1303 = vrot.slane %v1301, 4
      %v1304 = vshll.u32 %v1249, 16
      %v1306 = vrot.slane %v1304, 5
      %v1307 = vor.u32 %v1303, %v1306
      %v1308 = vrot.slane %v1307, 4
      %v1310 = vshll.u32 %v1250, 16
      %v1312 = vrot.slane %v1310, 5
      %v1313 = vsel %vm1299, %v1308, %v1312
      %v1314 = vshrl.u32 %v1250, 16
      %v1316 = vrot.slane %v1314, 4
      %v1317 = vor.u32 %v1316, %v1312
      %v1318 = vrot.slane %v1317, 4
      %v1320 = vshll.u32 %v1251, 16
      %v1322 = vrot.slane %v1320, 5
      %v1323 = vsel %vm1299, %v1318, %v1322
      %v1325 = vshrl.u32 %v1252, 16
      %v1327 = vrot.slane %v1325, 4
      %v1328 = vshll.u32 %v1252, 16
      %v1330 = vrot.slane %v1328, 5
      %v1331 = vor.u32 %v1327, %v1330
      %v1332 = vrot.slane %v1331, 4
      %v1334 = vshll.u32 %v1253, 16
      %v1336 = vrot.slane %v1334, 5
      %v1337 = vsel %vm1299, %v1332, %v1336
      %v1338 = vshrl.u32 %v1253, 16
      %v1340 = vrot.slane %v1338, 4
      %v1341 = vor.u32 %v1340, %v1336
      %v1342 = vrot.slane %v1341, 4
      %v1344 = vshll.u32 %v1254, 16
      %v1346 = vrot.slane %v1344, 5
      %v1347 = vsel %vm1299, %v1342, %v1346
      %v1349 = vshrl.u32 %v1255, 16
      %v1351 = vrot.slane %v1349, 4
      %v1352 = vshll.u32 %v1255, 16
      %v1354 = vrot.slane %v1352, 5
      %v1355 = vor.u32 %v1351, %v1354
      %v1356 = vrot.slane %v1355, 4
      %v1358 = vshll.u32 %v1256, 16
      %v1360 = vrot.slane %v1358, 5
      %v1361 = vsel %vm1299, %v1356, %v1360
      %v1362 = vshrl.u32 %v1256, 16
      %v1364 = vrot.slane %v1362, 4
      %v1365 = vor.u32 %v1364, %v1360
      %v1366 = vrot.slane %v1365, 4
      %v1368 = vshll.u32 %v1257, 16
      %v1370 = vrot.slane %v1368, 5
      %v1371 = vsel %vm1299, %v1366, %v1370
      %v1373 = vshrl.u32 %v1258, 16
      %v1375 = vrot.slane %v1373, 4
      %v1376 = vshll.u32 %v1258, 16
      %v1378 = vrot.slane %v1376, 5
      %v1379 = vor.u32 %v1375, %v1378
      %v1380 = vrot.slane %v1379, 4
      %v1382 = vshll.u32 %v1259, 16
      %v1384 = vrot.slane %v1382, 5
      %v1385 = vsel %vm1299, %v1380, %v1384
      %v1386 = vshrl.u32 %v1259, 16
      %v1388 = vrot.slane %v1386, 4
      %v1389 = vor.u32 %v1388, %v1384
      %v1390 = vrot.slane %v1389, 4
      %v1392 = vshll.u32 %v1260, 16
      %v1394 = vrot.slane %v1392, 5
      %v1395 = vsel %vm1299, %v1390, %v1394
      %v1397 = vshrl.u32 %v1261, 16
      %v1399 = vrot.slane %v1397, 4
      %v1400 = vshll.u32 %v1261, 16
      %v1402 = vrot.slane %v1400, 5
      %v1403 = vor.u32 %v1399, %v1402
      %v1404 = vrot.slane %v1403, 4
      %v1406 = vshll.u32 %v1262, 16
      %v1408 = vrot.slane %v1406, 5
      %v1409 = vsel %vm1299, %v1404, %v1408
      %v1410 = vshrl.u32 %v1262, 16
      %v1412 = vrot.slane %v1410, 4
      %v1413 = vor.u32 %v1412, %v1408
      %v1414 = vrot.slane %v1413, 4
      %v1416 = vshll.u32 %v1263, 16
      %v1418 = vrot.slane %v1416, 5
      %v1419 = vsel %vm1299, %v1414, %v1418
      %v1421 = vshrl.u32 %v1264, 16
      %v1423 = vrot.slane %v1421, 4
      %v1424 = vshll.u32 %v1264, 16
      %v1426 = vrot.slane %v1424, 5
      %v1427 = vor.u32 %v1423, %v1426
      %v1428 = vrot.slane %v1427, 4
      %v1430 = vshll.u32 %v1265, 16
      %v1432 = vrot.slane %v1430, 5
      %v1433 = vsel %vm1299, %v1428, %v1432
      %v1434 = vshrl.u32 %v1265, 16
      %v1436 = vrot.slane %v1434, 4
      %v1437 = vor.u32 %v1436, %v1432
      %v1438 = vrot.slane %v1437, 4
      %v1440 = vshll.u32 %v1266, 16
      %v1442 = vrot.slane %v1440, 5
      %v1443 = vsel %vm1299, %v1438, %v1442
      %v1445 = vshrl.u32 %v1267, 16
      %v1447 = vrot.slane %v1445, 4
      %v1448 = vshll.u32 %v1267, 16
      %v1450 = vrot.slane %v1448, 5
      %v1451 = vor.u32 %v1447, %v1450
      %v1452 = vrot.slane %v1451, 4
      %v1454 = vshll.u32 %v1268, 16
      %v1456 = vrot.slane %v1454, 5
      %v1457 = vsel %vm1299, %v1452, %v1456
      %v1458 = vshrl.u32 %v1268, 16
      %v1460 = vrot.slane %v1458, 4
      %v1461 = vor.u32 %v1460, %v1456
      %v1462 = vrot.slane %v1461, 4
      %v1464 = vshll.u32 %v1269, 16
      %v1466 = vrot.slane %v1464, 5
      %v1467 = vsel %vm1299, %v1462, %v1466
      %v1469 = vshrl.u32 %v1270, 16
      %v1471 = vrot.slane %v1469, 4
      %v1472 = vshll.u32 %v1270, 16
      %v1474 = vrot.slane %v1472, 5
      %v1475 = vor.u32 %v1471, %v1474
      %v1476 = vrot.slane %v1475, 4
      %v1478 = vshll.u32 %v1271, 16
      %v1480 = vrot.slane %v1478, 5
      %v1481 = vsel %vm1299, %v1476, %v1480
      %v1482 = vshrl.u32 %v1271, 16
      %v1484 = vrot.slane %v1482, 4
      %v1485 = vor.u32 %v1484, %v1480
      %v1486 = vrot.slane %v1485, 4
      %v1488 = vshll.u32 %v1272, 16
      %v1490 = vrot.slane %v1488, 5
      %v1491 = vsel %vm1299, %v1486, %v1490
      %v1493 = vshrl.u32 %v1273, 16
      %v1495 = vrot.slane %v1493, 4
      %v1496 = vshll.u32 %v1273, 16
      %v1498 = vrot.slane %v1496, 5
      %v1499 = vor.u32 %v1495, %v1498
      %v1500 = vrot.slane %v1499, 4
      %v1502 = vshll.u32 %v1274, 16
      %v1504 = vrot.slane %v1502, 5
      %v1505 = vsel %vm1299, %v1500, %v1504
      %v1506 = vshrl.u32 %v1274, 16
      %v1508 = vrot.slane %v1506, 4
      %v1509 = vor.u32 %v1508, %v1504
      %v1510 = vrot.slane %v1509, 4
      %v1512 = vshll.u32 %v1275, 16
      %v1514 = vrot.slane %v1512, 5
      %v1515 = vsel %vm1299, %v1510, %v1514
      %v1517 = vshrl.u32 %v1276, 16
      %v1519 = vrot.slane %v1517, 4
      %v1520 = vshll.u32 %v1276, 16
      %v1522 = vrot.slane %v1520, 5
      %v1523 = vor.u32 %v1519, %v1522
      %v1524 = vrot.slane %v1523, 4
      %v1526 = vshll.u32 %v1277, 16
      %v1528 = vrot.slane %v1526, 5
      %v1529 = vsel %vm1299, %v1524, %v1528
      %v1530 = vshrl.u32 %v1277, 16
      %v1532 = vrot.slane %v1530, 4
      %v1533 = vor.u32 %v1532, %v1528
      %v1534 = vrot.slane %v1533, 4
      %v1536 = vshll.u32 %v1278, 16
      %v1538 = vrot.slane %v1536, 5
      %v1539 = vsel %vm1299, %v1534, %v1538
      %v1541 = vshrl.u32 %v1279, 16
      %v1543 = vrot.slane %v1541, 4
      %v1544 = vshll.u32 %v1279, 16
      %v1546 = vrot.slane %v1544, 5
      %v1547 = vor.u32 %v1543, %v1546
      %v1548 = vrot.slane %v1547, 4
      %v1550 = vshll.u32 %v1280, 16
      %v1552 = vrot.slane %v1550, 5
      %v1553 = vsel %vm1299, %v1548, %v1552
      %v1554 = vshrl.u32 %v1280, 16
      %v1556 = vrot.slane %v1554, 4
      %v1557 = vor.u32 %v1556, %v1552
      %v1558 = vrot.slane %v1557, 4
      %v1560 = vshll.u32 %v1281, 16
      %v1562 = vrot.slane %v1560, 5
      %v1563 = vsel %vm1299, %v1558, %v1562
      %v1565 = vshrl.u32 %v1282, 16
      %v1567 = vrot.slane %v1565, 4
      %v1568 = vshll.u32 %v1282, 16
      %v1570 = vrot.slane %v1568, 5
      %v1571 = vor.u32 %v1567, %v1570
      %v1572 = vrot.slane %v1571, 4
      %v1574 = vshll.u32 %v1283, 16
      %v1576 = vrot.slane %v1574, 5
      %v1577 = vsel %vm1299, %v1572, %v1576
      %v1578 = vshrl.u32 %v1283, 16
      %v1580 = vrot.slane %v1578, 4
      %v1581 = vor.u32 %v1580, %v1576
      %v1582 = vrot.slane %v1581, 4
      %v1584 = vshll.u32 %v1284, 16
      %v1586 = vrot.slane %v1584, 5
      %v1587 = vsel %vm1299, %v1582, %v1586
      %v1589 = vshrl.u32 %v1285, 16
      %v1591 = vrot.slane %v1589, 4
      %v1592 = vshll.u32 %v1285, 16
      %v1594 = vrot.slane %v1592, 5
      %v1595 = vor.u32 %v1591, %v1594
      %v1596 = vrot.slane %v1595, 4
      %v1598 = vshll.u32 %v1286, 16
      %v1600 = vrot.slane %v1598, 5
      %v1601 = vsel %vm1299, %v1596, %v1600
      %v1602 = vshrl.u32 %v1286, 16
      %v1604 = vrot.slane %v1602, 4
      %v1605 = vor.u32 %v1604, %v1600
      %v1606 = vrot.slane %v1605, 4
      %v1608 = vshll.u32 %v1287, 16
      %v1610 = vrot.slane %v1608, 5
      %v1611 = vsel %vm1299, %v1606, %v1610
      %v1613 = vshrl.u32 %v1288, 16
      %v1615 = vrot.slane %v1613, 4
      %v1616 = vshll.u32 %v1288, 16
      %v1618 = vrot.slane %v1616, 5
      %v1619 = vor.u32 %v1615, %v1618
      %v1620 = vrot.slane %v1619, 4
      %v1622 = vshll.u32 %v1289, 16
      %v1624 = vrot.slane %v1622, 5
      %v1625 = vsel %vm1299, %v1620, %v1624
      %v1626 = vshrl.u32 %v1289, 16
      %v1628 = vrot.slane %v1626, 4
      %v1629 = vor.u32 %v1628, %v1624
      %v1630 = vrot.slane %v1629, 4
      %v1632 = vshll.u32 %v1290, 16
      %v1634 = vrot.slane %v1632, 5
      %v1635 = vsel %vm1299, %v1630, %v1634
      %v1637 = vshrl.u32 %v1291, 16
      %v1639 = vrot.slane %v1637, 4
      %v1640 = vshll.u32 %v1291, 16
      %v1642 = vrot.slane %v1640, 5
      %v1643 = vor.u32 %v1639, %v1642
      %v1644 = vrot.slane %v1643, 4
      %v1646 = vshll.u32 %v1292, 16
      %v1648 = vrot.slane %v1646, 5
      %v1649 = vsel %vm1299, %v1644, %v1648
      %v1650 = vshrl.u32 %v1292, 16
      %v1652 = vrot.slane %v1650, 4
      %v1653 = vor.u32 %v1652, %v1648
      %v1654 = vrot.slane %v1653, 4
      %v1656 = vshll.u32 %v1293, 16
      %v1658 = vrot.slane %v1656, 5
      %v1659 = vsel %vm1299, %v1654, %v1658
      %v1661 = vshrl.u32 %v1294, 16
      %v1663 = vrot.slane %v1661, 4
      %v1664 = vshll.u32 %v1294, 16
      %v1666 = vrot.slane %v1664, 5
      %v1667 = vor.u32 %v1663, %v1666
      %v1668 = vrot.slane %v1667, 4
      %v1670 = vshll.u32 %v1295, 16
      %v1672 = vrot.slane %v1670, 5
      %v1673 = vsel %vm1299, %v1668, %v1672
      %v1674 = vshrl.u32 %v1295, 16
      %v1676 = vrot.slane %v1674, 4
      %v1677 = vor.u32 %v1676, %v1672
      %v1678 = vrot.slane %v1677, 4
      %v1680 = vshll.u32 %v1296, 16
      %v1682 = vrot.slane %v1680, 5
      %v1683 = vsel %vm1299, %v1678, %v1682
      %1684 = vrot.lane.b32.xlu0 %v1313, 16
      %v1685 = vpop.permute.xlu0 %1684
      %1686 = vrot.lane.b32.xlu0 %v1323, 16
      %v1687 = vpop.permute.xlu0 %1686
      %1688 = vrot.lane.b32.xlu0 %v1337, 16
      %v1689 = vpop.permute.xlu0 %1688
      %1690 = vrot.lane.b32.xlu0 %v1347, 16
      %v1691 = vpop.permute.xlu0 %1690
      %1692 = vrot.lane.b32.xlu0 %v1361, 16
      %v1693 = vpop.permute.xlu0 %1692
      %1694 = vrot.lane.b32.xlu0 %v1371, 16
      %v1695 = vpop.permute.xlu0 %1694
      %1696 = vrot.lane.b32.xlu0 %v1385, 16
      %v1697 = vpop.permute.xlu0 %1696
      %1698 = vrot.lane.b32.xlu0 %v1395, 16
      %v1699 = vpop.permute.xlu0 %1698
      %1700 = vrot.lane.b32.xlu0 %v1409, 16
      %v1701 = vpop.permute.xlu0 %1700
      %1702 = vrot.lane.b32.xlu0 %v1419, 16
      %v1703 = vpop.permute.xlu0 %1702
      %1704 = vrot.lane.b32.xlu0 %v1433, 16
      %v1705 = vpop.permute.xlu0 %1704
      %1706 = vrot.lane.b32.xlu0 %v1443, 16
      %v1707 = vpop.permute.xlu0 %1706
      %1708 = vrot.lane.b32.xlu0 %v1457, 16
      %v1709 = vpop.permute.xlu0 %1708
      %1710 = vrot.lane.b32.xlu0 %v1467, 16
      %v1711 = vpop.permute.xlu0 %1710
      %1712 = vrot.lane.b32.xlu0 %v1481, 16
      %v1713 = vpop.permute.xlu0 %1712
      %1714 = vrot.lane.b32.xlu0 %v1491, 16
      %v1715 = vpop.permute.xlu0 %1714
      %1716 = vrot.lane.b32.xlu0 %v1505, 16
      %v1717 = vpop.permute.xlu0 %1716
      %1718 = vrot.lane.b32.xlu0 %v1515, 16
      %v1719 = vpop.permute.xlu0 %1718
      %1720 = vrot.lane.b32.xlu0 %v1529, 16
      %v1721 = vpop.permute.xlu0 %1720
      %1722 = vrot.lane.b32.xlu0 %v1539, 16
      %v1723 = vpop.permute.xlu0 %1722
      %1724 = vrot.lane.b32.xlu0 %v1553, 16
      %v1725 = vpop.permute.xlu0 %1724
      %1726 = vrot.lane.b32.xlu0 %v1563, 16
      %v1727 = vpop.permute.xlu0 %1726
      %1728 = vrot.lane.b32.xlu0 %v1577, 16
      %v1729 = vpop.permute.xlu0 %1728
      %1730 = vrot.lane.b32.xlu0 %v1587, 16
      %v1731 = vpop.permute.xlu0 %1730
      %1732 = vrot.lane.b32.xlu0 %v1601, 16
      %v1733 = vpop.permute.xlu0 %1732
      %1734 = vrot.lane.b32.xlu0 %v1611, 16
      %v1735 = vpop.permute.xlu0 %1734
      %1736 = vrot.lane.b32.xlu0 %v1625, 16
      %v1737 = vpop.permute.xlu0 %1736
      %1738 = vrot.lane.b32.xlu0 %v1635, 16
      %v1739 = vpop.permute.xlu0 %1738
      %1740 = vrot.lane.b32.xlu0 %v1649, 16
      %v1741 = vpop.permute.xlu0 %1740
      %1742 = vrot.lane.b32.xlu0 %v1659, 16
      %v1743 = vpop.permute.xlu0 %1742
      %1744 = vrot.lane.b32.xlu0 %v1673, 16
      %v1745 = vpop.permute.xlu0 %1744
      %1746 = vrot.lane.b32.xlu0 %v1683, 16
      %v1747 = vpop.permute.xlu0 %1746
      %vm1780 = vcmask 191616
      %1781 = vst.msk [vmem:[#allocation3] sm:$0xf] %vm1780, %v1685
      %1782 = vst.msk [vmem:[#allocation3 + $0x4] sm:$0xf] %vm1780, %v1687
      %1783 = vst.msk [vmem:[#allocation3 + $0x8] sm:$0xf] %vm1780, %v1689
      %1784 = vst.msk [vmem:[#allocation3 + $0xc] sm:$0xf] %vm1780, %v1691
      %1785 = vst.msk [vmem:[#allocation3 + $0x10] sm:$0xf] %vm1780, %v1693
      %1786 = vst.msk [vmem:[#allocation3 + $0x14] sm:$0xf] %vm1780, %v1695
      %1787 = vst.msk [vmem:[#allocation3 + $0x18] sm:$0xf] %vm1780, %v1697
      %1788 = vst.msk [vmem:[#allocation3 + $0x1c] sm:$0xf] %vm1780, %v1699
      %1789 = vst.msk [vmem:[#allocation3 + $0x20] sm:$0xf] %vm1780, %v1701
      %1790 = vst.msk [vmem:[#allocation3 + $0x24] sm:$0xf] %vm1780, %v1703
      %1791 = vst.msk [vmem:[#allocation3 + $0x28] sm:$0xf] %vm1780, %v1705
      %1792 = vst.msk [vmem:[#allocation3 + $0x2c] sm:$0xf] %vm1780, %v1707
      %1793 = vst.msk [vmem:[#allocation3 + $0x30] sm:$0xf] %vm1780, %v1709
      %1794 = vst.msk [vmem:[#allocation3 + $0x34] sm:$0xf] %vm1780, %v1711
      %1795 = vst.msk [vmem:[#allocation3 + $0x38] sm:$0xf] %vm1780, %v1713
      %1796 = vst.msk [vmem:[#allocation3 + $0x3c] sm:$0xf] %vm1780, %v1715
      %1797 = vst.msk [vmem:[#allocation3 + $0x40] sm:$0xf] %vm1780, %v1717
      %1798 = vst.msk [vmem:[#allocation3 + $0x44] sm:$0xf] %vm1780, %v1719
      %1799 = vst.msk [vmem:[#allocation3 + $0x48] sm:$0xf] %vm1780, %v1721
      %1800 = vst.msk [vmem:[#allocation3 + $0x4c] sm:$0xf] %vm1780, %v1723
      %1801 = vst.msk [vmem:[#allocation3 + $0x50] sm:$0xf] %vm1780, %v1725
      %1802 = vst.msk [vmem:[#allocation3 + $0x54] sm:$0xf] %vm1780, %v1727
      %1803 = vst.msk [vmem:[#allocation3 + $0x58] sm:$0xf] %vm1780, %v1729
      %1804 = vst.msk [vmem:[#allocation3 + $0x5c] sm:$0xf] %vm1780, %v1731
      %1805 = vst.msk [vmem:[#allocation3 + $0x60] sm:$0xf] %vm1780, %v1733
      %1806 = vst.msk [vmem:[#allocation3 + $0x64] sm:$0xf] %vm1780, %v1735
      %1807 = vst.msk [vmem:[#allocation3 + $0x68] sm:$0xf] %vm1780, %v1737
      %1808 = vst.msk [vmem:[#allocation3 + $0x6c] sm:$0xf] %vm1780, %v1739
      %1809 = vst.msk [vmem:[#allocation3 + $0x70] sm:$0xf] %vm1780, %v1741
      %1810 = vst.msk [vmem:[#allocation3 + $0x74] sm:$0xf] %vm1780, %v1743
      %1811 = vst.msk [vmem:[#allocation3 + $0x78] sm:$0xf] %vm1780, %v1745
      %1812 = vst.msk [vmem:[#allocation3 + $0x7c] sm:$0xf] %vm1780, %v1747
      %v1813 = vld [vmem:[%s485] sm:$0x8]
      %v1814 = vld [vmem:[%s485 + $0x4] sm:$0xf]
      %v1815 = vld [vmem:[%s485 + $0x8] sm:$0xf]
      %v1816 = vld [vmem:[%s485 + $0x10] sm:$0x8]
      %v1817 = vld [vmem:[%s485 + $0x14] sm:$0xf]
      %v1818 = vld [vmem:[%s485 + $0x18] sm:$0xf]
      %v1819 = vld [vmem:[%s485 + $0x20] sm:$0x8]
      %v1820 = vld [vmem:[%s485 + $0x24] sm:$0xf]
      %v1821 = vld [vmem:[%s485 + $0x28] sm:$0xf]
      %v1822 = vld [vmem:[%s485 + $0x30] sm:$0x8]
      %v1823 = vld [vmem:[%s485 + $0x34] sm:$0xf]
      %v1824 = vld [vmem:[%s485 + $0x38] sm:$0xf]
      %v1825 = vld [vmem:[%s485 + $0x40] sm:$0x8]
      %v1826 = vld [vmem:[%s485 + $0x44] sm:$0xf]
      %v1827 = vld [vmem:[%s485 + $0x48] sm:$0xf]
      %v1828 = vld [vmem:[%s485 + $0x50] sm:$0x8]
      %v1829 = vld [vmem:[%s485 + $0x54] sm:$0xf]
      %v1830 = vld [vmem:[%s485 + $0x58] sm:$0xf]
      %v1831 = vld [vmem:[%s485 + $0x60] sm:$0x8]
      %v1832 = vld [vmem:[%s485 + $0x64] sm:$0xf]
      %v1833 = vld [vmem:[%s485 + $0x68] sm:$0xf]
      %v1834 = vld [vmem:[%s485 + $0x70] sm:$0x8]
      %v1835 = vld [vmem:[%s485 + $0x74] sm:$0xf]
      %v1836 = vld [vmem:[%s485 + $0x78] sm:$0xf]
      %v1837 = vld [vmem:[%s485 + $0x80] sm:$0x8]
      %v1838 = vld [vmem:[%s485 + $0x84] sm:$0xf]
      %v1839 = vld [vmem:[%s485 + $0x88] sm:$0xf]
      %v1840 = vld [vmem:[%s485 + $0x90] sm:$0x8]
      %v1841 = vld [vmem:[%s485 + $0x94] sm:$0xf]
      %v1842 = vld [vmem:[%s485 + $0x98] sm:$0xf]
      %v1843 = vld [vmem:[%s485 + $0xa0] sm:$0x8]
      %v1844 = vld [vmem:[%s485 + $0xa4] sm:$0xf]
      %v1845 = vld [vmem:[%s485 + $0xa8] sm:$0xf]
      %v1846 = vld [vmem:[%s485 + $0xb0] sm:$0x8]
      %v1847 = vld [vmem:[%s485 + $0xb4] sm:$0xf]
      %v1848 = vld [vmem:[%s485 + $0xb8] sm:$0xf]
      %v1849 = vld [vmem:[%s485 + $0xc0] sm:$0x8]
      %v1850 = vld [vmem:[%s485 + $0xc4] sm:$0xf]
      %v1851 = vld [vmem:[%s485 + $0xc8] sm:$0xf]
      %v1852 = vld [vmem:[%s485 + $0xd0] sm:$0x8]
      %v1853 = vld [vmem:[%s485 + $0xd4] sm:$0xf]
      %v1854 = vld [vmem:[%s485 + $0xd8] sm:$0xf]
      %v1855 = vld [vmem:[%s485 + $0xe0] sm:$0x8]
      %v1856 = vld [vmem:[%s485 + $0xe4] sm:$0xf]
      %v1857 = vld [vmem:[%s485 + $0xe8] sm:$0xf]
      %v1858 = vld [vmem:[%s485 + $0xf0] sm:$0x8]
      %v1859 = vld [vmem:[%s485 + $0xf4] sm:$0xf]
      %v1860 = vld [vmem:[%s485 + $0xf8] sm:$0xf]
      %v1862 = vshrl.u32 %v1813, 16
      %v1864 = vrot.slane %v1862, 7
      %v1865 = vrot.slane %v1864, 4
      %v1867 = vshrl.u32 %v1814, 16
      %v1869 = vrot.slane %v1867, 7
      %v1870 = vshll.u32 %v1814, 16
      %v1872 = vor.u32 %v1869, %v1870
      %v1873 = vsel %vm639, %v1865, %v1872
      %v1874 = vrot.slane %v1869, 4
      %v1876 = vshrl.u32 %v1815, 16
      %v1878 = vrot.slane %v1876, 7
      %v1879 = vshll.u32 %v1815, 16
      %v1881 = vor.u32 %v1878, %v1879
      %v1882 = vsel %vm639, %v1874, %v1881
      %v1884 = vshrl.u32 %v1816, 16
      %v1886 = vrot.slane %v1884, 7
      %v1887 = vrot.slane %v1886, 4
      %v1889 = vshrl.u32 %v1817, 16
      %v1891 = vrot.slane %v1889, 7
      %v1892 = vshll.u32 %v1817, 16
      %v1894 = vor.u32 %v1891, %v1892
      %v1895 = vsel %vm639, %v1887, %v1894
      %v1896 = vrot.slane %v1891, 4
      %v1898 = vshrl.u32 %v1818, 16
      %v1900 = vrot.slane %v1898, 7
      %v1901 = vshll.u32 %v1818, 16
      %v1903 = vor.u32 %v1900, %v1901
      %v1904 = vsel %vm639, %v1896, %v1903
      %v1906 = vshrl.u32 %v1819, 16
      %v1908 = vrot.slane %v1906, 7
      %v1909 = vrot.slane %v1908, 4
      %v1911 = vshrl.u32 %v1820, 16
      %v1913 = vrot.slane %v1911, 7
      %v1914 = vshll.u32 %v1820, 16
      %v1916 = vor.u32 %v1913, %v1914
      %v1917 = vsel %vm639, %v1909, %v1916
      %v1918 = vrot.slane %v1913, 4
      %v1920 = vshrl.u32 %v1821, 16
      %v1922 = vrot.slane %v1920, 7
      %v1923 = vshll.u32 %v1821, 16
      %v1925 = vor.u32 %v1922, %v1923
      %v1926 = vsel %vm639, %v1918, %v1925
      %v1928 = vshrl.u32 %v1822, 16
      %v1930 = vrot.slane %v1928, 7
      %v1931 = vrot.slane %v1930, 4
      %v1933 = vshrl.u32 %v1823, 16
      %v1935 = vrot.slane %v1933, 7
      %v1936 = vshll.u32 %v1823, 16
      %v1938 = vor.u32 %v1935, %v1936
      %v1939 = vsel %vm639, %v1931, %v1938
      %v1940 = vrot.slane %v1935, 4
      %v1942 = vshrl.u32 %v1824, 16
      %v1944 = vrot.slane %v1942, 7
      %v1945 = vshll.u32 %v1824, 16
      %v1947 = vor.u32 %v1944, %v1945
      %v1948 = vsel %vm639, %v1940, %v1947
      %v1950 = vshrl.u32 %v1825, 16
      %v1952 = vrot.slane %v1950, 7
      %v1953 = vrot.slane %v1952, 4
      %v1955 = vshrl.u32 %v1826, 16
      %v1957 = vrot.slane %v1955, 7
      %v1958 = vshll.u32 %v1826, 16
      %v1960 = vor.u32 %v1957, %v1958
      %v1961 = vsel %vm639, %v1953, %v1960
      %v1962 = vrot.slane %v1957, 4
      %v1964 = vshrl.u32 %v1827, 16
      %v1966 = vrot.slane %v1964, 7
      %v1967 = vshll.u32 %v1827, 16
      %v1969 = vor.u32 %v1966, %v1967
      %v1970 = vsel %vm639, %v1962, %v1969
      %v1972 = vshrl.u32 %v1828, 16
      %v1974 = vrot.slane %v1972, 7
      %v1975 = vrot.slane %v1974, 4
      %v1977 = vshrl.u32 %v1829, 16
      %v1979 = vrot.slane %v1977, 7
      %v1980 = vshll.u32 %v1829, 16
      %v1982 = vor.u32 %v1979, %v1980
      %v1983 = vsel %vm639, %v1975, %v1982
      %v1984 = vrot.slane %v1979, 4
      %v1986 = vshrl.u32 %v1830, 16
      %v1988 = vrot.slane %v1986, 7
      %v1989 = vshll.u32 %v1830, 16
      %v1991 = vor.u32 %v1988, %v1989
      %v1992 = vsel %vm639, %v1984, %v1991
      %v1994 = vshrl.u32 %v1831, 16
      %v1996 = vrot.slane %v1994, 7
      %v1997 = vrot.slane %v1996, 4
      %v1999 = vshrl.u32 %v1832, 16
      %v2001 = vrot.slane %v1999, 7
      %v2002 = vshll.u32 %v1832, 16
      %v2004 = vor.u32 %v2001, %v2002
      %v2005 = vsel %vm639, %v1997, %v2004
      %v2006 = vrot.slane %v2001, 4
      %v2008 = vshrl.u32 %v1833, 16
      %v2010 = vrot.slane %v2008, 7
      %v2011 = vshll.u32 %v1833, 16
      %v2013 = vor.u32 %v2010, %v2011
      %v2014 = vsel %vm639, %v2006, %v2013
      %v2016 = vshrl.u32 %v1834, 16
      %v2018 = vrot.slane %v2016, 7
      %v2019 = vrot.slane %v2018, 4
      %v2021 = vshrl.u32 %v1835, 16
      %v2023 = vrot.slane %v2021, 7
      %v2024 = vshll.u32 %v1835, 16
      %v2026 = vor.u32 %v2023, %v2024
      %v2027 = vsel %vm639, %v2019, %v2026
      %v2028 = vrot.slane %v2023, 4
      %v2030 = vshrl.u32 %v1836, 16
      %v2032 = vrot.slane %v2030, 7
      %v2033 = vshll.u32 %v1836, 16
      %v2035 = vor.u32 %v2032, %v2033
      %v2036 = vsel %vm639, %v2028, %v2035
      %v2038 = vshrl.u32 %v1837, 16
      %v2040 = vrot.slane %v2038, 7
      %v2041 = vrot.slane %v2040, 4
      %v2043 = vshrl.u32 %v1838, 16
      %v2045 = vrot.slane %v2043, 7
      %v2046 = vshll.u32 %v1838, 16
      %v2048 = vor.u32 %v2045, %v2046
      %v2049 = vsel %vm639, %v2041, %v2048
      %v2050 = vrot.slane %v2045, 4
      %v2052 = vshrl.u32 %v1839, 16
      %v2054 = vrot.slane %v2052, 7
      %v2055 = vshll.u32 %v1839, 16
      %v2057 = vor.u32 %v2054, %v2055
      %v2058 = vsel %vm639, %v2050, %v2057
      %v2060 = vshrl.u32 %v1840, 16
      %v2062 = vrot.slane %v2060, 7
      %v2063 = vrot.slane %v2062, 4
      %v2065 = vshrl.u32 %v1841, 16
      %v2067 = vrot.slane %v2065, 7
      %v2068 = vshll.u32 %v1841, 16
      %v2070 = vor.u32 %v2067, %v2068
      %v2071 = vsel %vm639, %v2063, %v2070
      %v2072 = vrot.slane %v2067, 4
      %v2074 = vshrl.u32 %v1842, 16
      %v2076 = vrot.slane %v2074, 7
      %v2077 = vshll.u32 %v1842, 16
      %v2079 = vor.u32 %v2076, %v2077
      %v2080 = vsel %vm639, %v2072, %v2079
      %v2082 = vshrl.u32 %v1843, 16
      %v2084 = vrot.slane %v2082, 7
      %v2085 = vrot.slane %v2084, 4
      %v2087 = vshrl.u32 %v1844, 16
      %v2089 = vrot.slane %v2087, 7
      %v2090 = vshll.u32 %v1844, 16
      %v2092 = vor.u32 %v2089, %v2090
      %v2093 = vsel %vm639, %v2085, %v2092
      %v2094 = vrot.slane %v2089, 4
      %v2096 = vshrl.u32 %v1845, 16
      %v2098 = vrot.slane %v2096, 7
      %v2099 = vshll.u32 %v1845, 16
      %v2101 = vor.u32 %v2098, %v2099
      %v2102 = vsel %vm639, %v2094, %v2101
      %v2104 = vshrl.u32 %v1846, 16
      %v2106 = vrot.slane %v2104, 7
      %v2107 = vrot.slane %v2106, 4
      %v2109 = vshrl.u32 %v1847, 16
      %v2111 = vrot.slane %v2109, 7
      %v2112 = vshll.u32 %v1847, 16
      %v2114 = vor.u32 %v2111, %v2112
      %v2115 = vsel %vm639, %v2107, %v2114
      %v2116 = vrot.slane %v2111, 4
      %v2118 = vshrl.u32 %v1848, 16
      %v2120 = vrot.slane %v2118, 7
      %v2121 = vshll.u32 %v1848, 16
      %v2123 = vor.u32 %v2120, %v2121
      %v2124 = vsel %vm639, %v2116, %v2123
      %v2126 = vshrl.u32 %v1849, 16
      %v2128 = vrot.slane %v2126, 7
      %v2129 = vrot.slane %v2128, 4
      %v2131 = vshrl.u32 %v1850, 16
      %v2133 = vrot.slane %v2131, 7
      %v2134 = vshll.u32 %v1850, 16
      %v2136 = vor.u32 %v2133, %v2134
      %v2137 = vsel %vm639, %v2129, %v2136
      %v2138 = vrot.slane %v2133, 4
      %v2140 = vshrl.u32 %v1851, 16
      %v2142 = vrot.slane %v2140, 7
      %v2143 = vshll.u32 %v1851, 16
      %v2145 = vor.u32 %v2142, %v2143
      %v2146 = vsel %vm639, %v2138, %v2145
      %v2148 = vshrl.u32 %v1852, 16
      %v2150 = vrot.slane %v2148, 7
      %v2151 = vrot.slane %v2150, 4
      %v2153 = vshrl.u32 %v1853, 16
      %v2155 = vrot.slane %v2153, 7
      %v2156 = vshll.u32 %v1853, 16
      %v2158 = vor.u32 %v2155, %v2156
      %v2159 = vsel %vm639, %v2151, %v2158
      %v2160 = vrot.slane %v2155, 4
      %v2162 = vshrl.u32 %v1854, 16
      %v2164 = vrot.slane %v2162, 7
      %v2165 = vshll.u32 %v1854, 16
      %v2167 = vor.u32 %v2164, %v2165
      %v2168 = vsel %vm639, %v2160, %v2167
      %v2170 = vshrl.u32 %v1855, 16
      %v2172 = vrot.slane %v2170, 7
      %v2173 = vrot.slane %v2172, 4
      %v2175 = vshrl.u32 %v1856, 16
      %v2177 = vrot.slane %v2175, 7
      %v2178 = vshll.u32 %v1856, 16
      %v2180 = vor.u32 %v2177, %v2178
      %v2181 = vsel %vm639, %v2173, %v2180
      %v2182 = vrot.slane %v2177, 4
      %v2184 = vshrl.u32 %v1857, 16
      %v2186 = vrot.slane %v2184, 7
      %v2187 = vshll.u32 %v1857, 16
      %v2189 = vor.u32 %v2186, %v2187
      %v2190 = vsel %vm639, %v2182, %v2189
      %v2192 = vshrl.u32 %v1858, 16
      %v2194 = vrot.slane %v2192, 7
      %v2195 = vrot.slane %v2194, 4
      %v2197 = vshrl.u32 %v1859, 16
      %v2199 = vrot.slane %v2197, 7
      %v2200 = vshll.u32 %v1859, 16
      %v2202 = vor.u32 %v2199, %v2200
      %v2203 = vsel %vm639, %v2195, %v2202
      %v2204 = vrot.slane %v2199, 4
      %v2206 = vshrl.u32 %v1860, 16
      %v2208 = vrot.slane %v2206, 7
      %v2209 = vshll.u32 %v1860, 16
      %v2211 = vor.u32 %v2208, %v2209
      %v2212 = vsel %vm639, %v2204, %v2211
      %2213 = vrot.lane.b32.xlu0 %v1873, 24
      %v2214 = vpop.permute.xlu0 %2213
      %2215 = vrot.lane.b32.xlu0 %v1882, 24
      %v2216 = vpop.permute.xlu0 %2215
      %2217 = vrot.lane.b32.xlu0 %v1895, 24
      %v2218 = vpop.permute.xlu0 %2217
      %2219 = vrot.lane.b32.xlu0 %v1904, 24
      %v2220 = vpop.permute.xlu0 %2219
      %2221 = vrot.lane.b32.xlu0 %v1917, 24
      %v2222 = vpop.permute.xlu0 %2221
      %2223 = vrot.lane.b32.xlu0 %v1926, 24
      %v2224 = vpop.permute.xlu0 %2223
      %2225 = vrot.lane.b32.xlu0 %v1939, 24
      %v2226 = vpop.permute.xlu0 %2225
      %2227 = vrot.lane.b32.xlu0 %v1948, 24
      %v2228 = vpop.permute.xlu0 %2227
      %2229 = vrot.lane.b32.xlu0 %v1961, 24
      %v2230 = vpop.permute.xlu0 %2229
      %2231 = vrot.lane.b32.xlu0 %v1970, 24
      %v2232 = vpop.permute.xlu0 %2231
      %2233 = vrot.lane.b32.xlu0 %v1983, 24
      %v2234 = vpop.permute.xlu0 %2233
      %2235 = vrot.lane.b32.xlu0 %v1992, 24
      %v2236 = vpop.permute.xlu0 %2235
      %2237 = vrot.lane.b32.xlu0 %v2005, 24
      %v2238 = vpop.permute.xlu0 %2237
      %2239 = vrot.lane.b32.xlu0 %v2014, 24
      %v2240 = vpop.permute.xlu0 %2239
      %2241 = vrot.lane.b32.xlu0 %v2027, 24
      %v2242 = vpop.permute.xlu0 %2241
      %2243 = vrot.lane.b32.xlu0 %v2036, 24
      %v2244 = vpop.permute.xlu0 %2243
      %2245 = vrot.lane.b32.xlu0 %v2049, 24
      %v2246 = vpop.permute.xlu0 %2245
      %2247 = vrot.lane.b32.xlu0 %v2058, 24
      %v2248 = vpop.permute.xlu0 %2247
      %2249 = vrot.lane.b32.xlu0 %v2071, 24
      %v2250 = vpop.permute.xlu0 %2249
      %2251 = vrot.lane.b32.xlu0 %v2080, 24
      %v2252 = vpop.permute.xlu0 %2251
      %2253 = vrot.lane.b32.xlu0 %v2093, 24
      %v2254 = vpop.permute.xlu0 %2253
      %2255 = vrot.lane.b32.xlu0 %v2102, 24
      %v2256 = vpop.permute.xlu0 %2255
      %2257 = vrot.lane.b32.xlu0 %v2115, 24
      %v2258 = vpop.permute.xlu0 %2257
      %2259 = vrot.lane.b32.xlu0 %v2124, 24
      %v2260 = vpop.permute.xlu0 %2259
      %2261 = vrot.lane.b32.xlu0 %v2137, 24
      %v2262 = vpop.permute.xlu0 %2261
      %2263 = vrot.lane.b32.xlu0 %v2146, 24
      %v2264 = vpop.permute.xlu0 %2263
      %2265 = vrot.lane.b32.xlu0 %v2159, 24
      %v2266 = vpop.permute.xlu0 %2265
      %2267 = vrot.lane.b32.xlu0 %v2168, 24
      %v2268 = vpop.permute.xlu0 %2267
      %2269 = vrot.lane.b32.xlu0 %v2181, 24
      %v2270 = vpop.permute.xlu0 %2269
      %2271 = vrot.lane.b32.xlu0 %v2190, 24
      %v2272 = vpop.permute.xlu0 %2271
      %2273 = vrot.lane.b32.xlu0 %v2203, 24
      %v2274 = vpop.permute.xlu0 %2273
      %2275 = vrot.lane.b32.xlu0 %v2212, 24
      %v2276 = vpop.permute.xlu0 %2275
      %vm2309 = vcmask 257216
      %2310 = vst.msk [vmem:[#allocation3] sm:$0xf] %vm2309, %v2214
      %2311 = vst.msk [vmem:[#allocation3 + $0x4] sm:$0xf] %vm2309, %v2216
      %2312 = vst.msk [vmem:[#allocation3 + $0x8] sm:$0xf] %vm2309, %v2218
      %2313 = vst.msk [vmem:[#allocation3 + $0xc] sm:$0xf] %vm2309, %v2220
      %2314 = vst.msk [vmem:[#allocation3 + $0x10] sm:$0xf] %vm2309, %v2222
      %2315 = vst.msk [vmem:[#allocation3 + $0x14] sm:$0xf] %vm2309, %v2224
      %2316 = vst.msk [vmem:[#allocation3 + $0x18] sm:$0xf] %vm2309, %v2226
      %2317 = vst.msk [vmem:[#allocation3 + $0x1c] sm:$0xf] %vm2309, %v2228
      %2318 = vst.msk [vmem:[#allocation3 + $0x20] sm:$0xf] %vm2309, %v2230
      %2319 = vst.msk [vmem:[#allocation3 + $0x24] sm:$0xf] %vm2309, %v2232
      %2320 = vst.msk [vmem:[#allocation3 + $0x28] sm:$0xf] %vm2309, %v2234
      %2321 = vst.msk [vmem:[#allocation3 + $0x2c] sm:$0xf] %vm2309, %v2236
      %2322 = vst.msk [vmem:[#allocation3 + $0x30] sm:$0xf] %vm2309, %v2238
      %2323 = vst.msk [vmem:[#allocation3 + $0x34] sm:$0xf] %vm2309, %v2240
      %2324 = vst.msk [vmem:[#allocation3 + $0x38] sm:$0xf] %vm2309, %v2242
      %2325 = vst.msk [vmem:[#allocation3 + $0x3c] sm:$0xf] %vm2309, %v2244
      %2326 = vst.msk [vmem:[#allocation3 + $0x40] sm:$0xf] %vm2309, %v2246
      %2327 = vst.msk [vmem:[#allocation3 + $0x44] sm:$0xf] %vm2309, %v2248
      %2328 = vst.msk [vmem:[#allocation3 + $0x48] sm:$0xf] %vm2309, %v2250
      %2329 = vst.msk [vmem:[#allocation3 + $0x4c] sm:$0xf] %vm2309, %v2252
      %2330 = vst.msk [vmem:[#allocation3 + $0x50] sm:$0xf] %vm2309, %v2254
      %2331 = vst.msk [vmem:[#allocation3 + $0x54] sm:$0xf] %vm2309, %v2256
      %2332 = vst.msk [vmem:[#allocation3 + $0x58] sm:$0xf] %vm2309, %v2258
      %2333 = vst.msk [vmem:[#allocation3 + $0x5c] sm:$0xf] %vm2309, %v2260
      %2334 = vst.msk [vmem:[#allocation3 + $0x60] sm:$0xf] %vm2309, %v2262
      %2335 = vst.msk [vmem:[#allocation3 + $0x64] sm:$0xf] %vm2309, %v2264
      %2336 = vst.msk [vmem:[#allocation3 + $0x68] sm:$0xf] %vm2309, %v2266
      %2337 = vst.msk [vmem:[#allocation3 + $0x6c] sm:$0xf] %vm2309, %v2268
      %2338 = vst.msk [vmem:[#allocation3 + $0x70] sm:$0xf] %vm2309, %v2270
      %2339 = vst.msk [vmem:[#allocation3 + $0x74] sm:$0xf] %vm2309, %v2272
      %2340 = vst.msk [vmem:[#allocation3 + $0x78] sm:$0xf] %vm2309, %v2274
      %2341 = vst.msk [vmem:[#allocation3 + $0x7c] sm:$0xf] %vm2309, %v2276
      %v2342 = vld [vmem:[%s485 + $0x4] sm:$0xf]
      %v2343 = vld [vmem:[%s485 + $0x8] sm:$0xf]
      %v2344 = vld [vmem:[%s485 + $0x14] sm:$0xf]
      %v2345 = vld [vmem:[%s485 + $0x18] sm:$0xf]
      %v2346 = vld [vmem:[%s485 + $0x24] sm:$0xf]
      %v2347 = vld [vmem:[%s485 + $0x28] sm:$0xf]
      %v2348 = vld [vmem:[%s485 + $0x34] sm:$0xf]
      %v2349 = vld [vmem:[%s485 + $0x38] sm:$0xf]
      %v2350 = vld [vmem:[%s485 + $0x44] sm:$0xf]
      %v2351 = vld [vmem:[%s485 + $0x48] sm:$0xf]
      %v2352 = vld [vmem:[%s485 + $0x54] sm:$0xf]
      %v2353 = vld [vmem:[%s485 + $0x58] sm:$0xf]
      %v2354 = vld [vmem:[%s485 + $0x64] sm:$0xf]
      %v2355 = vld [vmem:[%s485 + $0x68] sm:$0xf]
      %v2356 = vld [vmem:[%s485 + $0x74] sm:$0xf]
      %v2357 = vld [vmem:[%s485 + $0x78] sm:$0xf]
      %v2358 = vld [vmem:[%s485 + $0x84] sm:$0xf]
      %v2359 = vld [vmem:[%s485 + $0x88] sm:$0xf]
      %v2360 = vld [vmem:[%s485 + $0x94] sm:$0xf]
      %v2361 = vld [vmem:[%s485 + $0x98] sm:$0xf]
      %v2362 = vld [vmem:[%s485 + $0xa4] sm:$0xf]
      %v2363 = vld [vmem:[%s485 + $0xa8] sm:$0xf]
      %v2364 = vld [vmem:[%s485 + $0xb4] sm:$0xf]
      %v2365 = vld [vmem:[%s485 + $0xb8] sm:$0xf]
      %v2366 = vld [vmem:[%s485 + $0xc4] sm:$0xf]
      %v2367 = vld [vmem:[%s485 + $0xc8] sm:$0xf]
      %v2368 = vld [vmem:[%s485 + $0xd4] sm:$0xf]
      %v2369 = vld [vmem:[%s485 + $0xd8] sm:$0xf]
      %v2370 = vld [vmem:[%s485 + $0xe4] sm:$0xf]
      %v2371 = vld [vmem:[%s485 + $0xe8] sm:$0xf]
      %v2372 = vld [vmem:[%s485 + $0xf4] sm:$0xf]
      %v2373 = vld [vmem:[%s485 + $0xf8] sm:$0xf]
      %2406 = vrot.lane.b32.xlu0 %v2342, 32
      %v2407 = vpop.permute.xlu0 %2406
      %2408 = vrot.lane.b32.xlu0 %v2343, 32
      %v2409 = vpop.permute.xlu0 %2408
      %2410 = vrot.lane.b32.xlu0 %v2344, 32
      %v2411 = vpop.permute.xlu0 %2410
      %2412 = vrot.lane.b32.xlu0 %v2345, 32
      %v2413 = vpop.permute.xlu0 %2412
      %2414 = vrot.lane.b32.xlu0 %v2346, 32
      %v2415 = vpop.permute.xlu0 %2414
      %2416 = vrot.lane.b32.xlu0 %v2347, 32
      %v2417 = vpop.permute.xlu0 %2416
      %2418 = vrot.lane.b32.xlu0 %v2348, 32
      %v2419 = vpop.permute.xlu0 %2418
      %2420 = vrot.lane.b32.xlu0 %v2349, 32
      %v2421 = vpop.permute.xlu0 %2420
      %2422 = vrot.lane.b32.xlu0 %v2350, 32
      %v2423 = vpop.permute.xlu0 %2422
      %2424 = vrot.lane.b32.xlu0 %v2351, 32
      %v2425 = vpop.permute.xlu0 %2424
      %2426 = vrot.lane.b32.xlu0 %v2352, 32
      %v2427 = vpop.permute.xlu0 %2426
      %2428 = vrot.lane.b32.xlu0 %v2353, 32
      %v2429 = vpop.permute.xlu0 %2428
      %2430 = vrot.lane.b32.xlu0 %v2354, 32
      %v2431 = vpop.permute.xlu0 %2430
      %2432 = vrot.lane.b32.xlu0 %v2355, 32
      %v2433 = vpop.permute.xlu0 %2432
      %2434 = vrot.lane.b32.xlu0 %v2356, 32
      %v2435 = vpop.permute.xlu0 %2434
      %2436 = vrot.lane.b32.xlu0 %v2357, 32
      %v2437 = vpop.permute.xlu0 %2436
      %2438 = vrot.lane.b32.xlu0 %v2358, 32
      %v2439 = vpop.permute.xlu0 %2438
      %2440 = vrot.lane.b32.xlu0 %v2359, 32
      %v2441 = vpop.permute.xlu0 %2440
      %2442 = vrot.lane.b32.xlu0 %v2360, 32
      %v2443 = vpop.permute.xlu0 %2442
      %2444 = vrot.lane.b32.xlu0 %v2361, 32
      %v2445 = vpop.permute.xlu0 %2444
      %2446 = vrot.lane.b32.xlu0 %v2362, 32
      %v2447 = vpop.permute.xlu0 %2446
      %2448 = vrot.lane.b32.xlu0 %v2363, 32
      %v2449 = vpop.permute.xlu0 %2448
      %2450 = vrot.lane.b32.xlu0 %v2364, 32
      %v2451 = vpop.permute.xlu0 %2450
      %2452 = vrot.lane.b32.xlu0 %v2365, 32
      %v2453 = vpop.permute.xlu0 %2452
      %2454 = vrot.lane.b32.xlu0 %v2366, 32
      %v2455 = vpop.permute.xlu0 %2454
      %2456 = vrot.lane.b32.xlu0 %v2367, 32
      %v2457 = vpop.permute.xlu0 %2456
      %2458 = vrot.lane.b32.xlu0 %v2368, 32
      %v2459 = vpop.permute.xlu0 %2458
      %2460 = vrot.lane.b32.xlu0 %v2369, 32
      %v2461 = vpop.permute.xlu0 %2460
      %2462 = vrot.lane.b32.xlu0 %v2370, 32
      %v2463 = vpop.permute.xlu0 %2462
      %2464 = vrot.lane.b32.xlu0 %v2371, 32
      %v2465 = vpop.permute.xlu0 %2464
      %2466 = vrot.lane.b32.xlu0 %v2372, 32
      %v2467 = vpop.permute.xlu0 %2466
      %2468 = vrot.lane.b32.xlu0 %v2373, 32
      %v2469 = vpop.permute.xlu0 %2468
      %vm2502 = vcmask 322816
      %2503 = vst.msk [vmem:[#allocation3] sm:$0xf] %vm2502, %v2407
      %2504 = vst.msk [vmem:[#allocation3 + $0x4] sm:$0xf] %vm2502, %v2409
      %2505 = vst.msk [vmem:[#allocation3 + $0x8] sm:$0xf] %vm2502, %v2411
      %2506 = vst.msk [vmem:[#allocation3 + $0xc] sm:$0xf] %vm2502, %v2413
      %2507 = vst.msk [vmem:[#allocation3 + $0x10] sm:$0xf] %vm2502, %v2415
      %2508 = vst.msk [vmem:[#allocation3 + $0x14] sm:$0xf] %vm2502, %v2417
      %2509 = vst.msk [vmem:[#allocation3 + $0x18] sm:$0xf] %vm2502, %v2419
      %2510 = vst.msk [vmem:[#allocation3 + $0x1c] sm:$0xf] %vm2502, %v2421
      %2511 = vst.msk [vmem:[#allocation3 + $0x20] sm:$0xf] %vm2502, %v2423
      %2512 = vst.msk [vmem:[#allocation3 + $0x24] sm:$0xf] %vm2502, %v2425
      %2513 = vst.msk [vmem:[#allocation3 + $0x28] sm:$0xf] %vm2502, %v2427
      %2514 = vst.msk [vmem:[#allocation3 + $0x2c] sm:$0xf] %vm2502, %v2429
      %2515 = vst.msk [vmem:[#allocation3 + $0x30] sm:$0xf] %vm2502, %v2431
      %2516 = vst.msk [vmem:[#allocation3 + $0x34] sm:$0xf] %vm2502, %v2433
      %2517 = vst.msk [vmem:[#allocation3 + $0x38] sm:$0xf] %vm2502, %v2435
      %2518 = vst.msk [vmem:[#allocation3 + $0x3c] sm:$0xf] %vm2502, %v2437
      %2519 = vst.msk [vmem:[#allocation3 + $0x40] sm:$0xf] %vm2502, %v2439
      %2520 = vst.msk [vmem:[#allocation3 + $0x44] sm:$0xf] %vm2502, %v2441
      %2521 = vst.msk [vmem:[#allocation3 + $0x48] sm:$0xf] %vm2502, %v2443
      %2522 = vst.msk [vmem:[#allocation3 + $0x4c] sm:$0xf] %vm2502, %v2445
      %2523 = vst.msk [vmem:[#allocation3 + $0x50] sm:$0xf] %vm2502, %v2447
      %2524 = vst.msk [vmem:[#allocation3 + $0x54] sm:$0xf] %vm2502, %v2449
      %2525 = vst.msk [vmem:[#allocation3 + $0x58] sm:$0xf] %vm2502, %v2451
      %2526 = vst.msk [vmem:[#allocation3 + $0x5c] sm:$0xf] %vm2502, %v2453
      %2527 = vst.msk [vmem:[#allocation3 + $0x60] sm:$0xf] %vm2502, %v2455
      %2528 = vst.msk [vmem:[#allocation3 + $0x64] sm:$0xf] %vm2502, %v2457
      %2529 = vst.msk [vmem:[#allocation3 + $0x68] sm:$0xf] %vm2502, %v2459
      %2530 = vst.msk [vmem:[#allocation3 + $0x6c] sm:$0xf] %vm2502, %v2461
      %2531 = vst.msk [vmem:[#allocation3 + $0x70] sm:$0xf] %vm2502, %v2463
      %2532 = vst.msk [vmem:[#allocation3 + $0x74] sm:$0xf] %vm2502, %v2465
      %2533 = vst.msk [vmem:[#allocation3 + $0x78] sm:$0xf] %vm2502, %v2467
      %2534 = vst.msk [vmem:[#allocation3 + $0x7c] sm:$0xf] %vm2502, %v2469
      %v2535 = vld [vmem:[%s485 + $0x4] sm:$0xf]
      %v2536 = vld [vmem:[%s485 + $0x8] sm:$0xf]
      %v2537 = vld [vmem:[%s485 + $0xc] sm:$0x1]
      %v2538 = vld [vmem:[%s485 + $0x14] sm:$0xf]
      %v2539 = vld [vmem:[%s485 + $0x18] sm:$0xf]
      %v2540 = vld [vmem:[%s485 + $0x1c] sm:$0x1]
      %v2541 = vld [vmem:[%s485 + $0x24] sm:$0xf]
      %v2542 = vld [vmem:[%s485 + $0x28] sm:$0xf]
      %v2543 = vld [vmem:[%s485 + $0x2c] sm:$0x1]
      %v2544 = vld [vmem:[%s485 + $0x34] sm:$0xf]
      %v2545 = vld [vmem:[%s485 + $0x38] sm:$0xf]
      %v2546 = vld [vmem:[%s485 + $0x3c] sm:$0x1]
      %v2547 = vld [vmem:[%s485 + $0x44] sm:$0xf]
      %v2548 = vld [vmem:[%s485 + $0x48] sm:$0xf]
      %v2549 = vld [vmem:[%s485 + $0x4c] sm:$0x1]
      %v2550 = vld [vmem:[%s485 + $0x54] sm:$0xf]
      %v2551 = vld [vmem:[%s485 + $0x58] sm:$0xf]
      %v2552 = vld [vmem:[%s485 + $0x5c] sm:$0x1]
      %v2553 = vld [vmem:[%s485 + $0x64] sm:$0xf]
      %v2554 = vld [vmem:[%s485 + $0x68] sm:$0xf]
      %v2555 = vld [vmem:[%s485 + $0x6c] sm:$0x1]
      %v2556 = vld [vmem:[%s485 + $0x74] sm:$0xf]
      %v2557 = vld [vmem:[%s485 + $0x78] sm:$0xf]
      %v2558 = vld [vmem:[%s485 + $0x7c] sm:$0x1]
      %v2559 = vld [vmem:[%s485 + $0x84] sm:$0xf]
      %v2560 = vld [vmem:[%s485 + $0x88] sm:$0xf]
      %v2561 = vld [vmem:[%s485 + $0x8c] sm:$0x1]
      %v2562 = vld [vmem:[%s485 + $0x94] sm:$0xf]
      %v2563 = vld [vmem:[%s485 + $0x98] sm:$0xf]
      %v2564 = vld [vmem:[%s485 + $0x9c] sm:$0x1]
      %v2565 = vld [vmem:[%s485 + $0xa4] sm:$0xf]
      %v2566 = vld [vmem:[%s485 + $0xa8] sm:$0xf]
      %v2567 = vld [vmem:[%s485 + $0xac] sm:$0x1]
      %v2568 = vld [vmem:[%s485 + $0xb4] sm:$0xf]
      %v2569 = vld [vmem:[%s485 + $0xb8] sm:$0xf]
      %v2570 = vld [vmem:[%s485 + $0xbc] sm:$0x1]
      %v2571 = vld [vmem:[%s485 + $0xc4] sm:$0xf]
      %v2572 = vld [vmem:[%s485 + $0xc8] sm:$0xf]
      %v2573 = vld [vmem:[%s485 + $0xcc] sm:$0x1]
      %v2574 = vld [vmem:[%s485 + $0xd4] sm:$0xf]
      %v2575 = vld [vmem:[%s485 + $0xd8] sm:$0xf]
      %v2576 = vld [vmem:[%s485 + $0xdc] sm:$0x1]
      %v2577 = vld [vmem:[%s485 + $0xe4] sm:$0xf]
      %v2578 = vld [vmem:[%s485 + $0xe8] sm:$0xf]
      %v2579 = vld [vmem:[%s485 + $0xec] sm:$0x1]
      %v2580 = vld [vmem:[%s485 + $0xf4] sm:$0xf]
      %v2581 = vld [vmem:[%s485 + $0xf8] sm:$0xf]
      %v2582 = vld [vmem:[%s485 + $0xfc] sm:$0x1]
      %v2584 = vshrl.u32 %v2535, 16
      %v2586 = vrot.slane %v2584, 4
      %v2587 = vshll.u32 %v2535, 16
      %v2589 = vrot.slane %v2587, 5
      %v2590 = vor.u32 %v2586, %v2589
      %v2591 = vrot.slane %v2590, 4
      %v2593 = vshll.u32 %v2536, 16
      %v2595 = vrot.slane %v2593, 5
      %v2596 = vsel %vm1299, %v2591, %v2595
      %v2597 = vshrl.u32 %v2536, 16
      %v2599 = vrot.slane %v2597, 4
      %v2600 = vor.u32 %v2599, %v2595
      %v2601 = vrot.slane %v2600, 4
      %v2603 = vshll.u32 %v2537, 16
      %v2605 = vrot.slane %v2603, 5
      %v2606 = vsel %vm1299, %v2601, %v2605
      %v2608 = vshrl.u32 %v2538, 16
      %v2610 = vrot.slane %v2608, 4
      %v2611 = vshll.u32 %v2538, 16
      %v2613 = vrot.slane %v2611, 5
      %v2614 = vor.u32 %v2610, %v2613
      %v2615 = vrot.slane %v2614, 4
      %v2617 = vshll.u32 %v2539, 16
      %v2619 = vrot.slane %v2617, 5
      %v2620 = vsel %vm1299, %v2615, %v2619
      %v2621 = vshrl.u32 %v2539, 16
      %v2623 = vrot.slane %v2621, 4
      %v2624 = vor.u32 %v2623, %v2619
      %v2625 = vrot.slane %v2624, 4
      %v2627 = vshll.u32 %v2540, 16
      %v2629 = vrot.slane %v2627, 5
      %v2630 = vsel %vm1299, %v2625, %v2629
      %v2632 = vshrl.u32 %v2541, 16
      %v2634 = vrot.slane %v2632, 4
      %v2635 = vshll.u32 %v2541, 16
      %v2637 = vrot.slane %v2635, 5
      %v2638 = vor.u32 %v2634, %v2637
      %v2639 = vrot.slane %v2638, 4
      %v2641 = vshll.u32 %v2542, 16
      %v2643 = vrot.slane %v2641, 5
      %v2644 = vsel %vm1299, %v2639, %v2643
      %v2645 = vshrl.u32 %v2542, 16
      %v2647 = vrot.slane %v2645, 4
      %v2648 = vor.u32 %v2647, %v2643
      %v2649 = vrot.slane %v2648, 4
      %v2651 = vshll.u32 %v2543, 16
      %v2653 = vrot.slane %v2651, 5
      %v2654 = vsel %vm1299, %v2649, %v2653
      %v2656 = vshrl.u32 %v2544, 16
      %v2658 = vrot.slane %v2656, 4
      %v2659 = vshll.u32 %v2544, 16
      %v2661 = vrot.slane %v2659, 5
      %v2662 = vor.u32 %v2658, %v2661
      %v2663 = vrot.slane %v2662, 4
      %v2665 = vshll.u32 %v2545, 16
      %v2667 = vrot.slane %v2665, 5
      %v2668 = vsel %vm1299, %v2663, %v2667
      %v2669 = vshrl.u32 %v2545, 16
      %v2671 = vrot.slane %v2669, 4
      %v2672 = vor.u32 %v2671, %v2667
      %v2673 = vrot.slane %v2672, 4
      %v2675 = vshll.u32 %v2546, 16
      %v2677 = vrot.slane %v2675, 5
      %v2678 = vsel %vm1299, %v2673, %v2677
      %v2680 = vshrl.u32 %v2547, 16
      %v2682 = vrot.slane %v2680, 4
      %v2683 = vshll.u32 %v2547, 16
      %v2685 = vrot.slane %v2683, 5
      %v2686 = vor.u32 %v2682, %v2685
      %v2687 = vrot.slane %v2686, 4
      %v2689 = vshll.u32 %v2548, 16
      %v2691 = vrot.slane %v2689, 5
      %v2692 = vsel %vm1299, %v2687, %v2691
      %v2693 = vshrl.u32 %v2548, 16
      %v2695 = vrot.slane %v2693, 4
      %v2696 = vor.u32 %v2695, %v2691
      %v2697 = vrot.slane %v2696, 4
      %v2699 = vshll.u32 %v2549, 16
      %v2701 = vrot.slane %v2699, 5
      %v2702 = vsel %vm1299, %v2697, %v2701
      %v2704 = vshrl.u32 %v2550, 16
      %v2706 = vrot.slane %v2704, 4
      %v2707 = vshll.u32 %v2550, 16
      %v2709 = vrot.slane %v2707, 5
      %v2710 = vor.u32 %v2706, %v2709
      %v2711 = vrot.slane %v2710, 4
      %v2713 = vshll.u32 %v2551, 16
      %v2715 = vrot.slane %v2713, 5
      %v2716 = vsel %vm1299, %v2711, %v2715
      %v2717 = vshrl.u32 %v2551, 16
      %v2719 = vrot.slane %v2717, 4
      %v2720 = vor.u32 %v2719, %v2715
      %v2721 = vrot.slane %v2720, 4
      %v2723 = vshll.u32 %v2552, 16
      %v2725 = vrot.slane %v2723, 5
      %v2726 = vsel %vm1299, %v2721, %v2725
      %v2728 = vshrl.u32 %v2553, 16
      %v2730 = vrot.slane %v2728, 4
      %v2731 = vshll.u32 %v2553, 16
      %v2733 = vrot.slane %v2731, 5
      %v2734 = vor.u32 %v2730, %v2733
      %v2735 = vrot.slane %v2734, 4
      %v2737 = vshll.u32 %v2554, 16
      %v2739 = vrot.slane %v2737, 5
      %v2740 = vsel %vm1299, %v2735, %v2739
      %v2741 = vshrl.u32 %v2554, 16
      %v2743 = vrot.slane %v2741, 4
      %v2744 = vor.u32 %v2743, %v2739
      %v2745 = vrot.slane %v2744, 4
      %v2747 = vshll.u32 %v2555, 16
      %v2749 = vrot.slane %v2747, 5
      %v2750 = vsel %vm1299, %v2745, %v2749
      %v2752 = vshrl.u32 %v2556, 16
      %v2754 = vrot.slane %v2752, 4
      %v2755 = vshll.u32 %v2556, 16
      %v2757 = vrot.slane %v2755, 5
      %v2758 = vor.u32 %v2754, %v2757
      %v2759 = vrot.slane %v2758, 4
      %v2761 = vshll.u32 %v2557, 16
      %v2763 = vrot.slane %v2761, 5
      %v2764 = vsel %vm1299, %v2759, %v2763
      %v2765 = vshrl.u32 %v2557, 16
      %v2767 = vrot.slane %v2765, 4
      %v2768 = vor.u32 %v2767, %v2763
      %v2769 = vrot.slane %v2768, 4
      %v2771 = vshll.u32 %v2558, 16
      %v2773 = vrot.slane %v2771, 5
      %v2774 = vsel %vm1299, %v2769, %v2773
      %v2776 = vshrl.u32 %v2559, 16
      %v2778 = vrot.slane %v2776, 4
      %v2779 = vshll.u32 %v2559, 16
      %v2781 = vrot.slane %v2779, 5
      %v2782 = vor.u32 %v2778, %v2781
      %v2783 = vrot.slane %v2782, 4
      %v2785 = vshll.u32 %v2560, 16
      %v2787 = vrot.slane %v2785, 5
      %v2788 = vsel %vm1299, %v2783, %v2787
      %v2789 = vshrl.u32 %v2560, 16
      %v2791 = vrot.slane %v2789, 4
      %v2792 = vor.u32 %v2791, %v2787
      %v2793 = vrot.slane %v2792, 4
      %v2795 = vshll.u32 %v2561, 16
      %v2797 = vrot.slane %v2795, 5
      %v2798 = vsel %vm1299, %v2793, %v2797
      %v2800 = vshrl.u32 %v2562, 16
      %v2802 = vrot.slane %v2800, 4
      %v2803 = vshll.u32 %v2562, 16
      %v2805 = vrot.slane %v2803, 5
      %v2806 = vor.u32 %v2802, %v2805
      %v2807 = vrot.slane %v2806, 4
      %v2809 = vshll.u32 %v2563, 16
      %v2811 = vrot.slane %v2809, 5
      %v2812 = vsel %vm1299, %v2807, %v2811
      %v2813 = vshrl.u32 %v2563, 16
      %v2815 = vrot.slane %v2813, 4
      %v2816 = vor.u32 %v2815, %v2811
      %v2817 = vrot.slane %v2816, 4
      %v2819 = vshll.u32 %v2564, 16
      %v2821 = vrot.slane %v2819, 5
      %v2822 = vsel %vm1299, %v2817, %v2821
      %v2824 = vshrl.u32 %v2565, 16
      %v2826 = vrot.slane %v2824, 4
      %v2827 = vshll.u32 %v2565, 16
      %v2829 = vrot.slane %v2827, 5
      %v2830 = vor.u32 %v2826, %v2829
      %v2831 = vrot.slane %v2830, 4
      %v2833 = vshll.u32 %v2566, 16
      %v2835 = vrot.slane %v2833, 5
      %v2836 = vsel %vm1299, %v2831, %v2835
      %v2837 = vshrl.u32 %v2566, 16
      %v2839 = vrot.slane %v2837, 4
      %v2840 = vor.u32 %v2839, %v2835
      %v2841 = vrot.slane %v2840, 4
      %v2843 = vshll.u32 %v2567, 16
      %v2845 = vrot.slane %v2843, 5
      %v2846 = vsel %vm1299, %v2841, %v2845
      %v2848 = vshrl.u32 %v2568, 16
      %v2850 = vrot.slane %v2848, 4
      %v2851 = vshll.u32 %v2568, 16
      %v2853 = vrot.slane %v2851, 5
      %v2854 = vor.u32 %v2850, %v2853
      %v2855 = vrot.slane %v2854, 4
      %v2857 = vshll.u32 %v2569, 16
      %v2859 = vrot.slane %v2857, 5
      %v2860 = vsel %vm1299, %v2855, %v2859
      %v2861 = vshrl.u32 %v2569, 16
      %v2863 = vrot.slane %v2861, 4
      %v2864 = vor.u32 %v2863, %v2859
      %v2865 = vrot.slane %v2864, 4
      %v2867 = vshll.u32 %v2570, 16
      %v2869 = vrot.slane %v2867, 5
      %v2870 = vsel %vm1299, %v2865, %v2869
      %v2872 = vshrl.u32 %v2571, 16
      %v2874 = vrot.slane %v2872, 4
      %v2875 = vshll.u32 %v2571, 16
      %v2877 = vrot.slane %v2875, 5
      %v2878 = vor.u32 %v2874, %v2877
      %v2879 = vrot.slane %v2878, 4
      %v2881 = vshll.u32 %v2572, 16
      %v2883 = vrot.slane %v2881, 5
      %v2884 = vsel %vm1299, %v2879, %v2883
      %v2885 = vshrl.u32 %v2572, 16
      %v2887 = vrot.slane %v2885, 4
      %v2888 = vor.u32 %v2887, %v2883
      %v2889 = vrot.slane %v2888, 4
      %v2891 = vshll.u32 %v2573, 16
      %v2893 = vrot.slane %v2891, 5
      %v2894 = vsel %vm1299, %v2889, %v2893
      %v2896 = vshrl.u32 %v2574, 16
      %v2898 = vrot.slane %v2896, 4
      %v2899 = vshll.u32 %v2574, 16
      %v2901 = vrot.slane %v2899, 5
      %v2902 = vor.u32 %v2898, %v2901
      %v2903 = vrot.slane %v2902, 4
      %v2905 = vshll.u32 %v2575, 16
      %v2907 = vrot.slane %v2905, 5
      %v2908 = vsel %vm1299, %v2903, %v2907
      %v2909 = vshrl.u32 %v2575, 16
      %v2911 = vrot.slane %v2909, 4
      %v2912 = vor.u32 %v2911, %v2907
      %v2913 = vrot.slane %v2912, 4
      %v2915 = vshll.u32 %v2576, 16
      %v2917 = vrot.slane %v2915, 5
      %v2918 = vsel %vm1299, %v2913, %v2917
      %v2920 = vshrl.u32 %v2577, 16
      %v2922 = vrot.slane %v2920, 4
      %v2923 = vshll.u32 %v2577, 16
      %v2925 = vrot.slane %v2923, 5
      %v2926 = vor.u32 %v2922, %v2925
      %v2927 = vrot.slane %v2926, 4
      %v2929 = vshll.u32 %v2578, 16
      %v2931 = vrot.slane %v2929, 5
      %v2932 = vsel %vm1299, %v2927, %v2931
      %v2933 = vshrl.u32 %v2578, 16
      %v2935 = vrot.slane %v2933, 4
      %v2936 = vor.u32 %v2935, %v2931
      %v2937 = vrot.slane %v2936, 4
      %v2939 = vshll.u32 %v2579, 16
      %v2941 = vrot.slane %v2939, 5
      %v2942 = vsel %vm1299, %v2937, %v2941
      %v2944 = vshrl.u32 %v2580, 16
      %v2946 = vrot.slane %v2944, 4
      %v2947 = vshll.u32 %v2580, 16
      %v2949 = vrot.slane %v2947, 5
      %v2950 = vor.u32 %v2946, %v2949
      %v2951 = vrot.slane %v2950, 4
      %v2953 = vshll.u32 %v2581, 16
      %v2955 = vrot.slane %v2953, 5
      %v2956 = vsel %vm1299, %v2951, %v2955
      %v2957 = vshrl.u32 %v2581, 16
      %v2959 = vrot.slane %v2957, 4
      %v2960 = vor.u32 %v2959, %v2955
      %v2961 = vrot.slane %v2960, 4
      %v2963 = vshll.u32 %v2582, 16
      %v2965 = vrot.slane %v2963, 5
      %v2966 = vsel %vm1299, %v2961, %v2965
      %2967 = vrot.lane.b32.xlu0 %v2596, 40
      %v2968 = vpop.permute.xlu0 %2967
      %2969 = vrot.lane.b32.xlu0 %v2606, 40
      %v2970 = vpop.permute.xlu0 %2969
      %2971 = vrot.lane.b32.xlu0 %v2620, 40
      %v2972 = vpop.permute.xlu0 %2971
      %2973 = vrot.lane.b32.xlu0 %v2630, 40
      %v2974 = vpop.permute.xlu0 %2973
      %2975 = vrot.lane.b32.xlu0 %v2644, 40
      %v2976 = vpop.permute.xlu0 %2975
      %2977 = vrot.lane.b32.xlu0 %v2654, 40
      %v2978 = vpop.permute.xlu0 %2977
      %2979 = vrot.lane.b32.xlu0 %v2668, 40
      %v2980 = vpop.permute.xlu0 %2979
      %2981 = vrot.lane.b32.xlu0 %v2678, 40
      %v2982 = vpop.permute.xlu0 %2981
      %2983 = vrot.lane.b32.xlu0 %v2692, 40
      %v2984 = vpop.permute.xlu0 %2983
      %2985 = vrot.lane.b32.xlu0 %v2702, 40
      %v2986 = vpop.permute.xlu0 %2985
      %2987 = vrot.lane.b32.xlu0 %v2716, 40
      %v2988 = vpop.permute.xlu0 %2987
      %2989 = vrot.lane.b32.xlu0 %v2726, 40
      %v2990 = vpop.permute.xlu0 %2989
      %2991 = vrot.lane.b32.xlu0 %v2740, 40
      %v2992 = vpop.permute.xlu0 %2991
      %2993 = vrot.lane.b32.xlu0 %v2750, 40
      %v2994 = vpop.permute.xlu0 %2993
      %2995 = vrot.lane.b32.xlu0 %v2764, 40
      %v2996 = vpop.permute.xlu0 %2995
      %2997 = vrot.lane.b32.xlu0 %v2774, 40
      %v2998 = vpop.permute.xlu0 %2997
      %2999 = vrot.lane.b32.xlu0 %v2788, 40
      %v3000 = vpop.permute.xlu0 %2999
      %3001 = vrot.lane.b32.xlu0 %v2798, 40
      %v3002 = vpop.permute.xlu0 %3001
      %3003 = vrot.lane.b32.xlu0 %v2812, 40
      %v3004 = vpop.permute.xlu0 %3003
      %3005 = vrot.lane.b32.xlu0 %v2822, 40
      %v3006 = vpop.permute.xlu0 %3005
      %3007 = vrot.lane.b32.xlu0 %v2836, 40
      %v3008 = vpop.permute.xlu0 %3007
      %3009 = vrot.lane.b32.xlu0 %v2846, 40
      %v3010 = vpop.permute.xlu0 %3009
      %3011 = vrot.lane.b32.xlu0 %v2860, 40
      %v3012 = vpop.permute.xlu0 %3011
      %3013 = vrot.lane.b32.xlu0 %v2870, 40
      %v3014 = vpop.permute.xlu0 %3013
      %3015 = vrot.lane.b32.xlu0 %v2884, 40
      %v3016 = vpop.permute.xlu0 %3015
      %3017 = vrot.lane.b32.xlu0 %v2894, 40
      %v3018 = vpop.permute.xlu0 %3017
      %3019 = vrot.lane.b32.xlu0 %v2908, 40
      %v3020 = vpop.permute.xlu0 %3019
      %3021 = vrot.lane.b32.xlu0 %v2918, 40
      %v3022 = vpop.permute.xlu0 %3021
      %3023 = vrot.lane.b32.xlu0 %v2932, 40
      %v3024 = vpop.permute.xlu0 %3023
      %3025 = vrot.lane.b32.xlu0 %v2942, 40
      %v3026 = vpop.permute.xlu0 %3025
      %3027 = vrot.lane.b32.xlu0 %v2956, 40
      %v3028 = vpop.permute.xlu0 %3027
      %3029 = vrot.lane.b32.xlu0 %v2966, 40
      %v3030 = vpop.permute.xlu0 %3029
      %vm3063 = vcmask 388416
      %3064 = vst.msk [vmem:[#allocation3] sm:$0xf] %vm3063, %v2968
      %3065 = vst.msk [vmem:[#allocation3 + $0x4] sm:$0xf] %vm3063, %v2970
      %3066 = vst.msk [vmem:[#allocation3 + $0x8] sm:$0xf] %vm3063, %v2972
      %3067 = vst.msk [vmem:[#allocation3 + $0xc] sm:$0xf] %vm3063, %v2974
      %3068 = vst.msk [vmem:[#allocation3 + $0x10] sm:$0xf] %vm3063, %v2976
      %3069 = vst.msk [vmem:[#allocation3 + $0x14] sm:$0xf] %vm3063, %v2978
      %3070 = vst.msk [vmem:[#allocation3 + $0x18] sm:$0xf] %vm3063, %v2980
      %3071 = vst.msk [vmem:[#allocation3 + $0x1c] sm:$0xf] %vm3063, %v2982
      %3072 = vst.msk [vmem:[#allocation3 + $0x20] sm:$0xf] %vm3063, %v2984
      %3073 = vst.msk [vmem:[#allocation3 + $0x24] sm:$0xf] %vm3063, %v2986
      %3074 = vst.msk [vmem:[#allocation3 + $0x28] sm:$0xf] %vm3063, %v2988
      %3075 = vst.msk [vmem:[#allocation3 + $0x2c] sm:$0xf] %vm3063, %v2990
      %3076 = vst.msk [vmem:[#allocation3 + $0x30] sm:$0xf] %vm3063, %v2992
      %3077 = vst.msk [vmem:[#allocation3 + $0x34] sm:$0xf] %vm3063, %v2994
      %3078 = vst.msk [vmem:[#allocation3 + $0x38] sm:$0xf] %vm3063, %v2996
      %3079 = vst.msk [vmem:[#allocation3 + $0x3c] sm:$0xf] %vm3063, %v2998
      %3080 = vst.msk [vmem:[#allocation3 + $0x40] sm:$0xf] %vm3063, %v3000
      %3081 = vst.msk [vmem:[#allocation3 + $0x44] sm:$0xf] %vm3063, %v3002
      %3082 = vst.msk [vmem:[#allocation3 + $0x48] sm:$0xf] %vm3063, %v3004
      %3083 = vst.msk [vmem:[#allocation3 + $0x4c] sm:$0xf] %vm3063, %v3006
      %3084 = vst.msk [vmem:[#allocation3 + $0x50] sm:$0xf] %vm3063, %v3008
      %3085 = vst.msk [vmem:[#allocation3 + $0x54] sm:$0xf] %vm3063, %v3010
      %3086 = vst.msk [vmem:[#allocation3 + $0x58] sm:$0xf] %vm3063, %v3012
      %3087 = vst.msk [vmem:[#allocation3 + $0x5c] sm:$0xf] %vm3063, %v3014
      %3088 = vst.msk [vmem:[#allocation3 + $0x60] sm:$0xf] %vm3063, %v3016
      %3089 = vst.msk [vmem:[#allocation3 + $0x64] sm:$0xf] %vm3063, %v3018
      %3090 = vst.msk [vmem:[#allocation3 + $0x68] sm:$0xf] %vm3063, %v3020
      %3091 = vst.msk [vmem:[#allocation3 + $0x6c] sm:$0xf] %vm3063, %v3022
      %3092 = vst.msk [vmem:[#allocation3 + $0x70] sm:$0xf] %vm3063, %v3024
      %3093 = vst.msk [vmem:[#allocation3 + $0x74] sm:$0xf] %vm3063, %v3026
      %3094 = vst.msk [vmem:[#allocation3 + $0x78] sm:$0xf] %vm3063, %v3028
      %3095 = vst.msk [vmem:[#allocation3 + $0x7c] sm:$0xf] %vm3063, %v3030
      %s3096 = scalar_lea.vmem [#allocation2], 32
      %v3097 = vld [vmem:[%s3096] sm:$0x8]
      %v3098 = vld [vmem:[%s3096 + $0x4] sm:$0xf]
      %v3099 = vld [vmem:[%s3096 + $0x8] sm:$0xf]
      %v3100 = vld [vmem:[%s3096 + $0x10] sm:$0x8]
      %v3101 = vld [vmem:[%s3096 + $0x14] sm:$0xf]
      %v3102 = vld [vmem:[%s3096 + $0x18] sm:$0xf]
      %v3103 = vld [vmem:[%s3096 + $0x20] sm:$0x8]
      %v3104 = vld [vmem:[%s3096 + $0x24] sm:$0xf]
      %v3105 = vld [vmem:[%s3096 + $0x28] sm:$0xf]
      %v3106 = vld [vmem:[%s3096 + $0x30] sm:$0x8]
      %v3107 = vld [vmem:[%s3096 + $0x34] sm:$0xf]
      %v3108 = vld [vmem:[%s3096 + $0x38] sm:$0xf]
      %v3109 = vld [vmem:[%s3096 + $0x40] sm:$0x8]
      %v3110 = vld [vmem:[%s3096 + $0x44] sm:$0xf]
      %v3111 = vld [vmem:[%s3096 + $0x48] sm:$0xf]
      %v3112 = vld [vmem:[%s3096 + $0x50] sm:$0x8]
      %v3113 = vld [vmem:[%s3096 + $0x54] sm:$0xf]
      %v3114 = vld [vmem:[%s3096 + $0x58] sm:$0xf]
      %v3115 = vld [vmem:[%s3096 + $0x60] sm:$0x8]
      %v3116 = vld [vmem:[%s3096 + $0x64] sm:$0xf]
      %v3117 = vld [vmem:[%s3096 + $0x68] sm:$0xf]
      %v3118 = vld [vmem:[%s3096 + $0x70] sm:$0x8]
      %v3119 = vld [vmem:[%s3096 + $0x74] sm:$0xf]
      %v3120 = vld [vmem:[%s3096 + $0x78] sm:$0xf]
      %v3121 = vld [vmem:[%s3096 + $0x80] sm:$0x8]
      %v3122 = vld [vmem:[%s3096 + $0x84] sm:$0xf]
      %v3123 = vld [vmem:[%s3096 + $0x88] sm:$0xf]
      %v3124 = vld [vmem:[%s3096 + $0x90] sm:$0x8]
      %v3125 = vld [vmem:[%s3096 + $0x94] sm:$0xf]
      %v3126 = vld [vmem:[%s3096 + $0x98] sm:$0xf]
      %v3127 = vld [vmem:[%s3096 + $0xa0] sm:$0x8]
      %v3128 = vld [vmem:[%s3096 + $0xa4] sm:$0xf]
      %v3129 = vld [vmem:[%s3096 + $0xa8] sm:$0xf]
      %v3130 = vld [vmem:[%s3096 + $0xb0] sm:$0x8]
      %v3131 = vld [vmem:[%s3096 + $0xb4] sm:$0xf]
      %v3132 = vld [vmem:[%s3096 + $0xb8] sm:$0xf]
      %v3133 = vld [vmem:[%s3096 + $0xc0] sm:$0x8]
      %v3134 = vld [vmem:[%s3096 + $0xc4] sm:$0xf]
      %v3135 = vld [vmem:[%s3096 + $0xc8] sm:$0xf]
      %v3136 = vld [vmem:[%s3096 + $0xd0] sm:$0x8]
      %v3137 = vld [vmem:[%s3096 + $0xd4] sm:$0xf]
      %v3138 = vld [vmem:[%s3096 + $0xd8] sm:$0xf]
      %v3139 = vld [vmem:[%s3096 + $0xe0] sm:$0x8]
      %v3140 = vld [vmem:[%s3096 + $0xe4] sm:$0xf]
      %v3141 = vld [vmem:[%s3096 + $0xe8] sm:$0xf]
      %v3142 = vld [vmem:[%s3096 + $0xf0] sm:$0x8]
      %v3143 = vld [vmem:[%s3096 + $0xf4] sm:$0xf]
      %v3144 = vld [vmem:[%s3096 + $0xf8] sm:$0xf]
      %v3146 = vshrl.u32 %v3097, 16
      %v3148 = vrot.slane %v3146, 7
      %v3149 = vrot.slane %v3148, 4
      %v3151 = vshrl.u32 %v3098, 16
      %v3153 = vrot.slane %v3151, 7
      %v3154 = vshll.u32 %v3098, 16
      %v3156 = vor.u32 %v3153, %v3154
      %v3157 = vsel %vm639, %v3149, %v3156
      %v3158 = vrot.slane %v3153, 4
      %v3160 = vshrl.u32 %v3099, 16
      %v3162 = vrot.slane %v3160, 7
      %v3163 = vshll.u32 %v3099, 16
      %v3165 = vor.u32 %v3162, %v3163
      %v3166 = vsel %vm639, %v3158, %v3165
      %v3168 = vshrl.u32 %v3100, 16
      %v3170 = vrot.slane %v3168, 7
      %v3171 = vrot.slane %v3170, 4
      %v3173 = vshrl.u32 %v3101, 16
      %v3175 = vrot.slane %v3173, 7
      %v3176 = vshll.u32 %v3101, 16
      %v3178 = vor.u32 %v3175, %v3176
      %v3179 = vsel %vm639, %v3171, %v3178
      %v3180 = vrot.slane %v3175, 4
      %v3182 = vshrl.u32 %v3102, 16
      %v3184 = vrot.slane %v3182, 7
      %v3185 = vshll.u32 %v3102, 16
      %v3187 = vor.u32 %v3184, %v3185
      %v3188 = vsel %vm639, %v3180, %v3187
      %v3190 = vshrl.u32 %v3103, 16
      %v3192 = vrot.slane %v3190, 7
      %v3193 = vrot.slane %v3192, 4
      %v3195 = vshrl.u32 %v3104, 16
      %v3197 = vrot.slane %v3195, 7
      %v3198 = vshll.u32 %v3104, 16
      %v3200 = vor.u32 %v3197, %v3198
      %v3201 = vsel %vm639, %v3193, %v3200
      %v3202 = vrot.slane %v3197, 4
      %v3204 = vshrl.u32 %v3105, 16
      %v3206 = vrot.slane %v3204, 7
      %v3207 = vshll.u32 %v3105, 16
      %v3209 = vor.u32 %v3206, %v3207
      %v3210 = vsel %vm639, %v3202, %v3209
      %v3212 = vshrl.u32 %v3106, 16
      %v3214 = vrot.slane %v3212, 7
      %v3215 = vrot.slane %v3214, 4
      %v3217 = vshrl.u32 %v3107, 16
      %v3219 = vrot.slane %v3217, 7
      %v3220 = vshll.u32 %v3107, 16
      %v3222 = vor.u32 %v3219, %v3220
      %v3223 = vsel %vm639, %v3215, %v3222
      %v3224 = vrot.slane %v3219, 4
      %v3226 = vshrl.u32 %v3108, 16
      %v3228 = vrot.slane %v3226, 7
      %v3229 = vshll.u32 %v3108, 16
      %v3231 = vor.u32 %v3228, %v3229
      %v3232 = vsel %vm639, %v3224, %v3231
      %v3234 = vshrl.u32 %v3109, 16
      %v3236 = vrot.slane %v3234, 7
      %v3237 = vrot.slane %v3236, 4
      %v3239 = vshrl.u32 %v3110, 16
      %v3241 = vrot.slane %v3239, 7
      %v3242 = vshll.u32 %v3110, 16
      %v3244 = vor.u32 %v3241, %v3242
      %v3245 = vsel %vm639, %v3237, %v3244
      %v3246 = vrot.slane %v3241, 4
      %v3248 = vshrl.u32 %v3111, 16
      %v3250 = vrot.slane %v3248, 7
      %v3251 = vshll.u32 %v3111, 16
      %v3253 = vor.u32 %v3250, %v3251
      %v3254 = vsel %vm639, %v3246, %v3253
      %v3256 = vshrl.u32 %v3112, 16
      %v3258 = vrot.slane %v3256, 7
      %v3259 = vrot.slane %v3258, 4
      %v3261 = vshrl.u32 %v3113, 16
      %v3263 = vrot.slane %v3261, 7
      %v3264 = vshll.u32 %v3113, 16
      %v3266 = vor.u32 %v3263, %v3264
      %v3267 = vsel %vm639, %v3259, %v3266
      %v3268 = vrot.slane %v3263, 4
      %v3270 = vshrl.u32 %v3114, 16
      %v3272 = vrot.slane %v3270, 7
      %v3273 = vshll.u32 %v3114, 16
      %v3275 = vor.u32 %v3272, %v3273
      %v3276 = vsel %vm639, %v3268, %v3275
      %v3278 = vshrl.u32 %v3115, 16
      %v3280 = vrot.slane %v3278, 7
      %v3281 = vrot.slane %v3280, 4
      %v3283 = vshrl.u32 %v3116, 16
      %v3285 = vrot.slane %v3283, 7
      %v3286 = vshll.u32 %v3116, 16
      %v3288 = vor.u32 %v3285, %v3286
      %v3289 = vsel %vm639, %v3281, %v3288
      %v3290 = vrot.slane %v3285, 4
      %v3292 = vshrl.u32 %v3117, 16
      %v3294 = vrot.slane %v3292, 7
      %v3295 = vshll.u32 %v3117, 16
      %v3297 = vor.u32 %v3294, %v3295
      %v3298 = vsel %vm639, %v3290, %v3297
      %v3300 = vshrl.u32 %v3118, 16
      %v3302 = vrot.slane %v3300, 7
      %v3303 = vrot.slane %v3302, 4
      %v3305 = vshrl.u32 %v3119, 16
      %v3307 = vrot.slane %v3305, 7
      %v3308 = vshll.u32 %v3119, 16
      %v3310 = vor.u32 %v3307, %v3308
      %v3311 = vsel %vm639, %v3303, %v3310
      %v3312 = vrot.slane %v3307, 4
      %v3314 = vshrl.u32 %v3120, 16
      %v3316 = vrot.slane %v3314, 7
      %v3317 = vshll.u32 %v3120, 16
      %v3319 = vor.u32 %v3316, %v3317
      %v3320 = vsel %vm639, %v3312, %v3319
      %v3322 = vshrl.u32 %v3121, 16
      %v3324 = vrot.slane %v3322, 7
      %v3325 = vrot.slane %v3324, 4
      %v3327 = vshrl.u32 %v3122, 16
      %v3329 = vrot.slane %v3327, 7
      %v3330 = vshll.u32 %v3122, 16
      %v3332 = vor.u32 %v3329, %v3330
      %v3333 = vsel %vm639, %v3325, %v3332
      %v3334 = vrot.slane %v3329, 4
      %v3336 = vshrl.u32 %v3123, 16
      %v3338 = vrot.slane %v3336, 7
      %v3339 = vshll.u32 %v3123, 16
      %v3341 = vor.u32 %v3338, %v3339
      %v3342 = vsel %vm639, %v3334, %v3341
      %v3344 = vshrl.u32 %v3124, 16
      %v3346 = vrot.slane %v3344, 7
      %v3347 = vrot.slane %v3346, 4
      %v3349 = vshrl.u32 %v3125, 16
      %v3351 = vrot.slane %v3349, 7
      %v3352 = vshll.u32 %v3125, 16
      %v3354 = vor.u32 %v3351, %v3352
      %v3355 = vsel %vm639, %v3347, %v3354
      %v3356 = vrot.slane %v3351, 4
      %v3358 = vshrl.u32 %v3126, 16
      %v3360 = vrot.slane %v3358, 7
      %v3361 = vshll.u32 %v3126, 16
      %v3363 = vor.u32 %v3360, %v3361
      %v3364 = vsel %vm639, %v3356, %v3363
      %v3366 = vshrl.u32 %v3127, 16
      %v3368 = vrot.slane %v3366, 7
      %v3369 = vrot.slane %v3368, 4
      %v3371 = vshrl.u32 %v3128, 16
      %v3373 = vrot.slane %v3371, 7
      %v3374 = vshll.u32 %v3128, 16
      %v3376 = vor.u32 %v3373, %v3374
      %v3377 = vsel %vm639, %v3369, %v3376
      %v3378 = vrot.slane %v3373, 4
      %v3380 = vshrl.u32 %v3129, 16
      %v3382 = vrot.slane %v3380, 7
      %v3383 = vshll.u32 %v3129, 16
      %v3385 = vor.u32 %v3382, %v3383
      %v3386 = vsel %vm639, %v3378, %v3385
      %v3388 = vshrl.u32 %v3130, 16
      %v3390 = vrot.slane %v3388, 7
      %v3391 = vrot.slane %v3390, 4
      %v3393 = vshrl.u32 %v3131, 16
      %v3395 = vrot.slane %v3393, 7
      %v3396 = vshll.u32 %v3131, 16
      %v3398 = vor.u32 %v3395, %v3396
      %v3399 = vsel %vm639, %v3391, %v3398
      %v3400 = vrot.slane %v3395, 4
      %v3402 = vshrl.u32 %v3132, 16
      %v3404 = vrot.slane %v3402, 7
      %v3405 = vshll.u32 %v3132, 16
      %v3407 = vor.u32 %v3404, %v3405
      %v3408 = vsel %vm639, %v3400, %v3407
      %v3410 = vshrl.u32 %v3133, 16
      %v3412 = vrot.slane %v3410, 7
      %v3413 = vrot.slane %v3412, 4
      %v3415 = vshrl.u32 %v3134, 16
      %v3417 = vrot.slane %v3415, 7
      %v3418 = vshll.u32 %v3134, 16
      %v3420 = vor.u32 %v3417, %v3418
      %v3421 = vsel %vm639, %v3413, %v3420
      %v3422 = vrot.slane %v3417, 4
      %v3424 = vshrl.u32 %v3135, 16
      %v3426 = vrot.slane %v3424, 7
      %v3427 = vshll.u32 %v3135, 16
      %v3429 = vor.u32 %v3426, %v3427
      %v3430 = vsel %vm639, %v3422, %v3429
      %v3432 = vshrl.u32 %v3136, 16
      %v3434 = vrot.slane %v3432, 7
      %v3435 = vrot.slane %v3434, 4
      %v3437 = vshrl.u32 %v3137, 16
      %v3439 = vrot.slane %v3437, 7
      %v3440 = vshll.u32 %v3137, 16
      %v3442 = vor.u32 %v3439, %v3440
      %v3443 = vsel %vm639, %v3435, %v3442
      %v3444 = vrot.slane %v3439, 4
      %v3446 = vshrl.u32 %v3138, 16
      %v3448 = vrot.slane %v3446, 7
      %v3449 = vshll.u32 %v3138, 16
      %v3451 = vor.u32 %v3448, %v3449
      %v3452 = vsel %vm639, %v3444, %v3451
      %v3454 = vshrl.u32 %v3139, 16
      %v3456 = vrot.slane %v3454, 7
      %v3457 = vrot.slane %v3456, 4
      %v3459 = vshrl.u32 %v3140, 16
      %v3461 = vrot.slane %v3459, 7
      %v3462 = vshll.u32 %v3140, 16
      %v3464 = vor.u32 %v3461, %v3462
      %v3465 = vsel %vm639, %v3457, %v3464
      %v3466 = vrot.slane %v3461, 4
      %v3468 = vshrl.u32 %v3141, 16
      %v3470 = vrot.slane %v3468, 7
      %v3471 = vshll.u32 %v3141, 16
      %v3473 = vor.u32 %v3470, %v3471
      %v3474 = vsel %vm639, %v3466, %v3473
      %v3476 = vshrl.u32 %v3142, 16
      %v3478 = vrot.slane %v3476, 7
      %v3479 = vrot.slane %v3478, 4
      %v3481 = vshrl.u32 %v3143, 16
      %v3483 = vrot.slane %v3481, 7
      %v3484 = vshll.u32 %v3143, 16
      %v3486 = vor.u32 %v3483, %v3484
      %v3487 = vsel %vm639, %v3479, %v3486
      %v3488 = vrot.slane %v3483, 4
      %v3490 = vshrl.u32 %v3144, 16
      %v3492 = vrot.slane %v3490, 7
      %v3493 = vshll.u32 %v3144, 16
      %v3495 = vor.u32 %v3492, %v3493
      %v3496 = vsel %vm639, %v3488, %v3495
      %3497 = vrot.lane.b32.xlu0 %v3157, 48
      %v3498 = vpop.permute.xlu0 %3497
      %3499 = vrot.lane.b32.xlu0 %v3166, 48
      %v3500 = vpop.permute.xlu0 %3499
      %3501 = vrot.lane.b32.xlu0 %v3179, 48
      %v3502 = vpop.permute.xlu0 %3501
      %3503 = vrot.lane.b32.xlu0 %v3188, 48
      %v3504 = vpop.permute.xlu0 %3503
      %3505 = vrot.lane.b32.xlu0 %v3201, 48
      %v3506 = vpop.permute.xlu0 %3505
      %3507 = vrot.lane.b32.xlu0 %v3210, 48
      %v3508 = vpop.permute.xlu0 %3507
      %3509 = vrot.lane.b32.xlu0 %v3223, 48
      %v3510 = vpop.permute.xlu0 %3509
      %3511 = vrot.lane.b32.xlu0 %v3232, 48
      %v3512 = vpop.permute.xlu0 %3511
      %3513 = vrot.lane.b32.xlu0 %v3245, 48
      %v3514 = vpop.permute.xlu0 %3513
      %3515 = vrot.lane.b32.xlu0 %v3254, 48
      %v3516 = vpop.permute.xlu0 %3515
      %3517 = vrot.lane.b32.xlu0 %v3267, 48
      %v3518 = vpop.permute.xlu0 %3517
      %3519 = vrot.lane.b32.xlu0 %v3276, 48
      %v3520 = vpop.permute.xlu0 %3519
      %3521 = vrot.lane.b32.xlu0 %v3289, 48
      %v3522 = vpop.permute.xlu0 %3521
      %3523 = vrot.lane.b32.xlu0 %v3298, 48
      %v3524 = vpop.permute.xlu0 %3523
      %3525 = vrot.lane.b32.xlu0 %v3311, 48
      %v3526 = vpop.permute.xlu0 %3525
      %3527 = vrot.lane.b32.xlu0 %v3320, 48
      %v3528 = vpop.permute.xlu0 %3527
      %3529 = vrot.lane.b32.xlu0 %v3333, 48
      %v3530 = vpop.permute.xlu0 %3529
      %3531 = vrot.lane.b32.xlu0 %v3342, 48
      %v3532 = vpop.permute.xlu0 %3531
      %3533 = vrot.lane.b32.xlu0 %v3355, 48
      %v3534 = vpop.permute.xlu0 %3533
      %3535 = vrot.lane.b32.xlu0 %v3364, 48
      %v3536 = vpop.permute.xlu0 %3535
      %3537 = vrot.lane.b32.xlu0 %v3377, 48
      %v3538 = vpop.permute.xlu0 %3537
      %3539 = vrot.lane.b32.xlu0 %v3386, 48
      %v3540 = vpop.permute.xlu0 %3539
      %3541 = vrot.lane.b32.xlu0 %v3399, 48
      %v3542 = vpop.permute.xlu0 %3541
      %3543 = vrot.lane.b32.xlu0 %v3408, 48
      %v3544 = vpop.permute.xlu0 %3543
      %3545 = vrot.lane.b32.xlu0 %v3421, 48
      %v3546 = vpop.permute.xlu0 %3545
      %3547 = vrot.lane.b32.xlu0 %v3430, 48
      %v3548 = vpop.permute.xlu0 %3547
      %3549 = vrot.lane.b32.xlu0 %v3443, 48
      %v3550 = vpop.permute.xlu0 %3549
      %3551 = vrot.lane.b32.xlu0 %v3452, 48
      %v3552 = vpop.permute.xlu0 %3551
      %3553 = vrot.lane.b32.xlu0 %v3465, 48
      %v3554 = vpop.permute.xlu0 %3553
      %3555 = vrot.lane.b32.xlu0 %v3474, 48
      %v3556 = vpop.permute.xlu0 %3555
      %3557 = vrot.lane.b32.xlu0 %v3487, 48
      %v3558 = vpop.permute.xlu0 %3557
      %3559 = vrot.lane.b32.xlu0 %v3496, 48
      %v3560 = vpop.permute.xlu0 %3559
      %vm3593 = vcmask 454016
      %3594 = vst.msk [vmem:[#allocation3] sm:$0xf] %vm3593, %v3498
      %3595 = vst.msk [vmem:[#allocation3 + $0x4] sm:$0xf] %vm3593, %v3500
      %3596 = vst.msk [vmem:[#allocation3 + $0x8] sm:$0xf] %vm3593, %v3502
      %3597 = vst.msk [vmem:[#allocation3 + $0xc] sm:$0xf] %vm3593, %v3504
      %3598 = vst.msk [vmem:[#allocation3 + $0x10] sm:$0xf] %vm3593, %v3506
      %3599 = vst.msk [vmem:[#allocation3 + $0x14] sm:$0xf] %vm3593, %v3508
      %3600 = vst.msk [vmem:[#allocation3 + $0x18] sm:$0xf] %vm3593, %v3510
      %3601 = vst.msk [vmem:[#allocation3 + $0x1c] sm:$0xf] %vm3593, %v3512
      %3602 = vst.msk [vmem:[#allocation3 + $0x20] sm:$0xf] %vm3593, %v3514
      %3603 = vst.msk [vmem:[#allocation3 + $0x24] sm:$0xf] %vm3593, %v3516
      %3604 = vst.msk [vmem:[#allocation3 + $0x28] sm:$0xf] %vm3593, %v3518
      %3605 = vst.msk [vmem:[#allocation3 + $0x2c] sm:$0xf] %vm3593, %v3520
      %3606 = vst.msk [vmem:[#allocation3 + $0x30] sm:$0xf] %vm3593, %v3522
      %3607 = vst.msk [vmem:[#allocation3 + $0x34] sm:$0xf] %vm3593, %v3524
      %3608 = vst.msk [vmem:[#allocation3 + $0x38] sm:$0xf] %vm3593, %v3526
      %3609 = vst.msk [vmem:[#allocation3 + $0x3c] sm:$0xf] %vm3593, %v3528
      %3610 = vst.msk [vmem:[#allocation3 + $0x40] sm:$0xf] %vm3593, %v3530
      %3611 = vst.msk [vmem:[#allocation3 + $0x44] sm:$0xf] %vm3593, %v3532
      %3612 = vst.msk [vmem:[#allocation3 + $0x48] sm:$0xf] %vm3593, %v3534
      %3613 = vst.msk [vmem:[#allocation3 + $0x4c] sm:$0xf] %vm3593, %v3536
      %3614 = vst.msk [vmem:[#allocation3 + $0x50] sm:$0xf] %vm3593, %v3538
      %3615 = vst.msk [vmem:[#allocation3 + $0x54] sm:$0xf] %vm3593, %v3540
      %3616 = vst.msk [vmem:[#allocation3 + $0x58] sm:$0xf] %vm3593, %v3542
      %3617 = vst.msk [vmem:[#allocation3 + $0x5c] sm:$0xf] %vm3593, %v3544
      %3618 = vst.msk [vmem:[#allocation3 + $0x60] sm:$0xf] %vm3593, %v3546
      %3619 = vst.msk [vmem:[#allocation3 + $0x64] sm:$0xf] %vm3593, %v3548
      %3620 = vst.msk [vmem:[#allocation3 + $0x68] sm:$0xf] %vm3593, %v3550
      %3621 = vst.msk [vmem:[#allocation3 + $0x6c] sm:$0xf] %vm3593, %v3552
      %3622 = vst.msk [vmem:[#allocation3 + $0x70] sm:$0xf] %vm3593, %v3554
      %3623 = vst.msk [vmem:[#allocation3 + $0x74] sm:$0xf] %vm3593, %v3556
      %3624 = vst.msk [vmem:[#allocation3 + $0x78] sm:$0xf] %vm3593, %v3558
      %3625 = vst.msk [vmem:[#allocation3 + $0x7c] sm:$0xf] %vm3593, %v3560
      %v3626 = vld [vmem:[%s3096 + $0x4] sm:$0xf]
      %v3627 = vld [vmem:[%s3096 + $0x8] sm:$0xf]
      %v3628 = vld [vmem:[%s3096 + $0x14] sm:$0xf]
      %v3629 = vld [vmem:[%s3096 + $0x18] sm:$0xf]
      %v3630 = vld [vmem:[%s3096 + $0x24] sm:$0xf]
      %v3631 = vld [vmem:[%s3096 + $0x28] sm:$0xf]
      %v3632 = vld [vmem:[%s3096 + $0x34] sm:$0xf]
      %v3633 = vld [vmem:[%s3096 + $0x38] sm:$0xf]
      %v3634 = vld [vmem:[%s3096 + $0x44] sm:$0xf]
      %v3635 = vld [vmem:[%s3096 + $0x48] sm:$0xf]
      %v3636 = vld [vmem:[%s3096 + $0x54] sm:$0xf]
      %v3637 = vld [vmem:[%s3096 + $0x58] sm:$0xf]
      %v3638 = vld [vmem:[%s3096 + $0x64] sm:$0xf]
      %v3639 = vld [vmem:[%s3096 + $0x68] sm:$0xf]
      %v3640 = vld [vmem:[%s3096 + $0x74] sm:$0xf]
      %v3641 = vld [vmem:[%s3096 + $0x78] sm:$0xf]
      %v3642 = vld [vmem:[%s3096 + $0x84] sm:$0xf]
      %v3643 = vld [vmem:[%s3096 + $0x88] sm:$0xf]
      %v3644 = vld [vmem:[%s3096 + $0x94] sm:$0xf]
      %v3645 = vld [vmem:[%s3096 + $0x98] sm:$0xf]
      %v3646 = vld [vmem:[%s3096 + $0xa4] sm:$0xf]
      %v3647 = vld [vmem:[%s3096 + $0xa8] sm:$0xf]
      %v3648 = vld [vmem:[%s3096 + $0xb4] sm:$0xf]
      %v3649 = vld [vmem:[%s3096 + $0xb8] sm:$0xf]
      %v3650 = vld [vmem:[%s3096 + $0xc4] sm:$0xf]
      %v3651 = vld [vmem:[%s3096 + $0xc8] sm:$0xf]
      %v3652 = vld [vmem:[%s3096 + $0xd4] sm:$0xf]
      %v3653 = vld [vmem:[%s3096 + $0xd8] sm:$0xf]
      %v3654 = vld [vmem:[%s3096 + $0xe4] sm:$0xf]
      %v3655 = vld [vmem:[%s3096 + $0xe8] sm:$0xf]
      %v3656 = vld [vmem:[%s3096 + $0xf4] sm:$0xf]
      %v3657 = vld [vmem:[%s3096 + $0xf8] sm:$0xf]
      %3690 = vrot.lane.b32.xlu0 %v3626, 56
      %v3691 = vpop.permute.xlu0 %3690
      %3692 = vrot.lane.b32.xlu0 %v3627, 56
      %v3693 = vpop.permute.xlu0 %3692
      %3694 = vrot.lane.b32.xlu0 %v3628, 56
      %v3695 = vpop.permute.xlu0 %3694
      %3696 = vrot.lane.b32.xlu0 %v3629, 56
      %v3697 = vpop.permute.xlu0 %3696
      %3698 = vrot.lane.b32.xlu0 %v3630, 56
      %v3699 = vpop.permute.xlu0 %3698
      %3700 = vrot.lane.b32.xlu0 %v3631, 56
      %v3701 = vpop.permute.xlu0 %3700
      %3702 = vrot.lane.b32.xlu0 %v3632, 56
      %v3703 = vpop.permute.xlu0 %3702
      %3704 = vrot.lane.b32.xlu0 %v3633, 56
      %v3705 = vpop.permute.xlu0 %3704
      %3706 = vrot.lane.b32.xlu0 %v3634, 56
      %v3707 = vpop.permute.xlu0 %3706
      %3708 = vrot.lane.b32.xlu0 %v3635, 56
      %v3709 = vpop.permute.xlu0 %3708
      %3710 = vrot.lane.b32.xlu0 %v3636, 56
      %v3711 = vpop.permute.xlu0 %3710
      %3712 = vrot.lane.b32.xlu0 %v3637, 56
      %v3713 = vpop.permute.xlu0 %3712
      %3714 = vrot.lane.b32.xlu0 %v3638, 56
      %v3715 = vpop.permute.xlu0 %3714
      %3716 = vrot.lane.b32.xlu0 %v3639, 56
      %v3717 = vpop.permute.xlu0 %3716
      %3718 = vrot.lane.b32.xlu0 %v3640, 56
      %v3719 = vpop.permute.xlu0 %3718
      %3720 = vrot.lane.b32.xlu0 %v3641, 56
      %v3721 = vpop.permute.xlu0 %3720
      %3722 = vrot.lane.b32.xlu0 %v3642, 56
      %v3723 = vpop.permute.xlu0 %3722
      %3724 = vrot.lane.b32.xlu0 %v3643, 56
      %v3725 = vpop.permute.xlu0 %3724
      %3726 = vrot.lane.b32.xlu0 %v3644, 56
      %v3727 = vpop.permute.xlu0 %3726
      %3728 = vrot.lane.b32.xlu0 %v3645, 56
      %v3729 = vpop.permute.xlu0 %3728
      %3730 = vrot.lane.b32.xlu0 %v3646, 56
      %v3731 = vpop.permute.xlu0 %3730
      %3732 = vrot.lane.b32.xlu0 %v3647, 56
      %v3733 = vpop.permute.xlu0 %3732
      %3734 = vrot.lane.b32.xlu0 %v3648, 56
      %v3735 = vpop.permute.xlu0 %3734
      %3736 = vrot.lane.b32.xlu0 %v3649, 56
      %v3737 = vpop.permute.xlu0 %3736
      %3738 = vrot.lane.b32.xlu0 %v3650, 56
      %v3739 = vpop.permute.xlu0 %3738
      %3740 = vrot.lane.b32.xlu0 %v3651, 56
      %v3741 = vpop.permute.xlu0 %3740
      %3742 = vrot.lane.b32.xlu0 %v3652, 56
      %v3743 = vpop.permute.xlu0 %3742
      %3744 = vrot.lane.b32.xlu0 %v3653, 56
      %v3745 = vpop.permute.xlu0 %3744
      %3746 = vrot.lane.b32.xlu0 %v3654, 56
      %v3747 = vpop.permute.xlu0 %3746
      %3748 = vrot.lane.b32.xlu0 %v3655, 56
      %v3749 = vpop.permute.xlu0 %3748
      %3750 = vrot.lane.b32.xlu0 %v3656, 56
      %v3751 = vpop.permute.xlu0 %3750
      %3752 = vrot.lane.b32.xlu0 %v3657, 56
      %v3753 = vpop.permute.xlu0 %3752
      %vm3786 = vcmask 519616
      %3787 = vst.msk [vmem:[#allocation3] sm:$0xf] %vm3786, %v3691
      %3788 = vst.msk [vmem:[#allocation3 + $0x4] sm:$0xf] %vm3786, %v3693
      %3789 = vst.msk [vmem:[#allocation3 + $0x8] sm:$0xf] %vm3786, %v3695
      %3790 = vst.msk [vmem:[#allocation3 + $0xc] sm:$0xf] %vm3786, %v3697
      %3791 = vst.msk [vmem:[#allocation3 + $0x10] sm:$0xf] %vm3786, %v3699
      %3792 = vst.msk [vmem:[#allocation3 + $0x14] sm:$0xf] %vm3786, %v3701
      %3793 = vst.msk [vmem:[#allocation3 + $0x18] sm:$0xf] %vm3786, %v3703
      %3794 = vst.msk [vmem:[#allocation3 + $0x1c] sm:$0xf] %vm3786, %v3705
      %3795 = vst.msk [vmem:[#allocation3 + $0x20] sm:$0xf] %vm3786, %v3707
      %3796 = vst.msk [vmem:[#allocation3 + $0x24] sm:$0xf] %vm3786, %v3709
      %3797 = vst.msk [vmem:[#allocation3 + $0x28] sm:$0xf] %vm3786, %v3711
      %3798 = vst.msk [vmem:[#allocation3 + $0x2c] sm:$0xf] %vm3786, %v3713
      %3799 = vst.msk [vmem:[#allocation3 + $0x30] sm:$0xf] %vm3786, %v3715
      %3800 = vst.msk [vmem:[#allocation3 + $0x34] sm:$0xf] %vm3786, %v3717
      %3801 = vst.msk [vmem:[#allocation3 + $0x38] sm:$0xf] %vm3786, %v3719
      %3802 = vst.msk [vmem:[#allocation3 + $0x3c] sm:$0xf] %vm3786, %v3721
      %3803 = vst.msk [vmem:[#allocation3 + $0x40] sm:$0xf] %vm3786, %v3723
      %3804 = vst.msk [vmem:[#allocation3 + $0x44] sm:$0xf] %vm3786, %v3725
      %3805 = vst.msk [vmem:[#allocation3 + $0x48] sm:$0xf] %vm3786, %v3727
      %3806 = vst.msk [vmem:[#allocation3 + $0x4c] sm:$0xf] %vm3786, %v3729
      %3807 = vst.msk [vmem:[#allocation3 + $0x50] sm:$0xf] %vm3786, %v3731
      %3808 = vst.msk [vmem:[#allocation3 + $0x54] sm:$0xf] %vm3786, %v3733
      %3809 = vst.msk [vmem:[#allocation3 + $0x58] sm:$0xf] %vm3786, %v3735
      %3810 = vst.msk [vmem:[#allocation3 + $0x5c] sm:$0xf] %vm3786, %v3737
      %3811 = vst.msk [vmem:[#allocation3 + $0x60] sm:$0xf] %vm3786, %v3739
      %3812 = vst.msk [vmem:[#allocation3 + $0x64] sm:$0xf] %vm3786, %v3741
      %3813 = vst.msk [vmem:[#allocation3 + $0x68] sm:$0xf] %vm3786, %v3743
      %3814 = vst.msk [vmem:[#allocation3 + $0x6c] sm:$0xf] %vm3786, %v3745
      %3815 = vst.msk [vmem:[#allocation3 + $0x70] sm:$0xf] %vm3786, %v3747
      %3816 = vst.msk [vmem:[#allocation3 + $0x74] sm:$0xf] %vm3786, %v3749
      %3817 = vst.msk [vmem:[#allocation3 + $0x78] sm:$0xf] %vm3786, %v3751
      %3818 = vst.msk [vmem:[#allocation3 + $0x7c] sm:$0xf] %vm3786, %v3753
      %v3819 = vld [vmem:[%s3096 + $0x4] sm:$0xf]
      %v3820 = vld [vmem:[%s3096 + $0x8] sm:$0xf]
      %v3821 = vld [vmem:[%s3096 + $0xc] sm:$0x1]
      %v3822 = vld [vmem:[%s3096 + $0x14] sm:$0xf]
      %v3823 = vld [vmem:[%s3096 + $0x18] sm:$0xf]
      %v3824 = vld [vmem:[%s3096 + $0x1c] sm:$0x1]
      %v3825 = vld [vmem:[%s3096 + $0x24] sm:$0xf]
      %v3826 = vld [vmem:[%s3096 + $0x28] sm:$0xf]
      %v3827 = vld [vmem:[%s3096 + $0x2c] sm:$0x1]
      %v3828 = vld [vmem:[%s3096 + $0x34] sm:$0xf]
      %v3829 = vld [vmem:[%s3096 + $0x38] sm:$0xf]
      %v3830 = vld [vmem:[%s3096 + $0x3c] sm:$0x1]
      %v3831 = vld [vmem:[%s3096 + $0x44] sm:$0xf]
      %v3832 = vld [vmem:[%s3096 + $0x48] sm:$0xf]
      %v3833 = vld [vmem:[%s3096 + $0x4c] sm:$0x1]
      %v3834 = vld [vmem:[%s3096 + $0x54] sm:$0xf]
      %v3835 = vld [vmem:[%s3096 + $0x58] sm:$0xf]
      %v3836 = vld [vmem:[%s3096 + $0x5c] sm:$0x1]
      %v3837 = vld [vmem:[%s3096 + $0x64] sm:$0xf]
      %v3838 = vld [vmem:[%s3096 + $0x68] sm:$0xf]
      %v3839 = vld [vmem:[%s3096 + $0x6c] sm:$0x1]
      %v3840 = vld [vmem:[%s3096 + $0x74] sm:$0xf]
      %v3841 = vld [vmem:[%s3096 + $0x78] sm:$0xf]
      %v3842 = vld [vmem:[%s3096 + $0x7c] sm:$0x1]
      %v3843 = vld [vmem:[%s3096 + $0x84] sm:$0xf]
      %v3844 = vld [vmem:[%s3096 + $0x88] sm:$0xf]
      %v3845 = vld [vmem:[%s3096 + $0x8c] sm:$0x1]
      %v3846 = vld [vmem:[%s3096 + $0x94] sm:$0xf]
      %v3847 = vld [vmem:[%s3096 + $0x98] sm:$0xf]
      %v3848 = vld [vmem:[%s3096 + $0x9c] sm:$0x1]
      %v3849 = vld [vmem:[%s3096 + $0xa4] sm:$0xf]
      %v3850 = vld [vmem:[%s3096 + $0xa8] sm:$0xf]
      %v3851 = vld [vmem:[%s3096 + $0xac] sm:$0x1]
      %v3852 = vld [vmem:[%s3096 + $0xb4] sm:$0xf]
      %v3853 = vld [vmem:[%s3096 + $0xb8] sm:$0xf]
      %v3854 = vld [vmem:[%s3096 + $0xbc] sm:$0x1]
      %v3855 = vld [vmem:[%s3096 + $0xc4] sm:$0xf]
      %v3856 = vld [vmem:[%s3096 + $0xc8] sm:$0xf]
      %v3857 = vld [vmem:[%s3096 + $0xcc] sm:$0x1]
      %v3858 = vld [vmem:[%s3096 + $0xd4] sm:$0xf]
      %v3859 = vld [vmem:[%s3096 + $0xd8] sm:$0xf]
      %v3860 = vld [vmem:[%s3096 + $0xdc] sm:$0x1]
      %v3861 = vld [vmem:[%s3096 + $0xe4] sm:$0xf]
      %v3862 = vld [vmem:[%s3096 + $0xe8] sm:$0xf]
      %v3863 = vld [vmem:[%s3096 + $0xec] sm:$0x1]
      %v3864 = vld [vmem:[%s3096 + $0xf4] sm:$0xf]
      %v3865 = vld [vmem:[%s3096 + $0xf8] sm:$0xf]
      %v3866 = vld [vmem:[%s3096 + $0xfc] sm:$0x1]
      %v3868 = vshrl.u32 %v3819, 16
      %v3870 = vrot.slane %v3868, 4
      %v3871 = vshll.u32 %v3819, 16
      %v3873 = vrot.slane %v3871, 5
      %v3874 = vor.u32 %v3870, %v3873
      %v3875 = vrot.slane %v3874, 4
      %v3877 = vshll.u32 %v3820, 16
      %v3879 = vrot.slane %v3877, 5
      %v3880 = vsel %vm1299, %v3875, %v3879
      %v3881 = vshrl.u32 %v3820, 16
      %v3883 = vrot.slane %v3881, 4
      %v3884 = vor.u32 %v3883, %v3879
      %v3885 = vrot.slane %v3884, 4
      %v3887 = vshll.u32 %v3821, 16
      %v3889 = vrot.slane %v3887, 5
      %v3890 = vsel %vm1299, %v3885, %v3889
      %v3892 = vshrl.u32 %v3822, 16
      %v3894 = vrot.slane %v3892, 4
      %v3895 = vshll.u32 %v3822, 16
      %v3897 = vrot.slane %v3895, 5
      %v3898 = vor.u32 %v3894, %v3897
      %v3899 = vrot.slane %v3898, 4
      %v3901 = vshll.u32 %v3823, 16
      %v3903 = vrot.slane %v3901, 5
      %v3904 = vsel %vm1299, %v3899, %v3903
      %v3905 = vshrl.u32 %v3823, 16
      %v3907 = vrot.slane %v3905, 4
      %v3908 = vor.u32 %v3907, %v3903
      %v3909 = vrot.slane %v3908, 4
      %v3911 = vshll.u32 %v3824, 16
      %v3913 = vrot.slane %v3911, 5
      %v3914 = vsel %vm1299, %v3909, %v3913
      %v3916 = vshrl.u32 %v3825, 16
      %v3918 = vrot.slane %v3916, 4
      %v3919 = vshll.u32 %v3825, 16
      %v3921 = vrot.slane %v3919, 5
      %v3922 = vor.u32 %v3918, %v3921
      %v3923 = vrot.slane %v3922, 4
      %v3925 = vshll.u32 %v3826, 16
      %v3927 = vrot.slane %v3925, 5
      %v3928 = vsel %vm1299, %v3923, %v3927
      %v3929 = vshrl.u32 %v3826, 16
      %v3931 = vrot.slane %v3929, 4
      %v3932 = vor.u32 %v3931, %v3927
      %v3933 = vrot.slane %v3932, 4
      %v3935 = vshll.u32 %v3827, 16
      %v3937 = vrot.slane %v3935, 5
      %v3938 = vsel %vm1299, %v3933, %v3937
      %v3940 = vshrl.u32 %v3828, 16
      %v3942 = vrot.slane %v3940, 4
      %v3943 = vshll.u32 %v3828, 16
      %v3945 = vrot.slane %v3943, 5
      %v3946 = vor.u32 %v3942, %v3945
      %v3947 = vrot.slane %v3946, 4
      %v3949 = vshll.u32 %v3829, 16
      %v3951 = vrot.slane %v3949, 5
      %v3952 = vsel %vm1299, %v3947, %v3951
      %v3953 = vshrl.u32 %v3829, 16
      %v3955 = vrot.slane %v3953, 4
      %v3956 = vor.u32 %v3955, %v3951
      %v3957 = vrot.slane %v3956, 4
      %v3959 = vshll.u32 %v3830, 16
      %v3961 = vrot.slane %v3959, 5
      %v3962 = vsel %vm1299, %v3957, %v3961
      %v3964 = vshrl.u32 %v3831, 16
      %v3966 = vrot.slane %v3964, 4
      %v3967 = vshll.u32 %v3831, 16
      %v3969 = vrot.slane %v3967, 5
      %v3970 = vor.u32 %v3966, %v3969
      %v3971 = vrot.slane %v3970, 4
      %v3973 = vshll.u32 %v3832, 16
      %v3975 = vrot.slane %v3973, 5
      %v3976 = vsel %vm1299, %v3971, %v3975
      %v3977 = vshrl.u32 %v3832, 16
      %v3979 = vrot.slane %v3977, 4
      %v3980 = vor.u32 %v3979, %v3975
      %v3981 = vrot.slane %v3980, 4
      %v3983 = vshll.u32 %v3833, 16
      %v3985 = vrot.slane %v3983, 5
      %v3986 = vsel %vm1299, %v3981, %v3985
      %v3988 = vshrl.u32 %v3834, 16
      %v3990 = vrot.slane %v3988, 4
      %v3991 = vshll.u32 %v3834, 16
      %v3993 = vrot.slane %v3991, 5
      %v3994 = vor.u32 %v3990, %v3993
      %v3995 = vrot.slane %v3994, 4
      %v3997 = vshll.u32 %v3835, 16
      %v3999 = vrot.slane %v3997, 5
      %v4000 = vsel %vm1299, %v3995, %v3999
      %v4001 = vshrl.u32 %v3835, 16
      %v4003 = vrot.slane %v4001, 4
      %v4004 = vor.u32 %v4003, %v3999
      %v4005 = vrot.slane %v4004, 4
      %v4007 = vshll.u32 %v3836, 16
      %v4009 = vrot.slane %v4007, 5
      %v4010 = vsel %vm1299, %v4005, %v4009
      %v4012 = vshrl.u32 %v3837, 16
      %v4014 = vrot.slane %v4012, 4
      %v4015 = vshll.u32 %v3837, 16
      %v4017 = vrot.slane %v4015, 5
      %v4018 = vor.u32 %v4014, %v4017
      %v4019 = vrot.slane %v4018, 4
      %v4021 = vshll.u32 %v3838, 16
      %v4023 = vrot.slane %v4021, 5
      %v4024 = vsel %vm1299, %v4019, %v4023
      %v4025 = vshrl.u32 %v3838, 16
      %v4027 = vrot.slane %v4025, 4
      %v4028 = vor.u32 %v4027, %v4023
      %v4029 = vrot.slane %v4028, 4
      %v4031 = vshll.u32 %v3839, 16
      %v4033 = vrot.slane %v4031, 5
      %v4034 = vsel %vm1299, %v4029, %v4033
      %v4036 = vshrl.u32 %v3840, 16
      %v4038 = vrot.slane %v4036, 4
      %v4039 = vshll.u32 %v3840, 16
      %v4041 = vrot.slane %v4039, 5
      %v4042 = vor.u32 %v4038, %v4041
      %v4043 = vrot.slane %v4042, 4
      %v4045 = vshll.u32 %v3841, 16
      %v4047 = vrot.slane %v4045, 5
      %v4048 = vsel %vm1299, %v4043, %v4047
      %v4049 = vshrl.u32 %v3841, 16
      %v4051 = vrot.slane %v4049, 4
      %v4052 = vor.u32 %v4051, %v4047
      %v4053 = vrot.slane %v4052, 4
      %v4055 = vshll.u32 %v3842, 16
      %v4057 = vrot.slane %v4055, 5
      %v4058 = vsel %vm1299, %v4053, %v4057
      %v4060 = vshrl.u32 %v3843, 16
      %v4062 = vrot.slane %v4060, 4
      %v4063 = vshll.u32 %v3843, 16
      %v4065 = vrot.slane %v4063, 5
      %v4066 = vor.u32 %v4062, %v4065
      %v4067 = vrot.slane %v4066, 4
      %v4069 = vshll.u32 %v3844, 16
      %v4071 = vrot.slane %v4069, 5
      %v4072 = vsel %vm1299, %v4067, %v4071
      %v4073 = vshrl.u32 %v3844, 16
      %v4075 = vrot.slane %v4073, 4
      %v4076 = vor.u32 %v4075, %v4071
      %v4077 = vrot.slane %v4076, 4
      %v4079 = vshll.u32 %v3845, 16
      %v4081 = vrot.slane %v4079, 5
      %v4082 = vsel %vm1299, %v4077, %v4081
      %v4084 = vshrl.u32 %v3846, 16
      %v4086 = vrot.slane %v4084, 4
      %v4087 = vshll.u32 %v3846, 16
      %v4089 = vrot.slane %v4087, 5
      %v4090 = vor.u32 %v4086, %v4089
      %v4091 = vrot.slane %v4090, 4
      %v4093 = vshll.u32 %v3847, 16
      %v4095 = vrot.slane %v4093, 5
      %v4096 = vsel %vm1299, %v4091, %v4095
      %v4097 = vshrl.u32 %v3847, 16
      %v4099 = vrot.slane %v4097, 4
      %v4100 = vor.u32 %v4099, %v4095
      %v4101 = vrot.slane %v4100, 4
      %v4103 = vshll.u32 %v3848, 16
      %v4105 = vrot.slane %v4103, 5
      %v4106 = vsel %vm1299, %v4101, %v4105
      %v4108 = vshrl.u32 %v3849, 16
      %v4110 = vrot.slane %v4108, 4
      %v4111 = vshll.u32 %v3849, 16
      %v4113 = vrot.slane %v4111, 5
      %v4114 = vor.u32 %v4110, %v4113
      %v4115 = vrot.slane %v4114, 4
      %v4117 = vshll.u32 %v3850, 16
      %v4119 = vrot.slane %v4117, 5
      %v4120 = vsel %vm1299, %v4115, %v4119
      %v4121 = vshrl.u32 %v3850, 16
      %v4123 = vrot.slane %v4121, 4
      %v4124 = vor.u32 %v4123, %v4119
      %v4125 = vrot.slane %v4124, 4
      %v4127 = vshll.u32 %v3851, 16
      %v4129 = vrot.slane %v4127, 5
      %v4130 = vsel %vm1299, %v4125, %v4129
      %v4132 = vshrl.u32 %v3852, 16
      %v4134 = vrot.slane %v4132, 4
      %v4135 = vshll.u32 %v3852, 16
      %v4137 = vrot.slane %v4135, 5
      %v4138 = vor.u32 %v4134, %v4137
      %v4139 = vrot.slane %v4138, 4
      %v4141 = vshll.u32 %v3853, 16
      %v4143 = vrot.slane %v4141, 5
      %v4144 = vsel %vm1299, %v4139, %v4143
      %v4145 = vshrl.u32 %v3853, 16
      %v4147 = vrot.slane %v4145, 4
      %v4148 = vor.u32 %v4147, %v4143
      %v4149 = vrot.slane %v4148, 4
      %v4151 = vshll.u32 %v3854, 16
      %v4153 = vrot.slane %v4151, 5
      %v4154 = vsel %vm1299, %v4149, %v4153
      %v4156 = vshrl.u32 %v3855, 16
      %v4158 = vrot.slane %v4156, 4
      %v4159 = vshll.u32 %v3855, 16
      %v4161 = vrot.slane %v4159, 5
      %v4162 = vor.u32 %v4158, %v4161
      %v4163 = vrot.slane %v4162, 4
      %v4165 = vshll.u32 %v3856, 16
      %v4167 = vrot.slane %v4165, 5
      %v4168 = vsel %vm1299, %v4163, %v4167
      %v4169 = vshrl.u32 %v3856, 16
      %v4171 = vrot.slane %v4169, 4
      %v4172 = vor.u32 %v4171, %v4167
      %v4173 = vrot.slane %v4172, 4
      %v4175 = vshll.u32 %v3857, 16
      %v4177 = vrot.slane %v4175, 5
      %v4178 = vsel %vm1299, %v4173, %v4177
      %v4180 = vshrl.u32 %v3858, 16
      %v4182 = vrot.slane %v4180, 4
      %v4183 = vshll.u32 %v3858, 16
      %v4185 = vrot.slane %v4183, 5
      %v4186 = vor.u32 %v4182, %v4185
      %v4187 = vrot.slane %v4186, 4
      %v4189 = vshll.u32 %v3859, 16
      %v4191 = vrot.slane %v4189, 5
      %v4192 = vsel %vm1299, %v4187, %v4191
      %v4193 = vshrl.u32 %v3859, 16
      %v4195 = vrot.slane %v4193, 4
      %v4196 = vor.u32 %v4195, %v4191
      %v4197 = vrot.slane %v4196, 4
      %v4199 = vshll.u32 %v3860, 16
      %v4201 = vrot.slane %v4199, 5
      %v4202 = vsel %vm1299, %v4197, %v4201
      %v4204 = vshrl.u32 %v3861, 16
      %v4206 = vrot.slane %v4204, 4
      %v4207 = vshll.u32 %v3861, 16
      %v4209 = vrot.slane %v4207, 5
      %v4210 = vor.u32 %v4206, %v4209
      %v4211 = vrot.slane %v4210, 4
      %v4213 = vshll.u32 %v3862, 16
      %v4215 = vrot.slane %v4213, 5
      %v4216 = vsel %vm1299, %v4211, %v4215
      %v4217 = vshrl.u32 %v3862, 16
      %v4219 = vrot.slane %v4217, 4
      %v4220 = vor.u32 %v4219, %v4215
      %v4221 = vrot.slane %v4220, 4
      %v4223 = vshll.u32 %v3863, 16
      %v4225 = vrot.slane %v4223, 5
      %v4226 = vsel %vm1299, %v4221, %v4225
      %v4228 = vshrl.u32 %v3864, 16
      %v4230 = vrot.slane %v4228, 4
      %v4231 = vshll.u32 %v3864, 16
      %v4233 = vrot.slane %v4231, 5
      %v4234 = vor.u32 %v4230, %v4233
      %v4235 = vrot.slane %v4234, 4
      %v4237 = vshll.u32 %v3865, 16
      %v4239 = vrot.slane %v4237, 5
      %v4240 = vsel %vm1299, %v4235, %v4239
      %v4241 = vshrl.u32 %v3865, 16
      %v4243 = vrot.slane %v4241, 4
      %v4244 = vor.u32 %v4243, %v4239
      %v4245 = vrot.slane %v4244, 4
      %v4247 = vshll.u32 %v3866, 16
      %v4249 = vrot.slane %v4247, 5
      %v4250 = vsel %vm1299, %v4245, %v4249
      %4251 = vrot.lane.b32.xlu0 %v3880, 64
      %v4252 = vpop.permute.xlu0 %4251
      %4253 = vrot.lane.b32.xlu0 %v3890, 64
      %v4254 = vpop.permute.xlu0 %4253
      %4255 = vrot.lane.b32.xlu0 %v3904, 64
      %v4256 = vpop.permute.xlu0 %4255
      %4257 = vrot.lane.b32.xlu0 %v3914, 64
      %v4258 = vpop.permute.xlu0 %4257
      %4259 = vrot.lane.b32.xlu0 %v3928, 64
      %v4260 = vpop.permute.xlu0 %4259
      %4261 = vrot.lane.b32.xlu0 %v3938, 64
      %v4262 = vpop.permute.xlu0 %4261
      %4263 = vrot.lane.b32.xlu0 %v3952, 64
      %v4264 = vpop.permute.xlu0 %4263
      %4265 = vrot.lane.b32.xlu0 %v3962, 64
      %v4266 = vpop.permute.xlu0 %4265
      %4267 = vrot.lane.b32.xlu0 %v3976, 64
      %v4268 = vpop.permute.xlu0 %4267
      %4269 = vrot.lane.b32.xlu0 %v3986, 64
      %v4270 = vpop.permute.xlu0 %4269
      %4271 = vrot.lane.b32.xlu0 %v4000, 64
      %v4272 = vpop.permute.xlu0 %4271
      %4273 = vrot.lane.b32.xlu0 %v4010, 64
      %v4274 = vpop.permute.xlu0 %4273
      %4275 = vrot.lane.b32.xlu0 %v4024, 64
      %v4276 = vpop.permute.xlu0 %4275
      %4277 = vrot.lane.b32.xlu0 %v4034, 64
      %v4278 = vpop.permute.xlu0 %4277
      %4279 = vrot.lane.b32.xlu0 %v4048, 64
      %v4280 = vpop.permute.xlu0 %4279
      %4281 = vrot.lane.b32.xlu0 %v4058, 64
      %v4282 = vpop.permute.xlu0 %4281
      %4283 = vrot.lane.b32.xlu0 %v4072, 64
      %v4284 = vpop.permute.xlu0 %4283
      %4285 = vrot.lane.b32.xlu0 %v4082, 64
      %v4286 = vpop.permute.xlu0 %4285
      %4287 = vrot.lane.b32.xlu0 %v4096, 64
      %v4288 = vpop.permute.xlu0 %4287
      %4289 = vrot.lane.b32.xlu0 %v4106, 64
      %v4290 = vpop.permute.xlu0 %4289
      %4291 = vrot.lane.b32.xlu0 %v4120, 64
      %v4292 = vpop.permute.xlu0 %4291
      %4293 = vrot.lane.b32.xlu0 %v4130, 64
      %v4294 = vpop.permute.xlu0 %4293
      %4295 = vrot.lane.b32.xlu0 %v4144, 64
      %v4296 = vpop.permute.xlu0 %4295
      %4297 = vrot.lane.b32.xlu0 %v4154, 64
      %v4298 = vpop.permute.xlu0 %4297
      %4299 = vrot.lane.b32.xlu0 %v4168, 64
      %v4300 = vpop.permute.xlu0 %4299
      %4301 = vrot.lane.b32.xlu0 %v4178, 64
      %v4302 = vpop.permute.xlu0 %4301
      %4303 = vrot.lane.b32.xlu0 %v4192, 64
      %v4304 = vpop.permute.xlu0 %4303
      %4305 = vrot.lane.b32.xlu0 %v4202, 64
      %v4306 = vpop.permute.xlu0 %4305
      %4307 = vrot.lane.b32.xlu0 %v4216, 64
      %v4308 = vpop.permute.xlu0 %4307
      %4309 = vrot.lane.b32.xlu0 %v4226, 64
      %v4310 = vpop.permute.xlu0 %4309
      %4311 = vrot.lane.b32.xlu0 %v4240, 64
      %v4312 = vpop.permute.xlu0 %4311
      %4313 = vrot.lane.b32.xlu0 %v4250, 64
      %v4314 = vpop.permute.xlu0 %4313
      %vm4347 = vcmask 585216
      %4348 = vst.msk [vmem:[#allocation3] sm:$0xf] %vm4347, %v4252
      %4349 = vst.msk [vmem:[#allocation3 + $0x4] sm:$0xf] %vm4347, %v4254
      %4350 = vst.msk [vmem:[#allocation3 + $0x8] sm:$0xf] %vm4347, %v4256
      %4351 = vst.msk [vmem:[#allocation3 + $0xc] sm:$0xf] %vm4347, %v4258
      %4352 = vst.msk [vmem:[#allocation3 + $0x10] sm:$0xf] %vm4347, %v4260
      %4353 = vst.msk [vmem:[#allocation3 + $0x14] sm:$0xf] %vm4347, %v4262
      %4354 = vst.msk [vmem:[#allocation3 + $0x18] sm:$0xf] %vm4347, %v4264
      %4355 = vst.msk [vmem:[#allocation3 + $0x1c] sm:$0xf] %vm4347, %v4266
      %4356 = vst.msk [vmem:[#allocation3 + $0x20] sm:$0xf] %vm4347, %v4268
      %4357 = vst.msk [vmem:[#allocation3 + $0x24] sm:$0xf] %vm4347, %v4270
      %4358 = vst.msk [vmem:[#allocation3 + $0x28] sm:$0xf] %vm4347, %v4272
      %4359 = vst.msk [vmem:[#allocation3 + $0x2c] sm:$0xf] %vm4347, %v4274
      %4360 = vst.msk [vmem:[#allocation3 + $0x30] sm:$0xf] %vm4347, %v4276
      %4361 = vst.msk [vmem:[#allocation3 + $0x34] sm:$0xf] %vm4347, %v4278
      %4362 = vst.msk [vmem:[#allocation3 + $0x38] sm:$0xf] %vm4347, %v4280
      %4363 = vst.msk [vmem:[#allocation3 + $0x3c] sm:$0xf] %vm4347, %v4282
      %4364 = vst.msk [vmem:[#allocation3 + $0x40] sm:$0xf] %vm4347, %v4284
      %4365 = vst.msk [vmem:[#allocation3 + $0x44] sm:$0xf] %vm4347, %v4286
      %4366 = vst.msk [vmem:[#allocation3 + $0x48] sm:$0xf] %vm4347, %v4288
      %4367 = vst.msk [vmem:[#allocation3 + $0x4c] sm:$0xf] %vm4347, %v4290
      %4368 = vst.msk [vmem:[#allocation3 + $0x50] sm:$0xf] %vm4347, %v4292
      %4369 = vst.msk [vmem:[#allocation3 + $0x54] sm:$0xf] %vm4347, %v4294
      %4370 = vst.msk [vmem:[#allocation3 + $0x58] sm:$0xf] %vm4347, %v4296
      %4371 = vst.msk [vmem:[#allocation3 + $0x5c] sm:$0xf] %vm4347, %v4298
      %4372 = vst.msk [vmem:[#allocation3 + $0x60] sm:$0xf] %vm4347, %v4300
      %4373 = vst.msk [vmem:[#allocation3 + $0x64] sm:$0xf] %vm4347, %v4302
      %4374 = vst.msk [vmem:[#allocation3 + $0x68] sm:$0xf] %vm4347, %v4304
      %4375 = vst.msk [vmem:[#allocation3 + $0x6c] sm:$0xf] %vm4347, %v4306
      %4376 = vst.msk [vmem:[#allocation3 + $0x70] sm:$0xf] %vm4347, %v4308
      %4377 = vst.msk [vmem:[#allocation3 + $0x74] sm:$0xf] %vm4347, %v4310
      %4378 = vst.msk [vmem:[#allocation3 + $0x78] sm:$0xf] %vm4347, %v4312
      %4379 = vst.msk [vmem:[#allocation3 + $0x7c] sm:$0xf] %vm4347, %v4314
      %v4380 = vld [vmem:[#allocation3] sm:$0xf]
      %v4381 = vld [vmem:[#allocation3 + $0x4] sm:$0xf]
      %v4382 = vld [vmem:[#allocation3 + $0x8] sm:$0xf]
      %v4383 = vld [vmem:[#allocation3 + $0xc] sm:$0xf]
      %v4384 = vld [vmem:[#allocation3 + $0x10] sm:$0xf]
      %v4385 = vld [vmem:[#allocation3 + $0x14] sm:$0xf]
      %v4386 = vld [vmem:[#allocation3 + $0x18] sm:$0xf]
      %v4387 = vld [vmem:[#allocation3 + $0x1c] sm:$0xf]
      %v4388 = vld [vmem:[#allocation3 + $0x20] sm:$0xf]
      %v4389 = vld [vmem:[#allocation3 + $0x24] sm:$0xf]
      %v4390 = vld [vmem:[#allocation3 + $0x28] sm:$0xf]
      %v4391 = vld [vmem:[#allocation3 + $0x2c] sm:$0xf]
      %v4392 = vld [vmem:[#allocation3 + $0x30] sm:$0xf]
      %v4393 = vld [vmem:[#allocation3 + $0x34] sm:$0xf]
      %v4394 = vld [vmem:[#allocation3 + $0x38] sm:$0xf]
      %v4395 = vld [vmem:[#allocation3 + $0x3c] sm:$0xf]
      %v4396 = vld [vmem:[#allocation3 + $0x40] sm:$0xf]
      %v4397 = vld [vmem:[#allocation3 + $0x44] sm:$0xf]
      %v4398 = vld [vmem:[#allocation3 + $0x48] sm:$0xf]
      %v4399 = vld [vmem:[#allocation3 + $0x4c] sm:$0xf]
      %v4400 = vld [vmem:[#allocation3 + $0x50] sm:$0xf]
      %v4401 = vld [vmem:[#allocation3 + $0x54] sm:$0xf]
      %v4402 = vld [vmem:[#allocation3 + $0x58] sm:$0xf]
      %v4403 = vld [vmem:[#allocation3 + $0x5c] sm:$0xf]
      %v4404 = vld [vmem:[#allocation3 + $0x60] sm:$0xf]
      %v4405 = vld [vmem:[#allocation3 + $0x64] sm:$0xf]
      %v4406 = vld [vmem:[#allocation3 + $0x68] sm:$0xf]
      %v4407 = vld [vmem:[#allocation3 + $0x6c] sm:$0xf]
      %v4408 = vld [vmem:[#allocation3 + $0x70] sm:$0xf]
      %v4409 = vld [vmem:[#allocation3 + $0x74] sm:$0xf]
      %v4410 = vld [vmem:[#allocation3 + $0x78] sm:$0xf]
      %v4411 = vld [vmem:[#allocation3 + $0x7c] sm:$0xf]
      %v4412 = vld [vmem:[%s1] sm:$0xf]
      %v4413 = vld [vmem:[%s1 + $0x4] sm:$0xf]
      %v4414 = vld [vmem:[%s1 + $0x8] sm:$0xf]
      %v4415 = vld [vmem:[%s1 + $0xc] sm:$0xf]
      %v4416 = vld [vmem:[%s1 + $0x10] sm:$0xf]
      %v4417 = vld [vmem:[%s1 + $0x14] sm:$0xf]
      %v4418 = vld [vmem:[%s1 + $0x18] sm:$0xf]
      %v4419 = vld [vmem:[%s1 + $0x1c] sm:$0xf]
      %v4420 = vld [vmem:[%s1 + $0x20] sm:$0xf]
      %v4421 = vld [vmem:[%s1 + $0x24] sm:$0xf]
      %v4422 = vld [vmem:[%s1 + $0x28] sm:$0xf]
      %v4423 = vld [vmem:[%s1 + $0x2c] sm:$0xf]
      %v4424 = vld [vmem:[%s1 + $0x30] sm:$0xf]
      %v4425 = vld [vmem:[%s1 + $0x34] sm:$0xf]
      %v4426 = vld [vmem:[%s1 + $0x38] sm:$0xf]
      %v4427 = vld [vmem:[%s1 + $0x3c] sm:$0xf]
      %v4460 = vunpack.c.l.b16 %v4380
      %v4461 = vunpack.c.l.b16 %v4381
      %v4462 = vunpack.c.l.b16 %v4382
      %v4463 = vunpack.c.l.b16 %v4383
      %v4464 = vunpack.c.l.b16 %v4384
      %v4465 = vunpack.c.l.b16 %v4385
      %v4466 = vunpack.c.l.b16 %v4386
      %v4467 = vunpack.c.l.b16 %v4387
      %v4468 = vunpack.c.l.b16 %v4388
      %v4469 = vunpack.c.l.b16 %v4389
      %v4470 = vunpack.c.l.b16 %v4390
      %v4471 = vunpack.c.l.b16 %v4391
      %v4472 = vunpack.c.l.b16 %v4392
      %v4473 = vunpack.c.l.b16 %v4393
      %v4474 = vunpack.c.l.b16 %v4394
      %v4475 = vunpack.c.l.b16 %v4395
      %v4476 = vunpack.c.l.b16 %v4396
      %v4477 = vunpack.c.l.b16 %v4397
      %v4478 = vunpack.c.l.b16 %v4398
      %v4479 = vunpack.c.l.b16 %v4399
      %v4480 = vunpack.c.l.b16 %v4400
      %v4481 = vunpack.c.l.b16 %v4401
      %v4482 = vunpack.c.l.b16 %v4402
      %v4483 = vunpack.c.l.b16 %v4403
      %v4484 = vunpack.c.l.b16 %v4404
      %v4485 = vunpack.c.l.b16 %v4405
      %v4486 = vunpack.c.l.b16 %v4406
      %v4487 = vunpack.c.l.b16 %v4407
      %v4488 = vunpack.c.l.b16 %v4408
      %v4489 = vunpack.c.l.b16 %v4409
      %v4490 = vunpack.c.l.b16 %v4410
      %v4491 = vunpack.c.l.b16 %v4411
      %v4492 = vpack.c.b16 %v4461, %v4460
      %v4493 = vpack.c.b16 %v4463, %v4462
      %v4494 = vpack.c.b16 %v4465, %v4464
      %v4495 = vpack.c.b16 %v4467, %v4466
      %v4496 = vpack.c.b16 %v4469, %v4468
      %v4497 = vpack.c.b16 %v4471, %v4470
      %v4498 = vpack.c.b16 %v4473, %v4472
      %v4499 = vpack.c.b16 %v4475, %v4474
      %v4500 = vpack.c.b16 %v4477, %v4476
      %v4501 = vpack.c.b16 %v4479, %v4478
      %v4502 = vpack.c.b16 %v4481, %v4480
      %v4503 = vpack.c.b16 %v4483, %v4482
      %v4504 = vpack.c.b16 %v4485, %v4484
      %v4505 = vpack.c.b16 %v4487, %v4486
      %v4506 = vpack.c.b16 %v4489, %v4488
      %v4507 = vpack.c.b16 %v4491, %v4490
      %v4540 = vunpack.c.l.b16 %v4412
      %v4541 = vunpack.c.l.b16 %v4413
      %v4542 = vunpack.c.l.b16 %v4414
      %v4543 = vunpack.c.l.b16 %v4415
      %v4544 = vunpack.c.l.b16 %v4416
      %v4545 = vunpack.c.l.b16 %v4417
      %v4546 = vunpack.c.l.b16 %v4418
      %v4547 = vunpack.c.l.b16 %v4419
      %v4548 = vunpack.c.l.b16 %v4420
      %v4549 = vunpack.c.l.b16 %v4421
      %v4550 = vunpack.c.l.b16 %v4422
      %v4551 = vunpack.c.l.b16 %v4423
      %v4552 = vunpack.c.l.b16 %v4424
      %v4553 = vunpack.c.l.b16 %v4425
      %v4554 = vunpack.c.l.b16 %v4426
      %v4555 = vunpack.c.l.b16 %v4427
      %v4556 = vpack.c.b16 %v4541, %v4540
      %v4557 = vpack.c.b16 %v4543, %v4542
      %v4558 = vpack.c.b16 %v4545, %v4544
      %v4559 = vpack.c.b16 %v4547, %v4546
      %v4560 = vpack.c.b16 %v4549, %v4548
      %v4561 = vpack.c.b16 %v4551, %v4550
      %v4562 = vpack.c.b16 %v4553, %v4552
      %v4563 = vpack.c.b16 %v4555, %v4554
      %4572 = vmatpush.bf16.msra.mxu0 %v4563
      %4573 = vmatpush.bf16.msra.mxu0 %v4562
      %4574 = vmatpush.bf16.msra.mxu0 %v4561
      %4575 = vmatpush.bf16.msra.mxu0 %v4560
      %4576 = vmatpush.bf16.msra.mxu0 %v4559
      %4577 = vmatpush.bf16.msra.mxu0 %v4558
      %4578 = vmatpush.bf16.msra.mxu0 %v4557
      %4579 = vmatpush.bf16.msra.mxu0 %v4556
      %4580 = vmatmul.bf16.gmra.mxu0 %v4492
      %v4581 = vpop.f32.mrf.mxu0
      %v4582 = vadd.f32 0.0, %v4581
      %v4583 = vpop.f32.mrf.mxu0
      %v4584 = vadd.f32 0.0, %v4583
      %4585 = vmatmul.bf16.gmra.mxu0 %v4493
      %v4586 = vpop.f32.mrf.mxu0
      %v4587 = vadd.f32 0.0, %v4586
      %v4588 = vpop.f32.mrf.mxu0
      %v4589 = vadd.f32 0.0, %v4588
      %4590 = vmatmul.bf16.gmra.mxu0 %v4494
      %v4591 = vpop.f32.mrf.mxu0
      %v4592 = vadd.f32 0.0, %v4591
      %v4593 = vpop.f32.mrf.mxu0
      %v4594 = vadd.f32 0.0, %v4593
      %4595 = vmatmul.bf16.gmra.mxu0 %v4495
      %v4596 = vpop.f32.mrf.mxu0
      %v4597 = vadd.f32 0.0, %v4596
      %v4598 = vpop.f32.mrf.mxu0
      %v4599 = vadd.f32 0.0, %v4598
      %4600 = vmatmul.bf16.gmra.mxu0 %v4496
      %v4601 = vpop.f32.mrf.mxu0
      %v4602 = vadd.f32 0.0, %v4601
      %v4603 = vpop.f32.mrf.mxu0
      %v4604 = vadd.f32 0.0, %v4603
      %4605 = vmatmul.bf16.gmra.mxu0 %v4497
      %v4606 = vpop.f32.mrf.mxu0
      %v4607 = vadd.f32 0.0, %v4606
      %v4608 = vpop.f32.mrf.mxu0
      %v4609 = vadd.f32 0.0, %v4608
      %4610 = vmatmul.bf16.gmra.mxu0 %v4498
      %v4611 = vpop.f32.mrf.mxu0
      %v4612 = vadd.f32 0.0, %v4611
      %v4613 = vpop.f32.mrf.mxu0
      %v4614 = vadd.f32 0.0, %v4613
      %4615 = vmatmul.bf16.gmra.mxu0 %v4499
      %v4616 = vpop.f32.mrf.mxu0
      %v4617 = vadd.f32 0.0, %v4616
      %v4618 = vpop.f32.mrf.mxu0
      %v4619 = vadd.f32 0.0, %v4618
      %4620 = vmatmul.bf16.gmra.mxu0 %v4500
      %v4621 = vpop.f32.mrf.mxu0
      %v4622 = vadd.f32 0.0, %v4621
      %v4623 = vpop.f32.mrf.mxu0
      %v4624 = vadd.f32 0.0, %v4623
      %4625 = vmatmul.bf16.gmra.mxu0 %v4501
      %v4626 = vpop.f32.mrf.mxu0
      %v4627 = vadd.f32 0.0, %v4626
      %v4628 = vpop.f32.mrf.mxu0
      %v4629 = vadd.f32 0.0, %v4628
      %4630 = vmatmul.bf16.gmra.mxu0 %v4502
      %v4631 = vpop.f32.mrf.mxu0
      %v4632 = vadd.f32 0.0, %v4631
      %v4633 = vpop.f32.mrf.mxu0
      %v4634 = vadd.f32 0.0, %v4633
      %4635 = vmatmul.bf16.gmra.mxu0 %v4503
      %v4636 = vpop.f32.mrf.mxu0
      %v4637 = vadd.f32 0.0, %v4636
      %v4638 = vpop.f32.mrf.mxu0
      %v4639 = vadd.f32 0.0, %v4638
      %4640 = vmatmul.bf16.gmra.mxu0 %v4504
      %v4641 = vpop.f32.mrf.mxu0
      %v4642 = vadd.f32 0.0, %v4641
      %v4643 = vpop.f32.mrf.mxu0
      %v4644 = vadd.f32 0.0, %v4643
      %4645 = vmatmul.bf16.gmra.mxu0 %v4505
      %v4646 = vpop.f32.mrf.mxu0
      %v4647 = vadd.f32 0.0, %v4646
      %v4648 = vpop.f32.mrf.mxu0
      %v4649 = vadd.f32 0.0, %v4648
      %4650 = vmatmul.bf16.gmra.mxu0 %v4506
      %v4651 = vpop.f32.mrf.mxu0
      %v4652 = vadd.f32 0.0, %v4651
      %v4653 = vpop.f32.mrf.mxu0
      %v4654 = vadd.f32 0.0, %v4653
      %4655 = vmatmul.bf16.gmra.mxu0 %v4507
      %v4656 = vpop.f32.mrf.mxu0
      %v4657 = vadd.f32 0.0, %v4656
      %v4658 = vpop.f32.mrf.mxu0
      %v4659 = vadd.f32 0.0, %v4658
      %4660 = vdwg.mxu0
      %vm4661 = vcmask 64512
      %4662 = vst.msk [vmem:[%s258] sm:$0xff] %vm4661, %v4582
      %4663 = vst.msk [vmem:[%s258 + $0x8] sm:$0xff] %vm4661, %v4584
      %4664 = vst.msk [vmem:[%s258 + $0x10] sm:$0xff] %vm4661, %v4587
      %4665 = vst.msk [vmem:[%s258 + $0x18] sm:$0xff] %vm4661, %v4589
      %4666 = vst.msk [vmem:[%s258 + $0x20] sm:$0xff] %vm4661, %v4592
      %4667 = vst.msk [vmem:[%s258 + $0x28] sm:$0xff] %vm4661, %v4594
      %4668 = vst.msk [vmem:[%s258 + $0x30] sm:$0xff] %vm4661, %v4597
      %4669 = vst.msk [vmem:[%s258 + $0x38] sm:$0xff] %vm4661, %v4599
      %4670 = vst.msk [vmem:[%s258 + $0x40] sm:$0xff] %vm4661, %v4602
      %4671 = vst.msk [vmem:[%s258 + $0x48] sm:$0xff] %vm4661, %v4604
      %4672 = vst.msk [vmem:[%s258 + $0x50] sm:$0xff] %vm4661, %v4607
      %4673 = vst.msk [vmem:[%s258 + $0x58] sm:$0xff] %vm4661, %v4609
      %4674 = vst.msk [vmem:[%s258 + $0x60] sm:$0xff] %vm4661, %v4612
      %4675 = vst.msk [vmem:[%s258 + $0x68] sm:$0xff] %vm4661, %v4614
      %4676 = vst.msk [vmem:[%s258 + $0x70] sm:$0xff] %vm4661, %v4617
      %4677 = vst.msk [vmem:[%s258 + $0x78] sm:$0xff] %vm4661, %v4619
      %4678 = vst.msk [vmem:[%s258 + $0x80] sm:$0xff] %vm4661, %v4622
      %4679 = vst.msk [vmem:[%s258 + $0x88] sm:$0xff] %vm4661, %v4624
      %4680 = vst.msk [vmem:[%s258 + $0x90] sm:$0xff] %vm4661, %v4627
      %4681 = vst.msk [vmem:[%s258 + $0x98] sm:$0xff] %vm4661, %v4629
      %4682 = vst.msk [vmem:[%s258 + $0xa0] sm:$0xff] %vm4661, %v4632
      %4683 = vst.msk [vmem:[%s258 + $0xa8] sm:$0xff] %vm4661, %v4634
      %4684 = vst.msk [vmem:[%s258 + $0xb0] sm:$0xff] %vm4661, %v4637
      %4685 = vst.msk [vmem:[%s258 + $0xb8] sm:$0xff] %vm4661, %v4639
      %4686 = vst.msk [vmem:[%s258 + $0xc0] sm:$0xff] %vm4661, %v4642
      %4687 = vst.msk [vmem:[%s258 + $0xc8] sm:$0xff] %vm4661, %v4644
      %4688 = vst.msk [vmem:[%s258 + $0xd0] sm:$0xff] %vm4661, %v4647
      %4689 = vst.msk [vmem:[%s258 + $0xd8] sm:$0xff] %vm4661, %v4649
      %4690 = vst.msk [vmem:[%s258 + $0xe0] sm:$0xff] %vm4661, %v4652
      %4691 = vst.msk [vmem:[%s258 + $0xe8] sm:$0xff] %vm4661, %v4654
      %4692 = vst.msk [vmem:[%s258 + $0xf0] sm:$0xff] %vm4661, %v4657
      %4693 = vst.msk [vmem:[%s258 + $0xf8] sm:$0xff] %vm4661, %v4659
      %v4694 = vsel %vm4661, %v4582, 0.0
      %v4695 = vsel %vm4661, %v4584, 0.0
      %v4696 = vadd.f32 %v4694, %v4695
      %v4697 = vsel %vm4661, %v4587, 0.0
      %v4698 = vadd.f32 %v4696, %v4697
      %v4699 = vsel %vm4661, %v4589, 0.0
      %v4700 = vadd.f32 %v4698, %v4699
      %v4701 = vsel %vm4661, %v4592, 0.0
      %v4702 = vadd.f32 %v4700, %v4701
      %v4703 = vsel %vm4661, %v4594, 0.0
      %v4704 = vadd.f32 %v4702, %v4703
      %v4705 = vsel %vm4661, %v4597, 0.0
      %v4706 = vadd.f32 %v4704, %v4705
      %v4707 = vsel %vm4661, %v4599, 0.0
      %v4708 = vadd.f32 %v4706, %v4707
      %v4709 = vsel %vm4661, %v4602, 0.0
      %v4710 = vadd.f32 %v4708, %v4709
      %v4711 = vsel %vm4661, %v4604, 0.0
      %v4712 = vadd.f32 %v4710, %v4711
      %v4713 = vsel %vm4661, %v4607, 0.0
      %v4714 = vadd.f32 %v4712, %v4713
      %v4715 = vsel %vm4661, %v4609, 0.0
      %v4716 = vadd.f32 %v4714, %v4715
      %v4717 = vsel %vm4661, %v4612, 0.0
      %v4718 = vadd.f32 %v4716, %v4717
      %v4719 = vsel %vm4661, %v4614, 0.0
      %v4720 = vadd.f32 %v4718, %v4719
      %v4721 = vsel %vm4661, %v4617, 0.0
      %v4722 = vadd.f32 %v4720, %v4721
      %v4723 = vsel %vm4661, %v4619, 0.0
      %v4724 = vadd.f32 %v4722, %v4723
      %v4725 = vsel %vm4661, %v4622, 0.0
      %v4726 = vadd.f32 %v4724, %v4725
      %v4727 = vsel %vm4661, %v4624, 0.0
      %v4728 = vadd.f32 %v4726, %v4727
      %v4729 = vsel %vm4661, %v4627, 0.0
      %v4730 = vadd.f32 %v4728, %v4729
      %v4731 = vsel %vm4661, %v4629, 0.0
      %v4732 = vadd.f32 %v4730, %v4731
      %v4733 = vsel %vm4661, %v4632, 0.0
      %v4734 = vadd.f32 %v4732, %v4733
      %v4735 = vsel %vm4661, %v4634, 0.0
      %v4736 = vadd.f32 %v4734, %v4735
      %v4737 = vsel %vm4661, %v4637, 0.0
      %v4738 = vadd.f32 %v4736, %v4737
      %v4739 = vsel %vm4661, %v4639, 0.0
      %v4740 = vadd.f32 %v4738, %v4739
      %v4741 = vsel %vm4661, %v4642, 0.0
      %v4742 = vadd.f32 %v4740, %v4741
      %v4743 = vsel %vm4661, %v4644, 0.0
      %v4744 = vadd.f32 %v4742, %v4743
      %v4745 = vsel %vm4661, %v4647, 0.0
      %v4746 = vadd.f32 %v4744, %v4745
      %v4747 = vsel %vm4661, %v4649, 0.0
      %v4748 = vadd.f32 %v4746, %v4747
      %v4749 = vsel %vm4661, %v4652, 0.0
      %v4750 = vadd.f32 %v4748, %v4749
      %v4751 = vsel %vm4661, %v4654, 0.0
      %v4752 = vadd.f32 %v4750, %v4751
      %v4753 = vsel %vm4661, %v4657, 0.0
      %v4754 = vadd.f32 %v4752, %v4753
      %v4755 = vsel %vm4661, %v4659, 0.0
      %v4756 = vadd.f32 %v4754, %v4755
      %v4757 = vrot.slane %v4756, 4
      %v4758 = vadd.f32 %v4756, %v4757
      %v4759 = vrot.slane %v4758, 2
      %v4760 = vadd.f32 %v4758, %v4759
      %v4761 = vrot.slane %v4760, 1
      %v4762 = vadd.f32 %v4760, %v4761
      %v4763 = vmul.f32 %v4582, %v4582
      %v4764 = vmul.f32 %v4584, %v4584
      %v4765 = vmul.f32 %v4587, %v4587
      %v4766 = vmul.f32 %v4589, %v4589
      %v4767 = vmul.f32 %v4592, %v4592
      %v4768 = vmul.f32 %v4594, %v4594
      %v4769 = vmul.f32 %v4597, %v4597
      %v4770 = vmul.f32 %v4599, %v4599
      %v4771 = vmul.f32 %v4602, %v4602
      %v4772 = vmul.f32 %v4604, %v4604
      %v4773 = vmul.f32 %v4607, %v4607
      %v4774 = vmul.f32 %v4609, %v4609
      %v4775 = vmul.f32 %v4612, %v4612
      %v4776 = vmul.f32 %v4614, %v4614
      %v4777 = vmul.f32 %v4617, %v4617
      %v4778 = vmul.f32 %v4619, %v4619
      %v4779 = vmul.f32 %v4622, %v4622
      %v4780 = vmul.f32 %v4624, %v4624
      %v4781 = vmul.f32 %v4627, %v4627
      %v4782 = vmul.f32 %v4629, %v4629
      %v4783 = vmul.f32 %v4632, %v4632
      %v4784 = vmul.f32 %v4634, %v4634
      %v4785 = vmul.f32 %v4637, %v4637
      %v4786 = vmul.f32 %v4639, %v4639
      %v4787 = vmul.f32 %v4642, %v4642
      %v4788 = vmul.f32 %v4644, %v4644
      %v4789 = vmul.f32 %v4647, %v4647
      %v4790 = vmul.f32 %v4649, %v4649
      %v4791 = vmul.f32 %v4652, %v4652
      %v4792 = vmul.f32 %v4654, %v4654
      %v4793 = vmul.f32 %v4657, %v4657
      %v4794 = vmul.f32 %v4659, %v4659
      %v4795 = vsel %vm4661, %v4763, 0.0
      %v4796 = vsel %vm4661, %v4764, 0.0
      %v4797 = vadd.f32 %v4795, %v4796
      %v4798 = vsel %vm4661, %v4765, 0.0
      %v4799 = vadd.f32 %v4797, %v4798
      %v4800 = vsel %vm4661, %v4766, 0.0
      %v4801 = vadd.f32 %v4799, %v4800
      %v4802 = vsel %vm4661, %v4767, 0.0
      %v4803 = vadd.f32 %v4801, %v4802
      %v4804 = vsel %vm4661, %v4768, 0.0
      %v4805 = vadd.f32 %v4803, %v4804
      %v4806 = vsel %vm4661, %v4769, 0.0
      %v4807 = vadd.f32 %v4805, %v4806
      %v4808 = vsel %vm4661, %v4770, 0.0
      %v4809 = vadd.f32 %v4807, %v4808
      %v4810 = vsel %vm4661, %v4771, 0.0
      %v4811 = vadd.f32 %v4809, %v4810
      %v4812 = vsel %vm4661, %v4772, 0.0
      %v4813 = vadd.f32 %v4811, %v4812
      %v4814 = vsel %vm4661, %v4773, 0.0
      %v4815 = vadd.f32 %v4813, %v4814
      %v4816 = vsel %vm4661, %v4774, 0.0
      %v4817 = vadd.f32 %v4815, %v4816
      %v4818 = vsel %vm4661, %v4775, 0.0
      %v4819 = vadd.f32 %v4817, %v4818
      %v4820 = vsel %vm4661, %v4776, 0.0
      %v4821 = vadd.f32 %v4819, %v4820
      %v4822 = vsel %vm4661, %v4777, 0.0
      %v4823 = vadd.f32 %v4821, %v4822
      %v4824 = vsel %vm4661, %v4778, 0.0
      %v4825 = vadd.f32 %v4823, %v4824
      %v4826 = vsel %vm4661, %v4779, 0.0
      %v4827 = vadd.f32 %v4825, %v4826
      %v4828 = vsel %vm4661, %v4780, 0.0
      %v4829 = vadd.f32 %v4827, %v4828
      %v4830 = vsel %vm4661, %v4781, 0.0
      %v4831 = vadd.f32 %v4829, %v4830
      %v4832 = vsel %vm4661, %v4782, 0.0
      %v4833 = vadd.f32 %v4831, %v4832
      %v4834 = vsel %vm4661, %v4783, 0.0
      %v4835 = vadd.f32 %v4833, %v4834
      %v4836 = vsel %vm4661, %v4784, 0.0
      %v4837 = vadd.f32 %v4835, %v4836
      %v4838 = vsel %vm4661, %v4785, 0.0
      %v4839 = vadd.f32 %v4837, %v4838
      %v4840 = vsel %vm4661, %v4786, 0.0
      %v4841 = vadd.f32 %v4839, %v4840
      %v4842 = vsel %vm4661, %v4787, 0.0
      %v4843 = vadd.f32 %v4841, %v4842
      %v4844 = vsel %vm4661, %v4788, 0.0
      %v4845 = vadd.f32 %v4843, %v4844
      %v4846 = vsel %vm4661, %v4789, 0.0
      %v4847 = vadd.f32 %v4845, %v4846
      %v4848 = vsel %vm4661, %v4790, 0.0
      %v4849 = vadd.f32 %v4847, %v4848
      %v4850 = vsel %vm4661, %v4791, 0.0
      %v4851 = vadd.f32 %v4849, %v4850
      %v4852 = vsel %vm4661, %v4792, 0.0
      %v4853 = vadd.f32 %v4851, %v4852
      %v4854 = vsel %vm4661, %v4793, 0.0
      %v4855 = vadd.f32 %v4853, %v4854
      %v4856 = vsel %vm4661, %v4794, 0.0
      %v4857 = vadd.f32 %v4855, %v4856
      %v4858 = vrot.slane %v4857, 4
      %v4859 = vadd.f32 %v4857, %v4858
      %v4860 = vrot.slane %v4859, 2
      %v4861 = vadd.f32 %v4859, %v4860
      %v4862 = vrot.slane %v4861, 1
      %v4863 = vadd.f32 %v4861, %v4862
      %vm4864 = vcmask 1040384
      %v4865 = vsel %vm4864, %v4762, %v4863
      %vm4866 = vcmask 58368
      %4867 = vst.msk [vmem:[%s266] sm:$0x3] %vm4866, %v4865
      %s4868 = smul.u32 32, %s22
      %p4869 = scmp.lt.s32.totalorder %s21, 1
      %s4870 = scalar_select %p4869, %s21, 1
      %p4871 = scmp.lt.s32.totalorder %s4868, 31
      %s4872 = scalar_select %p4871, %s4868, 31
      %s4873 = smul.addr %s4870, 32
      %s4874 = sadd.s32 %s4872, %s4873
      %s4875 = smul.addr %s4874, 8
      %s4876 = scalar_lea.vmem %s4, %s4875
      %p4877 = scmp.lt.s32.totalorder %s21, 1
      %s4878 = scalar_select %p4877, %s21, 1
      %p4879 = scmp.lt.s32.totalorder %s22, 0
      %s4880 = scalar_select %p4879, %s22, 0
      %s4881 = sadd.s32 %s4880, %s4878
      %s4882 = smul.addr %s4881, 2
      %s4883 = scalar_lea.vmem %s5, %s4882
      // Predicated region
      $region45: #{double_conv.4} parent=35 // pred_check
        %p4884 = pneg %p138
      $region46: #{double_conv.4} parent=35 // pred_check_branch
        %4886 = sbr.rel (%p4884) target = $region48
      $region47: #{double_conv.4} parent=35 // pred_region
        %s4887 = smul.u32 32, %s22
      $region48: #{double_conv.4} parent=35 // pred_fallthru
        _
      // Predicated region
      $region49: #{double_conv.4} parent=35 // pred_check
        %p4888 = pneg %p166
      $region50: #{double_conv.4} parent=35 // pred_check_branch
        %4890 = sbr.rel (%p4888) target = $region52
      $region51: #{double_conv.4} parent=35 // pred_region
        _
      $region52: #{double_conv.4} parent=35 // pred_fallthru
        _
    $region36: #{double_conv.4} parent=5 // pred_fallthru
      _
    %p4891 = scmp.le.s32.totalorder 2, %s12
    // Predicated region
    $region53: #{double_conv.4} parent=5 // pred_check
      %p4892 = pneg %p4891
    $region54: #{double_conv.4} parent=5 // pred_check_branch
      %4894 = sbr.rel (%p4892) target = $region56
    $region55: #{double_conv.4} parent=5 // pred_region
      %s4895 = ssub.s32 %s12, 2
      // Predicated region
      $region57: #{double_conv.4} parent=55 // pred_check
        %p4896 = pneg %p144
      $region58: #{double_conv.4} parent=55 // pred_check_branch
        %4898 = sbr.rel (%p4896) target = $region60
      $region59: #{double_conv.4} parent=55 // pred_region
        %s4899 = smul.u32 32, %s24
        %p4900 = scmp.lt.s32.totalorder %s23, 1
        %s4901 = scalar_select %p4900, %s23, 1
        %p4902 = scmp.lt.s32.totalorder %s4899, 31
        %s4903 = scalar_select %p4902, %s4899, 31
        %s4904 = smul.addr %s4901, 32
        %s4905 = sadd.s32 %s4903, %s4904
        %s4906 = smul.addr %s4905, 8
        %s4907 = scalar_lea.vmem %s4, %s4906
      $region60: #{double_conv.4} parent=55 // pred_fallthru
        _
      // Predicated region
      $region61: #{double_conv.4} parent=55 // pred_check
        %p4908 = pneg %p172
      $region62: #{double_conv.4} parent=55 // pred_check_branch
        %4910 = sbr.rel (%p4908) target = $region64
      $region63: #{double_conv.4} parent=55 // pred_region
        %p4911 = scmp.lt.s32.totalorder %s23, 1
        %s4912 = scalar_select %p4911, %s23, 1
        %p4913 = scmp.lt.s32.totalorder %s24, 0
        %s4914 = scalar_select %p4913, %s24, 0
        %s4915 = sadd.s32 %s4914, %s4912
        %s4916 = smul.addr %s4915, 2
        %s4917 = scalar_lea.vmem %s5, %s4916
      $region64: #{double_conv.4} parent=55 // pred_fallthru
        _
    $region56: #{double_conv.4} parent=5 // pred_fallthru
      _
  $region6: #{double_conv.4} parent=0 // loop_footer
    %s16 = sadd.s32 1, %s12
  $region7: #{double_conv.4} parent=0 // loop_footer_branch
    %11 = sbr.rel target = $region3
  $region8: #{double_conv.4} parent=0 // loop_exit
    _

// kernel: double_conv.3
$region0: #{double_conv.3}
  #allocation0 [shape = 'u32[]', space=smem, size = 0x4, offset = 0x4, fixed_abs, tag = 'smem constant byte address 0x4 - core index']
  #allocation1 [shape = 'u32[72,128]{1,0:T(1,128)}', space=vmem, size = 0x9000, scoped, tag = 'internal scratch']
  #allocation2 [shape = 'bf16[18,32,4]{2,1,0:T(8,128)(2,1)}', space=vmem, size = 0x24000, scoped, tag = 'scratch operand']
  #allocation3 [shape = 'bf16[256,128]{1,0:T(8,128)(2,1)}', space=vmem, size = 0x10000, scoped, tag = 'scratch operand']
  %s0 = inlined_call_operand.vmem [shape: f32[2,16,16,4], index: 0, kind: input, shape index: {}]
  %s1 = inlined_call_operand.vmem [shape: bf16[128,8], index: 1, kind: input, shape index: {}]
  %s2 = inlined_call_operand.vmem [shape: f32[1,4], index: 2, kind: input, shape index: {}, may-alias: {2,3}]
  %s3 = inlined_call_operand.vmem [shape: f32[1,4], index: 3, kind: input, shape index: {}, may-alias: {2,3}]
  %s4 = inlined_call_operand.vmem [shape: f32[2,256,8], index: 4, kind: output, shape index: {0}]
  %s5 = inlined_call_operand.vmem [shape: f32[2,1,2,8], index: 5, kind: output, shape index: {1}]
  %6 = xla_tuple %s4, %s5
  %s7 = sld [smem:[#allocation0]]
  $region65: #{double_conv.3} parent=0
    _
  %s9 = ssub.s32 1, %s7
  %s10 = scalar_select 0, %s9, %s7
  loop: start=0, step=1, limit=4
  $region2: #{double_conv.3} parent=0 // loop_pre_header
    _
  $region3: #{double_conv.3} parent=0 // loop_header
    %s12 = sphi 0, %s16
    %p13 = scmp.ge.s32.totalorder %s12, 4
    %s19 = sphi 0, %s31
    %s20 = sphi 0, %s27
    %s21 = sphi 0, %s19
    %s22 = sphi 0, %s20
    %s23 = sphi 0, %s21
    %s24 = sphi 0, %s22
    %s34 = sphi 0, %s36
    %s37 = sphi 0, %s34
    %s38 = sphi 0, %s37
    %s54 = sphi 0, %s38
    %s58 = sphi 0, %s58
    %s60 = sphi 0, %s58
    %s61 = sphi 0, %s60
    %s75 = sphi 0, %s61
    %s79 = sphi 0, %s79
    %s81 = sphi 0, %s79
    %s82 = sphi 0, %s81
    %s96 = sphi 0, %s82
    %s100 = sphi 0, %s100
    %s102 = sphi 0, %s100
    %s103 = sphi 0, %s102
    %s117 = sphi 0, %s103
    %s125 = sphi 0, %s127
    %s128 = sphi 0, %s125
    %s129 = sphi 0, %s128
    %s145 = sphi 0, %s129
    %s153 = sphi 0, %s155
    %s156 = sphi 0, %s153
    %s157 = sphi 0, %s156
    %s173 = sphi 0, %s157
  $region4: #{double_conv.3} parent=0 // loop_header_branch
    %15 = sbr.rel (%p13) target = $region8
  $region5: #{double_conv.3} parent=0 // loop_body
    %s17 = ssub.s32 %s12, 1
    %s18 = ssub.s32 %s12, 2
    %s25 = sadd.s32 1, %s20
    %p26 = scmp.ge.s32.totalorder %s25, 1
    %s27 = scalar_select %p26, 0, %s25
    %s28 = sadd.s32 1, %s19
    %s29 = scalar_select %p26, %s28, %s19
    %p30 = scmp.ge.s32.totalorder %s29, 2
    %s31 = scalar_select %p30, 0, %s29
    %s32 = ssub.s32 %s19, %s31
    %p33 = scmp.eq.s32.totalorder %s32, 0
    %s35 = sadd.s32 %s34, 1
    %s36 = scalar_select %p33, %s34, %s35
    %p39 = pneg %p33
    %p40 = scmp.eq.s32.totalorder %s12, 1
    %p41 = por %p39, %p40
    %p42 = scmp.ne.s32.totalorder %s34, %s37
    %p43 = scmp.eq.s32.totalorder %s12, 0
    %p44 = por %p42, %p43
    %p45 = scmp.ne.s32.totalorder %s34, %s37
    %p46 = scmp.eq.s32.totalorder %s17, 1
    %p47 = por %p45, %p46
    %p48 = scmp.ne.s32.totalorder %s37, %s38
    %p49 = scmp.eq.s32.totalorder %s17, 0
    %p50 = por %p48, %p49
    %p51 = scmp.ne.s32.totalorder %s37, %s38
    %p52 = scmp.eq.s32.totalorder %s18, 1
    %p53 = por %p51, %p52
    %p55 = scmp.ne.s32.totalorder %s38, %s54
    %p56 = scmp.eq.s32.totalorder %s18, 0
    %p57 = por %p55, %p56
    %s59 = sadd.s32 %s58, 1
    %p62 = scmp.eq.s32.totalorder %s12, 1
    %p63 = scmp.ne.s32.totalorder %s58, %s60
    %p64 = scmp.eq.s32.totalorder %s12, 0
    %p65 = por %p63, %p64
    %p66 = scmp.ne.s32.totalorder %s58, %s60
    %p67 = scmp.eq.s32.totalorder %s17, 1
    %p68 = por %p66, %p67
    %p69 = scmp.ne.s32.totalorder %s60, %s61
    %p70 = scmp.eq.s32.totalorder %s17, 0
    %p71 = por %p69, %p70
    %p72 = scmp.ne.s32.totalorder %s60, %s61
    %p73 = scmp.eq.s32.totalorder %s18, 1
    %p74 = por %p72, %p73
    %p76 = scmp.ne.s32.totalorder %s61, %s75
    %p77 = scmp.eq.s32.totalorder %s18, 0
    %p78 = por %p76, %p77
    %s80 = sadd.s32 %s79, 1
    %p83 = scmp.eq.s32.totalorder %s12, 1
    %p84 = scmp.ne.s32.totalorder %s79, %s81
    %p85 = scmp.eq.s32.totalorder %s12, 0
    %p86 = por %p84, %p85
    %p87 = scmp.ne.s32.totalorder %s79, %s81
    %p88 = scmp.eq.s32.totalorder %s17, 1
    %p89 = por %p87, %p88
    %p90 = scmp.ne.s32.totalorder %s81, %s82
    %p91 = scmp.eq.s32.totalorder %s17, 0
    %p92 = por %p90, %p91
    %p93 = scmp.ne.s32.totalorder %s81, %s82
    %p94 = scmp.eq.s32.totalorder %s18, 1
    %p95 = por %p93, %p94
    %p97 = scmp.ne.s32.totalorder %s82, %s96
    %p98 = scmp.eq.s32.totalorder %s18, 0
    %p99 = por %p97, %p98
    %s101 = sadd.s32 %s100, 1
    %p104 = scmp.eq.s32.totalorder %s12, 1
    %p105 = scmp.ne.s32.totalorder %s100, %s102
    %p106 = scmp.eq.s32.totalorder %s12, 0
    %p107 = por %p105, %p106
    %p108 = scmp.ne.s32.totalorder %s100, %s102
    %p109 = scmp.eq.s32.totalorder %s17, 1
    %p110 = por %p108, %p109
    %p111 = scmp.ne.s32.totalorder %s102, %s103
    %p112 = scmp.eq.s32.totalorder %s17, 0
    %p113 = por %p111, %p112
    %p114 = scmp.ne.s32.totalorder %s102, %s103
    %p115 = scmp.eq.s32.totalorder %s18, 1
    %p116 = por %p114, %p115
    %p118 = scmp.ne.s32.totalorder %s103, %s117
    %p119 = scmp.eq.s32.totalorder %s18, 0
    %p120 = por %p118, %p119
    %s121 = ssub.s32 %s19, %s31
    %s122 = ssub.s32 %s20, %s27
    %s123 = sor.u32 %s121, %s122
    %p124 = scmp.eq.s32.totalorder %s123, 0
    %s126 = sadd.s32 %s125, 1
    %s127 = scalar_select %p124, %s125, %s126
    %p130 = pneg %p124
    %p131 = scmp.eq.s32.totalorder %s12, 1
    %p132 = por %p130, %p131
    %p133 = scmp.ne.s32.totalorder %s125, %s128
    %p134 = scmp.eq.s32.totalorder %s12, 0
    %p135 = por %p133, %p134
    %p136 = scmp.ne.s32.totalorder %s125, %s128
    %p137 = scmp.eq.s32.totalorder %s17, 1
    %p138 = por %p136, %p137
    %p139 = scmp.ne.s32.totalorder %s128, %s129
    %p140 = scmp.eq.s32.totalorder %s17, 0
    %p141 = por %p139, %p140
    %p142 = scmp.ne.s32.totalorder %s128, %s129
    %p143 = scmp.eq.s32.totalorder %s18, 1
    %p144 = por %p142, %p143
    %p146 = scmp.ne.s32.totalorder %s129, %s145
    %p147 = scmp.eq.s32.totalorder %s18, 0
    %p148 = por %p146, %p147
    %s149 = ssub.s32 %s19, %s31
    %s150 = ssub.s32 %s20, %s27
    %s151 = sor.u32 %s149, %s150
    %p152 = scmp.eq.s32.totalorder %s151, 0
    %s154 = sadd.s32 %s153, 1
    %s155 = scalar_select %p152, %s153, %s154
    %p158 = pneg %p152
    %p159 = scmp.eq.s32.totalorder %s12, 1
    %p160 = por %p158, %p159
    %p161 = scmp.ne.s32.totalorder %s153, %s156
    %p162 = scmp.eq.s32.totalorder %s12, 0
    %p163 = por %p161, %p162
    %p164 = scmp.ne.s32.totalorder %s153, %s156
    %p165 = scmp.eq.s32.totalorder %s17, 1
    %p166 = por %p164, %p165
    %p167 = scmp.ne.s32.totalorder %s156, %s157
    %p168 = scmp.eq.s32.totalorder %s17, 0
    %p169 = por %p167, %p168
    %p170 = scmp.ne.s32.totalorder %s156, %s157
    %p171 = scmp.eq.s32.totalorder %s18, 1
    %p172 = por %p170, %p171
    %p174 = scmp.ne.s32.totalorder %s157, %s173
    %p175 = scmp.eq.s32.totalorder %s18, 0
    %p176 = por %p174, %p175
    %p177 = scmp.le.s32.totalorder 1, %s12
    %p178 = scmp.lt.s32.totalorder %s12, 3
    %p179 = pnand %p177, %p178
    %p180 = pneg %p179
    // Predicated region
    $region9: #{double_conv.3} parent=5 // pred_check
      _
    $region10: #{double_conv.3} parent=5 // pred_check_branch
      %182 = sbr.rel (%p179) target = $region12
    $region11: #{double_conv.3} parent=5 // pred_region
      %s183 = ssub.s32 %s12, 1
      // Predicated region
      $region13: #{double_conv.3} parent=11 // pred_check
        %p184 = pneg %p71
      $region14: #{double_conv.3} parent=11 // pred_check_branch
        %186 = sbr.rel (%p184) target = $region16
      $region15: #{double_conv.3} parent=11 // pred_region
        _
      $region16: #{double_conv.3} parent=11 // pred_fallthru
        _
      // Predicated region
      $region17: #{double_conv.3} parent=11 // pred_check
        %p187 = pneg %p92
      $region18: #{double_conv.3} parent=11 // pred_check_branch
        %189 = sbr.rel (%p187) target = $region20
      $region19: #{double_conv.3} parent=11 // pred_region
        _
      $region20: #{double_conv.3} parent=11 // pred_fallthru
        _
      // Predicated region
      $region21: #{double_conv.3} parent=11 // pred_check
        %p190 = pneg %p113
      $region22: #{double_conv.3} parent=11 // pred_check_branch
        %192 = sbr.rel (%p190) target = $region24
      $region23: #{double_conv.3} parent=11 // pred_region
        _
      $region24: #{double_conv.3} parent=11 // pred_fallthru
        _
    $region12: #{double_conv.3} parent=5 // pred_fallthru
      _
    %p193 = scmp.lt.s32.totalorder %s12, 2
    // Predicated region
    $region25: #{double_conv.3} parent=5 // pred_check
      %p194 = pneg %p193
    $region26: #{double_conv.3} parent=5 // pred_check_branch
      %196 = sbr.rel (%p194) target = $region28
    $region27: #{double_conv.3} parent=5 // pred_region
      // Predicated region
      $region29: #{double_conv.3} parent=27 // pred_check
        %p197 = pneg %p44
      $region30: #{double_conv.3} parent=27 // pred_check_branch
        %199 = sbr.rel (%p197) target = $region32
      $region31: #{double_conv.3} parent=27 // pred_region
        %p200 = scmp.lt.s32.totalorder %s19, 1
        %s201 = scalar_select %p200, %s19, 1
        %s202 = smul.addr %s201, 32
        %s203 = smul.addr %s202, 8
        %s204 = scalar_lea.vmem %s0, %s203
      $region32: #{double_conv.3} parent=27 // pred_fallthru
        _
    $region28: #{double_conv.3} parent=5 // pred_fallthru
      _
    %p205 = scmp.le.s32.totalorder 1, %s12
    %p206 = scmp.lt.s32.totalorder %s12, 3
    %p207 = pnand %p205, %p206
    %p208 = pneg %p207
    // Predicated region
    $region33: #{double_conv.3} parent=5 // pred_check
      _
    $region34: #{double_conv.3} parent=5 // pred_check_branch
      %210 = sbr.rel (%p207) target = $region36
    $region35: #{double_conv.3} parent=5 // pred_region
      %s211 = ssub.s32 %s12, 1
      %p212 = scmp.lt.s32.totalorder %s21, 1
      %s213 = scalar_select %p212, %s21, 1
      %s214 = smul.addr %s213, 32
      %s215 = smul.addr %s214, 8
      %s216 = scalar_lea.vmem %s0, %s215
      %p217 = pneg %p50
      %p218 = pneg %p47
      %p219 = pneg %p71
      %p220 = pneg %p68
      %p221 = pneg %p92
      %p222 = pneg %p89
      %p223 = pneg %p113
      %p224 = pneg %p110
      %p225 = pneg %p141
      %p226 = pneg %p138
      %s227 = smul.u32 32, %s22
      %p228 = scmp.lt.s32.totalorder %s21, 1
      %s229 = scalar_select %p228, %s21, 1
      %p230 = scmp.lt.s32.totalorder %s227, 31
      %s231 = scalar_select %p230, %s227, 31
      %s232 = smul.addr %s229, 32
      %s233 = sadd.s32 %s231, %s232
      %s234 = smul.addr %s233, 8
      %s235 = scalar_lea.vmem %s4, %s234
      %p236 = pneg %p169
      %p237 = pneg %p166
      %p238 = scmp.lt.s32.totalorder %s21, 1
      %s239 = scalar_select %p238, %s21, 1
      %p240 = scmp.lt.s32.totalorder %s22, 0
      %s241 = scalar_select %p240, %s22, 0
      %s242 = sadd.s32 %s241, %s239
      %s243 = smul.addr %s242, 2
      %s244 = scalar_lea.vmem %s5, %s243
      %p245 = scmp.lt.s32.totalorder %s21, 1
      %s246 = scalar_select %p245, %s21, 1
      %s247 = smul.addr %s246, 32
      %s248 = smul.addr %s247, 8
      %s249 = scalar_lea.vmem %s0, %s248
      %s250 = smul.u32 32, %s22
      %p251 = scmp.lt.s32.totalorder %s21, 1
      %s252 = scalar_select %p251, %s21, 1
      %p253 = scmp.lt.s32.totalorder %s250, 31
      %s254 = scalar_select %p253, %s250, 31
      %s255 = smul.addr %s252, 32
      %s256 = sadd.s32 %s254, %s255
      %s257 = smul.addr %s256, 8
      %s258 = scalar_lea.vmem %s4, %s257
      %s259 = smul.u32 32, %s22
      %p260 = scmp.lt.s32.totalorder %s21, 1
      %s261 = scalar_select %p260, %s21, 1
      %p262 = scmp.lt.s32.totalorder %s22, 0
      %s263 = scalar_select %p262, %s22, 0
      %s264 = sadd.s32 %s263, %s261
      %s265 = smul.addr %s264, 2
      %s266 = scalar_lea.vmem %s5, %s265
      %s268 = smul.u32 %s22, 16
      %vm269 = vcmask 27648
      %270 = vst.msk [vmem:[#allocation2] sm:$0xf] %vm269, 0
      %271 = vst.msk [vmem:[#allocation2 + $0x4] sm:$0xf] %vm269, 0
      %272 = vst.msk [vmem:[#allocation2 + $0x8] sm:$0xf] %vm269, 0
      %273 = vst.msk [vmem:[#allocation2 + $0xc] sm:$0xf] %vm269, 0
      %s274 = scalar_lea.vmem [#allocation2], 272
      %275 = vst.msk [vmem:[%s274] sm:$0xf] %vm269, 0
      %276 = vst.msk [vmem:[%s274 + $0x4] sm:$0xf] %vm269, 0
      %277 = vst.msk [vmem:[%s274 + $0x8] sm:$0xf] %vm269, 0
      %278 = vst.msk [vmem:[%s274 + $0xc] sm:$0xf] %vm269, 0
      %279 = vst.msk [vmem:[#allocation2] sm:$0xf] %vm269, 0
      %280 = vst.msk [vmem:[#allocation2 + $0x10] sm:$0xf] %vm269, 0
      %281 = vst.msk [vmem:[#allocation2 + $0x20] sm:$0xf] %vm269, 0
      %282 = vst.msk [vmem:[#allocation2 + $0x30] sm:$0xf] %vm269, 0
      %283 = vst.msk [vmem:[#allocation2 + $0x40] sm:$0xf] %vm269, 0
      %284 = vst.msk [vmem:[#allocation2 + $0x50] sm:$0xf] %vm269, 0
      %285 = vst.msk [vmem:[#allocation2 + $0x60] sm:$0xf] %vm269, 0
      %286 = vst.msk [vmem:[#allocation2 + $0x70] sm:$0xf] %vm269, 0
      %287 = vst.msk [vmem:[#allocation2 + $0x80] sm:$0xf] %vm269, 0
      %288 = vst.msk [vmem:[#allocation2 + $0x90] sm:$0xf] %vm269, 0
      %289 = vst.msk [vmem:[#allocation2 + $0xa0] sm:$0xf] %vm269, 0
      %290 = vst.msk [vmem:[#allocation2 + $0xb0] sm:$0xf] %vm269, 0
      %291 = vst.msk [vmem:[#allocation2 + $0xc0] sm:$0xf] %vm269, 0
      %292 = vst.msk [vmem:[#allocation2 + $0xd0] sm:$0xf] %vm269, 0
      %293 = vst.msk [vmem:[#allocation2 + $0xe0] sm:$0xf] %vm269, 0
      %294 = vst.msk [vmem:[#allocation2 + $0xf0] sm:$0xf] %vm269, 0
      %295 = vst.msk [vmem:[#allocation2 + $0x100] sm:$0xf] %vm269, 0
      %296 = vst.msk [vmem:[#allocation2 + $0x110] sm:$0xf] %vm269, 0
      %297 = vst.msk [vmem:[#allocation2 + $0xc] sm:$0xf] %vm269, 0
      %298 = vst.msk [vmem:[#allocation2 + $0x1c] sm:$0xf] %vm269, 0
      %299 = vst.msk [vmem:[#allocation2 + $0x2c] sm:$0xf] %vm269, 0
      %300 = vst.msk [vmem:[#allocation2 + $0x3c] sm:$0xf] %vm269, 0
      %301 = vst.msk [vmem:[#allocation2 + $0x4c] sm:$0xf] %vm269, 0
      %302 = vst.msk [vmem:[#allocation2 + $0x5c] sm:$0xf] %vm269, 0
      %303 = vst.msk [vmem:[#allocation2 + $0x6c] sm:$0xf] %vm269, 0
      %304 = vst.msk [vmem:[#allocation2 + $0x7c] sm:$0xf] %vm269, 0
      %305 = vst.msk [vmem:[#allocation2 + $0x8c] sm:$0xf] %vm269, 0
      %306 = vst.msk [vmem:[#allocation2 + $0x9c] sm:$0xf] %vm269, 0
      %307 = vst.msk [vmem:[#allocation2 + $0xac] sm:$0xf] %vm269, 0
      %308 = vst.msk [vmem:[#allocation2 + $0xbc] sm:$0xf] %vm269, 0
      %309 = vst.msk [vmem:[#allocation2 + $0xcc] sm:$0xf] %vm269, 0
      %310 = vst.msk [vmem:[#allocation2 + $0xdc] sm:$0xf] %vm269, 0
      %311 = vst.msk [vmem:[#allocation2 + $0xec] sm:$0xf] %vm269, 0
      %312 = vst.msk [vmem:[#allocation2 + $0xfc] sm:$0xf] %vm269, 0
      %313 = vst.msk [vmem:[#allocation2 + $0x10c] sm:$0xf] %vm269, 0
      %314 = vst.msk [vmem:[#allocation2 + $0x11c] sm:$0xf] %vm269, 0
      %s315 = smul.u32 %s268, 16
      %s316 = scalar_lea.vmem %s249, %s315
      %v317 = vld [vmem:[%s316] sm:$0xff]
      %v318 = vld [vmem:[%s316 + $0x8] sm:$0xff]
      %v319 = vld [vmem:[%s316 + $0x10] sm:$0xff]
      %v320 = vld [vmem:[%s316 + $0x18] sm:$0xff]
      %v321 = vld [vmem:[%s316 + $0x20] sm:$0xff]
      %v322 = vld [vmem:[%s316 + $0x28] sm:$0xff]
      %v323 = vld [vmem:[%s316 + $0x30] sm:$0xff]
      %v324 = vld [vmem:[%s316 + $0x38] sm:$0xff]
      %v325 = vld [vmem:[%s316 + $0x40] sm:$0xff]
      %v326 = vld [vmem:[%s316 + $0x48] sm:$0xff]
      %v327 = vld [vmem:[%s316 + $0x50] sm:$0xff]
      %v328 = vld [vmem:[%s316 + $0x58] sm:$0xff]
      %v329 = vld [vmem:[%s316 + $0x60] sm:$0xff]
      %v330 = vld [vmem:[%s316 + $0x68] sm:$0xff]
      %v331 = vld [vmem:[%s316 + $0x70] sm:$0xff]
      %v332 = vld [vmem:[%s316 + $0x78] sm:$0xff]
      %v333 = vld [vmem:[%s316 + $0x80] sm:$0xff]
      %v334 = vld [vmem:[%s316 + $0x88] sm:$0xff]
      %v335 = vld [vmem:[%s316 + $0x90] sm:$0xff]
      %v336 = vld [vmem:[%s316 + $0x98] sm:$0xff]
      %v337 = vld [vmem:[%s316 + $0xa0] sm:$0xff]
      %v338 = vld [vmem:[%s316 + $0xa8] sm:$0xff]
      %v339 = vld [vmem:[%s316 + $0xb0] sm:$0xff]
      %v340 = vld [vmem:[%s316 + $0xb8] sm:$0xff]
      %v341 = vld [vmem:[%s316 + $0xc0] sm:$0xff]
      %v342 = vld [vmem:[%s316 + $0xc8] sm:$0xff]
      %v343 = vld [vmem:[%s316 + $0xd0] sm:$0xff]
      %v344 = vld [vmem:[%s316 + $0xd8] sm:$0xff]
      %v345 = vld [vmem:[%s316 + $0xe0] sm:$0xff]
      %v346 = vld [vmem:[%s316 + $0xe8] sm:$0xff]
      %v347 = vld [vmem:[%s316 + $0xf0] sm:$0xff]
      %v348 = vld [vmem:[%s316 + $0xf8] sm:$0xff]
      %v349 = vpack.c.bf16 %v317, %v317
      %v350 = vpack.c.bf16 %v318, %v318
      %v351 = vpack.c.bf16 %v319, %v319
      %v352 = vpack.c.bf16 %v320, %v320
      %v353 = vpack.c.bf16 %v321, %v321
      %v354 = vpack.c.bf16 %v322, %v322
      %v355 = vpack.c.bf16 %v323, %v323
      %v356 = vpack.c.bf16 %v324, %v324
      %v357 = vpack.c.bf16 %v325, %v325
      %v358 = vpack.c.bf16 %v326, %v326
      %v359 = vpack.c.bf16 %v327, %v327
      %v360 = vpack.c.bf16 %v328, %v328
      %v361 = vpack.c.bf16 %v329, %v329
      %v362 = vpack.c.bf16 %v330, %v330
      %v363 = vpack.c.bf16 %v331, %v331
      %v364 = vpack.c.bf16 %v332, %v332
      %v365 = vpack.c.bf16 %v333, %v333
      %v366 = vpack.c.bf16 %v334, %v334
      %v367 = vpack.c.bf16 %v335, %v335
      %v368 = vpack.c.bf16 %v336, %v336
      %v369 = vpack.c.bf16 %v337, %v337
      %v370 = vpack.c.bf16 %v338, %v338
      %v371 = vpack.c.bf16 %v339, %v339
      %v372 = vpack.c.bf16 %v340, %v340
      %v373 = vpack.c.bf16 %v341, %v341
      %v374 = vpack.c.bf16 %v342, %v342
      %v375 = vpack.c.bf16 %v343, %v343
      %v376 = vpack.c.bf16 %v344, %v344
      %v377 = vpack.c.bf16 %v345, %v345
      %v378 = vpack.c.bf16 %v346, %v346
      %v379 = vpack.c.bf16 %v347, %v347
      %v380 = vpack.c.bf16 %v348, %v348
      %s381 = scalar_lea.vmem [#allocation2], 16
      %382 = vst.msk [vmem:[%s381 + $0x4] sm:$0xf] %vm269, %v349
      %383 = vst.msk [vmem:[%s381 + $0x8] sm:$0xf] %vm269, %v350
      %384 = vst.msk [vmem:[%s381 + $0x14] sm:$0xf] %vm269, %v351
      %385 = vst.msk [vmem:[%s381 + $0x18] sm:$0xf] %vm269, %v352
      %386 = vst.msk [vmem:[%s381 + $0x24] sm:$0xf] %vm269, %v353
      %387 = vst.msk [vmem:[%s381 + $0x28] sm:$0xf] %vm269, %v354
      %388 = vst.msk [vmem:[%s381 + $0x34] sm:$0xf] %vm269, %v355
      %389 = vst.msk [vmem:[%s381 + $0x38] sm:$0xf] %vm269, %v356
      %390 = vst.msk [vmem:[%s381 + $0x44] sm:$0xf] %vm269, %v357
      %391 = vst.msk [vmem:[%s381 + $0x48] sm:$0xf] %vm269, %v358
      %392 = vst.msk [vmem:[%s381 + $0x54] sm:$0xf] %vm269, %v359
      %393 = vst.msk [vmem:[%s381 + $0x58] sm:$0xf] %vm269, %v360
      %394 = vst.msk [vmem:[%s381 + $0x64] sm:$0xf] %vm269, %v361
      %395 = vst.msk [vmem:[%s381 + $0x68] sm:$0xf] %vm269, %v362
      %396 = vst.msk [vmem:[%s381 + $0x74] sm:$0xf] %vm269, %v363
      %397 = vst.msk [vmem:[%s381 + $0x78] sm:$0xf] %vm269, %v364
      %398 = vst.msk [vmem:[%s381 + $0x84] sm:$0xf] %vm269, %v365
      %399 = vst.msk [vmem:[%s381 + $0x88] sm:$0xf] %vm269, %v366
      %400 = vst.msk [vmem:[%s381 + $0x94] sm:$0xf] %vm269, %v367
      %401 = vst.msk [vmem:[%s381 + $0x98] sm:$0xf] %vm269, %v368
      %402 = vst.msk [vmem:[%s381 + $0xa4] sm:$0xf] %vm269, %v369
      %403 = vst.msk [vmem:[%s381 + $0xa8] sm:$0xf] %vm269, %v370
      %404 = vst.msk [vmem:[%s381 + $0xb4] sm:$0xf] %vm269, %v371
      %405 = vst.msk [vmem:[%s381 + $0xb8] sm:$0xf] %vm269, %v372
      %406 = vst.msk [vmem:[%s381 + $0xc4] sm:$0xf] %vm269, %v373
      %407 = vst.msk [vmem:[%s381 + $0xc8] sm:$0xf] %vm269, %v374
      %408 = vst.msk [vmem:[%s381 + $0xd4] sm:$0xf] %vm269, %v375
      %409 = vst.msk [vmem:[%s381 + $0xd8] sm:$0xf] %vm269, %v376
      %410 = vst.msk [vmem:[%s381 + $0xe4] sm:$0xf] %vm269, %v377
      %411 = vst.msk [vmem:[%s381 + $0xe8] sm:$0xf] %vm269, %v378
      %412 = vst.msk [vmem:[%s381 + $0xf4] sm:$0xf] %vm269, %v379
      %413 = vst.msk [vmem:[%s381 + $0xf8] sm:$0xf] %vm269, %v380
      %p414 = scmp.gt.s32.totalorder %s22, 0
      // Predicated region
      $region37: #{double_conv.3} parent=35 // pred_check
        %p415 = pneg %p414
      $region38: #{double_conv.3} parent=35 // pred_check_branch
        %417 = sbr.rel (%p415) target = $region40
      $region39: #{double_conv.3} parent=35 // pred_region
        %s418 = ssub.s32 %s268, 1
        %s419 = smul.u32 %s418, 16
        %s420 = scalar_lea.vmem %s249, %s419
        %v421 = vld [vmem:[%s420] sm:$0xff]
        %v422 = vld [vmem:[%s420 + $0x8] sm:$0xff]
        %v423 = vpack.c.bf16 %v421, %v421
        %v424 = vpack.c.bf16 %v422, %v422
        %425 = vst.msk [vmem:[#allocation2 + $0x4] sm:$0xf] %vm269, %v423
        %426 = vst.msk [vmem:[#allocation2 + $0x8] sm:$0xf] %vm269, %v424
      $region40: #{double_conv.3} parent=35 // pred_fallthru
        _
      %p427 = scmp.lt.s32.totalorder %s22, 0
      // Predicated region
      $region41: #{double_conv.3} parent=35 // pred_check
        %p428 = pneg %p427
      $region42: #{double_conv.3} parent=35 // pred_check_branch
        %430 = sbr.rel (%p428) target = $region44
      $region43: #{double_conv.3} parent=35 // pred_region
        %s431 = sadd.s32 %s268, 16
        %s432 = smul.u32 %s431, 16
        %s433 = scalar_lea.vmem %s249, %s432
        %v434 = vld [vmem:[%s433] sm:$0xff]
        %v435 = vld [vmem:[%s433 + $0x8] sm:$0xff]
        %v436 = vpack.c.bf16 %v434, %v434
        %v437 = vpack.c.bf16 %v435, %v435
        %438 = vst.msk [vmem:[%s274 + $0x4] sm:$0xf] %vm269, %v436
        %439 = vst.msk [vmem:[%s274 + $0x8] sm:$0xf] %vm269, %v437
      $region44: #{double_conv.3} parent=35 // pred_fallthru
        _
      %vm440 = vcmask 1043744
      %441 = vst.msk [vmem:[#allocation3] sm:$0xf] %vm440, 0
      %442 = vst.msk [vmem:[#allocation3 + $0x4] sm:$0xf] %vm440, 0
      %443 = vst.msk [vmem:[#allocation3 + $0x8] sm:$0xf] %vm440, 0
      %444 = vst.msk [vmem:[#allocation3 + $0xc] sm:$0xf] %vm440, 0
      %445 = vst.msk [vmem:[#allocation3 + $0x10] sm:$0xf] %vm440, 0
      %446 = vst.msk [vmem:[#allocation3 + $0x14] sm:$0xf] %vm440, 0
      %447 = vst.msk [vmem:[#allocation3 + $0x18] sm:$0xf] %vm440, 0
      %448 = vst.msk [vmem:[#allocation3 + $0x1c] sm:$0xf] %vm440, 0
      %449 = vst.msk [vmem:[#allocation3 + $0x20] sm:$0xf] %vm440, 0
      %450 = vst.msk [vmem:[#allocation3 + $0x24] sm:$0xf] %vm440, 0
      %451 = vst.msk [vmem:[#allocation3 + $0x28] sm:$0xf] %vm440, 0
      %452 = vst.msk [vmem:[#allocation3 + $0x2c] sm:$0xf] %vm440, 0
      %453 = vst.msk [vmem:[#allocation3 + $0x30] sm:$0xf] %vm440, 0
      %454 = vst.msk [vmem:[#allocation3 + $0x34] sm:$0xf] %vm440, 0
      %455 = vst.msk [vmem:[#allocation3 + $0x38] sm:$0xf] %vm440, 0
      %456 = vst.msk [vmem:[#allocation3 + $0x3c] sm:$0xf] %vm440, 0
      %457 = vst.msk [vmem:[#allocation3 + $0x40] sm:$0xf] %vm440, 0
      %458 = vst.msk [vmem:[#allocation3 + $0x44] sm:$0xf] %vm440, 0
      %459 = vst.msk [vmem:[#allocation3 + $0x48] sm:$0xf] %vm440, 0
      %460 = vst.msk [vmem:[#allocation3 + $0x4c] sm:$0xf] %vm440, 0
      %461 = vst.msk [vmem:[#allocation3 + $0x50] sm:$0xf] %vm440, 0
      %462 = vst.msk [vmem:[#allocation3 + $0x54] sm:$0xf] %vm440, 0
      %463 = vst.msk [vmem:[#allocation3 + $0x58] sm:$0xf] %vm440, 0
      %464 = vst.msk [vmem:[#allocation3 + $0x5c] sm:$0xf] %vm440, 0
      %465 = vst.msk [vmem:[#allocation3 + $0x60] sm:$0xf] %vm440, 0
      %466 = vst.msk [vmem:[#allocation3 + $0x64] sm:$0xf] %vm440, 0
      %467 = vst.msk [vmem:[#allocation3 + $0x68] sm:$0xf] %vm440, 0
      %468 = vst.msk [vmem:[#allocation3 + $0x6c] sm:$0xf] %vm440, 0
      %469 = vst.msk [vmem:[#allocation3 + $0x70] sm:$0xf] %vm440, 0
      %470 = vst.msk [vmem:[#allocation3 + $0x74] sm:$0xf] %vm440, 0
      %471 = vst.msk [vmem:[#allocation3 + $0x78] sm:$0xf] %vm440, 0
      %472 = vst.msk [vmem:[#allocation3 + $0x7c] sm:$0xf] %vm440, 0
      %v473 = vld [vmem:[#allocation2] sm:$0x8]
      %v474 = vld [vmem:[#allocation2 + $0x4] sm:$0xf]
      %v475 = vld [vmem:[#allocation2 + $0x8] sm:$0xf]
      %v476 = vld [vmem:[#allocation2 + $0x10] sm:$0x8]
      %v477 = vld [vmem:[#allocation2 + $0x14] sm:$0xf]
      %v478 = vld [vmem:[#allocation2 + $0x18] sm:$0xf]
      %v479 = vld [vmem:[#allocation2 + $0x20] sm:$0x8]
      %v480 = vld [vmem:[#allocation2 + $0x24] sm:$0xf]
      %v481 = vld [vmem:[#allocation2 + $0x28] sm:$0xf]
      %v482 = vld [vmem:[#allocation2 + $0x30] sm:$0x8]
      %v483 = vld [vmem:[#allocation2 + $0x34] sm:$0xf]
      %v484 = vld [vmem:[#allocation2 + $0x38] sm:$0xf]
      %v485 = vld [vmem:[#allocation2 + $0x40] sm:$0x8]
      %v486 = vld [vmem:[#allocation2 + $0x44] sm:$0xf]
      %v487 = vld [vmem:[#allocation2 + $0x48] sm:$0xf]
      %v488 = vld [vmem:[#allocation2 + $0x50] sm:$0x8]
      %v489 = vld [vmem:[#allocation2 + $0x54] sm:$0xf]
      %v490 = vld [vmem:[#allocation2 + $0x58] sm:$0xf]
      %v491 = vld [vmem:[#allocation2 + $0x60] sm:$0x8]
      %v492 = vld [vmem:[#allocation2 + $0x64] sm:$0xf]
      %v493 = vld [vmem:[#allocation2 + $0x68] sm:$0xf]
      %v494 = vld [vmem:[#allocation2 + $0x70] sm:$0x8]
      %v495 = vld [vmem:[#allocation2 + $0x74] sm:$0xf]
      %v496 = vld [vmem:[#allocation2 + $0x78] sm:$0xf]
      %v497 = vld [vmem:[#allocation2 + $0x80] sm:$0x8]
      %v498 = vld [vmem:[#allocation2 + $0x84] sm:$0xf]
      %v499 = vld [vmem:[#allocation2 + $0x88] sm:$0xf]
      %v500 = vld [vmem:[#allocation2 + $0x90] sm:$0x8]
      %v501 = vld [vmem:[#allocation2 + $0x94] sm:$0xf]
      %v502 = vld [vmem:[#allocation2 + $0x98] sm:$0xf]
      %v503 = vld [vmem:[#allocation2 + $0xa0] sm:$0x8]
      %v504 = vld [vmem:[#allocation2 + $0xa4] sm:$0xf]
      %v505 = vld [vmem:[#allocation2 + $0xa8] sm:$0xf]
      %v506 = vld [vmem:[#allocation2 + $0xb0] sm:$0x8]
      %v507 = vld [vmem:[#allocation2 + $0xb4] sm:$0xf]
      %v508 = vld [vmem:[#allocation2 + $0xb8] sm:$0xf]
      %v509 = vld [vmem:[#allocation2 + $0xc0] sm:$0x8]
      %v510 = vld [vmem:[#allocation2 + $0xc4] sm:$0xf]
      %v511 = vld [vmem:[#allocation2 + $0xc8] sm:$0xf]
      %v512 = vld [vmem:[#allocation2 + $0xd0] sm:$0x8]
      %v513 = vld [vmem:[#allocation2 + $0xd4] sm:$0xf]
      %v514 = vld [vmem:[#allocation2 + $0xd8] sm:$0xf]
      %v515 = vld [vmem:[#allocation2 + $0xe0] sm:$0x8]
      %v516 = vld [vmem:[#allocation2 + $0xe4] sm:$0xf]
      %v517 = vld [vmem:[#allocation2 + $0xe8] sm:$0xf]
      %v518 = vld [vmem:[#allocation2 + $0xf0] sm:$0x8]
      %v519 = vld [vmem:[#allocation2 + $0xf4] sm:$0xf]
      %v520 = vld [vmem:[#allocation2 + $0xf8] sm:$0xf]
      %vm521 = vsmask.f32 256
      %vm522 = vsmask.f32 4368
      %vm523 = vmor %vm521, %vm522
      %v525 = vshrl.u32 %v473, 16
      %v527 = vrot.slane %v525, 7
      %v528 = vrot.slane %v527, 4
      %v530 = vshrl.u32 %v474, 16
      %v532 = vrot.slane %v530, 7
      %v533 = vshll.u32 %v474, 16
      %v535 = vor.u32 %v532, %v533
      %v536 = vsel %vm523, %v528, %v535
      %v537 = vrot.slane %v532, 4
      %v539 = vshrl.u32 %v475, 16
      %v541 = vrot.slane %v539, 7
      %v542 = vshll.u32 %v475, 16
      %v544 = vor.u32 %v541, %v542
      %v545 = vsel %vm523, %v537, %v544
      %v547 = vshrl.u32 %v476, 16
      %v549 = vrot.slane %v547, 7
      %v550 = vrot.slane %v549, 4
      %v552 = vshrl.u32 %v477, 16
      %v554 = vrot.slane %v552, 7
      %v555 = vshll.u32 %v477, 16
      %v557 = vor.u32 %v554, %v555
      %v558 = vsel %vm523, %v550, %v557
      %v559 = vrot.slane %v554, 4
      %v561 = vshrl.u32 %v478, 16
      %v563 = vrot.slane %v561, 7
      %v564 = vshll.u32 %v478, 16
      %v566 = vor.u32 %v563, %v564
      %v567 = vsel %vm523, %v559, %v566
      %v569 = vshrl.u32 %v479, 16
      %v571 = vrot.slane %v569, 7
      %v572 = vrot.slane %v571, 4
      %v574 = vshrl.u32 %v480, 16
      %v576 = vrot.slane %v574, 7
      %v577 = vshll.u32 %v480, 16
      %v579 = vor.u32 %v576, %v577
      %v580 = vsel %vm523, %v572, %v579
      %v581 = vrot.slane %v576, 4
      %v583 = vshrl.u32 %v481, 16
      %v585 = vrot.slane %v583, 7
      %v586 = vshll.u32 %v481, 16
      %v588 = vor.u32 %v585, %v586
      %v589 = vsel %vm523, %v581, %v588
      %v591 = vshrl.u32 %v482, 16
      %v593 = vrot.slane %v591, 7
      %v594 = vrot.slane %v593, 4
      %v596 = vshrl.u32 %v483, 16
      %v598 = vrot.slane %v596, 7
      %v599 = vshll.u32 %v483, 16
      %v601 = vor.u32 %v598, %v599
      %v602 = vsel %vm523, %v594, %v601
      %v603 = vrot.slane %v598, 4
      %v605 = vshrl.u32 %v484, 16
      %v607 = vrot.slane %v605, 7
      %v608 = vshll.u32 %v484, 16
      %v610 = vor.u32 %v607, %v608
      %v611 = vsel %vm523, %v603, %v610
      %v613 = vshrl.u32 %v485, 16
      %v615 = vrot.slane %v613, 7
      %v616 = vrot.slane %v615, 4
      %v618 = vshrl.u32 %v486, 16
      %v620 = vrot.slane %v618, 7
      %v621 = vshll.u32 %v486, 16
      %v623 = vor.u32 %v620, %v621
      %v624 = vsel %vm523, %v616, %v623
      %v625 = vrot.slane %v620, 4
      %v627 = vshrl.u32 %v487, 16
      %v629 = vrot.slane %v627, 7
      %v630 = vshll.u32 %v487, 16
      %v632 = vor.u32 %v629, %v630
      %v633 = vsel %vm523, %v625, %v632
      %v635 = vshrl.u32 %v488, 16
      %v637 = vrot.slane %v635, 7
      %v638 = vrot.slane %v637, 4
      %v640 = vshrl.u32 %v489, 16
      %v642 = vrot.slane %v640, 7
      %v643 = vshll.u32 %v489, 16
      %v645 = vor.u32 %v642, %v643
      %v646 = vsel %vm523, %v638, %v645
      %v647 = vrot.slane %v642, 4
      %v649 = vshrl.u32 %v490, 16
      %v651 = vrot.slane %v649, 7
      %v652 = vshll.u32 %v490, 16
      %v654 = vor.u32 %v651, %v652
      %v655 = vsel %vm523, %v647, %v654
      %v657 = vshrl.u32 %v491, 16
      %v659 = vrot.slane %v657, 7
      %v660 = vrot.slane %v659, 4
      %v662 = vshrl.u32 %v492, 16
      %v664 = vrot.slane %v662, 7
      %v665 = vshll.u32 %v492, 16
      %v667 = vor.u32 %v664, %v665
      %v668 = vsel %vm523, %v660, %v667
      %v669 = vrot.slane %v664, 4
      %v671 = vshrl.u32 %v493, 16
      %v673 = vrot.slane %v671, 7
      %v674 = vshll.u32 %v493, 16
      %v676 = vor.u32 %v673, %v674
      %v677 = vsel %vm523, %v669, %v676
      %v679 = vshrl.u32 %v494, 16
      %v681 = vrot.slane %v679, 7
      %v682 = vrot.slane %v681, 4
      %v684 = vshrl.u32 %v495, 16
      %v686 = vrot.slane %v684, 7
      %v687 = vshll.u32 %v495, 16
      %v689 = vor.u32 %v686, %v687
      %v690 = vsel %vm523, %v682, %v689
      %v691 = vrot.slane %v686, 4
      %v693 = vshrl.u32 %v496, 16
      %v695 = vrot.slane %v693, 7
      %v696 = vshll.u32 %v496, 16
      %v698 = vor.u32 %v695, %v696
      %v699 = vsel %vm523, %v691, %v698
      %v701 = vshrl.u32 %v497, 16
      %v703 = vrot.slane %v701, 7
      %v704 = vrot.slane %v703, 4
      %v706 = vshrl.u32 %v498, 16
      %v708 = vrot.slane %v706, 7
      %v709 = vshll.u32 %v498, 16
      %v711 = vor.u32 %v708, %v709
      %v712 = vsel %vm523, %v704, %v711
      %v713 = vrot.slane %v708, 4
      %v715 = vshrl.u32 %v499, 16
      %v717 = vrot.slane %v715, 7
      %v718 = vshll.u32 %v499, 16
      %v720 = vor.u32 %v717, %v718
      %v721 = vsel %vm523, %v713, %v720
      %v723 = vshrl.u32 %v500, 16
      %v725 = vrot.slane %v723, 7
      %v726 = vrot.slane %v725, 4
      %v728 = vshrl.u32 %v501, 16
      %v730 = vrot.slane %v728, 7
      %v731 = vshll.u32 %v501, 16
      %v733 = vor.u32 %v730, %v731
      %v734 = vsel %vm523, %v726, %v733
      %v735 = vrot.slane %v730, 4
      %v737 = vshrl.u32 %v502, 16
      %v739 = vrot.slane %v737, 7
      %v740 = vshll.u32 %v502, 16
      %v742 = vor.u32 %v739, %v740
      %v743 = vsel %vm523, %v735, %v742
      %v745 = vshrl.u32 %v503, 16
      %v747 = vrot.slane %v745, 7
      %v748 = vrot.slane %v747, 4
      %v750 = vshrl.u32 %v504, 16
      %v752 = vrot.slane %v750, 7
      %v753 = vshll.u32 %v504, 16
      %v755 = vor.u32 %v752, %v753
      %v756 = vsel %vm523, %v748, %v755
      %v757 = vrot.slane %v752, 4
      %v759 = vshrl.u32 %v505, 16
      %v761 = vrot.slane %v759, 7
      %v762 = vshll.u32 %v505, 16
      %v764 = vor.u32 %v761, %v762
      %v765 = vsel %vm523, %v757, %v764
      %v767 = vshrl.u32 %v506, 16
      %v769 = vrot.slane %v767, 7
      %v770 = vrot.slane %v769, 4
      %v772 = vshrl.u32 %v507, 16
      %v774 = vrot.slane %v772, 7
      %v775 = vshll.u32 %v507, 16
      %v777 = vor.u32 %v774, %v775
      %v778 = vsel %vm523, %v770, %v777
      %v779 = vrot.slane %v774, 4
      %v781 = vshrl.u32 %v508, 16
      %v783 = vrot.slane %v781, 7
      %v784 = vshll.u32 %v508, 16
      %v786 = vor.u32 %v783, %v784
      %v787 = vsel %vm523, %v779, %v786
      %v789 = vshrl.u32 %v509, 16
      %v791 = vrot.slane %v789, 7
      %v792 = vrot.slane %v791, 4
      %v794 = vshrl.u32 %v510, 16
      %v796 = vrot.slane %v794, 7
      %v797 = vshll.u32 %v510, 16
      %v799 = vor.u32 %v796, %v797
      %v800 = vsel %vm523, %v792, %v799
      %v801 = vrot.slane %v796, 4
      %v803 = vshrl.u32 %v511, 16
      %v805 = vrot.slane %v803, 7
      %v806 = vshll.u32 %v511, 16
      %v808 = vor.u32 %v805, %v806
      %v809 = vsel %vm523, %v801, %v808
      %v811 = vshrl.u32 %v512, 16
      %v813 = vrot.slane %v811, 7
      %v814 = vrot.slane %v813, 4
      %v816 = vshrl.u32 %v513, 16
      %v818 = vrot.slane %v816, 7
      %v819 = vshll.u32 %v513, 16
      %v821 = vor.u32 %v818, %v819
      %v822 = vsel %vm523, %v814, %v821
      %v823 = vrot.slane %v818, 4
      %v825 = vshrl.u32 %v514, 16
      %v827 = vrot.slane %v825, 7
      %v828 = vshll.u32 %v514, 16
      %v830 = vor.u32 %v827, %v828
      %v831 = vsel %vm523, %v823, %v830
      %v833 = vshrl.u32 %v515, 16
      %v835 = vrot.slane %v833, 7
      %v836 = vrot.slane %v835, 4
      %v838 = vshrl.u32 %v516, 16
      %v840 = vrot.slane %v838, 7
      %v841 = vshll.u32 %v516, 16
      %v843 = vor.u32 %v840, %v841
      %v844 = vsel %vm523, %v836, %v843
      %v845 = vrot.slane %v840, 4
      %v847 = vshrl.u32 %v517, 16
      %v849 = vrot.slane %v847, 7
      %v850 = vshll.u32 %v517, 16
      %v852 = vor.u32 %v849, %v850
      %v853 = vsel %vm523, %v845, %v852
      %v855 = vshrl.u32 %v518, 16
      %v857 = vrot.slane %v855, 7
      %v858 = vrot.slane %v857, 4
      %v860 = vshrl.u32 %v519, 16
      %v862 = vrot.slane %v860, 7
      %v863 = vshll.u32 %v519, 16
      %v865 = vor.u32 %v862, %v863
      %v866 = vsel %vm523, %v858, %v865
      %v867 = vrot.slane %v862, 4
      %v869 = vshrl.u32 %v520, 16
      %v871 = vrot.slane %v869, 7
      %v872 = vshll.u32 %v520, 16
      %v874 = vor.u32 %v871, %v872
      %v875 = vsel %vm523, %v867, %v874
      %908 = vst.msk [vmem:[#allocation3] sm:$0xf] %vm269, %v536
      %909 = vst.msk [vmem:[#allocation3 + $0x4] sm:$0xf] %vm269, %v545
      %910 = vst.msk [vmem:[#allocation3 + $0x8] sm:$0xf] %vm269, %v558
      %911 = vst.msk [vmem:[#allocation3 + $0xc] sm:$0xf] %vm269, %v567
      %912 = vst.msk [vmem:[#allocation3 + $0x10] sm:$0xf] %vm269, %v580
      %913 = vst.msk [vmem:[#allocation3 + $0x14] sm:$0xf] %vm269, %v589
      %914 = vst.msk [vmem:[#allocation3 + $0x18] sm:$0xf] %vm269, %v602
      %915 = vst.msk [vmem:[#allocation3 + $0x1c] sm:$0xf] %vm269, %v611
      %916 = vst.msk [vmem:[#allocation3 + $0x20] sm:$0xf] %vm269, %v624
      %917 = vst.msk [vmem:[#allocation3 + $0x24] sm:$0xf] %vm269, %v633
      %918 = vst.msk [vmem:[#allocation3 + $0x28] sm:$0xf] %vm269, %v646
      %919 = vst.msk [vmem:[#allocation3 + $0x2c] sm:$0xf] %vm269, %v655
      %920 = vst.msk [vmem:[#allocation3 + $0x30] sm:$0xf] %vm269, %v668
      %921 = vst.msk [vmem:[#allocation3 + $0x34] sm:$0xf] %vm269, %v677
      %922 = vst.msk [vmem:[#allocation3 + $0x38] sm:$0xf] %vm269, %v690
      %923 = vst.msk [vmem:[#allocation3 + $0x3c] sm:$0xf] %vm269, %v699
      %924 = vst.msk [vmem:[#allocation3 + $0x40] sm:$0xf] %vm269, %v712
      %925 = vst.msk [vmem:[#allocation3 + $0x44] sm:$0xf] %vm269, %v721
      %926 = vst.msk [vmem:[#allocation3 + $0x48] sm:$0xf] %vm269, %v734
      %927 = vst.msk [vmem:[#allocation3 + $0x4c] sm:$0xf] %vm269, %v743
      %928 = vst.msk [vmem:[#allocation3 + $0x50] sm:$0xf] %vm269, %v756
      %929 = vst.msk [vmem:[#allocation3 + $0x54] sm:$0xf] %vm269, %v765
      %930 = vst.msk [vmem:[#allocation3 + $0x58] sm:$0xf] %vm269, %v778
      %931 = vst.msk [vmem:[#allocation3 + $0x5c] sm:$0xf] %vm269, %v787
      %932 = vst.msk [vmem:[#allocation3 + $0x60] sm:$0xf] %vm269, %v800
      %933 = vst.msk [vmem:[#allocation3 + $0x64] sm:$0xf] %vm269, %v809
      %934 = vst.msk [vmem:[#allocation3 + $0x68] sm:$0xf] %vm269, %v822
      %935 = vst.msk [vmem:[#allocation3 + $0x6c] sm:$0xf] %vm269, %v831
      %936 = vst.msk [vmem:[#allocation3 + $0x70] sm:$0xf] %vm269, %v844
      %937 = vst.msk [vmem:[#allocation3 + $0x74] sm:$0xf] %vm269, %v853
      %938 = vst.msk [vmem:[#allocation3 + $0x78] sm:$0xf] %vm269, %v866
      %939 = vst.msk [vmem:[#allocation3 + $0x7c] sm:$0xf] %vm269, %v875
      %v940 = vld [vmem:[#allocation2 + $0x4] sm:$0xf]
      %v941 = vld [vmem:[#allocation2 + $0x8] sm:$0xf]
      %v942 = vld [vmem:[#allocation2 + $0x14] sm:$0xf]
      %v943 = vld [vmem:[#allocation2 + $0x18] sm:$0xf]
      %v944 = vld [vmem:[#allocation2 + $0x24] sm:$0xf]
      %v945 = vld [vmem:[#allocation2 + $0x28] sm:$0xf]
      %v946 = vld [vmem:[#allocation2 + $0x34] sm:$0xf]
      %v947 = vld [vmem:[#allocation2 + $0x38] sm:$0xf]
      %v948 = vld [vmem:[#allocation2 + $0x44] sm:$0xf]
      %v949 = vld [vmem:[#allocation2 + $0x48] sm:$0xf]
      %v950 = vld [vmem:[#allocation2 + $0x54] sm:$0xf]
      %v951 = vld [vmem:[#allocation2 + $0x58] sm:$0xf]
      %v952 = vld [vmem:[#allocation2 + $0x64] sm:$0xf]
      %v953 = vld [vmem:[#allocation2 + $0x68] sm:$0xf]
      %v954 = vld [vmem:[#allocation2 + $0x74] sm:$0xf]
      %v955 = vld [vmem:[#allocation2 + $0x78] sm:$0xf]
      %v956 = vld [vmem:[#allocation2 + $0x84] sm:$0xf]
      %v957 = vld [vmem:[#allocation2 + $0x88] sm:$0xf]
      %v958 = vld [vmem:[#allocation2 + $0x94] sm:$0xf]
      %v959 = vld [vmem:[#allocation2 + $0x98] sm:$0xf]
      %v960 = vld [vmem:[#allocation2 + $0xa4] sm:$0xf]
      %v961 = vld [vmem:[#allocation2 + $0xa8] sm:$0xf]
      %v962 = vld [vmem:[#allocation2 + $0xb4] sm:$0xf]
      %v963 = vld [vmem:[#allocation2 + $0xb8] sm:$0xf]
      %v964 = vld [vmem:[#allocation2 + $0xc4] sm:$0xf]
      %v965 = vld [vmem:[#allocation2 + $0xc8] sm:$0xf]
      %v966 = vld [vmem:[#allocation2 + $0xd4] sm:$0xf]
      %v967 = vld [vmem:[#allocation2 + $0xd8] sm:$0xf]
      %v968 = vld [vmem:[#allocation2 + $0xe4] sm:$0xf]
      %v969 = vld [vmem:[#allocation2 + $0xe8] sm:$0xf]
      %v970 = vld [vmem:[#allocation2 + $0xf4] sm:$0xf]
      %v971 = vld [vmem:[#allocation2 + $0xf8] sm:$0xf]
      %1004 = vrot.lane.b32.xlu0 %v940, 4
      %v1005 = vpop.permute.xlu0 %1004
      %1006 = vrot.lane.b32.xlu0 %v941, 4
      %v1007 = vpop.permute.xlu0 %1006
      %1008 = vrot.lane.b32.xlu0 %v942, 4
      %v1009 = vpop.permute.xlu0 %1008
      %1010 = vrot.lane.b32.xlu0 %v943, 4
      %v1011 = vpop.permute.xlu0 %1010
      %1012 = vrot.lane.b32.xlu0 %v944, 4
      %v1013 = vpop.permute.xlu0 %1012
      %1014 = vrot.lane.b32.xlu0 %v945, 4
      %v1015 = vpop.permute.xlu0 %1014
      %1016 = vrot.lane.b32.xlu0 %v946, 4
      %v1017 = vpop.permute.xlu0 %1016
      %1018 = vrot.lane.b32.xlu0 %v947, 4
      %v1019 = vpop.permute.xlu0 %1018
      %1020 = vrot.lane.b32.xlu0 %v948, 4
      %v1021 = vpop.permute.xlu0 %1020
      %1022 = vrot.lane.b32.xlu0 %v949, 4
      %v1023 = vpop.permute.xlu0 %1022
      %1024 = vrot.lane.b32.xlu0 %v950, 4
      %v1025 = vpop.permute.xlu0 %1024
      %1026 = vrot.lane.b32.xlu0 %v951, 4
      %v1027 = vpop.permute.xlu0 %1026
      %1028 = vrot.lane.b32.xlu0 %v952, 4
      %v1029 = vpop.permute.xlu0 %1028
      %1030 = vrot.lane.b32.xlu0 %v953, 4
      %v1031 = vpop.permute.xlu0 %1030
      %1032 = vrot.lane.b32.xlu0 %v954, 4
      %v1033 = vpop.permute.xlu0 %1032
      %1034 = vrot.lane.b32.xlu0 %v955, 4
      %v1035 = vpop.permute.xlu0 %1034
      %1036 = vrot.lane.b32.xlu0 %v956, 4
      %v1037 = vpop.permute.xlu0 %1036
      %1038 = vrot.lane.b32.xlu0 %v957, 4
      %v1039 = vpop.permute.xlu0 %1038
      %1040 = vrot.lane.b32.xlu0 %v958, 4
      %v1041 = vpop.permute.xlu0 %1040
      %1042 = vrot.lane.b32.xlu0 %v959, 4
      %v1043 = vpop.permute.xlu0 %1042
      %1044 = vrot.lane.b32.xlu0 %v960, 4
      %v1045 = vpop.permute.xlu0 %1044
      %1046 = vrot.lane.b32.xlu0 %v961, 4
      %v1047 = vpop.permute.xlu0 %1046
      %1048 = vrot.lane.b32.xlu0 %v962, 4
      %v1049 = vpop.permute.xlu0 %1048
      %1050 = vrot.lane.b32.xlu0 %v963, 4
      %v1051 = vpop.permute.xlu0 %1050
      %1052 = vrot.lane.b32.xlu0 %v964, 4
      %v1053 = vpop.permute.xlu0 %1052
      %1054 = vrot.lane.b32.xlu0 %v965, 4
      %v1055 = vpop.permute.xlu0 %1054
      %1056 = vrot.lane.b32.xlu0 %v966, 4
      %v1057 = vpop.permute.xlu0 %1056
      %1058 = vrot.lane.b32.xlu0 %v967, 4
      %v1059 = vpop.permute.xlu0 %1058
      %1060 = vrot.lane.b32.xlu0 %v968, 4
      %v1061 = vpop.permute.xlu0 %1060
      %1062 = vrot.lane.b32.xlu0 %v969, 4
      %v1063 = vpop.permute.xlu0 %1062
      %1064 = vrot.lane.b32.xlu0 %v970, 4
      %v1065 = vpop.permute.xlu0 %1064
      %1066 = vrot.lane.b32.xlu0 %v971, 4
      %v1067 = vpop.permute.xlu0 %1066
      %vm1100 = vcmask 60448
      %1101 = vst.msk [vmem:[#allocation3] sm:$0xf] %vm1100, %v1005
      %1102 = vst.msk [vmem:[#allocation3 + $0x4] sm:$0xf] %vm1100, %v1007
      %1103 = vst.msk [vmem:[#allocation3 + $0x8] sm:$0xf] %vm1100, %v1009
      %1104 = vst.msk [vmem:[#allocation3 + $0xc] sm:$0xf] %vm1100, %v1011
      %1105 = vst.msk [vmem:[#allocation3 + $0x10] sm:$0xf] %vm1100, %v1013
      %1106 = vst.msk [vmem:[#allocation3 + $0x14] sm:$0xf] %vm1100, %v1015
      %1107 = vst.msk [vmem:[#allocation3 + $0x18] sm:$0xf] %vm1100, %v1017
      %1108 = vst.msk [vmem:[#allocation3 + $0x1c] sm:$0xf] %vm1100, %v1019
      %1109 = vst.msk [vmem:[#allocation3 + $0x20] sm:$0xf] %vm1100, %v1021
      %1110 = vst.msk [vmem:[#allocation3 + $0x24] sm:$0xf] %vm1100, %v1023
      %1111 = vst.msk [vmem:[#allocation3 + $0x28] sm:$0xf] %vm1100, %v1025
      %1112 = vst.msk [vmem:[#allocation3 + $0x2c] sm:$0xf] %vm1100, %v1027
      %1113 = vst.msk [vmem:[#allocation3 + $0x30] sm:$0xf] %vm1100, %v1029
      %1114 = vst.msk [vmem:[#allocation3 + $0x34] sm:$0xf] %vm1100, %v1031
      %1115 = vst.msk [vmem:[#allocation3 + $0x38] sm:$0xf] %vm1100, %v1033
      %1116 = vst.msk [vmem:[#allocation3 + $0x3c] sm:$0xf] %vm1100, %v1035
      %1117 = vst.msk [vmem:[#allocation3 + $0x40] sm:$0xf] %vm1100, %v1037
      %1118 = vst.msk [vmem:[#allocation3 + $0x44] sm:$0xf] %vm1100, %v1039
      %1119 = vst.msk [vmem:[#allocation3 + $0x48] sm:$0xf] %vm1100, %v1041
      %1120 = vst.msk [vmem:[#allocation3 + $0x4c] sm:$0xf] %vm1100, %v1043
      %1121 = vst.msk [vmem:[#allocation3 + $0x50] sm:$0xf] %vm1100, %v1045
      %1122 = vst.msk [vmem:[#allocation3 + $0x54] sm:$0xf] %vm1100, %v1047
      %1123 = vst.msk [vmem:[#allocation3 + $0x58] sm:$0xf] %vm1100, %v1049
      %1124 = vst.msk [vmem:[#allocation3 + $0x5c] sm:$0xf] %vm1100, %v1051
      %1125 = vst.msk [vmem:[#allocation3 + $0x60] sm:$0xf] %vm1100, %v1053
      %1126 = vst.msk [vmem:[#allocation3 + $0x64] sm:$0xf] %vm1100, %v1055
      %1127 = vst.msk [vmem:[#allocation3 + $0x68] sm:$0xf] %vm1100, %v1057
      %1128 = vst.msk [vmem:[#allocation3 + $0x6c] sm:$0xf] %vm1100, %v1059
      %1129 = vst.msk [vmem:[#allocation3 + $0x70] sm:$0xf] %vm1100, %v1061
      %1130 = vst.msk [vmem:[#allocation3 + $0x74] sm:$0xf] %vm1100, %v1063
      %1131 = vst.msk [vmem:[#allocation3 + $0x78] sm:$0xf] %vm1100, %v1065
      %1132 = vst.msk [vmem:[#allocation3 + $0x7c] sm:$0xf] %vm1100, %v1067
      %v1133 = vld [vmem:[#allocation2 + $0x4] sm:$0xf]
      %v1134 = vld [vmem:[#allocation2 + $0x8] sm:$0xf]
      %v1135 = vld [vmem:[#allocation2 + $0xc] sm:$0x1]
      %v1136 = vld [vmem:[#allocation2 + $0x14] sm:$0xf]
      %v1137 = vld [vmem:[#allocation2 + $0x18] sm:$0xf]
      %v1138 = vld [vmem:[#allocation2 + $0x1c] sm:$0x1]
      %v1139 = vld [vmem:[#allocation2 + $0x24] sm:$0xf]
      %v1140 = vld [vmem:[#allocation2 + $0x28] sm:$0xf]
      %v1141 = vld [vmem:[#allocation2 + $0x2c] sm:$0x1]
      %v1142 = vld [vmem:[#allocation2 + $0x34] sm:$0xf]
      %v1143 = vld [vmem:[#allocation2 + $0x38] sm:$0xf]
      %v1144 = vld [vmem:[#allocation2 + $0x3c] sm:$0x1]
      %v1145 = vld [vmem:[#allocation2 + $0x44] sm:$0xf]
      %v1146 = vld [vmem:[#allocation2 + $0x48] sm:$0xf]
      %v1147 = vld [vmem:[#allocation2 + $0x4c] sm:$0x1]
      %v1148 = vld [vmem:[#allocation2 + $0x54] sm:$0xf]
      %v1149 = vld [vmem:[#allocation2 + $0x58] sm:$0xf]
      %v1150 = vld [vmem:[#allocation2 + $0x5c] sm:$0x1]
      %v1151 = vld [vmem:[#allocation2 + $0x64] sm:$0xf]
      %v1152 = vld [vmem:[#allocation2 + $0x68] sm:$0xf]
      %v1153 = vld [vmem:[#allocation2 + $0x6c] sm:$0x1]
      %v1154 = vld [vmem:[#allocation2 + $0x74] sm:$0xf]
      %v1155 = vld [vmem:[#allocation2 + $0x78] sm:$0xf]
      %v1156 = vld [vmem:[#allocation2 + $0x7c] sm:$0x1]
      %v1157 = vld [vmem:[#allocation2 + $0x84] sm:$0xf]
      %v1158 = vld [vmem:[#allocation2 + $0x88] sm:$0xf]
      %v1159 = vld [vmem:[#allocation2 + $0x8c] sm:$0x1]
      %v1160 = vld [vmem:[#allocation2 + $0x94] sm:$0xf]
      %v1161 = vld [vmem:[#allocation2 + $0x98] sm:$0xf]
      %v1162 = vld [vmem:[#allocation2 + $0x9c] sm:$0x1]
      %v1163 = vld [vmem:[#allocation2 + $0xa4] sm:$0xf]
      %v1164 = vld [vmem:[#allocation2 + $0xa8] sm:$0xf]
      %v1165 = vld [vmem:[#allocation2 + $0xac] sm:$0x1]
      %v1166 = vld [vmem:[#allocation2 + $0xb4] sm:$0xf]
      %v1167 = vld [vmem:[#allocation2 + $0xb8] sm:$0xf]
      %v1168 = vld [vmem:[#allocation2 + $0xbc] sm:$0x1]
      %v1169 = vld [vmem:[#allocation2 + $0xc4] sm:$0xf]
      %v1170 = vld [vmem:[#allocation2 + $0xc8] sm:$0xf]
      %v1171 = vld [vmem:[#allocation2 + $0xcc] sm:$0x1]
      %v1172 = vld [vmem:[#allocation2 + $0xd4] sm:$0xf]
      %v1173 = vld [vmem:[#allocation2 + $0xd8] sm:$0xf]
      %v1174 = vld [vmem:[#allocation2 + $0xdc] sm:$0x1]
      %v1175 = vld [vmem:[#allocation2 + $0xe4] sm:$0xf]
      %v1176 = vld [vmem:[#allocation2 + $0xe8] sm:$0xf]
      %v1177 = vld [vmem:[#allocation2 + $0xec] sm:$0x1]
      %v1178 = vld [vmem:[#allocation2 + $0xf4] sm:$0xf]
      %v1179 = vld [vmem:[#allocation2 + $0xf8] sm:$0xf]
      %v1180 = vld [vmem:[#allocation2 + $0xfc] sm:$0x1]
      %vm1181 = vsmask.f32 3328
      %vm1182 = vsmask.f32 7440
      %vm1183 = vmor %vm1181, %vm1182
      %v1185 = vshrl.u32 %v1133, 16
      %v1187 = vrot.slane %v1185, 4
      %v1188 = vshll.u32 %v1133, 16
      %v1190 = vrot.slane %v1188, 5
      %v1191 = vor.u32 %v1187, %v1190
      %v1192 = vrot.slane %v1191, 4
      %v1194 = vshll.u32 %v1134, 16
      %v1196 = vrot.slane %v1194, 5
      %v1197 = vsel %vm1183, %v1192, %v1196
      %v1198 = vshrl.u32 %v1134, 16
      %v1200 = vrot.slane %v1198, 4
      %v1201 = vor.u32 %v1200, %v1196
      %v1202 = vrot.slane %v1201, 4
      %v1204 = vshll.u32 %v1135, 16
      %v1206 = vrot.slane %v1204, 5
      %v1207 = vsel %vm1183, %v1202, %v1206
      %v1209 = vshrl.u32 %v1136, 16
      %v1211 = vrot.slane %v1209, 4
      %v1212 = vshll.u32 %v1136, 16
      %v1214 = vrot.slane %v1212, 5
      %v1215 = vor.u32 %v1211, %v1214
      %v1216 = vrot.slane %v1215, 4
      %v1218 = vshll.u32 %v1137, 16
      %v1220 = vrot.slane %v1218, 5
      %v1221 = vsel %vm1183, %v1216, %v1220
      %v1222 = vshrl.u32 %v1137, 16
      %v1224 = vrot.slane %v1222, 4
      %v1225 = vor.u32 %v1224, %v1220
      %v1226 = vrot.slane %v1225, 4
      %v1228 = vshll.u32 %v1138, 16
      %v1230 = vrot.slane %v1228, 5
      %v1231 = vsel %vm1183, %v1226, %v1230
      %v1233 = vshrl.u32 %v1139, 16
      %v1235 = vrot.slane %v1233, 4
      %v1236 = vshll.u32 %v1139, 16
      %v1238 = vrot.slane %v1236, 5
      %v1239 = vor.u32 %v1235, %v1238
      %v1240 = vrot.slane %v1239, 4
      %v1242 = vshll.u32 %v1140, 16
      %v1244 = vrot.slane %v1242, 5
      %v1245 = vsel %vm1183, %v1240, %v1244
      %v1246 = vshrl.u32 %v1140, 16
      %v1248 = vrot.slane %v1246, 4
      %v1249 = vor.u32 %v1248, %v1244
      %v1250 = vrot.slane %v1249, 4
      %v1252 = vshll.u32 %v1141, 16
      %v1254 = vrot.slane %v1252, 5
      %v1255 = vsel %vm1183, %v1250, %v1254
      %v1257 = vshrl.u32 %v1142, 16
      %v1259 = vrot.slane %v1257, 4
      %v1260 = vshll.u32 %v1142, 16
      %v1262 = vrot.slane %v1260, 5
      %v1263 = vor.u32 %v1259, %v1262
      %v1264 = vrot.slane %v1263, 4
      %v1266 = vshll.u32 %v1143, 16
      %v1268 = vrot.slane %v1266, 5
      %v1269 = vsel %vm1183, %v1264, %v1268
      %v1270 = vshrl.u32 %v1143, 16
      %v1272 = vrot.slane %v1270, 4
      %v1273 = vor.u32 %v1272, %v1268
      %v1274 = vrot.slane %v1273, 4
      %v1276 = vshll.u32 %v1144, 16
      %v1278 = vrot.slane %v1276, 5
      %v1279 = vsel %vm1183, %v1274, %v1278
      %v1281 = vshrl.u32 %v1145, 16
      %v1283 = vrot.slane %v1281, 4
      %v1284 = vshll.u32 %v1145, 16
      %v1286 = vrot.slane %v1284, 5
      %v1287 = vor.u32 %v1283, %v1286
      %v1288 = vrot.slane %v1287, 4
      %v1290 = vshll.u32 %v1146, 16
      %v1292 = vrot.slane %v1290, 5
      %v1293 = vsel %vm1183, %v1288, %v1292
      %v1294 = vshrl.u32 %v1146, 16
      %v1296 = vrot.slane %v1294, 4
      %v1297 = vor.u32 %v1296, %v1292
      %v1298 = vrot.slane %v1297, 4
      %v1300 = vshll.u32 %v1147, 16
      %v1302 = vrot.slane %v1300, 5
      %v1303 = vsel %vm1183, %v1298, %v1302
      %v1305 = vshrl.u32 %v1148, 16
      %v1307 = vrot.slane %v1305, 4
      %v1308 = vshll.u32 %v1148, 16
      %v1310 = vrot.slane %v1308, 5
      %v1311 = vor.u32 %v1307, %v1310
      %v1312 = vrot.slane %v1311, 4
      %v1314 = vshll.u32 %v1149, 16
      %v1316 = vrot.slane %v1314, 5
      %v1317 = vsel %vm1183, %v1312, %v1316
      %v1318 = vshrl.u32 %v1149, 16
      %v1320 = vrot.slane %v1318, 4
      %v1321 = vor.u32 %v1320, %v1316
      %v1322 = vrot.slane %v1321, 4
      %v1324 = vshll.u32 %v1150, 16
      %v1326 = vrot.slane %v1324, 5
      %v1327 = vsel %vm1183, %v1322, %v1326
      %v1329 = vshrl.u32 %v1151, 16
      %v1331 = vrot.slane %v1329, 4
      %v1332 = vshll.u32 %v1151, 16
      %v1334 = vrot.slane %v1332, 5
      %v1335 = vor.u32 %v1331, %v1334
      %v1336 = vrot.slane %v1335, 4
      %v1338 = vshll.u32 %v1152, 16
      %v1340 = vrot.slane %v1338, 5
      %v1341 = vsel %vm1183, %v1336, %v1340
      %v1342 = vshrl.u32 %v1152, 16
      %v1344 = vrot.slane %v1342, 4
      %v1345 = vor.u32 %v1344, %v1340
      %v1346 = vrot.slane %v1345, 4
      %v1348 = vshll.u32 %v1153, 16
      %v1350 = vrot.slane %v1348, 5
      %v1351 = vsel %vm1183, %v1346, %v1350
      %v1353 = vshrl.u32 %v1154, 16
      %v1355 = vrot.slane %v1353, 4
      %v1356 = vshll.u32 %v1154, 16
      %v1358 = vrot.slane %v1356, 5
      %v1359 = vor.u32 %v1355, %v1358
      %v1360 = vrot.slane %v1359, 4
      %v1362 = vshll.u32 %v1155, 16
      %v1364 = vrot.slane %v1362, 5
      %v1365 = vsel %vm1183, %v1360, %v1364
      %v1366 = vshrl.u32 %v1155, 16
      %v1368 = vrot.slane %v1366, 4
      %v1369 = vor.u32 %v1368, %v1364
      %v1370 = vrot.slane %v1369, 4
      %v1372 = vshll.u32 %v1156, 16
      %v1374 = vrot.slane %v1372, 5
      %v1375 = vsel %vm1183, %v1370, %v1374
      %v1377 = vshrl.u32 %v1157, 16
      %v1379 = vrot.slane %v1377, 4
      %v1380 = vshll.u32 %v1157, 16
      %v1382 = vrot.slane %v1380, 5
      %v1383 = vor.u32 %v1379, %v1382
      %v1384 = vrot.slane %v1383, 4
      %v1386 = vshll.u32 %v1158, 16
      %v1388 = vrot.slane %v1386, 5
      %v1389 = vsel %vm1183, %v1384, %v1388
      %v1390 = vshrl.u32 %v1158, 16
      %v1392 = vrot.slane %v1390, 4
      %v1393 = vor.u32 %v1392, %v1388
      %v1394 = vrot.slane %v1393, 4
      %v1396 = vshll.u32 %v1159, 16
      %v1398 = vrot.slane %v1396, 5
      %v1399 = vsel %vm1183, %v1394, %v1398
      %v1401 = vshrl.u32 %v1160, 16
      %v1403 = vrot.slane %v1401, 4
      %v1404 = vshll.u32 %v1160, 16
      %v1406 = vrot.slane %v1404, 5
      %v1407 = vor.u32 %v1403, %v1406
      %v1408 = vrot.slane %v1407, 4
      %v1410 = vshll.u32 %v1161, 16
      %v1412 = vrot.slane %v1410, 5
      %v1413 = vsel %vm1183, %v1408, %v1412
      %v1414 = vshrl.u32 %v1161, 16
      %v1416 = vrot.slane %v1414, 4
      %v1417 = vor.u32 %v1416, %v1412
      %v1418 = vrot.slane %v1417, 4
      %v1420 = vshll.u32 %v1162, 16
      %v1422 = vrot.slane %v1420, 5
      %v1423 = vsel %vm1183, %v1418, %v1422
      %v1425 = vshrl.u32 %v1163, 16
      %v1427 = vrot.slane %v1425, 4
      %v1428 = vshll.u32 %v1163, 16
      %v1430 = vrot.slane %v1428, 5
      %v1431 = vor.u32 %v1427, %v1430
      %v1432 = vrot.slane %v1431, 4
      %v1434 = vshll.u32 %v1164, 16
      %v1436 = vrot.slane %v1434, 5
      %v1437 = vsel %vm1183, %v1432, %v1436
      %v1438 = vshrl.u32 %v1164, 16
      %v1440 = vrot.slane %v1438, 4
      %v1441 = vor.u32 %v1440, %v1436
      %v1442 = vrot.slane %v1441, 4
      %v1444 = vshll.u32 %v1165, 16
      %v1446 = vrot.slane %v1444, 5
      %v1447 = vsel %vm1183, %v1442, %v1446
      %v1449 = vshrl.u32 %v1166, 16
      %v1451 = vrot.slane %v1449, 4
      %v1452 = vshll.u32 %v1166, 16
      %v1454 = vrot.slane %v1452, 5
      %v1455 = vor.u32 %v1451, %v1454
      %v1456 = vrot.slane %v1455, 4
      %v1458 = vshll.u32 %v1167, 16
      %v1460 = vrot.slane %v1458, 5
      %v1461 = vsel %vm1183, %v1456, %v1460
      %v1462 = vshrl.u32 %v1167, 16
      %v1464 = vrot.slane %v1462, 4
      %v1465 = vor.u32 %v1464, %v1460
      %v1466 = vrot.slane %v1465, 4
      %v1468 = vshll.u32 %v1168, 16
      %v1470 = vrot.slane %v1468, 5
      %v1471 = vsel %vm1183, %v1466, %v1470
      %v1473 = vshrl.u32 %v1169, 16
      %v1475 = vrot.slane %v1473, 4
      %v1476 = vshll.u32 %v1169, 16
      %v1478 = vrot.slane %v1476, 5
      %v1479 = vor.u32 %v1475, %v1478
      %v1480 = vrot.slane %v1479, 4
      %v1482 = vshll.u32 %v1170, 16
      %v1484 = vrot.slane %v1482, 5
      %v1485 = vsel %vm1183, %v1480, %v1484
      %v1486 = vshrl.u32 %v1170, 16
      %v1488 = vrot.slane %v1486, 4
      %v1489 = vor.u32 %v1488, %v1484
      %v1490 = vrot.slane %v1489, 4
      %v1492 = vshll.u32 %v1171, 16
      %v1494 = vrot.slane %v1492, 5
      %v1495 = vsel %vm1183, %v1490, %v1494
      %v1497 = vshrl.u32 %v1172, 16
      %v1499 = vrot.slane %v1497, 4
      %v1500 = vshll.u32 %v1172, 16
      %v1502 = vrot.slane %v1500, 5
      %v1503 = vor.u32 %v1499, %v1502
      %v1504 = vrot.slane %v1503, 4
      %v1506 = vshll.u32 %v1173, 16
      %v1508 = vrot.slane %v1506, 5
      %v1509 = vsel %vm1183, %v1504, %v1508
      %v1510 = vshrl.u32 %v1173, 16
      %v1512 = vrot.slane %v1510, 4
      %v1513 = vor.u32 %v1512, %v1508
      %v1514 = vrot.slane %v1513, 4
      %v1516 = vshll.u32 %v1174, 16
      %v1518 = vrot.slane %v1516, 5
      %v1519 = vsel %vm1183, %v1514, %v1518
      %v1521 = vshrl.u32 %v1175, 16
      %v1523 = vrot.slane %v1521, 4
      %v1524 = vshll.u32 %v1175, 16
      %v1526 = vrot.slane %v1524, 5
      %v1527 = vor.u32 %v1523, %v1526
      %v1528 = vrot.slane %v1527, 4
      %v1530 = vshll.u32 %v1176, 16
      %v1532 = vrot.slane %v1530, 5
      %v1533 = vsel %vm1183, %v1528, %v1532
      %v1534 = vshrl.u32 %v1176, 16
      %v1536 = vrot.slane %v1534, 4
      %v1537 = vor.u32 %v1536, %v1532
      %v1538 = vrot.slane %v1537, 4
      %v1540 = vshll.u32 %v1177, 16
      %v1542 = vrot.slane %v1540, 5
      %v1543 = vsel %vm1183, %v1538, %v1542
      %v1545 = vshrl.u32 %v1178, 16
      %v1547 = vrot.slane %v1545, 4
      %v1548 = vshll.u32 %v1178, 16
      %v1550 = vrot.slane %v1548, 5
      %v1551 = vor.u32 %v1547, %v1550
      %v1552 = vrot.slane %v1551, 4
      %v1554 = vshll.u32 %v1179, 16
      %v1556 = vrot.slane %v1554, 5
      %v1557 = vsel %vm1183, %v1552, %v1556
      %v1558 = vshrl.u32 %v1179, 16
      %v1560 = vrot.slane %v1558, 4
      %v1561 = vor.u32 %v1560, %v1556
      %v1562 = vrot.slane %v1561, 4
      %v1564 = vshll.u32 %v1180, 16
      %v1566 = vrot.slane %v1564, 5
      %v1567 = vsel %vm1183, %v1562, %v1566
      %1568 = vrot.lane.b32.xlu0 %v1197, 8
      %v1569 = vpop.permute.xlu0 %1568
      %1570 = vrot.lane.b32.xlu0 %v1207, 8
      %v1571 = vpop.permute.xlu0 %1570
      %1572 = vrot.lane.b32.xlu0 %v1221, 8
      %v1573 = vpop.permute.xlu0 %1572
      %1574 = vrot.lane.b32.xlu0 %v1231, 8
      %v1575 = vpop.permute.xlu0 %1574
      %1576 = vrot.lane.b32.xlu0 %v1245, 8
      %v1577 = vpop.permute.xlu0 %1576
      %1578 = vrot.lane.b32.xlu0 %v1255, 8
      %v1579 = vpop.permute.xlu0 %1578
      %1580 = vrot.lane.b32.xlu0 %v1269, 8
      %v1581 = vpop.permute.xlu0 %1580
      %1582 = vrot.lane.b32.xlu0 %v1279, 8
      %v1583 = vpop.permute.xlu0 %1582
      %1584 = vrot.lane.b32.xlu0 %v1293, 8
      %v1585 = vpop.permute.xlu0 %1584
      %1586 = vrot.lane.b32.xlu0 %v1303, 8
      %v1587 = vpop.permute.xlu0 %1586
      %1588 = vrot.lane.b32.xlu0 %v1317, 8
      %v1589 = vpop.permute.xlu0 %1588
      %1590 = vrot.lane.b32.xlu0 %v1327, 8
      %v1591 = vpop.permute.xlu0 %1590
      %1592 = vrot.lane.b32.xlu0 %v1341, 8
      %v1593 = vpop.permute.xlu0 %1592
      %1594 = vrot.lane.b32.xlu0 %v1351, 8
      %v1595 = vpop.permute.xlu0 %1594
      %1596 = vrot.lane.b32.xlu0 %v1365, 8
      %v1597 = vpop.permute.xlu0 %1596
      %1598 = vrot.lane.b32.xlu0 %v1375, 8
      %v1599 = vpop.permute.xlu0 %1598
      %1600 = vrot.lane.b32.xlu0 %v1389, 8
      %v1601 = vpop.permute.xlu0 %1600
      %1602 = vrot.lane.b32.xlu0 %v1399, 8
      %v1603 = vpop.permute.xlu0 %1602
      %1604 = vrot.lane.b32.xlu0 %v1413, 8
      %v1605 = vpop.permute.xlu0 %1604
      %1606 = vrot.lane.b32.xlu0 %v1423, 8
      %v1607 = vpop.permute.xlu0 %1606
      %1608 = vrot.lane.b32.xlu0 %v1437, 8
      %v1609 = vpop.permute.xlu0 %1608
      %1610 = vrot.lane.b32.xlu0 %v1447, 8
      %v1611 = vpop.permute.xlu0 %1610
      %1612 = vrot.lane.b32.xlu0 %v1461, 8
      %v1613 = vpop.permute.xlu0 %1612
      %1614 = vrot.lane.b32.xlu0 %v1471, 8
      %v1615 = vpop.permute.xlu0 %1614
      %1616 = vrot.lane.b32.xlu0 %v1485, 8
      %v1617 = vpop.permute.xlu0 %1616
      %1618 = vrot.lane.b32.xlu0 %v1495, 8
      %v1619 = vpop.permute.xlu0 %1618
      %1620 = vrot.lane.b32.xlu0 %v1509, 8
      %v1621 = vpop.permute.xlu0 %1620
      %1622 = vrot.lane.b32.xlu0 %v1519, 8
      %v1623 = vpop.permute.xlu0 %1622
      %1624 = vrot.lane.b32.xlu0 %v1533, 8
      %v1625 = vpop.permute.xlu0 %1624
      %1626 = vrot.lane.b32.xlu0 %v1543, 8
      %v1627 = vpop.permute.xlu0 %1626
      %1628 = vrot.lane.b32.xlu0 %v1557, 8
      %v1629 = vpop.permute.xlu0 %1628
      %1630 = vrot.lane.b32.xlu0 %v1567, 8
      %v1631 = vpop.permute.xlu0 %1630
      %vm1664 = vcmask 93248
      %1665 = vst.msk [vmem:[#allocation3] sm:$0xf] %vm1664, %v1569
      %1666 = vst.msk [vmem:[#allocation3 + $0x4] sm:$0xf] %vm1664, %v1571
      %1667 = vst.msk [vmem:[#allocation3 + $0x8] sm:$0xf] %vm1664, %v1573
      %1668 = vst.msk [vmem:[#allocation3 + $0xc] sm:$0xf] %vm1664, %v1575
      %1669 = vst.msk [vmem:[#allocation3 + $0x10] sm:$0xf] %vm1664, %v1577
      %1670 = vst.msk [vmem:[#allocation3 + $0x14] sm:$0xf] %vm1664, %v1579
      %1671 = vst.msk [vmem:[#allocation3 + $0x18] sm:$0xf] %vm1664, %v1581
      %1672 = vst.msk [vmem:[#allocation3 + $0x1c] sm:$0xf] %vm1664, %v1583
      %1673 = vst.msk [vmem:[#allocation3 + $0x20] sm:$0xf] %vm1664, %v1585
      %1674 = vst.msk [vmem:[#allocation3 + $0x24] sm:$0xf] %vm1664, %v1587
      %1675 = vst.msk [vmem:[#allocation3 + $0x28] sm:$0xf] %vm1664, %v1589
      %1676 = vst.msk [vmem:[#allocation3 + $0x2c] sm:$0xf] %vm1664, %v1591
      %1677 = vst.msk [vmem:[#allocation3 + $0x30] sm:$0xf] %vm1664, %v1593
      %1678 = vst.msk [vmem:[#allocation3 + $0x34] sm:$0xf] %vm1664, %v1595
      %1679 = vst.msk [vmem:[#allocation3 + $0x38] sm:$0xf] %vm1664, %v1597
      %1680 = vst.msk [vmem:[#allocation3 + $0x3c] sm:$0xf] %vm1664, %v1599
      %1681 = vst.msk [vmem:[#allocation3 + $0x40] sm:$0xf] %vm1664, %v1601
      %1682 = vst.msk [vmem:[#allocation3 + $0x44] sm:$0xf] %vm1664, %v1603
      %1683 = vst.msk [vmem:[#allocation3 + $0x48] sm:$0xf] %vm1664, %v1605
      %1684 = vst.msk [vmem:[#allocation3 + $0x4c] sm:$0xf] %vm1664, %v1607
      %1685 = vst.msk [vmem:[#allocation3 + $0x50] sm:$0xf] %vm1664, %v1609
      %1686 = vst.msk [vmem:[#allocation3 + $0x54] sm:$0xf] %vm1664, %v1611
      %1687 = vst.msk [vmem:[#allocation3 + $0x58] sm:$0xf] %vm1664, %v1613
      %1688 = vst.msk [vmem:[#allocation3 + $0x5c] sm:$0xf] %vm1664, %v1615
      %1689 = vst.msk [vmem:[#allocation3 + $0x60] sm:$0xf] %vm1664, %v1617
      %1690 = vst.msk [vmem:[#allocation3 + $0x64] sm:$0xf] %vm1664, %v1619
      %1691 = vst.msk [vmem:[#allocation3 + $0x68] sm:$0xf] %vm1664, %v1621
      %1692 = vst.msk [vmem:[#allocation3 + $0x6c] sm:$0xf] %vm1664, %v1623
      %1693 = vst.msk [vmem:[#allocation3 + $0x70] sm:$0xf] %vm1664, %v1625
      %1694 = vst.msk [vmem:[#allocation3 + $0x74] sm:$0xf] %vm1664, %v1627
      %1695 = vst.msk [vmem:[#allocation3 + $0x78] sm:$0xf] %vm1664, %v1629
      %1696 = vst.msk [vmem:[#allocation3 + $0x7c] sm:$0xf] %vm1664, %v1631
      %v1697 = vld [vmem:[%s381] sm:$0x8]
      %v1698 = vld [vmem:[%s381 + $0x4] sm:$0xf]
      %v1699 = vld [vmem:[%s381 + $0x8] sm:$0xf]
      %v1700 = vld [vmem:[%s381 + $0x10] sm:$0x8]
      %v1701 = vld [vmem:[%s381 + $0x14] sm:$0xf]
      %v1702 = vld [vmem:[%s381 + $0x18] sm:$0xf]
      %v1703 = vld [vmem:[%s381 + $0x20] sm:$0x8]
      %v1704 = vld [vmem:[%s381 + $0x24] sm:$0xf]
      %v1705 = vld [vmem:[%s381 + $0x28] sm:$0xf]
      %v1706 = vld [vmem:[%s381 + $0x30] sm:$0x8]
      %v1707 = vld [vmem:[%s381 + $0x34] sm:$0xf]
      %v1708 = vld [vmem:[%s381 + $0x38] sm:$0xf]
      %v1709 = vld [vmem:[%s381 + $0x40] sm:$0x8]
      %v1710 = vld [vmem:[%s381 + $0x44] sm:$0xf]
      %v1711 = vld [vmem:[%s381 + $0x48] sm:$0xf]
      %v1712 = vld [vmem:[%s381 + $0x50] sm:$0x8]
      %v1713 = vld [vmem:[%s381 + $0x54] sm:$0xf]
      %v1714 = vld [vmem:[%s381 + $0x58] sm:$0xf]
      %v1715 = vld [vmem:[%s381 + $0x60] sm:$0x8]
      %v1716 = vld [vmem:[%s381 + $0x64] sm:$0xf]
      %v1717 = vld [vmem:[%s381 + $0x68] sm:$0xf]
      %v1718 = vld [vmem:[%s381 + $0x70] sm:$0x8]
      %v1719 = vld [vmem:[%s381 + $0x74] sm:$0xf]
      %v1720 = vld [vmem:[%s381 + $0x78] sm:$0xf]
      %v1721 = vld [vmem:[%s381 + $0x80] sm:$0x8]
      %v1722 = vld [vmem:[%s381 + $0x84] sm:$0xf]
      %v1723 = vld [vmem:[%s381 + $0x88] sm:$0xf]
      %v1724 = vld [vmem:[%s381 + $0x90] sm:$0x8]
      %v1725 = vld [vmem:[%s381 + $0x94] sm:$0xf]
      %v1726 = vld [vmem:[%s381 + $0x98] sm:$0xf]
      %v1727 = vld [vmem:[%s381 + $0xa0] sm:$0x8]
      %v1728 = vld [vmem:[%s381 + $0xa4] sm:$0xf]
      %v1729 = vld [vmem:[%s381 + $0xa8] sm:$0xf]
      %v1730 = vld [vmem:[%s381 + $0xb0] sm:$0x8]
      %v1731 = vld [vmem:[%s381 + $0xb4] sm:$0xf]
      %v1732 = vld [vmem:[%s381 + $0xb8] sm:$0xf]
      %v1733 = vld [vmem:[%s381 + $0xc0] sm:$0x8]
      %v1734 = vld [vmem:[%s381 + $0xc4] sm:$0xf]
      %v1735 = vld [vmem:[%s381 + $0xc8] sm:$0xf]
      %v1736 = vld [vmem:[%s381 + $0xd0] sm:$0x8]
      %v1737 = vld [vmem:[%s381 + $0xd4] sm:$0xf]
      %v1738 = vld [vmem:[%s381 + $0xd8] sm:$0xf]
      %v1739 = vld [vmem:[%s381 + $0xe0] sm:$0x8]
      %v1740 = vld [vmem:[%s381 + $0xe4] sm:$0xf]
      %v1741 = vld [vmem:[%s381 + $0xe8] sm:$0xf]
      %v1742 = vld [vmem:[%s381 + $0xf0] sm:$0x8]
      %v1743 = vld [vmem:[%s381 + $0xf4] sm:$0xf]
      %v1744 = vld [vmem:[%s381 + $0xf8] sm:$0xf]
      %v1746 = vshrl.u32 %v1697, 16
      %v1748 = vrot.slane %v1746, 7
      %v1749 = vrot.slane %v1748, 4
      %v1751 = vshrl.u32 %v1698, 16
      %v1753 = vrot.slane %v1751, 7
      %v1754 = vshll.u32 %v1698, 16
      %v1756 = vor.u32 %v1753, %v1754
      %v1757 = vsel %vm523, %v1749, %v1756
      %v1758 = vrot.slane %v1753, 4
      %v1760 = vshrl.u32 %v1699, 16
      %v1762 = vrot.slane %v1760, 7
      %v1763 = vshll.u32 %v1699, 16
      %v1765 = vor.u32 %v1762, %v1763
      %v1766 = vsel %vm523, %v1758, %v1765
      %v1768 = vshrl.u32 %v1700, 16
      %v1770 = vrot.slane %v1768, 7
      %v1771 = vrot.slane %v1770, 4
      %v1773 = vshrl.u32 %v1701, 16
      %v1775 = vrot.slane %v1773, 7
      %v1776 = vshll.u32 %v1701, 16
      %v1778 = vor.u32 %v1775, %v1776
      %v1779 = vsel %vm523, %v1771, %v1778
      %v1780 = vrot.slane %v1775, 4
      %v1782 = vshrl.u32 %v1702, 16
      %v1784 = vrot.slane %v1782, 7
      %v1785 = vshll.u32 %v1702, 16
      %v1787 = vor.u32 %v1784, %v1785
      %v1788 = vsel %vm523, %v1780, %v1787
      %v1790 = vshrl.u32 %v1703, 16
      %v1792 = vrot.slane %v1790, 7
      %v1793 = vrot.slane %v1792, 4
      %v1795 = vshrl.u32 %v1704, 16
      %v1797 = vrot.slane %v1795, 7
      %v1798 = vshll.u32 %v1704, 16
      %v1800 = vor.u32 %v1797, %v1798
      %v1801 = vsel %vm523, %v1793, %v1800
      %v1802 = vrot.slane %v1797, 4
      %v1804 = vshrl.u32 %v1705, 16
      %v1806 = vrot.slane %v1804, 7
      %v1807 = vshll.u32 %v1705, 16
      %v1809 = vor.u32 %v1806, %v1807
      %v1810 = vsel %vm523, %v1802, %v1809
      %v1812 = vshrl.u32 %v1706, 16
      %v1814 = vrot.slane %v1812, 7
      %v1815 = vrot.slane %v1814, 4
      %v1817 = vshrl.u32 %v1707, 16
      %v1819 = vrot.slane %v1817, 7
      %v1820 = vshll.u32 %v1707, 16
      %v1822 = vor.u32 %v1819, %v1820
      %v1823 = vsel %vm523, %v1815, %v1822
      %v1824 = vrot.slane %v1819, 4
      %v1826 = vshrl.u32 %v1708, 16
      %v1828 = vrot.slane %v1826, 7
      %v1829 = vshll.u32 %v1708, 16
      %v1831 = vor.u32 %v1828, %v1829
      %v1832 = vsel %vm523, %v1824, %v1831
      %v1834 = vshrl.u32 %v1709, 16
      %v1836 = vrot.slane %v1834, 7
      %v1837 = vrot.slane %v1836, 4
      %v1839 = vshrl.u32 %v1710, 16
      %v1841 = vrot.slane %v1839, 7
      %v1842 = vshll.u32 %v1710, 16
      %v1844 = vor.u32 %v1841, %v1842
      %v1845 = vsel %vm523, %v1837, %v1844
      %v1846 = vrot.slane %v1841, 4
      %v1848 = vshrl.u32 %v1711, 16
      %v1850 = vrot.slane %v1848, 7
      %v1851 = vshll.u32 %v1711, 16
      %v1853 = vor.u32 %v1850, %v1851
      %v1854 = vsel %vm523, %v1846, %v1853
      %v1856 = vshrl.u32 %v1712, 16
      %v1858 = vrot.slane %v1856, 7
      %v1859 = vrot.slane %v1858, 4
      %v1861 = vshrl.u32 %v1713, 16
      %v1863 = vrot.slane %v1861, 7
      %v1864 = vshll.u32 %v1713, 16
      %v1866 = vor.u32 %v1863, %v1864
      %v1867 = vsel %vm523, %v1859, %v1866
      %v1868 = vrot.slane %v1863, 4
      %v1870 = vshrl.u32 %v1714, 16
      %v1872 = vrot.slane %v1870, 7
      %v1873 = vshll.u32 %v1714, 16
      %v1875 = vor.u32 %v1872, %v1873
      %v1876 = vsel %vm523, %v1868, %v1875
      %v1878 = vshrl.u32 %v1715, 16
      %v1880 = vrot.slane %v1878, 7
      %v1881 = vrot.slane %v1880, 4
      %v1883 = vshrl.u32 %v1716, 16
      %v1885 = vrot.slane %v1883, 7
      %v1886 = vshll.u32 %v1716, 16
      %v1888 = vor.u32 %v1885, %v1886
      %v1889 = vsel %vm523, %v1881, %v1888
      %v1890 = vrot.slane %v1885, 4
      %v1892 = vshrl.u32 %v1717, 16
      %v1894 = vrot.slane %v1892, 7
      %v1895 = vshll.u32 %v1717, 16
      %v1897 = vor.u32 %v1894, %v1895
      %v1898 = vsel %vm523, %v1890, %v1897
      %v1900 = vshrl.u32 %v1718, 16
      %v1902 = vrot.slane %v1900, 7
      %v1903 = vrot.slane %v1902, 4
      %v1905 = vshrl.u32 %v1719, 16
      %v1907 = vrot.slane %v1905, 7
      %v1908 = vshll.u32 %v1719, 16
      %v1910 = vor.u32 %v1907, %v1908
      %v1911 = vsel %vm523, %v1903, %v1910
      %v1912 = vrot.slane %v1907, 4
      %v1914 = vshrl.u32 %v1720, 16
      %v1916 = vrot.slane %v1914, 7
      %v1917 = vshll.u32 %v1720, 16
      %v1919 = vor.u32 %v1916, %v1917
      %v1920 = vsel %vm523, %v1912, %v1919
      %v1922 = vshrl.u32 %v1721, 16
      %v1924 = vrot.slane %v1922, 7
      %v1925 = vrot.slane %v1924, 4
      %v1927 = vshrl.u32 %v1722, 16
      %v1929 = vrot.slane %v1927, 7
      %v1930 = vshll.u32 %v1722, 16
      %v1932 = vor.u32 %v1929, %v1930
      %v1933 = vsel %vm523, %v1925, %v1932
      %v1934 = vrot.slane %v1929, 4
      %v1936 = vshrl.u32 %v1723, 16
      %v1938 = vrot.slane %v1936, 7
      %v1939 = vshll.u32 %v1723, 16
      %v1941 = vor.u32 %v1938, %v1939
      %v1942 = vsel %vm523, %v1934, %v1941
      %v1944 = vshrl.u32 %v1724, 16
      %v1946 = vrot.slane %v1944, 7
      %v1947 = vrot.slane %v1946, 4
      %v1949 = vshrl.u32 %v1725, 16
      %v1951 = vrot.slane %v1949, 7
      %v1952 = vshll.u32 %v1725, 16
      %v1954 = vor.u32 %v1951, %v1952
      %v1955 = vsel %vm523, %v1947, %v1954
      %v1956 = vrot.slane %v1951, 4
      %v1958 = vshrl.u32 %v1726, 16
      %v1960 = vrot.slane %v1958, 7
      %v1961 = vshll.u32 %v1726, 16
      %v1963 = vor.u32 %v1960, %v1961
      %v1964 = vsel %vm523, %v1956, %v1963
      %v1966 = vshrl.u32 %v1727, 16
      %v1968 = vrot.slane %v1966, 7
      %v1969 = vrot.slane %v1968, 4
      %v1971 = vshrl.u32 %v1728, 16
      %v1973 = vrot.slane %v1971, 7
      %v1974 = vshll.u32 %v1728, 16
      %v1976 = vor.u32 %v1973, %v1974
      %v1977 = vsel %vm523, %v1969, %v1976
      %v1978 = vrot.slane %v1973, 4
      %v1980 = vshrl.u32 %v1729, 16
      %v1982 = vrot.slane %v1980, 7
      %v1983 = vshll.u32 %v1729, 16
      %v1985 = vor.u32 %v1982, %v1983
      %v1986 = vsel %vm523, %v1978, %v1985
      %v1988 = vshrl.u32 %v1730, 16
      %v1990 = vrot.slane %v1988, 7
      %v1991 = vrot.slane %v1990, 4
      %v1993 = vshrl.u32 %v1731, 16
      %v1995 = vrot.slane %v1993, 7
      %v1996 = vshll.u32 %v1731, 16
      %v1998 = vor.u32 %v1995, %v1996
      %v1999 = vsel %vm523, %v1991, %v1998
      %v2000 = vrot.slane %v1995, 4
      %v2002 = vshrl.u32 %v1732, 16
      %v2004 = vrot.slane %v2002, 7
      %v2005 = vshll.u32 %v1732, 16
      %v2007 = vor.u32 %v2004, %v2005
      %v2008 = vsel %vm523, %v2000, %v2007
      %v2010 = vshrl.u32 %v1733, 16
      %v2012 = vrot.slane %v2010, 7
      %v2013 = vrot.slane %v2012, 4
      %v2015 = vshrl.u32 %v1734, 16
      %v2017 = vrot.slane %v2015, 7
      %v2018 = vshll.u32 %v1734, 16
      %v2020 = vor.u32 %v2017, %v2018
      %v2021 = vsel %vm523, %v2013, %v2020
      %v2022 = vrot.slane %v2017, 4
      %v2024 = vshrl.u32 %v1735, 16
      %v2026 = vrot.slane %v2024, 7
      %v2027 = vshll.u32 %v1735, 16
      %v2029 = vor.u32 %v2026, %v2027
      %v2030 = vsel %vm523, %v2022, %v2029
      %v2032 = vshrl.u32 %v1736, 16
      %v2034 = vrot.slane %v2032, 7
      %v2035 = vrot.slane %v2034, 4
      %v2037 = vshrl.u32 %v1737, 16
      %v2039 = vrot.slane %v2037, 7
      %v2040 = vshll.u32 %v1737, 16
      %v2042 = vor.u32 %v2039, %v2040
      %v2043 = vsel %vm523, %v2035, %v2042
      %v2044 = vrot.slane %v2039, 4
      %v2046 = vshrl.u32 %v1738, 16
      %v2048 = vrot.slane %v2046, 7
      %v2049 = vshll.u32 %v1738, 16
      %v2051 = vor.u32 %v2048, %v2049
      %v2052 = vsel %vm523, %v2044, %v2051
      %v2054 = vshrl.u32 %v1739, 16
      %v2056 = vrot.slane %v2054, 7
      %v2057 = vrot.slane %v2056, 4
      %v2059 = vshrl.u32 %v1740, 16
      %v2061 = vrot.slane %v2059, 7
      %v2062 = vshll.u32 %v1740, 16
      %v2064 = vor.u32 %v2061, %v2062
      %v2065 = vsel %vm523, %v2057, %v2064
      %v2066 = vrot.slane %v2061, 4
      %v2068 = vshrl.u32 %v1741, 16
      %v2070 = vrot.slane %v2068, 7
      %v2071 = vshll.u32 %v1741, 16
      %v2073 = vor.u32 %v2070, %v2071
      %v2074 = vsel %vm523, %v2066, %v2073
      %v2076 = vshrl.u32 %v1742, 16
      %v2078 = vrot.slane %v2076, 7
      %v2079 = vrot.slane %v2078, 4
      %v2081 = vshrl.u32 %v1743, 16
      %v2083 = vrot.slane %v2081, 7
      %v2084 = vshll.u32 %v1743, 16
      %v2086 = vor.u32 %v2083, %v2084
      %v2087 = vsel %vm523, %v2079, %v2086
      %v2088 = vrot.slane %v2083, 4
      %v2090 = vshrl.u32 %v1744, 16
      %v2092 = vrot.slane %v2090, 7
      %v2093 = vshll.u32 %v1744, 16
      %v2095 = vor.u32 %v2092, %v2093
      %v2096 = vsel %vm523, %v2088, %v2095
      %2097 = vrot.lane.b32.xlu0 %v1757, 12
      %v2098 = vpop.permute.xlu0 %2097
      %2099 = vrot.lane.b32.xlu0 %v1766, 12
      %v2100 = vpop.permute.xlu0 %2099
      %2101 = vrot.lane.b32.xlu0 %v1779, 12
      %v2102 = vpop.permute.xlu0 %2101
      %2103 = vrot.lane.b32.xlu0 %v1788, 12
      %v2104 = vpop.permute.xlu0 %2103
      %2105 = vrot.lane.b32.xlu0 %v1801, 12
      %v2106 = vpop.permute.xlu0 %2105
      %2107 = vrot.lane.b32.xlu0 %v1810, 12
      %v2108 = vpop.permute.xlu0 %2107
      %2109 = vrot.lane.b32.xlu0 %v1823, 12
      %v2110 = vpop.permute.xlu0 %2109
      %2111 = vrot.lane.b32.xlu0 %v1832, 12
      %v2112 = vpop.permute.xlu0 %2111
      %2113 = vrot.lane.b32.xlu0 %v1845, 12
      %v2114 = vpop.permute.xlu0 %2113
      %2115 = vrot.lane.b32.xlu0 %v1854, 12
      %v2116 = vpop.permute.xlu0 %2115
      %2117 = vrot.lane.b32.xlu0 %v1867, 12
      %v2118 = vpop.permute.xlu0 %2117
      %2119 = vrot.lane.b32.xlu0 %v1876, 12
      %v2120 = vpop.permute.xlu0 %2119
      %2121 = vrot.lane.b32.xlu0 %v1889, 12
      %v2122 = vpop.permute.xlu0 %2121
      %2123 = vrot.lane.b32.xlu0 %v1898, 12
      %v2124 = vpop.permute.xlu0 %2123
      %2125 = vrot.lane.b32.xlu0 %v1911, 12
      %v2126 = vpop.permute.xlu0 %2125
      %2127 = vrot.lane.b32.xlu0 %v1920, 12
      %v2128 = vpop.permute.xlu0 %2127
      %2129 = vrot.lane.b32.xlu0 %v1933, 12
      %v2130 = vpop.permute.xlu0 %2129
      %2131 = vrot.lane.b32.xlu0 %v1942, 12
      %v2132 = vpop.permute.xlu0 %2131
      %2133 = vrot.lane.b32.xlu0 %v1955, 12
      %v2134 = vpop.permute.xlu0 %2133
      %2135 = vrot.lane.b32.xlu0 %v1964, 12
      %v2136 = vpop.permute.xlu0 %2135
      %2137 = vrot.lane.b32.xlu0 %v1977, 12
      %v2138 = vpop.permute.xlu0 %2137
      %2139 = vrot.lane.b32.xlu0 %v1986, 12
      %v2140 = vpop.permute.xlu0 %2139
      %2141 = vrot.lane.b32.xlu0 %v1999, 12
      %v2142 = vpop.permute.xlu0 %2141
      %2143 = vrot.lane.b32.xlu0 %v2008, 12
      %v2144 = vpop.permute.xlu0 %2143
      %2145 = vrot.lane.b32.xlu0 %v2021, 12
      %v2146 = vpop.permute.xlu0 %2145
      %2147 = vrot.lane.b32.xlu0 %v2030, 12
      %v2148 = vpop.permute.xlu0 %2147
      %2149 = vrot.lane.b32.xlu0 %v2043, 12
      %v2150 = vpop.permute.xlu0 %2149
      %2151 = vrot.lane.b32.xlu0 %v2052, 12
      %v2152 = vpop.permute.xlu0 %2151
      %2153 = vrot.lane.b32.xlu0 %v2065, 12
      %v2154 = vpop.permute.xlu0 %2153
      %2155 = vrot.lane.b32.xlu0 %v2074, 12
      %v2156 = vpop.permute.xlu0 %2155
      %2157 = vrot.lane.b32.xlu0 %v2087, 12
      %v2158 = vpop.permute.xlu0 %2157
      %2159 = vrot.lane.b32.xlu0 %v2096, 12
      %v2160 = vpop.permute.xlu0 %2159
      %vm2193 = vcmask 126048
      %2194 = vst.msk [vmem:[#allocation3] sm:$0xf] %vm2193, %v2098
      %2195 = vst.msk [vmem:[#allocation3 + $0x4] sm:$0xf] %vm2193, %v2100
      %2196 = vst.msk [vmem:[#allocation3 + $0x8] sm:$0xf] %vm2193, %v2102
      %2197 = vst.msk [vmem:[#allocation3 + $0xc] sm:$0xf] %vm2193, %v2104
      %2198 = vst.msk [vmem:[#allocation3 + $0x10] sm:$0xf] %vm2193, %v2106
      %2199 = vst.msk [vmem:[#allocation3 + $0x14] sm:$0xf] %vm2193, %v2108
      %2200 = vst.msk [vmem:[#allocation3 + $0x18] sm:$0xf] %vm2193, %v2110
      %2201 = vst.msk [vmem:[#allocation3 + $0x1c] sm:$0xf] %vm2193, %v2112
      %2202 = vst.msk [vmem:[#allocation3 + $0x20] sm:$0xf] %vm2193, %v2114
      %2203 = vst.msk [vmem:[#allocation3 + $0x24] sm:$0xf] %vm2193, %v2116
      %2204 = vst.msk [vmem:[#allocation3 + $0x28] sm:$0xf] %vm2193, %v2118
      %2205 = vst.msk [vmem:[#allocation3 + $0x2c] sm:$0xf] %vm2193, %v2120
      %2206 = vst.msk [vmem:[#allocation3 + $0x30] sm:$0xf] %vm2193, %v2122
      %2207 = vst.msk [vmem:[#allocation3 + $0x34] sm:$0xf] %vm2193, %v2124
      %2208 = vst.msk [vmem:[#allocation3 + $0x38] sm:$0xf] %vm2193, %v2126
      %2209 = vst.msk [vmem:[#allocation3 + $0x3c] sm:$0xf] %vm2193, %v2128
      %2210 = vst.msk [vmem:[#allocation3 + $0x40] sm:$0xf] %vm2193, %v2130
      %2211 = vst.msk [vmem:[#allocation3 + $0x44] sm:$0xf] %vm2193, %v2132
      %2212 = vst.msk [vmem:[#allocation3 + $0x48] sm:$0xf] %vm2193, %v2134
      %2213 = vst.msk [vmem:[#allocation3 + $0x4c] sm:$0xf] %vm2193, %v2136
      %2214 = vst.msk [vmem:[#allocation3 + $0x50] sm:$0xf] %vm2193, %v2138
      %2215 = vst.msk [vmem:[#allocation3 + $0x54] sm:$0xf] %vm2193, %v2140
      %2216 = vst.msk [vmem:[#allocation3 + $0x58] sm:$0xf] %vm2193, %v2142
      %2217 = vst.msk [vmem:[#allocation3 + $0x5c] sm:$0xf] %vm2193, %v2144
      %2218 = vst.msk [vmem:[#allocation3 + $0x60] sm:$0xf] %vm2193, %v2146
      %2219 = vst.msk [vmem:[#allocation3 + $0x64] sm:$0xf] %vm2193, %v2148
      %2220 = vst.msk [vmem:[#allocation3 + $0x68] sm:$0xf] %vm2193, %v2150
      %2221 = vst.msk [vmem:[#allocation3 + $0x6c] sm:$0xf] %vm2193, %v2152
      %2222 = vst.msk [vmem:[#allocation3 + $0x70] sm:$0xf] %vm2193, %v2154
      %2223 = vst.msk [vmem:[#allocation3 + $0x74] sm:$0xf] %vm2193, %v2156
      %2224 = vst.msk [vmem:[#allocation3 + $0x78] sm:$0xf] %vm2193, %v2158
      %2225 = vst.msk [vmem:[#allocation3 + $0x7c] sm:$0xf] %vm2193, %v2160
      %v2226 = vld [vmem:[%s381 + $0x4] sm:$0xf]
      %v2227 = vld [vmem:[%s381 + $0x8] sm:$0xf]
      %v2228 = vld [vmem:[%s381 + $0x14] sm:$0xf]
      %v2229 = vld [vmem:[%s381 + $0x18] sm:$0xf]
      %v2230 = vld [vmem:[%s381 + $0x24] sm:$0xf]
      %v2231 = vld [vmem:[%s381 + $0x28] sm:$0xf]
      %v2232 = vld [vmem:[%s381 + $0x34] sm:$0xf]
      %v2233 = vld [vmem:[%s381 + $0x38] sm:$0xf]
      %v2234 = vld [vmem:[%s381 + $0x44] sm:$0xf]
      %v2235 = vld [vmem:[%s381 + $0x48] sm:$0xf]
      %v2236 = vld [vmem:[%s381 + $0x54] sm:$0xf]
      %v2237 = vld [vmem:[%s381 + $0x58] sm:$0xf]
      %v2238 = vld [vmem:[%s381 + $0x64] sm:$0xf]
      %v2239 = vld [vmem:[%s381 + $0x68] sm:$0xf]
      %v2240 = vld [vmem:[%s381 + $0x74] sm:$0xf]
      %v2241 = vld [vmem:[%s381 + $0x78] sm:$0xf]
      %v2242 = vld [vmem:[%s381 + $0x84] sm:$0xf]
      %v2243 = vld [vmem:[%s381 + $0x88] sm:$0xf]
      %v2244 = vld [vmem:[%s381 + $0x94] sm:$0xf]
      %v2245 = vld [vmem:[%s381 + $0x98] sm:$0xf]
      %v2246 = vld [vmem:[%s381 + $0xa4] sm:$0xf]
      %v2247 = vld [vmem:[%s381 + $0xa8] sm:$0xf]
      %v2248 = vld [vmem:[%s381 + $0xb4] sm:$0xf]
      %v2249 = vld [vmem:[%s381 + $0xb8] sm:$0xf]
      %v2250 = vld [vmem:[%s381 + $0xc4] sm:$0xf]
      %v2251 = vld [vmem:[%s381 + $0xc8] sm:$0xf]
      %v2252 = vld [vmem:[%s381 + $0xd4] sm:$0xf]
      %v2253 = vld [vmem:[%s381 + $0xd8] sm:$0xf]
      %v2254 = vld [vmem:[%s381 + $0xe4] sm:$0xf]
      %v2255 = vld [vmem:[%s381 + $0xe8] sm:$0xf]
      %v2256 = vld [vmem:[%s381 + $0xf4] sm:$0xf]
      %v2257 = vld [vmem:[%s381 + $0xf8] sm:$0xf]
      %2290 = vrot.lane.b32.xlu0 %v2226, 16
      %v2291 = vpop.permute.xlu0 %2290
      %2292 = vrot.lane.b32.xlu0 %v2227, 16
      %v2293 = vpop.permute.xlu0 %2292
      %2294 = vrot.lane.b32.xlu0 %v2228, 16
      %v2295 = vpop.permute.xlu0 %2294
      %2296 = vrot.lane.b32.xlu0 %v2229, 16
      %v2297 = vpop.permute.xlu0 %2296
      %2298 = vrot.lane.b32.xlu0 %v2230, 16
      %v2299 = vpop.permute.xlu0 %2298
      %2300 = vrot.lane.b32.xlu0 %v2231, 16
      %v2301 = vpop.permute.xlu0 %2300
      %2302 = vrot.lane.b32.xlu0 %v2232, 16
      %v2303 = vpop.permute.xlu0 %2302
      %2304 = vrot.lane.b32.xlu0 %v2233, 16
      %v2305 = vpop.permute.xlu0 %2304
      %2306 = vrot.lane.b32.xlu0 %v2234, 16
      %v2307 = vpop.permute.xlu0 %2306
      %2308 = vrot.lane.b32.xlu0 %v2235, 16
      %v2309 = vpop.permute.xlu0 %2308
      %2310 = vrot.lane.b32.xlu0 %v2236, 16
      %v2311 = vpop.permute.xlu0 %2310
      %2312 = vrot.lane.b32.xlu0 %v2237, 16
      %v2313 = vpop.permute.xlu0 %2312
      %2314 = vrot.lane.b32.xlu0 %v2238, 16
      %v2315 = vpop.permute.xlu0 %2314
      %2316 = vrot.lane.b32.xlu0 %v2239, 16
      %v2317 = vpop.permute.xlu0 %2316
      %2318 = vrot.lane.b32.xlu0 %v2240, 16
      %v2319 = vpop.permute.xlu0 %2318
      %2320 = vrot.lane.b32.xlu0 %v2241, 16
      %v2321 = vpop.permute.xlu0 %2320
      %2322 = vrot.lane.b32.xlu0 %v2242, 16
      %v2323 = vpop.permute.xlu0 %2322
      %2324 = vrot.lane.b32.xlu0 %v2243, 16
      %v2325 = vpop.permute.xlu0 %2324
      %2326 = vrot.lane.b32.xlu0 %v2244, 16
      %v2327 = vpop.permute.xlu0 %2326
      %2328 = vrot.lane.b32.xlu0 %v2245, 16
      %v2329 = vpop.permute.xlu0 %2328
      %2330 = vrot.lane.b32.xlu0 %v2246, 16
      %v2331 = vpop.permute.xlu0 %2330
      %2332 = vrot.lane.b32.xlu0 %v2247, 16
      %v2333 = vpop.permute.xlu0 %2332
      %2334 = vrot.lane.b32.xlu0 %v2248, 16
      %v2335 = vpop.permute.xlu0 %2334
      %2336 = vrot.lane.b32.xlu0 %v2249, 16
      %v2337 = vpop.permute.xlu0 %2336
      %2338 = vrot.lane.b32.xlu0 %v2250, 16
      %v2339 = vpop.permute.xlu0 %2338
      %2340 = vrot.lane.b32.xlu0 %v2251, 16
      %v2341 = vpop.permute.xlu0 %2340
      %2342 = vrot.lane.b32.xlu0 %v2252, 16
      %v2343 = vpop.permute.xlu0 %2342
      %2344 = vrot.lane.b32.xlu0 %v2253, 16
      %v2345 = vpop.permute.xlu0 %2344
      %2346 = vrot.lane.b32.xlu0 %v2254, 16
      %v2347 = vpop.permute.xlu0 %2346
      %2348 = vrot.lane.b32.xlu0 %v2255, 16
      %v2349 = vpop.permute.xlu0 %2348
      %2350 = vrot.lane.b32.xlu0 %v2256, 16
      %v2351 = vpop.permute.xlu0 %2350
      %2352 = vrot.lane.b32.xlu0 %v2257, 16
      %v2353 = vpop.permute.xlu0 %2352
      %vm2386 = vcmask 158848
      %2387 = vst.msk [vmem:[#allocation3] sm:$0xf] %vm2386, %v2291
      %2388 = vst.msk [vmem:[#allocation3 + $0x4] sm:$0xf] %vm2386, %v2293
      %2389 = vst.msk [vmem:[#allocation3 + $0x8] sm:$0xf] %vm2386, %v2295
      %2390 = vst.msk [vmem:[#allocation3 + $0xc] sm:$0xf] %vm2386, %v2297
      %2391 = vst.msk [vmem:[#allocation3 + $0x10] sm:$0xf] %vm2386, %v2299
      %2392 = vst.msk [vmem:[#allocation3 + $0x14] sm:$0xf] %vm2386, %v2301
      %2393 = vst.msk [vmem:[#allocation3 + $0x18] sm:$0xf] %vm2386, %v2303
      %2394 = vst.msk [vmem:[#allocation3 + $0x1c] sm:$0xf] %vm2386, %v2305
      %2395 = vst.msk [vmem:[#allocation3 + $0x20] sm:$0xf] %vm2386, %v2307
      %2396 = vst.msk [vmem:[#allocation3 + $0x24] sm:$0xf] %vm2386, %v2309
      %2397 = vst.msk [vmem:[#allocation3 + $0x28] sm:$0xf] %vm2386, %v2311
      %2398 = vst.msk [vmem:[#allocation3 + $0x2c] sm:$0xf] %vm2386, %v2313
      %2399 = vst.msk [vmem:[#allocation3 + $0x30] sm:$0xf] %vm2386, %v2315
      %2400 = vst.msk [vmem:[#allocation3 + $0x34] sm:$0xf] %vm2386, %v2317
      %2401 = vst.msk [vmem:[#allocation3 + $0x38] sm:$0xf] %vm2386, %v2319
      %2402 = vst.msk [vmem:[#allocation3 + $0x3c] sm:$0xf] %vm2386, %v2321
      %2403 = vst.msk [vmem:[#allocation3 + $0x40] sm:$0xf] %vm2386, %v2323
      %2404 = vst.msk [vmem:[#allocation3 + $0x44] sm:$0xf] %vm2386, %v2325
      %2405 = vst.msk [vmem:[#allocation3 + $0x48] sm:$0xf] %vm2386, %v2327
      %2406 = vst.msk [vmem:[#allocation3 + $0x4c] sm:$0xf] %vm2386, %v2329
      %2407 = vst.msk [vmem:[#allocation3 + $0x50] sm:$0xf] %vm2386, %v2331
      %2408 = vst.msk [vmem:[#allocation3 + $0x54] sm:$0xf] %vm2386, %v2333
      %2409 = vst.msk [vmem:[#allocation3 + $0x58] sm:$0xf] %vm2386, %v2335
      %2410 = vst.msk [vmem:[#allocation3 + $0x5c] sm:$0xf] %vm2386, %v2337
      %2411 = vst.msk [vmem:[#allocation3 + $0x60] sm:$0xf] %vm2386, %v2339
      %2412 = vst.msk [vmem:[#allocation3 + $0x64] sm:$0xf] %vm2386, %v2341
      %2413 = vst.msk [vmem:[#allocation3 + $0x68] sm:$0xf] %vm2386, %v2343
      %2414 = vst.msk [vmem:[#allocation3 + $0x6c] sm:$0xf] %vm2386, %v2345
      %2415 = vst.msk [vmem:[#allocation3 + $0x70] sm:$0xf] %vm2386, %v2347
      %2416 = vst.msk [vmem:[#allocation3 + $0x74] sm:$0xf] %vm2386, %v2349
      %2417 = vst.msk [vmem:[#allocation3 + $0x78] sm:$0xf] %vm2386, %v2351
      %2418 = vst.msk [vmem:[#allocation3 + $0x7c] sm:$0xf] %vm2386, %v2353
      %v2419 = vld [vmem:[%s381 + $0x4] sm:$0xf]
      %v2420 = vld [vmem:[%s381 + $0x8] sm:$0xf]
      %v2421 = vld [vmem:[%s381 + $0xc] sm:$0x1]
      %v2422 = vld [vmem:[%s381 + $0x14] sm:$0xf]
      %v2423 = vld [vmem:[%s381 + $0x18] sm:$0xf]
      %v2424 = vld [vmem:[%s381 + $0x1c] sm:$0x1]
      %v2425 = vld [vmem:[%s381 + $0x24] sm:$0xf]
      %v2426 = vld [vmem:[%s381 + $0x28] sm:$0xf]
      %v2427 = vld [vmem:[%s381 + $0x2c] sm:$0x1]
      %v2428 = vld [vmem:[%s381 + $0x34] sm:$0xf]
      %v2429 = vld [vmem:[%s381 + $0x38] sm:$0xf]
      %v2430 = vld [vmem:[%s381 + $0x3c] sm:$0x1]
      %v2431 = vld [vmem:[%s381 + $0x44] sm:$0xf]
      %v2432 = vld [vmem:[%s381 + $0x48] sm:$0xf]
      %v2433 = vld [vmem:[%s381 + $0x4c] sm:$0x1]
      %v2434 = vld [vmem:[%s381 + $0x54] sm:$0xf]
      %v2435 = vld [vmem:[%s381 + $0x58] sm:$0xf]
      %v2436 = vld [vmem:[%s381 + $0x5c] sm:$0x1]
      %v2437 = vld [vmem:[%s381 + $0x64] sm:$0xf]
      %v2438 = vld [vmem:[%s381 + $0x68] sm:$0xf]
      %v2439 = vld [vmem:[%s381 + $0x6c] sm:$0x1]
      %v2440 = vld [vmem:[%s381 + $0x74] sm:$0xf]
      %v2441 = vld [vmem:[%s381 + $0x78] sm:$0xf]
      %v2442 = vld [vmem:[%s381 + $0x7c] sm:$0x1]
      %v2443 = vld [vmem:[%s381 + $0x84] sm:$0xf]
      %v2444 = vld [vmem:[%s381 + $0x88] sm:$0xf]
      %v2445 = vld [vmem:[%s381 + $0x8c] sm:$0x1]
      %v2446 = vld [vmem:[%s381 + $0x94] sm:$0xf]
      %v2447 = vld [vmem:[%s381 + $0x98] sm:$0xf]
      %v2448 = vld [vmem:[%s381 + $0x9c] sm:$0x1]
      %v2449 = vld [vmem:[%s381 + $0xa4] sm:$0xf]
      %v2450 = vld [vmem:[%s381 + $0xa8] sm:$0xf]
      %v2451 = vld [vmem:[%s381 + $0xac] sm:$0x1]
      %v2452 = vld [vmem:[%s381 + $0xb4] sm:$0xf]
      %v2453 = vld [vmem:[%s381 + $0xb8] sm:$0xf]
      %v2454 = vld [vmem:[%s381 + $0xbc] sm:$0x1]
      %v2455 = vld [vmem:[%s381 + $0xc4] sm:$0xf]
      %v2456 = vld [vmem:[%s381 + $0xc8] sm:$0xf]
      %v2457 = vld [vmem:[%s381 + $0xcc] sm:$0x1]
      %v2458 = vld [vmem:[%s381 + $0xd4] sm:$0xf]
      %v2459 = vld [vmem:[%s381 + $0xd8] sm:$0xf]
      %v2460 = vld [vmem:[%s381 + $0xdc] sm:$0x1]
      %v2461 = vld [vmem:[%s381 + $0xe4] sm:$0xf]
      %v2462 = vld [vmem:[%s381 + $0xe8] sm:$0xf]
      %v2463 = vld [vmem:[%s381 + $0xec] sm:$0x1]
      %v2464 = vld [vmem:[%s381 + $0xf4] sm:$0xf]
      %v2465 = vld [vmem:[%s381 + $0xf8] sm:$0xf]
      %v2466 = vld [vmem:[%s381 + $0xfc] sm:$0x1]
      %v2468 = vshrl.u32 %v2419, 16
      %v2470 = vrot.slane %v2468, 4
      %v2471 = vshll.u32 %v2419, 16
      %v2473 = vrot.slane %v2471, 5
      %v2474 = vor.u32 %v2470, %v2473
      %v2475 = vrot.slane %v2474, 4
      %v2477 = vshll.u32 %v2420, 16
      %v2479 = vrot.slane %v2477, 5
      %v2480 = vsel %vm1183, %v2475, %v2479
      %v2481 = vshrl.u32 %v2420, 16
      %v2483 = vrot.slane %v2481, 4
      %v2484 = vor.u32 %v2483, %v2479
      %v2485 = vrot.slane %v2484, 4
      %v2487 = vshll.u32 %v2421, 16
      %v2489 = vrot.slane %v2487, 5
      %v2490 = vsel %vm1183, %v2485, %v2489
      %v2492 = vshrl.u32 %v2422, 16
      %v2494 = vrot.slane %v2492, 4
      %v2495 = vshll.u32 %v2422, 16
      %v2497 = vrot.slane %v2495, 5
      %v2498 = vor.u32 %v2494, %v2497
      %v2499 = vrot.slane %v2498, 4
      %v2501 = vshll.u32 %v2423, 16
      %v2503 = vrot.slane %v2501, 5
      %v2504 = vsel %vm1183, %v2499, %v2503
      %v2505 = vshrl.u32 %v2423, 16
      %v2507 = vrot.slane %v2505, 4
      %v2508 = vor.u32 %v2507, %v2503
      %v2509 = vrot.slane %v2508, 4
      %v2511 = vshll.u32 %v2424, 16
      %v2513 = vrot.slane %v2511, 5
      %v2514 = vsel %vm1183, %v2509, %v2513
      %v2516 = vshrl.u32 %v2425, 16
      %v2518 = vrot.slane %v2516, 4
      %v2519 = vshll.u32 %v2425, 16
      %v2521 = vrot.slane %v2519, 5
      %v2522 = vor.u32 %v2518, %v2521
      %v2523 = vrot.slane %v2522, 4
      %v2525 = vshll.u32 %v2426, 16
      %v2527 = vrot.slane %v2525, 5
      %v2528 = vsel %vm1183, %v2523, %v2527
      %v2529 = vshrl.u32 %v2426, 16
      %v2531 = vrot.slane %v2529, 4
      %v2532 = vor.u32 %v2531, %v2527
      %v2533 = vrot.slane %v2532, 4
      %v2535 = vshll.u32 %v2427, 16
      %v2537 = vrot.slane %v2535, 5
      %v2538 = vsel %vm1183, %v2533, %v2537
      %v2540 = vshrl.u32 %v2428, 16
      %v2542 = vrot.slane %v2540, 4
      %v2543 = vshll.u32 %v2428, 16
      %v2545 = vrot.slane %v2543, 5
      %v2546 = vor.u32 %v2542, %v2545
      %v2547 = vrot.slane %v2546, 4
      %v2549 = vshll.u32 %v2429, 16
      %v2551 = vrot.slane %v2549, 5
      %v2552 = vsel %vm1183, %v2547, %v2551
      %v2553 = vshrl.u32 %v2429, 16
      %v2555 = vrot.slane %v2553, 4
      %v2556 = vor.u32 %v2555, %v2551
      %v2557 = vrot.slane %v2556, 4
      %v2559 = vshll.u32 %v2430, 16
      %v2561 = vrot.slane %v2559, 5
      %v2562 = vsel %vm1183, %v2557, %v2561
      %v2564 = vshrl.u32 %v2431, 16
      %v2566 = vrot.slane %v2564, 4
      %v2567 = vshll.u32 %v2431, 16
      %v2569 = vrot.slane %v2567, 5
      %v2570 = vor.u32 %v2566, %v2569
      %v2571 = vrot.slane %v2570, 4
      %v2573 = vshll.u32 %v2432, 16
      %v2575 = vrot.slane %v2573, 5
      %v2576 = vsel %vm1183, %v2571, %v2575
      %v2577 = vshrl.u32 %v2432, 16
      %v2579 = vrot.slane %v2577, 4
      %v2580 = vor.u32 %v2579, %v2575
      %v2581 = vrot.slane %v2580, 4
      %v2583 = vshll.u32 %v2433, 16
      %v2585 = vrot.slane %v2583, 5
      %v2586 = vsel %vm1183, %v2581, %v2585
      %v2588 = vshrl.u32 %v2434, 16
      %v2590 = vrot.slane %v2588, 4
      %v2591 = vshll.u32 %v2434, 16
      %v2593 = vrot.slane %v2591, 5
      %v2594 = vor.u32 %v2590, %v2593
      %v2595 = vrot.slane %v2594, 4
      %v2597 = vshll.u32 %v2435, 16
      %v2599 = vrot.slane %v2597, 5
      %v2600 = vsel %vm1183, %v2595, %v2599
      %v2601 = vshrl.u32 %v2435, 16
      %v2603 = vrot.slane %v2601, 4
      %v2604 = vor.u32 %v2603, %v2599
      %v2605 = vrot.slane %v2604, 4
      %v2607 = vshll.u32 %v2436, 16
      %v2609 = vrot.slane %v2607, 5
      %v2610 = vsel %vm1183, %v2605, %v2609
      %v2612 = vshrl.u32 %v2437, 16
      %v2614 = vrot.slane %v2612, 4
      %v2615 = vshll.u32 %v2437, 16
      %v2617 = vrot.slane %v2615, 5
      %v2618 = vor.u32 %v2614, %v2617
      %v2619 = vrot.slane %v2618, 4
      %v2621 = vshll.u32 %v2438, 16
      %v2623 = vrot.slane %v2621, 5
      %v2624 = vsel %vm1183, %v2619, %v2623
      %v2625 = vshrl.u32 %v2438, 16
      %v2627 = vrot.slane %v2625, 4
      %v2628 = vor.u32 %v2627, %v2623
      %v2629 = vrot.slane %v2628, 4
      %v2631 = vshll.u32 %v2439, 16
      %v2633 = vrot.slane %v2631, 5
      %v2634 = vsel %vm1183, %v2629, %v2633
      %v2636 = vshrl.u32 %v2440, 16
      %v2638 = vrot.slane %v2636, 4
      %v2639 = vshll.u32 %v2440, 16
      %v2641 = vrot.slane %v2639, 5
      %v2642 = vor.u32 %v2638, %v2641
      %v2643 = vrot.slane %v2642, 4
      %v2645 = vshll.u32 %v2441, 16
      %v2647 = vrot.slane %v2645, 5
      %v2648 = vsel %vm1183, %v2643, %v2647
      %v2649 = vshrl.u32 %v2441, 16
      %v2651 = vrot.slane %v2649, 4
      %v2652 = vor.u32 %v2651, %v2647
      %v2653 = vrot.slane %v2652, 4
      %v2655 = vshll.u32 %v2442, 16
      %v2657 = vrot.slane %v2655, 5
      %v2658 = vsel %vm1183, %v2653, %v2657
      %v2660 = vshrl.u32 %v2443, 16
      %v2662 = vrot.slane %v2660, 4
      %v2663 = vshll.u32 %v2443, 16
      %v2665 = vrot.slane %v2663, 5
      %v2666 = vor.u32 %v2662, %v2665
      %v2667 = vrot.slane %v2666, 4
      %v2669 = vshll.u32 %v2444, 16
      %v2671 = vrot.slane %v2669, 5
      %v2672 = vsel %vm1183, %v2667, %v2671
      %v2673 = vshrl.u32 %v2444, 16
      %v2675 = vrot.slane %v2673, 4
      %v2676 = vor.u32 %v2675, %v2671
      %v2677 = vrot.slane %v2676, 4
      %v2679 = vshll.u32 %v2445, 16
      %v2681 = vrot.slane %v2679, 5
      %v2682 = vsel %vm1183, %v2677, %v2681
      %v2684 = vshrl.u32 %v2446, 16
      %v2686 = vrot.slane %v2684, 4
      %v2687 = vshll.u32 %v2446, 16
      %v2689 = vrot.slane %v2687, 5
      %v2690 = vor.u32 %v2686, %v2689
      %v2691 = vrot.slane %v2690, 4
      %v2693 = vshll.u32 %v2447, 16
      %v2695 = vrot.slane %v2693, 5
      %v2696 = vsel %vm1183, %v2691, %v2695
      %v2697 = vshrl.u32 %v2447, 16
      %v2699 = vrot.slane %v2697, 4
      %v2700 = vor.u32 %v2699, %v2695
      %v2701 = vrot.slane %v2700, 4
      %v2703 = vshll.u32 %v2448, 16
      %v2705 = vrot.slane %v2703, 5
      %v2706 = vsel %vm1183, %v2701, %v2705
      %v2708 = vshrl.u32 %v2449, 16
      %v2710 = vrot.slane %v2708, 4
      %v2711 = vshll.u32 %v2449, 16
      %v2713 = vrot.slane %v2711, 5
      %v2714 = vor.u32 %v2710, %v2713
      %v2715 = vrot.slane %v2714, 4
      %v2717 = vshll.u32 %v2450, 16
      %v2719 = vrot.slane %v2717, 5
      %v2720 = vsel %vm1183, %v2715, %v2719
      %v2721 = vshrl.u32 %v2450, 16
      %v2723 = vrot.slane %v2721, 4
      %v2724 = vor.u32 %v2723, %v2719
      %v2725 = vrot.slane %v2724, 4
      %v2727 = vshll.u32 %v2451, 16
      %v2729 = vrot.slane %v2727, 5
      %v2730 = vsel %vm1183, %v2725, %v2729
      %v2732 = vshrl.u32 %v2452, 16
      %v2734 = vrot.slane %v2732, 4
      %v2735 = vshll.u32 %v2452, 16
      %v2737 = vrot.slane %v2735, 5
      %v2738 = vor.u32 %v2734, %v2737
      %v2739 = vrot.slane %v2738, 4
      %v2741 = vshll.u32 %v2453, 16
      %v2743 = vrot.slane %v2741, 5
      %v2744 = vsel %vm1183, %v2739, %v2743
      %v2745 = vshrl.u32 %v2453, 16
      %v2747 = vrot.slane %v2745, 4
      %v2748 = vor.u32 %v2747, %v2743
      %v2749 = vrot.slane %v2748, 4
      %v2751 = vshll.u32 %v2454, 16
      %v2753 = vrot.slane %v2751, 5
      %v2754 = vsel %vm1183, %v2749, %v2753
      %v2756 = vshrl.u32 %v2455, 16
      %v2758 = vrot.slane %v2756, 4
      %v2759 = vshll.u32 %v2455, 16
      %v2761 = vrot.slane %v2759, 5
      %v2762 = vor.u32 %v2758, %v2761
      %v2763 = vrot.slane %v2762, 4
      %v2765 = vshll.u32 %v2456, 16
      %v2767 = vrot.slane %v2765, 5
      %v2768 = vsel %vm1183, %v2763, %v2767
      %v2769 = vshrl.u32 %v2456, 16
      %v2771 = vrot.slane %v2769, 4
      %v2772 = vor.u32 %v2771, %v2767
      %v2773 = vrot.slane %v2772, 4
      %v2775 = vshll.u32 %v2457, 16
      %v2777 = vrot.slane %v2775, 5
      %v2778 = vsel %vm1183, %v2773, %v2777
      %v2780 = vshrl.u32 %v2458, 16
      %v2782 = vrot.slane %v2780, 4
      %v2783 = vshll.u32 %v2458, 16
      %v2785 = vrot.slane %v2783, 5
      %v2786 = vor.u32 %v2782, %v2785
      %v2787 = vrot.slane %v2786, 4
      %v2789 = vshll.u32 %v2459, 16
      %v2791 = vrot.slane %v2789, 5
      %v2792 = vsel %vm1183, %v2787, %v2791
      %v2793 = vshrl.u32 %v2459, 16
      %v2795 = vrot.slane %v2793, 4
      %v2796 = vor.u32 %v2795, %v2791
      %v2797 = vrot.slane %v2796, 4
      %v2799 = vshll.u32 %v2460, 16
      %v2801 = vrot.slane %v2799, 5
      %v2802 = vsel %vm1183, %v2797, %v2801
      %v2804 = vshrl.u32 %v2461, 16
      %v2806 = vrot.slane %v2804, 4
      %v2807 = vshll.u32 %v2461, 16
      %v2809 = vrot.slane %v2807, 5
      %v2810 = vor.u32 %v2806, %v2809
      %v2811 = vrot.slane %v2810, 4
      %v2813 = vshll.u32 %v2462, 16
      %v2815 = vrot.slane %v2813, 5
      %v2816 = vsel %vm1183, %v2811, %v2815
      %v2817 = vshrl.u32 %v2462, 16
      %v2819 = vrot.slane %v2817, 4
      %v2820 = vor.u32 %v2819, %v2815
      %v2821 = vrot.slane %v2820, 4
      %v2823 = vshll.u32 %v2463, 16
      %v2825 = vrot.slane %v2823, 5
      %v2826 = vsel %vm1183, %v2821, %v2825
      %v2828 = vshrl.u32 %v2464, 16
      %v2830 = vrot.slane %v2828, 4
      %v2831 = vshll.u32 %v2464, 16
      %v2833 = vrot.slane %v2831, 5
      %v2834 = vor.u32 %v2830, %v2833
      %v2835 = vrot.slane %v2834, 4
      %v2837 = vshll.u32 %v2465, 16
      %v2839 = vrot.slane %v2837, 5
      %v2840 = vsel %vm1183, %v2835, %v2839
      %v2841 = vshrl.u32 %v2465, 16
      %v2843 = vrot.slane %v2841, 4
      %v2844 = vor.u32 %v2843, %v2839
      %v2845 = vrot.slane %v2844, 4
      %v2847 = vshll.u32 %v2466, 16
      %v2849 = vrot.slane %v2847, 5
      %v2850 = vsel %vm1183, %v2845, %v2849
      %2851 = vrot.lane.b32.xlu0 %v2480, 20
      %v2852 = vpop.permute.xlu0 %2851
      %2853 = vrot.lane.b32.xlu0 %v2490, 20
      %v2854 = vpop.permute.xlu0 %2853
      %2855 = vrot.lane.b32.xlu0 %v2504, 20
      %v2856 = vpop.permute.xlu0 %2855
      %2857 = vrot.lane.b32.xlu0 %v2514, 20
      %v2858 = vpop.permute.xlu0 %2857
      %2859 = vrot.lane.b32.xlu0 %v2528, 20
      %v2860 = vpop.permute.xlu0 %2859
      %2861 = vrot.lane.b32.xlu0 %v2538, 20
      %v2862 = vpop.permute.xlu0 %2861
      %2863 = vrot.lane.b32.xlu0 %v2552, 20
      %v2864 = vpop.permute.xlu0 %2863
      %2865 = vrot.lane.b32.xlu0 %v2562, 20
      %v2866 = vpop.permute.xlu0 %2865
      %2867 = vrot.lane.b32.xlu0 %v2576, 20
      %v2868 = vpop.permute.xlu0 %2867
      %2869 = vrot.lane.b32.xlu0 %v2586, 20
      %v2870 = vpop.permute.xlu0 %2869
      %2871 = vrot.lane.b32.xlu0 %v2600, 20
      %v2872 = vpop.permute.xlu0 %2871
      %2873 = vrot.lane.b32.xlu0 %v2610, 20
      %v2874 = vpop.permute.xlu0 %2873
      %2875 = vrot.lane.b32.xlu0 %v2624, 20
      %v2876 = vpop.permute.xlu0 %2875
      %2877 = vrot.lane.b32.xlu0 %v2634, 20
      %v2878 = vpop.permute.xlu0 %2877
      %2879 = vrot.lane.b32.xlu0 %v2648, 20
      %v2880 = vpop.permute.xlu0 %2879
      %2881 = vrot.lane.b32.xlu0 %v2658, 20
      %v2882 = vpop.permute.xlu0 %2881
      %2883 = vrot.lane.b32.xlu0 %v2672, 20
      %v2884 = vpop.permute.xlu0 %2883
      %2885 = vrot.lane.b32.xlu0 %v2682, 20
      %v2886 = vpop.permute.xlu0 %2885
      %2887 = vrot.lane.b32.xlu0 %v2696, 20
      %v2888 = vpop.permute.xlu0 %2887
      %2889 = vrot.lane.b32.xlu0 %v2706, 20
      %v2890 = vpop.permute.xlu0 %2889
      %2891 = vrot.lane.b32.xlu0 %v2720, 20
      %v2892 = vpop.permute.xlu0 %2891
      %2893 = vrot.lane.b32.xlu0 %v2730, 20
      %v2894 = vpop.permute.xlu0 %2893
      %2895 = vrot.lane.b32.xlu0 %v2744, 20
      %v2896 = vpop.permute.xlu0 %2895
      %2897 = vrot.lane.b32.xlu0 %v2754, 20
      %v2898 = vpop.permute.xlu0 %2897
      %2899 = vrot.lane.b32.xlu0 %v2768, 20
      %v2900 = vpop.permute.xlu0 %2899
      %2901 = vrot.lane.b32.xlu0 %v2778, 20
      %v2902 = vpop.permute.xlu0 %2901
      %2903 = vrot.lane.b32.xlu0 %v2792, 20
      %v2904 = vpop.permute.xlu0 %2903
      %2905 = vrot.lane.b32.xlu0 %v2802, 20
      %v2906 = vpop.permute.xlu0 %2905
      %2907 = vrot.lane.b32.xlu0 %v2816, 20
      %v2908 = vpop.permute.xlu0 %2907
      %2909 = vrot.lane.b32.xlu0 %v2826, 20
      %v2910 = vpop.permute.xlu0 %2909
      %2911 = vrot.lane.b32.xlu0 %v2840, 20
      %v2912 = vpop.permute.xlu0 %2911
      %2913 = vrot.lane.b32.xlu0 %v2850, 20
      %v2914 = vpop.permute.xlu0 %2913
      %vm2947 = vcmask 191648
      %2948 = vst.msk [vmem:[#allocation3] sm:$0xf] %vm2947, %v2852
      %2949 = vst.msk [vmem:[#allocation3 + $0x4] sm:$0xf] %vm2947, %v2854
      %2950 = vst.msk [vmem:[#allocation3 + $0x8] sm:$0xf] %vm2947, %v2856
      %2951 = vst.msk [vmem:[#allocation3 + $0xc] sm:$0xf] %vm2947, %v2858
      %2952 = vst.msk [vmem:[#allocation3 + $0x10] sm:$0xf] %vm2947, %v2860
      %2953 = vst.msk [vmem:[#allocation3 + $0x14] sm:$0xf] %vm2947, %v2862
      %2954 = vst.msk [vmem:[#allocation3 + $0x18] sm:$0xf] %vm2947, %v2864
      %2955 = vst.msk [vmem:[#allocation3 + $0x1c] sm:$0xf] %vm2947, %v2866
      %2956 = vst.msk [vmem:[#allocation3 + $0x20] sm:$0xf] %vm2947, %v2868
      %2957 = vst.msk [vmem:[#allocation3 + $0x24] sm:$0xf] %vm2947, %v2870
      %2958 = vst.msk [vmem:[#allocation3 + $0x28] sm:$0xf] %vm2947, %v2872
      %2959 = vst.msk [vmem:[#allocation3 + $0x2c] sm:$0xf] %vm2947, %v2874
      %2960 = vst.msk [vmem:[#allocation3 + $0x30] sm:$0xf] %vm2947, %v2876
      %2961 = vst.msk [vmem:[#allocation3 + $0x34] sm:$0xf] %vm2947, %v2878
      %2962 = vst.msk [vmem:[#allocation3 + $0x38] sm:$0xf] %vm2947, %v2880
      %2963 = vst.msk [vmem:[#allocation3 + $0x3c] sm:$0xf] %vm2947, %v2882
      %2964 = vst.msk [vmem:[#allocation3 + $0x40] sm:$0xf] %vm2947, %v2884
      %2965 = vst.msk [vmem:[#allocation3 + $0x44] sm:$0xf] %vm2947, %v2886
      %2966 = vst.msk [vmem:[#allocation3 + $0x48] sm:$0xf] %vm2947, %v2888
      %2967 = vst.msk [vmem:[#allocation3 + $0x4c] sm:$0xf] %vm2947, %v2890
      %2968 = vst.msk [vmem:[#allocation3 + $0x50] sm:$0xf] %vm2947, %v2892
      %2969 = vst.msk [vmem:[#allocation3 + $0x54] sm:$0xf] %vm2947, %v2894
      %2970 = vst.msk [vmem:[#allocation3 + $0x58] sm:$0xf] %vm2947, %v2896
      %2971 = vst.msk [vmem:[#allocation3 + $0x5c] sm:$0xf] %vm2947, %v2898
      %2972 = vst.msk [vmem:[#allocation3 + $0x60] sm:$0xf] %vm2947, %v2900
      %2973 = vst.msk [vmem:[#allocation3 + $0x64] sm:$0xf] %vm2947, %v2902
      %2974 = vst.msk [vmem:[#allocation3 + $0x68] sm:$0xf] %vm2947, %v2904
      %2975 = vst.msk [vmem:[#allocation3 + $0x6c] sm:$0xf] %vm2947, %v2906
      %2976 = vst.msk [vmem:[#allocation3 + $0x70] sm:$0xf] %vm2947, %v2908
      %2977 = vst.msk [vmem:[#allocation3 + $0x74] sm:$0xf] %vm2947, %v2910
      %2978 = vst.msk [vmem:[#allocation3 + $0x78] sm:$0xf] %vm2947, %v2912
      %2979 = vst.msk [vmem:[#allocation3 + $0x7c] sm:$0xf] %vm2947, %v2914
      %s2980 = scalar_lea.vmem [#allocation2], 32
      %v2981 = vld [vmem:[%s2980] sm:$0x8]
      %v2982 = vld [vmem:[%s2980 + $0x4] sm:$0xf]
      %v2983 = vld [vmem:[%s2980 + $0x8] sm:$0xf]
      %v2984 = vld [vmem:[%s2980 + $0x10] sm:$0x8]
      %v2985 = vld [vmem:[%s2980 + $0x14] sm:$0xf]
      %v2986 = vld [vmem:[%s2980 + $0x18] sm:$0xf]
      %v2987 = vld [vmem:[%s2980 + $0x20] sm:$0x8]
      %v2988 = vld [vmem:[%s2980 + $0x24] sm:$0xf]
      %v2989 = vld [vmem:[%s2980 + $0x28] sm:$0xf]
      %v2990 = vld [vmem:[%s2980 + $0x30] sm:$0x8]
      %v2991 = vld [vmem:[%s2980 + $0x34] sm:$0xf]
      %v2992 = vld [vmem:[%s2980 + $0x38] sm:$0xf]
      %v2993 = vld [vmem:[%s2980 + $0x40] sm:$0x8]
      %v2994 = vld [vmem:[%s2980 + $0x44] sm:$0xf]
      %v2995 = vld [vmem:[%s2980 + $0x48] sm:$0xf]
      %v2996 = vld [vmem:[%s2980 + $0x50] sm:$0x8]
      %v2997 = vld [vmem:[%s2980 + $0x54] sm:$0xf]
      %v2998 = vld [vmem:[%s2980 + $0x58] sm:$0xf]
      %v2999 = vld [vmem:[%s2980 + $0x60] sm:$0x8]
      %v3000 = vld [vmem:[%s2980 + $0x64] sm:$0xf]
      %v3001 = vld [vmem:[%s2980 + $0x68] sm:$0xf]
      %v3002 = vld [vmem:[%s2980 + $0x70] sm:$0x8]
      %v3003 = vld [vmem:[%s2980 + $0x74] sm:$0xf]
      %v3004 = vld [vmem:[%s2980 + $0x78] sm:$0xf]
      %v3005 = vld [vmem:[%s2980 + $0x80] sm:$0x8]
      %v3006 = vld [vmem:[%s2980 + $0x84] sm:$0xf]
      %v3007 = vld [vmem:[%s2980 + $0x88] sm:$0xf]
      %v3008 = vld [vmem:[%s2980 + $0x90] sm:$0x8]
      %v3009 = vld [vmem:[%s2980 + $0x94] sm:$0xf]
      %v3010 = vld [vmem:[%s2980 + $0x98] sm:$0xf]
      %v3011 = vld [vmem:[%s2980 + $0xa0] sm:$0x8]
      %v3012 = vld [vmem:[%s2980 + $0xa4] sm:$0xf]
      %v3013 = vld [vmem:[%s2980 + $0xa8] sm:$0xf]
      %v3014 = vld [vmem:[%s2980 + $0xb0] sm:$0x8]
      %v3015 = vld [vmem:[%s2980 + $0xb4] sm:$0xf]
      %v3016 = vld [vmem:[%s2980 + $0xb8] sm:$0xf]
      %v3017 = vld [vmem:[%s2980 + $0xc0] sm:$0x8]
      %v3018 = vld [vmem:[%s2980 + $0xc4] sm:$0xf]
      %v3019 = vld [vmem:[%s2980 + $0xc8] sm:$0xf]
      %v3020 = vld [vmem:[%s2980 + $0xd0] sm:$0x8]
      %v3021 = vld [vmem:[%s2980 + $0xd4] sm:$0xf]
      %v3022 = vld [vmem:[%s2980 + $0xd8] sm:$0xf]
      %v3023 = vld [vmem:[%s2980 + $0xe0] sm:$0x8]
      %v3024 = vld [vmem:[%s2980 + $0xe4] sm:$0xf]
      %v3025 = vld [vmem:[%s2980 + $0xe8] sm:$0xf]
      %v3026 = vld [vmem:[%s2980 + $0xf0] sm:$0x8]
      %v3027 = vld [vmem:[%s2980 + $0xf4] sm:$0xf]
      %v3028 = vld [vmem:[%s2980 + $0xf8] sm:$0xf]
      %v3030 = vshrl.u32 %v2981, 16
      %v3032 = vrot.slane %v3030, 7
      %v3033 = vrot.slane %v3032, 4
      %v3035 = vshrl.u32 %v2982, 16
      %v3037 = vrot.slane %v3035, 7
      %v3038 = vshll.u32 %v2982, 16
      %v3040 = vor.u32 %v3037, %v3038
      %v3041 = vsel %vm523, %v3033, %v3040
      %v3042 = vrot.slane %v3037, 4
      %v3044 = vshrl.u32 %v2983, 16
      %v3046 = vrot.slane %v3044, 7
      %v3047 = vshll.u32 %v2983, 16
      %v3049 = vor.u32 %v3046, %v3047
      %v3050 = vsel %vm523, %v3042, %v3049
      %v3052 = vshrl.u32 %v2984, 16
      %v3054 = vrot.slane %v3052, 7
      %v3055 = vrot.slane %v3054, 4
      %v3057 = vshrl.u32 %v2985, 16
      %v3059 = vrot.slane %v3057, 7
      %v3060 = vshll.u32 %v2985, 16
      %v3062 = vor.u32 %v3059, %v3060
      %v3063 = vsel %vm523, %v3055, %v3062
      %v3064 = vrot.slane %v3059, 4
      %v3066 = vshrl.u32 %v2986, 16
      %v3068 = vrot.slane %v3066, 7
      %v3069 = vshll.u32 %v2986, 16
      %v3071 = vor.u32 %v3068, %v3069
      %v3072 = vsel %vm523, %v3064, %v3071
      %v3074 = vshrl.u32 %v2987, 16
      %v3076 = vrot.slane %v3074, 7
      %v3077 = vrot.slane %v3076, 4
      %v3079 = vshrl.u32 %v2988, 16
      %v3081 = vrot.slane %v3079, 7
      %v3082 = vshll.u32 %v2988, 16
      %v3084 = vor.u32 %v3081, %v3082
      %v3085 = vsel %vm523, %v3077, %v3084
      %v3086 = vrot.slane %v3081, 4
      %v3088 = vshrl.u32 %v2989, 16
      %v3090 = vrot.slane %v3088, 7
      %v3091 = vshll.u32 %v2989, 16
      %v3093 = vor.u32 %v3090, %v3091
      %v3094 = vsel %vm523, %v3086, %v3093
      %v3096 = vshrl.u32 %v2990, 16
      %v3098 = vrot.slane %v3096, 7
      %v3099 = vrot.slane %v3098, 4
      %v3101 = vshrl.u32 %v2991, 16
      %v3103 = vrot.slane %v3101, 7
      %v3104 = vshll.u32 %v2991, 16
      %v3106 = vor.u32 %v3103, %v3104
      %v3107 = vsel %vm523, %v3099, %v3106
      %v3108 = vrot.slane %v3103, 4
      %v3110 = vshrl.u32 %v2992, 16
      %v3112 = vrot.slane %v3110, 7
      %v3113 = vshll.u32 %v2992, 16
      %v3115 = vor.u32 %v3112, %v3113
      %v3116 = vsel %vm523, %v3108, %v3115
      %v3118 = vshrl.u32 %v2993, 16
      %v3120 = vrot.slane %v3118, 7
      %v3121 = vrot.slane %v3120, 4
      %v3123 = vshrl.u32 %v2994, 16
      %v3125 = vrot.slane %v3123, 7
      %v3126 = vshll.u32 %v2994, 16
      %v3128 = vor.u32 %v3125, %v3126
      %v3129 = vsel %vm523, %v3121, %v3128
      %v3130 = vrot.slane %v3125, 4
      %v3132 = vshrl.u32 %v2995, 16
      %v3134 = vrot.slane %v3132, 7
      %v3135 = vshll.u32 %v2995, 16
      %v3137 = vor.u32 %v3134, %v3135
      %v3138 = vsel %vm523, %v3130, %v3137
      %v3140 = vshrl.u32 %v2996, 16
      %v3142 = vrot.slane %v3140, 7
      %v3143 = vrot.slane %v3142, 4
      %v3145 = vshrl.u32 %v2997, 16
      %v3147 = vrot.slane %v3145, 7
      %v3148 = vshll.u32 %v2997, 16
      %v3150 = vor.u32 %v3147, %v3148
      %v3151 = vsel %vm523, %v3143, %v3150
      %v3152 = vrot.slane %v3147, 4
      %v3154 = vshrl.u32 %v2998, 16
      %v3156 = vrot.slane %v3154, 7
      %v3157 = vshll.u32 %v2998, 16
      %v3159 = vor.u32 %v3156, %v3157
      %v3160 = vsel %vm523, %v3152, %v3159
      %v3162 = vshrl.u32 %v2999, 16
      %v3164 = vrot.slane %v3162, 7
      %v3165 = vrot.slane %v3164, 4
      %v3167 = vshrl.u32 %v3000, 16
      %v3169 = vrot.slane %v3167, 7
      %v3170 = vshll.u32 %v3000, 16
      %v3172 = vor.u32 %v3169, %v3170
      %v3173 = vsel %vm523, %v3165, %v3172
      %v3174 = vrot.slane %v3169, 4
      %v3176 = vshrl.u32 %v3001, 16
      %v3178 = vrot.slane %v3176, 7
      %v3179 = vshll.u32 %v3001, 16
      %v3181 = vor.u32 %v3178, %v3179
      %v3182 = vsel %vm523, %v3174, %v3181
      %v3184 = vshrl.u32 %v3002, 16
      %v3186 = vrot.slane %v3184, 7
      %v3187 = vrot.slane %v3186, 4
      %v3189 = vshrl.u32 %v3003, 16
      %v3191 = vrot.slane %v3189, 7
      %v3192 = vshll.u32 %v3003, 16
      %v3194 = vor.u32 %v3191, %v3192
      %v3195 = vsel %vm523, %v3187, %v3194
      %v3196 = vrot.slane %v3191, 4
      %v3198 = vshrl.u32 %v3004, 16
      %v3200 = vrot.slane %v3198, 7
      %v3201 = vshll.u32 %v3004, 16
      %v3203 = vor.u32 %v3200, %v3201
      %v3204 = vsel %vm523, %v3196, %v3203
      %v3206 = vshrl.u32 %v3005, 16
      %v3208 = vrot.slane %v3206, 7
      %v3209 = vrot.slane %v3208, 4
      %v3211 = vshrl.u32 %v3006, 16
      %v3213 = vrot.slane %v3211, 7
      %v3214 = vshll.u32 %v3006, 16
      %v3216 = vor.u32 %v3213, %v3214
      %v3217 = vsel %vm523, %v3209, %v3216
      %v3218 = vrot.slane %v3213, 4
      %v3220 = vshrl.u32 %v3007, 16
      %v3222 = vrot.slane %v3220, 7
      %v3223 = vshll.u32 %v3007, 16
      %v3225 = vor.u32 %v3222, %v3223
      %v3226 = vsel %vm523, %v3218, %v3225
      %v3228 = vshrl.u32 %v3008, 16
      %v3230 = vrot.slane %v3228, 7
      %v3231 = vrot.slane %v3230, 4
      %v3233 = vshrl.u32 %v3009, 16
      %v3235 = vrot.slane %v3233, 7
      %v3236 = vshll.u32 %v3009, 16
      %v3238 = vor.u32 %v3235, %v3236
      %v3239 = vsel %vm523, %v3231, %v3238
      %v3240 = vrot.slane %v3235, 4
      %v3242 = vshrl.u32 %v3010, 16
      %v3244 = vrot.slane %v3242, 7
      %v3245 = vshll.u32 %v3010, 16
      %v3247 = vor.u32 %v3244, %v3245
      %v3248 = vsel %vm523, %v3240, %v3247
      %v3250 = vshrl.u32 %v3011, 16
      %v3252 = vrot.slane %v3250, 7
      %v3253 = vrot.slane %v3252, 4
      %v3255 = vshrl.u32 %v3012, 16
      %v3257 = vrot.slane %v3255, 7
      %v3258 = vshll.u32 %v3012, 16
      %v3260 = vor.u32 %v3257, %v3258
      %v3261 = vsel %vm523, %v3253, %v3260
      %v3262 = vrot.slane %v3257, 4
      %v3264 = vshrl.u32 %v3013, 16
      %v3266 = vrot.slane %v3264, 7
      %v3267 = vshll.u32 %v3013, 16
      %v3269 = vor.u32 %v3266, %v3267
      %v3270 = vsel %vm523, %v3262, %v3269
      %v3272 = vshrl.u32 %v3014, 16
      %v3274 = vrot.slane %v3272, 7
      %v3275 = vrot.slane %v3274, 4
      %v3277 = vshrl.u32 %v3015, 16
      %v3279 = vrot.slane %v3277, 7
      %v3280 = vshll.u32 %v3015, 16
      %v3282 = vor.u32 %v3279, %v3280
      %v3283 = vsel %vm523, %v3275, %v3282
      %v3284 = vrot.slane %v3279, 4
      %v3286 = vshrl.u32 %v3016, 16
      %v3288 = vrot.slane %v3286, 7
      %v3289 = vshll.u32 %v3016, 16
      %v3291 = vor.u32 %v3288, %v3289
      %v3292 = vsel %vm523, %v3284, %v3291
      %v3294 = vshrl.u32 %v3017, 16
      %v3296 = vrot.slane %v3294, 7
      %v3297 = vrot.slane %v3296, 4
      %v3299 = vshrl.u32 %v3018, 16
      %v3301 = vrot.slane %v3299, 7
      %v3302 = vshll.u32 %v3018, 16
      %v3304 = vor.u32 %v3301, %v3302
      %v3305 = vsel %vm523, %v3297, %v3304
      %v3306 = vrot.slane %v3301, 4
      %v3308 = vshrl.u32 %v3019, 16
      %v3310 = vrot.slane %v3308, 7
      %v3311 = vshll.u32 %v3019, 16
      %v3313 = vor.u32 %v3310, %v3311
      %v3314 = vsel %vm523, %v3306, %v3313
      %v3316 = vshrl.u32 %v3020, 16
      %v3318 = vrot.slane %v3316, 7
      %v3319 = vrot.slane %v3318, 4
      %v3321 = vshrl.u32 %v3021, 16
      %v3323 = vrot.slane %v3321, 7
      %v3324 = vshll.u32 %v3021, 16
      %v3326 = vor.u32 %v3323, %v3324
      %v3327 = vsel %vm523, %v3319, %v3326
      %v3328 = vrot.slane %v3323, 4
      %v3330 = vshrl.u32 %v3022, 16
      %v3332 = vrot.slane %v3330, 7
      %v3333 = vshll.u32 %v3022, 16
      %v3335 = vor.u32 %v3332, %v3333
      %v3336 = vsel %vm523, %v3328, %v3335
      %v3338 = vshrl.u32 %v3023, 16
      %v3340 = vrot.slane %v3338, 7
      %v3341 = vrot.slane %v3340, 4
      %v3343 = vshrl.u32 %v3024, 16
      %v3345 = vrot.slane %v3343, 7
      %v3346 = vshll.u32 %v3024, 16
      %v3348 = vor.u32 %v3345, %v3346
      %v3349 = vsel %vm523, %v3341, %v3348
      %v3350 = vrot.slane %v3345, 4
      %v3352 = vshrl.u32 %v3025, 16
      %v3354 = vrot.slane %v3352, 7
      %v3355 = vshll.u32 %v3025, 16
      %v3357 = vor.u32 %v3354, %v3355
      %v3358 = vsel %vm523, %v3350, %v3357
      %v3360 = vshrl.u32 %v3026, 16
      %v3362 = vrot.slane %v3360, 7
      %v3363 = vrot.slane %v3362, 4
      %v3365 = vshrl.u32 %v3027, 16
      %v3367 = vrot.slane %v3365, 7
      %v3368 = vshll.u32 %v3027, 16
      %v3370 = vor.u32 %v3367, %v3368
      %v3371 = vsel %vm523, %v3363, %v3370
      %v3372 = vrot.slane %v3367, 4
      %v3374 = vshrl.u32 %v3028, 16
      %v3376 = vrot.slane %v3374, 7
      %v3377 = vshll.u32 %v3028, 16
      %v3379 = vor.u32 %v3376, %v3377
      %v3380 = vsel %vm523, %v3372, %v3379
      %3381 = vrot.lane.b32.xlu0 %v3041, 24
      %v3382 = vpop.permute.xlu0 %3381
      %3383 = vrot.lane.b32.xlu0 %v3050, 24
      %v3384 = vpop.permute.xlu0 %3383
      %3385 = vrot.lane.b32.xlu0 %v3063, 24
      %v3386 = vpop.permute.xlu0 %3385
      %3387 = vrot.lane.b32.xlu0 %v3072, 24
      %v3388 = vpop.permute.xlu0 %3387
      %3389 = vrot.lane.b32.xlu0 %v3085, 24
      %v3390 = vpop.permute.xlu0 %3389
      %3391 = vrot.lane.b32.xlu0 %v3094, 24
      %v3392 = vpop.permute.xlu0 %3391
      %3393 = vrot.lane.b32.xlu0 %v3107, 24
      %v3394 = vpop.permute.xlu0 %3393
      %3395 = vrot.lane.b32.xlu0 %v3116, 24
      %v3396 = vpop.permute.xlu0 %3395
      %3397 = vrot.lane.b32.xlu0 %v3129, 24
      %v3398 = vpop.permute.xlu0 %3397
      %3399 = vrot.lane.b32.xlu0 %v3138, 24
      %v3400 = vpop.permute.xlu0 %3399
      %3401 = vrot.lane.b32.xlu0 %v3151, 24
      %v3402 = vpop.permute.xlu0 %3401
      %3403 = vrot.lane.b32.xlu0 %v3160, 24
      %v3404 = vpop.permute.xlu0 %3403
      %3405 = vrot.lane.b32.xlu0 %v3173, 24
      %v3406 = vpop.permute.xlu0 %3405
      %3407 = vrot.lane.b32.xlu0 %v3182, 24
      %v3408 = vpop.permute.xlu0 %3407
      %3409 = vrot.lane.b32.xlu0 %v3195, 24
      %v3410 = vpop.permute.xlu0 %3409
      %3411 = vrot.lane.b32.xlu0 %v3204, 24
      %v3412 = vpop.permute.xlu0 %3411
      %3413 = vrot.lane.b32.xlu0 %v3217, 24
      %v3414 = vpop.permute.xlu0 %3413
      %3415 = vrot.lane.b32.xlu0 %v3226, 24
      %v3416 = vpop.permute.xlu0 %3415
      %3417 = vrot.lane.b32.xlu0 %v3239, 24
      %v3418 = vpop.permute.xlu0 %3417
      %3419 = vrot.lane.b32.xlu0 %v3248, 24
      %v3420 = vpop.permute.xlu0 %3419
      %3421 = vrot.lane.b32.xlu0 %v3261, 24
      %v3422 = vpop.permute.xlu0 %3421
      %3423 = vrot.lane.b32.xlu0 %v3270, 24
      %v3424 = vpop.permute.xlu0 %3423
      %3425 = vrot.lane.b32.xlu0 %v3283, 24
      %v3426 = vpop.permute.xlu0 %3425
      %3427 = vrot.lane.b32.xlu0 %v3292, 24
      %v3428 = vpop.permute.xlu0 %3427
      %3429 = vrot.lane.b32.xlu0 %v3305, 24
      %v3430 = vpop.permute.xlu0 %3429
      %3431 = vrot.lane.b32.xlu0 %v3314, 24
      %v3432 = vpop.permute.xlu0 %3431
      %3433 = vrot.lane.b32.xlu0 %v3327, 24
      %v3434 = vpop.permute.xlu0 %3433
      %3435 = vrot.lane.b32.xlu0 %v3336, 24
      %v3436 = vpop.permute.xlu0 %3435
      %3437 = vrot.lane.b32.xlu0 %v3349, 24
      %v3438 = vpop.permute.xlu0 %3437
      %3439 = vrot.lane.b32.xlu0 %v3358, 24
      %v3440 = vpop.permute.xlu0 %3439
      %3441 = vrot.lane.b32.xlu0 %v3371, 24
      %v3442 = vpop.permute.xlu0 %3441
      %3443 = vrot.lane.b32.xlu0 %v3380, 24
      %v3444 = vpop.permute.xlu0 %3443
      %vm3477 = vcmask 224448
      %3478 = vst.msk [vmem:[#allocation3] sm:$0xf] %vm3477, %v3382
      %3479 = vst.msk [vmem:[#allocation3 + $0x4] sm:$0xf] %vm3477, %v3384
      %3480 = vst.msk [vmem:[#allocation3 + $0x8] sm:$0xf] %vm3477, %v3386
      %3481 = vst.msk [vmem:[#allocation3 + $0xc] sm:$0xf] %vm3477, %v3388
      %3482 = vst.msk [vmem:[#allocation3 + $0x10] sm:$0xf] %vm3477, %v3390
      %3483 = vst.msk [vmem:[#allocation3 + $0x14] sm:$0xf] %vm3477, %v3392
      %3484 = vst.msk [vmem:[#allocation3 + $0x18] sm:$0xf] %vm3477, %v3394
      %3485 = vst.msk [vmem:[#allocation3 + $0x1c] sm:$0xf] %vm3477, %v3396
      %3486 = vst.msk [vmem:[#allocation3 + $0x20] sm:$0xf] %vm3477, %v3398
      %3487 = vst.msk [vmem:[#allocation3 + $0x24] sm:$0xf] %vm3477, %v3400
      %3488 = vst.msk [vmem:[#allocation3 + $0x28] sm:$0xf] %vm3477, %v3402
      %3489 = vst.msk [vmem:[#allocation3 + $0x2c] sm:$0xf] %vm3477, %v3404
      %3490 = vst.msk [vmem:[#allocation3 + $0x30] sm:$0xf] %vm3477, %v3406
      %3491 = vst.msk [vmem:[#allocation3 + $0x34] sm:$0xf] %vm3477, %v3408
      %3492 = vst.msk [vmem:[#allocation3 + $0x38] sm:$0xf] %vm3477, %v3410
      %3493 = vst.msk [vmem:[#allocation3 + $0x3c] sm:$0xf] %vm3477, %v3412
      %3494 = vst.msk [vmem:[#allocation3 + $0x40] sm:$0xf] %vm3477, %v3414
      %3495 = vst.msk [vmem:[#allocation3 + $0x44] sm:$0xf] %vm3477, %v3416
      %3496 = vst.msk [vmem:[#allocation3 + $0x48] sm:$0xf] %vm3477, %v3418
      %3497 = vst.msk [vmem:[#allocation3 + $0x4c] sm:$0xf] %vm3477, %v3420
      %3498 = vst.msk [vmem:[#allocation3 + $0x50] sm:$0xf] %vm3477, %v3422
      %3499 = vst.msk [vmem:[#allocation3 + $0x54] sm:$0xf] %vm3477, %v3424
      %3500 = vst.msk [vmem:[#allocation3 + $0x58] sm:$0xf] %vm3477, %v3426
      %3501 = vst.msk [vmem:[#allocation3 + $0x5c] sm:$0xf] %vm3477, %v3428
      %3502 = vst.msk [vmem:[#allocation3 + $0x60] sm:$0xf] %vm3477, %v3430
      %3503 = vst.msk [vmem:[#allocation3 + $0x64] sm:$0xf] %vm3477, %v3432
      %3504 = vst.msk [vmem:[#allocation3 + $0x68] sm:$0xf] %vm3477, %v3434
      %3505 = vst.msk [vmem:[#allocation3 + $0x6c] sm:$0xf] %vm3477, %v3436
      %3506 = vst.msk [vmem:[#allocation3 + $0x70] sm:$0xf] %vm3477, %v3438
      %3507 = vst.msk [vmem:[#allocation3 + $0x74] sm:$0xf] %vm3477, %v3440
      %3508 = vst.msk [vmem:[#allocation3 + $0x78] sm:$0xf] %vm3477, %v3442
      %3509 = vst.msk [vmem:[#allocation3 + $0x7c] sm:$0xf] %vm3477, %v3444
      %v3510 = vld [vmem:[%s2980 + $0x4] sm:$0xf]
      %v3511 = vld [vmem:[%s2980 + $0x8] sm:$0xf]
      %v3512 = vld [vmem:[%s2980 + $0x14] sm:$0xf]
      %v3513 = vld [vmem:[%s2980 + $0x18] sm:$0xf]
      %v3514 = vld [vmem:[%s2980 + $0x24] sm:$0xf]
      %v3515 = vld [vmem:[%s2980 + $0x28] sm:$0xf]
      %v3516 = vld [vmem:[%s2980 + $0x34] sm:$0xf]
      %v3517 = vld [vmem:[%s2980 + $0x38] sm:$0xf]
      %v3518 = vld [vmem:[%s2980 + $0x44] sm:$0xf]
      %v3519 = vld [vmem:[%s2980 + $0x48] sm:$0xf]
      %v3520 = vld [vmem:[%s2980 + $0x54] sm:$0xf]
      %v3521 = vld [vmem:[%s2980 + $0x58] sm:$0xf]
      %v3522 = vld [vmem:[%s2980 + $0x64] sm:$0xf]
      %v3523 = vld [vmem:[%s2980 + $0x68] sm:$0xf]
      %v3524 = vld [vmem:[%s2980 + $0x74] sm:$0xf]
      %v3525 = vld [vmem:[%s2980 + $0x78] sm:$0xf]
      %v3526 = vld [vmem:[%s2980 + $0x84] sm:$0xf]
      %v3527 = vld [vmem:[%s2980 + $0x88] sm:$0xf]
      %v3528 = vld [vmem:[%s2980 + $0x94] sm:$0xf]
      %v3529 = vld [vmem:[%s2980 + $0x98] sm:$0xf]
      %v3530 = vld [vmem:[%s2980 + $0xa4] sm:$0xf]
      %v3531 = vld [vmem:[%s2980 + $0xa8] sm:$0xf]
      %v3532 = vld [vmem:[%s2980 + $0xb4] sm:$0xf]
      %v3533 = vld [vmem:[%s2980 + $0xb8] sm:$0xf]
      %v3534 = vld [vmem:[%s2980 + $0xc4] sm:$0xf]
      %v3535 = vld [vmem:[%s2980 + $0xc8] sm:$0xf]
      %v3536 = vld [vmem:[%s2980 + $0xd4] sm:$0xf]
      %v3537 = vld [vmem:[%s2980 + $0xd8] sm:$0xf]
      %v3538 = vld [vmem:[%s2980 + $0xe4] sm:$0xf]
      %v3539 = vld [vmem:[%s2980 + $0xe8] sm:$0xf]
      %v3540 = vld [vmem:[%s2980 + $0xf4] sm:$0xf]
      %v3541 = vld [vmem:[%s2980 + $0xf8] sm:$0xf]
      %3574 = vrot.lane.b32.xlu0 %v3510, 28
      %v3575 = vpop.permute.xlu0 %3574
      %3576 = vrot.lane.b32.xlu0 %v3511, 28
      %v3577 = vpop.permute.xlu0 %3576
      %3578 = vrot.lane.b32.xlu0 %v3512, 28
      %v3579 = vpop.permute.xlu0 %3578
      %3580 = vrot.lane.b32.xlu0 %v3513, 28
      %v3581 = vpop.permute.xlu0 %3580
      %3582 = vrot.lane.b32.xlu0 %v3514, 28
      %v3583 = vpop.permute.xlu0 %3582
      %3584 = vrot.lane.b32.xlu0 %v3515, 28
      %v3585 = vpop.permute.xlu0 %3584
      %3586 = vrot.lane.b32.xlu0 %v3516, 28
      %v3587 = vpop.permute.xlu0 %3586
      %3588 = vrot.lane.b32.xlu0 %v3517, 28
      %v3589 = vpop.permute.xlu0 %3588
      %3590 = vrot.lane.b32.xlu0 %v3518, 28
      %v3591 = vpop.permute.xlu0 %3590
      %3592 = vrot.lane.b32.xlu0 %v3519, 28
      %v3593 = vpop.permute.xlu0 %3592
      %3594 = vrot.lane.b32.xlu0 %v3520, 28
      %v3595 = vpop.permute.xlu0 %3594
      %3596 = vrot.lane.b32.xlu0 %v3521, 28
      %v3597 = vpop.permute.xlu0 %3596
      %3598 = vrot.lane.b32.xlu0 %v3522, 28
      %v3599 = vpop.permute.xlu0 %3598
      %3600 = vrot.lane.b32.xlu0 %v3523, 28
      %v3601 = vpop.permute.xlu0 %3600
      %3602 = vrot.lane.b32.xlu0 %v3524, 28
      %v3603 = vpop.permute.xlu0 %3602
      %3604 = vrot.lane.b32.xlu0 %v3525, 28
      %v3605 = vpop.permute.xlu0 %3604
      %3606 = vrot.lane.b32.xlu0 %v3526, 28
      %v3607 = vpop.permute.xlu0 %3606
      %3608 = vrot.lane.b32.xlu0 %v3527, 28
      %v3609 = vpop.permute.xlu0 %3608
      %3610 = vrot.lane.b32.xlu0 %v3528, 28
      %v3611 = vpop.permute.xlu0 %3610
      %3612 = vrot.lane.b32.xlu0 %v3529, 28
      %v3613 = vpop.permute.xlu0 %3612
      %3614 = vrot.lane.b32.xlu0 %v3530, 28
      %v3615 = vpop.permute.xlu0 %3614
      %3616 = vrot.lane.b32.xlu0 %v3531, 28
      %v3617 = vpop.permute.xlu0 %3616
      %3618 = vrot.lane.b32.xlu0 %v3532, 28
      %v3619 = vpop.permute.xlu0 %3618
      %3620 = vrot.lane.b32.xlu0 %v3533, 28
      %v3621 = vpop.permute.xlu0 %3620
      %3622 = vrot.lane.b32.xlu0 %v3534, 28
      %v3623 = vpop.permute.xlu0 %3622
      %3624 = vrot.lane.b32.xlu0 %v3535, 28
      %v3625 = vpop.permute.xlu0 %3624
      %3626 = vrot.lane.b32.xlu0 %v3536, 28
      %v3627 = vpop.permute.xlu0 %3626
      %3628 = vrot.lane.b32.xlu0 %v3537, 28
      %v3629 = vpop.permute.xlu0 %3628
      %3630 = vrot.lane.b32.xlu0 %v3538, 28
      %v3631 = vpop.permute.xlu0 %3630
      %3632 = vrot.lane.b32.xlu0 %v3539, 28
      %v3633 = vpop.permute.xlu0 %3632
      %3634 = vrot.lane.b32.xlu0 %v3540, 28
      %v3635 = vpop.permute.xlu0 %3634
      %3636 = vrot.lane.b32.xlu0 %v3541, 28
      %v3637 = vpop.permute.xlu0 %3636
      %vm3670 = vcmask 257248
      %3671 = vst.msk [vmem:[#allocation3] sm:$0xf] %vm3670, %v3575
      %3672 = vst.msk [vmem:[#allocation3 + $0x4] sm:$0xf] %vm3670, %v3577
      %3673 = vst.msk [vmem:[#allocation3 + $0x8] sm:$0xf] %vm3670, %v3579
      %3674 = vst.msk [vmem:[#allocation3 + $0xc] sm:$0xf] %vm3670, %v3581
      %3675 = vst.msk [vmem:[#allocation3 + $0x10] sm:$0xf] %vm3670, %v3583
      %3676 = vst.msk [vmem:[#allocation3 + $0x14] sm:$0xf] %vm3670, %v3585
      %3677 = vst.msk [vmem:[#allocation3 + $0x18] sm:$0xf] %vm3670, %v3587
      %3678 = vst.msk [vmem:[#allocation3 + $0x1c] sm:$0xf] %vm3670, %v3589
      %3679 = vst.msk [vmem:[#allocation3 + $0x20] sm:$0xf] %vm3670, %v3591
      %3680 = vst.msk [vmem:[#allocation3 + $0x24] sm:$0xf] %vm3670, %v3593
      %3681 = vst.msk [vmem:[#allocation3 + $0x28] sm:$0xf] %vm3670, %v3595
      %3682 = vst.msk [vmem:[#allocation3 + $0x2c] sm:$0xf] %vm3670, %v3597
      %3683 = vst.msk [vmem:[#allocation3 + $0x30] sm:$0xf] %vm3670, %v3599
      %3684 = vst.msk [vmem:[#allocation3 + $0x34] sm:$0xf] %vm3670, %v3601
      %3685 = vst.msk [vmem:[#allocation3 + $0x38] sm:$0xf] %vm3670, %v3603
      %3686 = vst.msk [vmem:[#allocation3 + $0x3c] sm:$0xf] %vm3670, %v3605
      %3687 = vst.msk [vmem:[#allocation3 + $0x40] sm:$0xf] %vm3670, %v3607
      %3688 = vst.msk [vmem:[#allocation3 + $0x44] sm:$0xf] %vm3670, %v3609
      %3689 = vst.msk [vmem:[#allocation3 + $0x48] sm:$0xf] %vm3670, %v3611
      %3690 = vst.msk [vmem:[#allocation3 + $0x4c] sm:$0xf] %vm3670, %v3613
      %3691 = vst.msk [vmem:[#allocation3 + $0x50] sm:$0xf] %vm3670, %v3615
      %3692 = vst.msk [vmem:[#allocation3 + $0x54] sm:$0xf] %vm3670, %v3617
      %3693 = vst.msk [vmem:[#allocation3 + $0x58] sm:$0xf] %vm3670, %v3619
      %3694 = vst.msk [vmem:[#allocation3 + $0x5c] sm:$0xf] %vm3670, %v3621
      %3695 = vst.msk [vmem:[#allocation3 + $0x60] sm:$0xf] %vm3670, %v3623
      %3696 = vst.msk [vmem:[#allocation3 + $0x64] sm:$0xf] %vm3670, %v3625
      %3697 = vst.msk [vmem:[#allocation3 + $0x68] sm:$0xf] %vm3670, %v3627
      %3698 = vst.msk [vmem:[#allocation3 + $0x6c] sm:$0xf] %vm3670, %v3629
      %3699 = vst.msk [vmem:[#allocation3 + $0x70] sm:$0xf] %vm3670, %v3631
      %3700 = vst.msk [vmem:[#allocation3 + $0x74] sm:$0xf] %vm3670, %v3633
      %3701 = vst.msk [vmem:[#allocation3 + $0x78] sm:$0xf] %vm3670, %v3635
      %3702 = vst.msk [vmem:[#allocation3 + $0x7c] sm:$0xf] %vm3670, %v3637
      %v3703 = vld [vmem:[%s2980 + $0x4] sm:$0xf]
      %v3704 = vld [vmem:[%s2980 + $0x8] sm:$0xf]
      %v3705 = vld [vmem:[%s2980 + $0xc] sm:$0x1]
      %v3706 = vld [vmem:[%s2980 + $0x14] sm:$0xf]
      %v3707 = vld [vmem:[%s2980 + $0x18] sm:$0xf]
      %v3708 = vld [vmem:[%s2980 + $0x1c] sm:$0x1]
      %v3709 = vld [vmem:[%s2980 + $0x24] sm:$0xf]
      %v3710 = vld [vmem:[%s2980 + $0x28] sm:$0xf]
      %v3711 = vld [vmem:[%s2980 + $0x2c] sm:$0x1]
      %v3712 = vld [vmem:[%s2980 + $0x34] sm:$0xf]
      %v3713 = vld [vmem:[%s2980 + $0x38] sm:$0xf]
      %v3714 = vld [vmem:[%s2980 + $0x3c] sm:$0x1]
      %v3715 = vld [vmem:[%s2980 + $0x44] sm:$0xf]
      %v3716 = vld [vmem:[%s2980 + $0x48] sm:$0xf]
      %v3717 = vld [vmem:[%s2980 + $0x4c] sm:$0x1]
      %v3718 = vld [vmem:[%s2980 + $0x54] sm:$0xf]
      %v3719 = vld [vmem:[%s2980 + $0x58] sm:$0xf]
      %v3720 = vld [vmem:[%s2980 + $0x5c] sm:$0x1]
      %v3721 = vld [vmem:[%s2980 + $0x64] sm:$0xf]
      %v3722 = vld [vmem:[%s2980 + $0x68] sm:$0xf]
      %v3723 = vld [vmem:[%s2980 + $0x6c] sm:$0x1]
      %v3724 = vld [vmem:[%s2980 + $0x74] sm:$0xf]
      %v3725 = vld [vmem:[%s2980 + $0x78] sm:$0xf]
      %v3726 = vld [vmem:[%s2980 + $0x7c] sm:$0x1]
      %v3727 = vld [vmem:[%s2980 + $0x84] sm:$0xf]
      %v3728 = vld [vmem:[%s2980 + $0x88] sm:$0xf]
      %v3729 = vld [vmem:[%s2980 + $0x8c] sm:$0x1]
      %v3730 = vld [vmem:[%s2980 + $0x94] sm:$0xf]
      %v3731 = vld [vmem:[%s2980 + $0x98] sm:$0xf]
      %v3732 = vld [vmem:[%s2980 + $0x9c] sm:$0x1]
      %v3733 = vld [vmem:[%s2980 + $0xa4] sm:$0xf]
      %v3734 = vld [vmem:[%s2980 + $0xa8] sm:$0xf]
      %v3735 = vld [vmem:[%s2980 + $0xac] sm:$0x1]
      %v3736 = vld [vmem:[%s2980 + $0xb4] sm:$0xf]
      %v3737 = vld [vmem:[%s2980 + $0xb8] sm:$0xf]
      %v3738 = vld [vmem:[%s2980 + $0xbc] sm:$0x1]
      %v3739 = vld [vmem:[%s2980 + $0xc4] sm:$0xf]
      %v3740 = vld [vmem:[%s2980 + $0xc8] sm:$0xf]
      %v3741 = vld [vmem:[%s2980 + $0xcc] sm:$0x1]
      %v3742 = vld [vmem:[%s2980 + $0xd4] sm:$0xf]
      %v3743 = vld [vmem:[%s2980 + $0xd8] sm:$0xf]
      %v3744 = vld [vmem:[%s2980 + $0xdc] sm:$0x1]
      %v3745 = vld [vmem:[%s2980 + $0xe4] sm:$0xf]
      %v3746 = vld [vmem:[%s2980 + $0xe8] sm:$0xf]
      %v3747 = vld [vmem:[%s2980 + $0xec] sm:$0x1]
      %v3748 = vld [vmem:[%s2980 + $0xf4] sm:$0xf]
      %v3749 = vld [vmem:[%s2980 + $0xf8] sm:$0xf]
      %v3750 = vld [vmem:[%s2980 + $0xfc] sm:$0x1]
      %v3752 = vshrl.u32 %v3703, 16
      %v3754 = vrot.slane %v3752, 4
      %v3755 = vshll.u32 %v3703, 16
      %v3757 = vrot.slane %v3755, 5
      %v3758 = vor.u32 %v3754, %v3757
      %v3759 = vrot.slane %v3758, 4
      %v3761 = vshll.u32 %v3704, 16
      %v3763 = vrot.slane %v3761, 5
      %v3764 = vsel %vm1183, %v3759, %v3763
      %v3765 = vshrl.u32 %v3704, 16
      %v3767 = vrot.slane %v3765, 4
      %v3768 = vor.u32 %v3767, %v3763
      %v3769 = vrot.slane %v3768, 4
      %v3771 = vshll.u32 %v3705, 16
      %v3773 = vrot.slane %v3771, 5
      %v3774 = vsel %vm1183, %v3769, %v3773
      %v3776 = vshrl.u32 %v3706, 16
      %v3778 = vrot.slane %v3776, 4
      %v3779 = vshll.u32 %v3706, 16
      %v3781 = vrot.slane %v3779, 5
      %v3782 = vor.u32 %v3778, %v3781
      %v3783 = vrot.slane %v3782, 4
      %v3785 = vshll.u32 %v3707, 16
      %v3787 = vrot.slane %v3785, 5
      %v3788 = vsel %vm1183, %v3783, %v3787
      %v3789 = vshrl.u32 %v3707, 16
      %v3791 = vrot.slane %v3789, 4
      %v3792 = vor.u32 %v3791, %v3787
      %v3793 = vrot.slane %v3792, 4
      %v3795 = vshll.u32 %v3708, 16
      %v3797 = vrot.slane %v3795, 5
      %v3798 = vsel %vm1183, %v3793, %v3797
      %v3800 = vshrl.u32 %v3709, 16
      %v3802 = vrot.slane %v3800, 4
      %v3803 = vshll.u32 %v3709, 16
      %v3805 = vrot.slane %v3803, 5
      %v3806 = vor.u32 %v3802, %v3805
      %v3807 = vrot.slane %v3806, 4
      %v3809 = vshll.u32 %v3710, 16
      %v3811 = vrot.slane %v3809, 5
      %v3812 = vsel %vm1183, %v3807, %v3811
      %v3813 = vshrl.u32 %v3710, 16
      %v3815 = vrot.slane %v3813, 4
      %v3816 = vor.u32 %v3815, %v3811
      %v3817 = vrot.slane %v3816, 4
      %v3819 = vshll.u32 %v3711, 16
      %v3821 = vrot.slane %v3819, 5
      %v3822 = vsel %vm1183, %v3817, %v3821
      %v3824 = vshrl.u32 %v3712, 16
      %v3826 = vrot.slane %v3824, 4
      %v3827 = vshll.u32 %v3712, 16
      %v3829 = vrot.slane %v3827, 5
      %v3830 = vor.u32 %v3826, %v3829
      %v3831 = vrot.slane %v3830, 4
      %v3833 = vshll.u32 %v3713, 16
      %v3835 = vrot.slane %v3833, 5
      %v3836 = vsel %vm1183, %v3831, %v3835
      %v3837 = vshrl.u32 %v3713, 16
      %v3839 = vrot.slane %v3837, 4
      %v3840 = vor.u32 %v3839, %v3835
      %v3841 = vrot.slane %v3840, 4
      %v3843 = vshll.u32 %v3714, 16
      %v3845 = vrot.slane %v3843, 5
      %v3846 = vsel %vm1183, %v3841, %v3845
      %v3848 = vshrl.u32 %v3715, 16
      %v3850 = vrot.slane %v3848, 4
      %v3851 = vshll.u32 %v3715, 16
      %v3853 = vrot.slane %v3851, 5
      %v3854 = vor.u32 %v3850, %v3853
      %v3855 = vrot.slane %v3854, 4
      %v3857 = vshll.u32 %v3716, 16
      %v3859 = vrot.slane %v3857, 5
      %v3860 = vsel %vm1183, %v3855, %v3859
      %v3861 = vshrl.u32 %v3716, 16
      %v3863 = vrot.slane %v3861, 4
      %v3864 = vor.u32 %v3863, %v3859
      %v3865 = vrot.slane %v3864, 4
      %v3867 = vshll.u32 %v3717, 16
      %v3869 = vrot.slane %v3867, 5
      %v3870 = vsel %vm1183, %v3865, %v3869
      %v3872 = vshrl.u32 %v3718, 16
      %v3874 = vrot.slane %v3872, 4
      %v3875 = vshll.u32 %v3718, 16
      %v3877 = vrot.slane %v3875, 5
      %v3878 = vor.u32 %v3874, %v3877
      %v3879 = vrot.slane %v3878, 4
      %v3881 = vshll.u32 %v3719, 16
      %v3883 = vrot.slane %v3881, 5
      %v3884 = vsel %vm1183, %v3879, %v3883
      %v3885 = vshrl.u32 %v3719, 16
      %v3887 = vrot.slane %v3885, 4
      %v3888 = vor.u32 %v3887, %v3883
      %v3889 = vrot.slane %v3888, 4
      %v3891 = vshll.u32 %v3720, 16
      %v3893 = vrot.slane %v3891, 5
      %v3894 = vsel %vm1183, %v3889, %v3893
      %v3896 = vshrl.u32 %v3721, 16
      %v3898 = vrot.slane %v3896, 4
      %v3899 = vshll.u32 %v3721, 16
      %v3901 = vrot.slane %v3899, 5
      %v3902 = vor.u32 %v3898, %v3901
      %v3903 = vrot.slane %v3902, 4
      %v3905 = vshll.u32 %v3722, 16
      %v3907 = vrot.slane %v3905, 5
      %v3908 = vsel %vm1183, %v3903, %v3907
      %v3909 = vshrl.u32 %v3722, 16
      %v3911 = vrot.slane %v3909, 4
      %v3912 = vor.u32 %v3911, %v3907
      %v3913 = vrot.slane %v3912, 4
      %v3915 = vshll.u32 %v3723, 16
      %v3917 = vrot.slane %v3915, 5
      %v3918 = vsel %vm1183, %v3913, %v3917
      %v3920 = vshrl.u32 %v3724, 16
      %v3922 = vrot.slane %v3920, 4
      %v3923 = vshll.u32 %v3724, 16
      %v3925 = vrot.slane %v3923, 5
      %v3926 = vor.u32 %v3922, %v3925
      %v3927 = vrot.slane %v3926, 4
      %v3929 = vshll.u32 %v3725, 16
      %v3931 = vrot.slane %v3929, 5
      %v3932 = vsel %vm1183, %v3927, %v3931
      %v3933 = vshrl.u32 %v3725, 16
      %v3935 = vrot.slane %v3933, 4
      %v3936 = vor.u32 %v3935, %v3931
      %v3937 = vrot.slane %v3936, 4
      %v3939 = vshll.u32 %v3726, 16
      %v3941 = vrot.slane %v3939, 5
      %v3942 = vsel %vm1183, %v3937, %v3941
      %v3944 = vshrl.u32 %v3727, 16
      %v3946 = vrot.slane %v3944, 4
      %v3947 = vshll.u32 %v3727, 16
      %v3949 = vrot.slane %v3947, 5
      %v3950 = vor.u32 %v3946, %v3949
      %v3951 = vrot.slane %v3950, 4
      %v3953 = vshll.u32 %v3728, 16
      %v3955 = vrot.slane %v3953, 5
      %v3956 = vsel %vm1183, %v3951, %v3955
      %v3957 = vshrl.u32 %v3728, 16
      %v3959 = vrot.slane %v3957, 4
      %v3960 = vor.u32 %v3959, %v3955
      %v3961 = vrot.slane %v3960, 4
      %v3963 = vshll.u32 %v3729, 16
      %v3965 = vrot.slane %v3963, 5
      %v3966 = vsel %vm1183, %v3961, %v3965
      %v3968 = vshrl.u32 %v3730, 16
      %v3970 = vrot.slane %v3968, 4
      %v3971 = vshll.u32 %v3730, 16
      %v3973 = vrot.slane %v3971, 5
      %v3974 = vor.u32 %v3970, %v3973
      %v3975 = vrot.slane %v3974, 4
      %v3977 = vshll.u32 %v3731, 16
      %v3979 = vrot.slane %v3977, 5
      %v3980 = vsel %vm1183, %v3975, %v3979
      %v3981 = vshrl.u32 %v3731, 16
      %v3983 = vrot.slane %v3981, 4
      %v3984 = vor.u32 %v3983, %v3979
      %v3985 = vrot.slane %v3984, 4
      %v3987 = vshll.u32 %v3732, 16
      %v3989 = vrot.slane %v3987, 5
      %v3990 = vsel %vm1183, %v3985, %v3989
      %v3992 = vshrl.u32 %v3733, 16
      %v3994 = vrot.slane %v3992, 4
      %v3995 = vshll.u32 %v3733, 16
      %v3997 = vrot.slane %v3995, 5
      %v3998 = vor.u32 %v3994, %v3997
      %v3999 = vrot.slane %v3998, 4
      %v4001 = vshll.u32 %v3734, 16
      %v4003 = vrot.slane %v4001, 5
      %v4004 = vsel %vm1183, %v3999, %v4003
      %v4005 = vshrl.u32 %v3734, 16
      %v4007 = vrot.slane %v4005, 4
      %v4008 = vor.u32 %v4007, %v4003
      %v4009 = vrot.slane %v4008, 4
      %v4011 = vshll.u32 %v3735, 16
      %v4013 = vrot.slane %v4011, 5
      %v4014 = vsel %vm1183, %v4009, %v4013
      %v4016 = vshrl.u32 %v3736, 16
      %v4018 = vrot.slane %v4016, 4
      %v4019 = vshll.u32 %v3736, 16
      %v4021 = vrot.slane %v4019, 5
      %v4022 = vor.u32 %v4018, %v4021
      %v4023 = vrot.slane %v4022, 4
      %v4025 = vshll.u32 %v3737, 16
      %v4027 = vrot.slane %v4025, 5
      %v4028 = vsel %vm1183, %v4023, %v4027
      %v4029 = vshrl.u32 %v3737, 16
      %v4031 = vrot.slane %v4029, 4
      %v4032 = vor.u32 %v4031, %v4027
      %v4033 = vrot.slane %v4032, 4
      %v4035 = vshll.u32 %v3738, 16
      %v4037 = vrot.slane %v4035, 5
      %v4038 = vsel %vm1183, %v4033, %v4037
      %v4040 = vshrl.u32 %v3739, 16
      %v4042 = vrot.slane %v4040, 4
      %v4043 = vshll.u32 %v3739, 16
      %v4045 = vrot.slane %v4043, 5
      %v4046 = vor.u32 %v4042, %v4045
      %v4047 = vrot.slane %v4046, 4
      %v4049 = vshll.u32 %v3740, 16
      %v4051 = vrot.slane %v4049, 5
      %v4052 = vsel %vm1183, %v4047, %v4051
      %v4053 = vshrl.u32 %v3740, 16
      %v4055 = vrot.slane %v4053, 4
      %v4056 = vor.u32 %v4055, %v4051
      %v4057 = vrot.slane %v4056, 4
      %v4059 = vshll.u32 %v3741, 16
      %v4061 = vrot.slane %v4059, 5
      %v4062 = vsel %vm1183, %v4057, %v4061
      %v4064 = vshrl.u32 %v3742, 16
      %v4066 = vrot.slane %v4064, 4
      %v4067 = vshll.u32 %v3742, 16
      %v4069 = vrot.slane %v4067, 5
      %v4070 = vor.u32 %v4066, %v4069
      %v4071 = vrot.slane %v4070, 4
      %v4073 = vshll.u32 %v3743, 16
      %v4075 = vrot.slane %v4073, 5
      %v4076 = vsel %vm1183, %v4071, %v4075
      %v4077 = vshrl.u32 %v3743, 16
      %v4079 = vrot.slane %v4077, 4
      %v4080 = vor.u32 %v4079, %v4075
      %v4081 = vrot.slane %v4080, 4
      %v4083 = vshll.u32 %v3744, 16
      %v4085 = vrot.slane %v4083, 5
      %v4086 = vsel %vm1183, %v4081, %v4085
      %v4088 = vshrl.u32 %v3745, 16
      %v4090 = vrot.slane %v4088, 4
      %v4091 = vshll.u32 %v3745, 16
      %v4093 = vrot.slane %v4091, 5
      %v4094 = vor.u32 %v4090, %v4093
      %v4095 = vrot.slane %v4094, 4
      %v4097 = vshll.u32 %v3746, 16
      %v4099 = vrot.slane %v4097, 5
      %v4100 = vsel %vm1183, %v4095, %v4099
      %v4101 = vshrl.u32 %v3746, 16
      %v4103 = vrot.slane %v4101, 4
      %v4104 = vor.u32 %v4103, %v4099
      %v4105 = vrot.slane %v4104, 4
      %v4107 = vshll.u32 %v3747, 16
      %v4109 = vrot.slane %v4107, 5
      %v4110 = vsel %vm1183, %v4105, %v4109
      %v4112 = vshrl.u32 %v3748, 16
      %v4114 = vrot.slane %v4112, 4
      %v4115 = vshll.u32 %v3748, 16
      %v4117 = vrot.slane %v4115, 5
      %v4118 = vor.u32 %v4114, %v4117
      %v4119 = vrot.slane %v4118, 4
      %v4121 = vshll.u32 %v3749, 16
      %v4123 = vrot.slane %v4121, 5
      %v4124 = vsel %vm1183, %v4119, %v4123
      %v4125 = vshrl.u32 %v3749, 16
      %v4127 = vrot.slane %v4125, 4
      %v4128 = vor.u32 %v4127, %v4123
      %v4129 = vrot.slane %v4128, 4
      %v4131 = vshll.u32 %v3750, 16
      %v4133 = vrot.slane %v4131, 5
      %v4134 = vsel %vm1183, %v4129, %v4133
      %4135 = vrot.lane.b32.xlu0 %v3764, 32
      %v4136 = vpop.permute.xlu0 %4135
      %4137 = vrot.lane.b32.xlu0 %v3774, 32
      %v4138 = vpop.permute.xlu0 %4137
      %4139 = vrot.lane.b32.xlu0 %v3788, 32
      %v4140 = vpop.permute.xlu0 %4139
      %4141 = vrot.lane.b32.xlu0 %v3798, 32
      %v4142 = vpop.permute.xlu0 %4141
      %4143 = vrot.lane.b32.xlu0 %v3812, 32
      %v4144 = vpop.permute.xlu0 %4143
      %4145 = vrot.lane.b32.xlu0 %v3822, 32
      %v4146 = vpop.permute.xlu0 %4145
      %4147 = vrot.lane.b32.xlu0 %v3836, 32
      %v4148 = vpop.permute.xlu0 %4147
      %4149 = vrot.lane.b32.xlu0 %v3846, 32
      %v4150 = vpop.permute.xlu0 %4149
      %4151 = vrot.lane.b32.xlu0 %v3860, 32
      %v4152 = vpop.permute.xlu0 %4151
      %4153 = vrot.lane.b32.xlu0 %v3870, 32
      %v4154 = vpop.permute.xlu0 %4153
      %4155 = vrot.lane.b32.xlu0 %v3884, 32
      %v4156 = vpop.permute.xlu0 %4155
      %4157 = vrot.lane.b32.xlu0 %v3894, 32
      %v4158 = vpop.permute.xlu0 %4157
      %4159 = vrot.lane.b32.xlu0 %v3908, 32
      %v4160 = vpop.permute.xlu0 %4159
      %4161 = vrot.lane.b32.xlu0 %v3918, 32
      %v4162 = vpop.permute.xlu0 %4161
      %4163 = vrot.lane.b32.xlu0 %v3932, 32
      %v4164 = vpop.permute.xlu0 %4163
      %4165 = vrot.lane.b32.xlu0 %v3942, 32
      %v4166 = vpop.permute.xlu0 %4165
      %4167 = vrot.lane.b32.xlu0 %v3956, 32
      %v4168 = vpop.permute.xlu0 %4167
      %4169 = vrot.lane.b32.xlu0 %v3966, 32
      %v4170 = vpop.permute.xlu0 %4169
      %4171 = vrot.lane.b32.xlu0 %v3980, 32
      %v4172 = vpop.permute.xlu0 %4171
      %4173 = vrot.lane.b32.xlu0 %v3990, 32
      %v4174 = vpop.permute.xlu0 %4173
      %4175 = vrot.lane.b32.xlu0 %v4004, 32
      %v4176 = vpop.permute.xlu0 %4175
      %4177 = vrot.lane.b32.xlu0 %v4014, 32
      %v4178 = vpop.permute.xlu0 %4177
      %4179 = vrot.lane.b32.xlu0 %v4028, 32
      %v4180 = vpop.permute.xlu0 %4179
      %4181 = vrot.lane.b32.xlu0 %v4038, 32
      %v4182 = vpop.permute.xlu0 %4181
      %4183 = vrot.lane.b32.xlu0 %v4052, 32
      %v4184 = vpop.permute.xlu0 %4183
      %4185 = vrot.lane.b32.xlu0 %v4062, 32
      %v4186 = vpop.permute.xlu0 %4185
      %4187 = vrot.lane.b32.xlu0 %v4076, 32
      %v4188 = vpop.permute.xlu0 %4187
      %4189 = vrot.lane.b32.xlu0 %v4086, 32
      %v4190 = vpop.permute.xlu0 %4189
      %4191 = vrot.lane.b32.xlu0 %v4100, 32
      %v4192 = vpop.permute.xlu0 %4191
      %4193 = vrot.lane.b32.xlu0 %v4110, 32
      %v4194 = vpop.permute.xlu0 %4193
      %4195 = vrot.lane.b32.xlu0 %v4124, 32
      %v4196 = vpop.permute.xlu0 %4195
      %4197 = vrot.lane.b32.xlu0 %v4134, 32
      %v4198 = vpop.permute.xlu0 %4197
      %vm4231 = vcmask 290048
      %4232 = vst.msk [vmem:[#allocation3] sm:$0xf] %vm4231, %v4136
      %4233 = vst.msk [vmem:[#allocation3 + $0x4] sm:$0xf] %vm4231, %v4138
      %4234 = vst.msk [vmem:[#allocation3 + $0x8] sm:$0xf] %vm4231, %v4140
      %4235 = vst.msk [vmem:[#allocation3 + $0xc] sm:$0xf] %vm4231, %v4142
      %4236 = vst.msk [vmem:[#allocation3 + $0x10] sm:$0xf] %vm4231, %v4144
      %4237 = vst.msk [vmem:[#allocation3 + $0x14] sm:$0xf] %vm4231, %v4146
      %4238 = vst.msk [vmem:[#allocation3 + $0x18] sm:$0xf] %vm4231, %v4148
      %4239 = vst.msk [vmem:[#allocation3 + $0x1c] sm:$0xf] %vm4231, %v4150
      %4240 = vst.msk [vmem:[#allocation3 + $0x20] sm:$0xf] %vm4231, %v4152
      %4241 = vst.msk [vmem:[#allocation3 + $0x24] sm:$0xf] %vm4231, %v4154
      %4242 = vst.msk [vmem:[#allocation3 + $0x28] sm:$0xf] %vm4231, %v4156
      %4243 = vst.msk [vmem:[#allocation3 + $0x2c] sm:$0xf] %vm4231, %v4158
      %4244 = vst.msk [vmem:[#allocation3 + $0x30] sm:$0xf] %vm4231, %v4160
      %4245 = vst.msk [vmem:[#allocation3 + $0x34] sm:$0xf] %vm4231, %v4162
      %4246 = vst.msk [vmem:[#allocation3 + $0x38] sm:$0xf] %vm4231, %v4164
      %4247 = vst.msk [vmem:[#allocation3 + $0x3c] sm:$0xf] %vm4231, %v4166
      %4248 = vst.msk [vmem:[#allocation3 + $0x40] sm:$0xf] %vm4231, %v4168
      %4249 = vst.msk [vmem:[#allocation3 + $0x44] sm:$0xf] %vm4231, %v4170
      %4250 = vst.msk [vmem:[#allocation3 + $0x48] sm:$0xf] %vm4231, %v4172
      %4251 = vst.msk [vmem:[#allocation3 + $0x4c] sm:$0xf] %vm4231, %v4174
      %4252 = vst.msk [vmem:[#allocation3 + $0x50] sm:$0xf] %vm4231, %v4176
      %4253 = vst.msk [vmem:[#allocation3 + $0x54] sm:$0xf] %vm4231, %v4178
      %4254 = vst.msk [vmem:[#allocation3 + $0x58] sm:$0xf] %vm4231, %v4180
      %4255 = vst.msk [vmem:[#allocation3 + $0x5c] sm:$0xf] %vm4231, %v4182
      %4256 = vst.msk [vmem:[#allocation3 + $0x60] sm:$0xf] %vm4231, %v4184
      %4257 = vst.msk [vmem:[#allocation3 + $0x64] sm:$0xf] %vm4231, %v4186
      %4258 = vst.msk [vmem:[#allocation3 + $0x68] sm:$0xf] %vm4231, %v4188
      %4259 = vst.msk [vmem:[#allocation3 + $0x6c] sm:$0xf] %vm4231, %v4190
      %4260 = vst.msk [vmem:[#allocation3 + $0x70] sm:$0xf] %vm4231, %v4192
      %4261 = vst.msk [vmem:[#allocation3 + $0x74] sm:$0xf] %vm4231, %v4194
      %4262 = vst.msk [vmem:[#allocation3 + $0x78] sm:$0xf] %vm4231, %v4196
      %4263 = vst.msk [vmem:[#allocation3 + $0x7c] sm:$0xf] %vm4231, %v4198
      %v4264 = vld [vmem:[#allocation3] sm:$0xf]
      %v4265 = vld [vmem:[#allocation3 + $0x4] sm:$0xf]
      %v4266 = vld [vmem:[#allocation3 + $0x8] sm:$0xf]
      %v4267 = vld [vmem:[#allocation3 + $0xc] sm:$0xf]
      %v4268 = vld [vmem:[#allocation3 + $0x10] sm:$0xf]
      %v4269 = vld [vmem:[#allocation3 + $0x14] sm:$0xf]
      %v4270 = vld [vmem:[#allocation3 + $0x18] sm:$0xf]
      %v4271 = vld [vmem:[#allocation3 + $0x1c] sm:$0xf]
      %v4272 = vld [vmem:[#allocation3 + $0x20] sm:$0xf]
      %v4273 = vld [vmem:[#allocation3 + $0x24] sm:$0xf]
      %v4274 = vld [vmem:[#allocation3 + $0x28] sm:$0xf]
      %v4275 = vld [vmem:[#allocation3 + $0x2c] sm:$0xf]
      %v4276 = vld [vmem:[#allocation3 + $0x30] sm:$0xf]
      %v4277 = vld [vmem:[#allocation3 + $0x34] sm:$0xf]
      %v4278 = vld [vmem:[#allocation3 + $0x38] sm:$0xf]
      %v4279 = vld [vmem:[#allocation3 + $0x3c] sm:$0xf]
      %v4280 = vld [vmem:[#allocation3 + $0x40] sm:$0xf]
      %v4281 = vld [vmem:[#allocation3 + $0x44] sm:$0xf]
      %v4282 = vld [vmem:[#allocation3 + $0x48] sm:$0xf]
      %v4283 = vld [vmem:[#allocation3 + $0x4c] sm:$0xf]
      %v4284 = vld [vmem:[#allocation3 + $0x50] sm:$0xf]
      %v4285 = vld [vmem:[#allocation3 + $0x54] sm:$0xf]
      %v4286 = vld [vmem:[#allocation3 + $0x58] sm:$0xf]
      %v4287 = vld [vmem:[#allocation3 + $0x5c] sm:$0xf]
      %v4288 = vld [vmem:[#allocation3 + $0x60] sm:$0xf]
      %v4289 = vld [vmem:[#allocation3 + $0x64] sm:$0xf]
      %v4290 = vld [vmem:[#allocation3 + $0x68] sm:$0xf]
      %v4291 = vld [vmem:[#allocation3 + $0x6c] sm:$0xf]
      %v4292 = vld [vmem:[#allocation3 + $0x70] sm:$0xf]
      %v4293 = vld [vmem:[#allocation3 + $0x74] sm:$0xf]
      %v4294 = vld [vmem:[#allocation3 + $0x78] sm:$0xf]
      %v4295 = vld [vmem:[#allocation3 + $0x7c] sm:$0xf]
      %v4296 = vld [vmem:[%s1] sm:$0xf]
      %v4297 = vld [vmem:[%s1 + $0x4] sm:$0xf]
      %v4298 = vld [vmem:[%s1 + $0x8] sm:$0xf]
      %v4299 = vld [vmem:[%s1 + $0xc] sm:$0xf]
      %v4300 = vld [vmem:[%s1 + $0x10] sm:$0xf]
      %v4301 = vld [vmem:[%s1 + $0x14] sm:$0xf]
      %v4302 = vld [vmem:[%s1 + $0x18] sm:$0xf]
      %v4303 = vld [vmem:[%s1 + $0x1c] sm:$0xf]
      %v4304 = vld [vmem:[%s1 + $0x20] sm:$0xf]
      %v4305 = vld [vmem:[%s1 + $0x24] sm:$0xf]
      %v4306 = vld [vmem:[%s1 + $0x28] sm:$0xf]
      %v4307 = vld [vmem:[%s1 + $0x2c] sm:$0xf]
      %v4308 = vld [vmem:[%s1 + $0x30] sm:$0xf]
      %v4309 = vld [vmem:[%s1 + $0x34] sm:$0xf]
      %v4310 = vld [vmem:[%s1 + $0x38] sm:$0xf]
      %v4311 = vld [vmem:[%s1 + $0x3c] sm:$0xf]
      %v4344 = vunpack.c.l.b16 %v4264
      %v4345 = vunpack.c.l.b16 %v4265
      %v4346 = vunpack.c.l.b16 %v4266
      %v4347 = vunpack.c.l.b16 %v4267
      %v4348 = vunpack.c.l.b16 %v4268
      %v4349 = vunpack.c.l.b16 %v4269
      %v4350 = vunpack.c.l.b16 %v4270
      %v4351 = vunpack.c.l.b16 %v4271
      %v4352 = vunpack.c.l.b16 %v4272
      %v4353 = vunpack.c.l.b16 %v4273
      %v4354 = vunpack.c.l.b16 %v4274
      %v4355 = vunpack.c.l.b16 %v4275
      %v4356 = vunpack.c.l.b16 %v4276
      %v4357 = vunpack.c.l.b16 %v4277
      %v4358 = vunpack.c.l.b16 %v4278
      %v4359 = vunpack.c.l.b16 %v4279
      %v4360 = vunpack.c.l.b16 %v4280
      %v4361 = vunpack.c.l.b16 %v4281
      %v4362 = vunpack.c.l.b16 %v4282
      %v4363 = vunpack.c.l.b16 %v4283
      %v4364 = vunpack.c.l.b16 %v4284
      %v4365 = vunpack.c.l.b16 %v4285
      %v4366 = vunpack.c.l.b16 %v4286
      %v4367 = vunpack.c.l.b16 %v4287
      %v4368 = vunpack.c.l.b16 %v4288
      %v4369 = vunpack.c.l.b16 %v4289
      %v4370 = vunpack.c.l.b16 %v4290
      %v4371 = vunpack.c.l.b16 %v4291
      %v4372 = vunpack.c.l.b16 %v4292
      %v4373 = vunpack.c.l.b16 %v4293
      %v4374 = vunpack.c.l.b16 %v4294
      %v4375 = vunpack.c.l.b16 %v4295
      %v4376 = vpack.c.b16 %v4345, %v4344
      %v4377 = vpack.c.b16 %v4347, %v4346
      %v4378 = vpack.c.b16 %v4349, %v4348
      %v4379 = vpack.c.b16 %v4351, %v4350
      %v4380 = vpack.c.b16 %v4353, %v4352
      %v4381 = vpack.c.b16 %v4355, %v4354
      %v4382 = vpack.c.b16 %v4357, %v4356
      %v4383 = vpack.c.b16 %v4359, %v4358
      %v4384 = vpack.c.b16 %v4361, %v4360
      %v4385 = vpack.c.b16 %v4363, %v4362
      %v4386 = vpack.c.b16 %v4365, %v4364
      %v4387 = vpack.c.b16 %v4367, %v4366
      %v4388 = vpack.c.b16 %v4369, %v4368
      %v4389 = vpack.c.b16 %v4371, %v4370
      %v4390 = vpack.c.b16 %v4373, %v4372
      %v4391 = vpack.c.b16 %v4375, %v4374
      %v4424 = vunpack.c.l.b16 %v4296
      %v4425 = vunpack.c.l.b16 %v4297
      %v4426 = vunpack.c.l.b16 %v4298
      %v4427 = vunpack.c.l.b16 %v4299
      %v4428 = vunpack.c.l.b16 %v4300
      %v4429 = vunpack.c.l.b16 %v4301
      %v4430 = vunpack.c.l.b16 %v4302
      %v4431 = vunpack.c.l.b16 %v4303
      %v4432 = vunpack.c.l.b16 %v4304
      %v4433 = vunpack.c.l.b16 %v4305
      %v4434 = vunpack.c.l.b16 %v4306
      %v4435 = vunpack.c.l.b16 %v4307
      %v4436 = vunpack.c.l.b16 %v4308
      %v4437 = vunpack.c.l.b16 %v4309
      %v4438 = vunpack.c.l.b16 %v4310
      %v4439 = vunpack.c.l.b16 %v4311
      %v4440 = vpack.c.b16 %v4425, %v4424
      %v4441 = vpack.c.b16 %v4427, %v4426
      %v4442 = vpack.c.b16 %v4429, %v4428
      %v4443 = vpack.c.b16 %v4431, %v4430
      %v4444 = vpack.c.b16 %v4433, %v4432
      %v4445 = vpack.c.b16 %v4435, %v4434
      %v4446 = vpack.c.b16 %v4437, %v4436
      %v4447 = vpack.c.b16 %v4439, %v4438
      %4456 = vmatpush.bf16.msra.mxu0 %v4447
      %4457 = vmatpush.bf16.msra.mxu0 %v4446
      %4458 = vmatpush.bf16.msra.mxu0 %v4445
      %4459 = vmatpush.bf16.msra.mxu0 %v4444
      %4460 = vmatpush.bf16.msra.mxu0 %v4443
      %4461 = vmatpush.bf16.msra.mxu0 %v4442
      %4462 = vmatpush.bf16.msra.mxu0 %v4441
      %4463 = vmatpush.bf16.msra.mxu0 %v4440
      %4464 = vmatmul.bf16.gmra.mxu0 %v4376
      %v4465 = vpop.f32.mrf.mxu0
      %v4466 = vadd.f32 0.0, %v4465
      %v4467 = vpop.f32.mrf.mxu0
      %v4468 = vadd.f32 0.0, %v4467
      %4469 = vmatmul.bf16.gmra.mxu0 %v4377
      %v4470 = vpop.f32.mrf.mxu0
      %v4471 = vadd.f32 0.0, %v4470
      %v4472 = vpop.f32.mrf.mxu0
      %v4473 = vadd.f32 0.0, %v4472
      %4474 = vmatmul.bf16.gmra.mxu0 %v4378
      %v4475 = vpop.f32.mrf.mxu0
      %v4476 = vadd.f32 0.0, %v4475
      %v4477 = vpop.f32.mrf.mxu0
      %v4478 = vadd.f32 0.0, %v4477
      %4479 = vmatmul.bf16.gmra.mxu0 %v4379
      %v4480 = vpop.f32.mrf.mxu0
      %v4481 = vadd.f32 0.0, %v4480
      %v4482 = vpop.f32.mrf.mxu0
      %v4483 = vadd.f32 0.0, %v4482
      %4484 = vmatmul.bf16.gmra.mxu0 %v4380
      %v4485 = vpop.f32.mrf.mxu0
      %v4486 = vadd.f32 0.0, %v4485
      %v4487 = vpop.f32.mrf.mxu0
      %v4488 = vadd.f32 0.0, %v4487
      %4489 = vmatmul.bf16.gmra.mxu0 %v4381
      %v4490 = vpop.f32.mrf.mxu0
      %v4491 = vadd.f32 0.0, %v4490
      %v4492 = vpop.f32.mrf.mxu0
      %v4493 = vadd.f32 0.0, %v4492
      %4494 = vmatmul.bf16.gmra.mxu0 %v4382
      %v4495 = vpop.f32.mrf.mxu0
      %v4496 = vadd.f32 0.0, %v4495
      %v4497 = vpop.f32.mrf.mxu0
      %v4498 = vadd.f32 0.0, %v4497
      %4499 = vmatmul.bf16.gmra.mxu0 %v4383
      %v4500 = vpop.f32.mrf.mxu0
      %v4501 = vadd.f32 0.0, %v4500
      %v4502 = vpop.f32.mrf.mxu0
      %v4503 = vadd.f32 0.0, %v4502
      %4504 = vmatmul.bf16.gmra.mxu0 %v4384
      %v4505 = vpop.f32.mrf.mxu0
      %v4506 = vadd.f32 0.0, %v4505
      %v4507 = vpop.f32.mrf.mxu0
      %v4508 = vadd.f32 0.0, %v4507
      %4509 = vmatmul.bf16.gmra.mxu0 %v4385
      %v4510 = vpop.f32.mrf.mxu0
      %v4511 = vadd.f32 0.0, %v4510
      %v4512 = vpop.f32.mrf.mxu0
      %v4513 = vadd.f32 0.0, %v4512
      %4514 = vmatmul.bf16.gmra.mxu0 %v4386
      %v4515 = vpop.f32.mrf.mxu0
      %v4516 = vadd.f32 0.0, %v4515
      %v4517 = vpop.f32.mrf.mxu0
      %v4518 = vadd.f32 0.0, %v4517
      %4519 = vmatmul.bf16.gmra.mxu0 %v4387
      %v4520 = vpop.f32.mrf.mxu0
      %v4521 = vadd.f32 0.0, %v4520
      %v4522 = vpop.f32.mrf.mxu0
      %v4523 = vadd.f32 0.0, %v4522
      %4524 = vmatmul.bf16.gmra.mxu0 %v4388
      %v4525 = vpop.f32.mrf.mxu0
      %v4526 = vadd.f32 0.0, %v4525
      %v4527 = vpop.f32.mrf.mxu0
      %v4528 = vadd.f32 0.0, %v4527
      %4529 = vmatmul.bf16.gmra.mxu0 %v4389
      %v4530 = vpop.f32.mrf.mxu0
      %v4531 = vadd.f32 0.0, %v4530
      %v4532 = vpop.f32.mrf.mxu0
      %v4533 = vadd.f32 0.0, %v4532
      %4534 = vmatmul.bf16.gmra.mxu0 %v4390
      %v4535 = vpop.f32.mrf.mxu0
      %v4536 = vadd.f32 0.0, %v4535
      %v4537 = vpop.f32.mrf.mxu0
      %v4538 = vadd.f32 0.0, %v4537
      %4539 = vmatmul.bf16.gmra.mxu0 %v4391
      %v4540 = vpop.f32.mrf.mxu0
      %v4541 = vadd.f32 0.0, %v4540
      %v4542 = vpop.f32.mrf.mxu0
      %v4543 = vadd.f32 0.0, %v4542
      %4544 = vdwg.mxu0
      %vm4545 = vcmask 64512
      %4546 = vst.msk [vmem:[%s258] sm:$0xff] %vm4545, %v4466
      %4547 = vst.msk [vmem:[%s258 + $0x8] sm:$0xff] %vm4545, %v4468
      %4548 = vst.msk [vmem:[%s258 + $0x10] sm:$0xff] %vm4545, %v4471
      %4549 = vst.msk [vmem:[%s258 + $0x18] sm:$0xff] %vm4545, %v4473
      %4550 = vst.msk [vmem:[%s258 + $0x20] sm:$0xff] %vm4545, %v4476
      %4551 = vst.msk [vmem:[%s258 + $0x28] sm:$0xff] %vm4545, %v4478
      %4552 = vst.msk [vmem:[%s258 + $0x30] sm:$0xff] %vm4545, %v4481
      %4553 = vst.msk [vmem:[%s258 + $0x38] sm:$0xff] %vm4545, %v4483
      %4554 = vst.msk [vmem:[%s258 + $0x40] sm:$0xff] %vm4545, %v4486
      %4555 = vst.msk [vmem:[%s258 + $0x48] sm:$0xff] %vm4545, %v4488
      %4556 = vst.msk [vmem:[%s258 + $0x50] sm:$0xff] %vm4545, %v4491
      %4557 = vst.msk [vmem:[%s258 + $0x58] sm:$0xff] %vm4545, %v4493
      %4558 = vst.msk [vmem:[%s258 + $0x60] sm:$0xff] %vm4545, %v4496
      %4559 = vst.msk [vmem:[%s258 + $0x68] sm:$0xff] %vm4545, %v4498
      %4560 = vst.msk [vmem:[%s258 + $0x70] sm:$0xff] %vm4545, %v4501
      %4561 = vst.msk [vmem:[%s258 + $0x78] sm:$0xff] %vm4545, %v4503
      %4562 = vst.msk [vmem:[%s258 + $0x80] sm:$0xff] %vm4545, %v4506
      %4563 = vst.msk [vmem:[%s258 + $0x88] sm:$0xff] %vm4545, %v4508
      %4564 = vst.msk [vmem:[%s258 + $0x90] sm:$0xff] %vm4545, %v4511
      %4565 = vst.msk [vmem:[%s258 + $0x98] sm:$0xff] %vm4545, %v4513
      %4566 = vst.msk [vmem:[%s258 + $0xa0] sm:$0xff] %vm4545, %v4516
      %4567 = vst.msk [vmem:[%s258 + $0xa8] sm:$0xff] %vm4545, %v4518
      %4568 = vst.msk [vmem:[%s258 + $0xb0] sm:$0xff] %vm4545, %v4521
      %4569 = vst.msk [vmem:[%s258 + $0xb8] sm:$0xff] %vm4545, %v4523
      %4570 = vst.msk [vmem:[%s258 + $0xc0] sm:$0xff] %vm4545, %v4526
      %4571 = vst.msk [vmem:[%s258 + $0xc8] sm:$0xff] %vm4545, %v4528
      %4572 = vst.msk [vmem:[%s258 + $0xd0] sm:$0xff] %vm4545, %v4531
      %4573 = vst.msk [vmem:[%s258 + $0xd8] sm:$0xff] %vm4545, %v4533
      %4574 = vst.msk [vmem:[%s258 + $0xe0] sm:$0xff] %vm4545, %v4536
      %4575 = vst.msk [vmem:[%s258 + $0xe8] sm:$0xff] %vm4545, %v4538
      %4576 = vst.msk [vmem:[%s258 + $0xf0] sm:$0xff] %vm4545, %v4541
      %4577 = vst.msk [vmem:[%s258 + $0xf8] sm:$0xff] %vm4545, %v4543
      %v4578 = vsel %vm4545, %v4466, 0.0
      %v4579 = vsel %vm4545, %v4468, 0.0
      %v4580 = vadd.f32 %v4578, %v4579
      %v4581 = vsel %vm4545, %v4471, 0.0
      %v4582 = vadd.f32 %v4580, %v4581
      %v4583 = vsel %vm4545, %v4473, 0.0
      %v4584 = vadd.f32 %v4582, %v4583
      %v4585 = vsel %vm4545, %v4476, 0.0
      %v4586 = vadd.f32 %v4584, %v4585
      %v4587 = vsel %vm4545, %v4478, 0.0
      %v4588 = vadd.f32 %v4586, %v4587
      %v4589 = vsel %vm4545, %v4481, 0.0
      %v4590 = vadd.f32 %v4588, %v4589
      %v4591 = vsel %vm4545, %v4483, 0.0
      %v4592 = vadd.f32 %v4590, %v4591
      %v4593 = vsel %vm4545, %v4486, 0.0
      %v4594 = vadd.f32 %v4592, %v4593
      %v4595 = vsel %vm4545, %v4488, 0.0
      %v4596 = vadd.f32 %v4594, %v4595
      %v4597 = vsel %vm4545, %v4491, 0.0
      %v4598 = vadd.f32 %v4596, %v4597
      %v4599 = vsel %vm4545, %v4493, 0.0
      %v4600 = vadd.f32 %v4598, %v4599
      %v4601 = vsel %vm4545, %v4496, 0.0
      %v4602 = vadd.f32 %v4600, %v4601
      %v4603 = vsel %vm4545, %v4498, 0.0
      %v4604 = vadd.f32 %v4602, %v4603
      %v4605 = vsel %vm4545, %v4501, 0.0
      %v4606 = vadd.f32 %v4604, %v4605
      %v4607 = vsel %vm4545, %v4503, 0.0
      %v4608 = vadd.f32 %v4606, %v4607
      %v4609 = vsel %vm4545, %v4506, 0.0
      %v4610 = vadd.f32 %v4608, %v4609
      %v4611 = vsel %vm4545, %v4508, 0.0
      %v4612 = vadd.f32 %v4610, %v4611
      %v4613 = vsel %vm4545, %v4511, 0.0
      %v4614 = vadd.f32 %v4612, %v4613
      %v4615 = vsel %vm4545, %v4513, 0.0
      %v4616 = vadd.f32 %v4614, %v4615
      %v4617 = vsel %vm4545, %v4516, 0.0
      %v4618 = vadd.f32 %v4616, %v4617
      %v4619 = vsel %vm4545, %v4518, 0.0
      %v4620 = vadd.f32 %v4618, %v4619
      %v4621 = vsel %vm4545, %v4521, 0.0
      %v4622 = vadd.f32 %v4620, %v4621
      %v4623 = vsel %vm4545, %v4523, 0.0
      %v4624 = vadd.f32 %v4622, %v4623
      %v4625 = vsel %vm4545, %v4526, 0.0
      %v4626 = vadd.f32 %v4624, %v4625
      %v4627 = vsel %vm4545, %v4528, 0.0
      %v4628 = vadd.f32 %v4626, %v4627
      %v4629 = vsel %vm4545, %v4531, 0.0
      %v4630 = vadd.f32 %v4628, %v4629
      %v4631 = vsel %vm4545, %v4533, 0.0
      %v4632 = vadd.f32 %v4630, %v4631
      %v4633 = vsel %vm4545, %v4536, 0.0
      %v4634 = vadd.f32 %v4632, %v4633
      %v4635 = vsel %vm4545, %v4538, 0.0
      %v4636 = vadd.f32 %v4634, %v4635
      %v4637 = vsel %vm4545, %v4541, 0.0
      %v4638 = vadd.f32 %v4636, %v4637
      %v4639 = vsel %vm4545, %v4543, 0.0
      %v4640 = vadd.f32 %v4638, %v4639
      %v4641 = vrot.slane %v4640, 4
      %v4642 = vadd.f32 %v4640, %v4641
      %v4643 = vrot.slane %v4642, 2
      %v4644 = vadd.f32 %v4642, %v4643
      %v4645 = vrot.slane %v4644, 1
      %v4646 = vadd.f32 %v4644, %v4645
      %v4647 = vmul.f32 %v4466, %v4466
      %v4648 = vmul.f32 %v4468, %v4468
      %v4649 = vmul.f32 %v4471, %v4471
      %v4650 = vmul.f32 %v4473, %v4473
      %v4651 = vmul.f32 %v4476, %v4476
      %v4652 = vmul.f32 %v4478, %v4478
      %v4653 = vmul.f32 %v4481, %v4481
      %v4654 = vmul.f32 %v4483, %v4483
      %v4655 = vmul.f32 %v4486, %v4486
      %v4656 = vmul.f32 %v4488, %v4488
      %v4657 = vmul.f32 %v4491, %v4491
      %v4658 = vmul.f32 %v4493, %v4493
      %v4659 = vmul.f32 %v4496, %v4496
      %v4660 = vmul.f32 %v4498, %v4498
      %v4661 = vmul.f32 %v4501, %v4501
      %v4662 = vmul.f32 %v4503, %v4503
      %v4663 = vmul.f32 %v4506, %v4506
      %v4664 = vmul.f32 %v4508, %v4508
      %v4665 = vmul.f32 %v4511, %v4511
      %v4666 = vmul.f32 %v4513, %v4513
      %v4667 = vmul.f32 %v4516, %v4516
      %v4668 = vmul.f32 %v4518, %v4518
      %v4669 = vmul.f32 %v4521, %v4521
      %v4670 = vmul.f32 %v4523, %v4523
      %v4671 = vmul.f32 %v4526, %v4526
      %v4672 = vmul.f32 %v4528, %v4528
      %v4673 = vmul.f32 %v4531, %v4531
      %v4674 = vmul.f32 %v4533, %v4533
      %v4675 = vmul.f32 %v4536, %v4536
      %v4676 = vmul.f32 %v4538, %v4538
      %v4677 = vmul.f32 %v4541, %v4541
      %v4678 = vmul.f32 %v4543, %v4543
      %v4679 = vsel %vm4545, %v4647, 0.0
      %v4680 = vsel %vm4545, %v4648, 0.0
      %v4681 = vadd.f32 %v4679, %v4680
      %v4682 = vsel %vm4545, %v4649, 0.0
      %v4683 = vadd.f32 %v4681, %v4682
      %v4684 = vsel %vm4545, %v4650, 0.0
      %v4685 = vadd.f32 %v4683, %v4684
      %v4686 = vsel %vm4545, %v4651, 0.0
      %v4687 = vadd.f32 %v4685, %v4686
      %v4688 = vsel %vm4545, %v4652, 0.0
      %v4689 = vadd.f32 %v4687, %v4688
      %v4690 = vsel %vm4545, %v4653, 0.0
      %v4691 = vadd.f32 %v4689, %v4690
      %v4692 = vsel %vm4545, %v4654, 0.0
      %v4693 = vadd.f32 %v4691, %v4692
      %v4694 = vsel %vm4545, %v4655, 0.0
      %v4695 = vadd.f32 %v4693, %v4694
      %v4696 = vsel %vm4545, %v4656, 0.0
      %v4697 = vadd.f32 %v4695, %v4696
      %v4698 = vsel %vm4545, %v4657, 0.0
      %v4699 = vadd.f32 %v4697, %v4698
      %v4700 = vsel %vm4545, %v4658, 0.0
      %v4701 = vadd.f32 %v4699, %v4700
      %v4702 = vsel %vm4545, %v4659, 0.0
      %v4703 = vadd.f32 %v4701, %v4702
      %v4704 = vsel %vm4545, %v4660, 0.0
      %v4705 = vadd.f32 %v4703, %v4704
      %v4706 = vsel %vm4545, %v4661, 0.0
      %v4707 = vadd.f32 %v4705, %v4706
      %v4708 = vsel %vm4545, %v4662, 0.0
      %v4709 = vadd.f32 %v4707, %v4708
      %v4710 = vsel %vm4545, %v4663, 0.0
      %v4711 = vadd.f32 %v4709, %v4710
      %v4712 = vsel %vm4545, %v4664, 0.0
      %v4713 = vadd.f32 %v4711, %v4712
      %v4714 = vsel %vm4545, %v4665, 0.0
      %v4715 = vadd.f32 %v4713, %v4714
      %v4716 = vsel %vm4545, %v4666, 0.0
      %v4717 = vadd.f32 %v4715, %v4716
      %v4718 = vsel %vm4545, %v4667, 0.0
      %v4719 = vadd.f32 %v4717, %v4718
      %v4720 = vsel %vm4545, %v4668, 0.0
      %v4721 = vadd.f32 %v4719, %v4720
      %v4722 = vsel %vm4545, %v4669, 0.0
      %v4723 = vadd.f32 %v4721, %v4722
      %v4724 = vsel %vm4545, %v4670, 0.0
      %v4725 = vadd.f32 %v4723, %v4724
      %v4726 = vsel %vm4545, %v4671, 0.0
      %v4727 = vadd.f32 %v4725, %v4726
      %v4728 = vsel %vm4545, %v4672, 0.0
      %v4729 = vadd.f32 %v4727, %v4728
      %v4730 = vsel %vm4545, %v4673, 0.0
      %v4731 = vadd.f32 %v4729, %v4730
      %v4732 = vsel %vm4545, %v4674, 0.0
      %v4733 = vadd.f32 %v4731, %v4732
      %v4734 = vsel %vm4545, %v4675, 0.0
      %v4735 = vadd.f32 %v4733, %v4734
      %v4736 = vsel %vm4545, %v4676, 0.0
      %v4737 = vadd.f32 %v4735, %v4736
      %v4738 = vsel %vm4545, %v4677, 0.0
      %v4739 = vadd.f32 %v4737, %v4738
      %v4740 = vsel %vm4545, %v4678, 0.0
      %v4741 = vadd.f32 %v4739, %v4740
      %v4742 = vrot.slane %v4741, 4
      %v4743 = vadd.f32 %v4741, %v4742
      %v4744 = vrot.slane %v4743, 2
      %v4745 = vadd.f32 %v4743, %v4744
      %v4746 = vrot.slane %v4745, 1
      %v4747 = vadd.f32 %v4745, %v4746
      %vm4748 = vcmask 1040384
      %v4749 = vsel %vm4748, %v4646, %v4747
      %vm4750 = vcmask 58368
      %4751 = vst.msk [vmem:[%s266] sm:$0x3] %vm4750, %v4749
      %s4752 = smul.u32 32, %s22
      %p4753 = scmp.lt.s32.totalorder %s21, 1
      %s4754 = scalar_select %p4753, %s21, 1
      %p4755 = scmp.lt.s32.totalorder %s4752, 31
      %s4756 = scalar_select %p4755, %s4752, 31
      %s4757 = smul.addr %s4754, 32
      %s4758 = sadd.s32 %s4756, %s4757
      %s4759 = smul.addr %s4758, 8
      %s4760 = scalar_lea.vmem %s4, %s4759
      %p4761 = scmp.lt.s32.totalorder %s21, 1
      %s4762 = scalar_select %p4761, %s21, 1
      %p4763 = scmp.lt.s32.totalorder %s22, 0
      %s4764 = scalar_select %p4763, %s22, 0
      %s4765 = sadd.s32 %s4764, %s4762
      %s4766 = smul.addr %s4765, 2
      %s4767 = scalar_lea.vmem %s5, %s4766
      // Predicated region
      $region45: #{double_conv.3} parent=35 // pred_check
        %p4768 = pneg %p138
      $region46: #{double_conv.3} parent=35 // pred_check_branch
        %4770 = sbr.rel (%p4768) target = $region48
      $region47: #{double_conv.3} parent=35 // pred_region
        %s4771 = smul.u32 32, %s22
      $region48: #{double_conv.3} parent=35 // pred_fallthru
        _
      // Predicated region
      $region49: #{double_conv.3} parent=35 // pred_check
        %p4772 = pneg %p166
      $region50: #{double_conv.3} parent=35 // pred_check_branch
        %4774 = sbr.rel (%p4772) target = $region52
      $region51: #{double_conv.3} parent=35 // pred_region
        _
      $region52: #{double_conv.3} parent=35 // pred_fallthru
        _
    $region36: #{double_conv.3} parent=5 // pred_fallthru
      _
    %p4775 = scmp.le.s32.totalorder 2, %s12
    // Predicated region
    $region53: #{double_conv.3} parent=5 // pred_check
      %p4776 = pneg %p4775
    $region54: #{double_conv.3} parent=5 // pred_check_branch
      %4778 = sbr.rel (%p4776) target = $region56
    $region55: #{double_conv.3} parent=5 // pred_region
      %s4779 = ssub.s32 %s12, 2
      // Predicated region
      $region57: #{double_conv.3} parent=55 // pred_check
        %p4780 = pneg %p144
      $region58: #{double_conv.3} parent=55 // pred_check_branch
        %4782 = sbr.rel (%p4780) target = $region60
      $region59: #{double_conv.3} parent=55 // pred_region
        %s4783 = smul.u32 32, %s24
        %p4784 = scmp.lt.s32.totalorder %s23, 1
        %s4785 = scalar_select %p4784, %s23, 1
        %p4786 = scmp.lt.s32.totalorder %s4783, 31
        %s4787 = scalar_select %p4786, %s4783, 31
        %s4788 = smul.addr %s4785, 32
        %s4789 = sadd.s32 %s4787, %s4788
        %s4790 = smul.addr %s4789, 8
        %s4791 = scalar_lea.vmem %s4, %s4790
      $region60: #{double_conv.3} parent=55 // pred_fallthru
        _
      // Predicated region
      $region61: #{double_conv.3} parent=55 // pred_check
        %p4792 = pneg %p172
      $region62: #{double_conv.3} parent=55 // pred_check_branch
        %4794 = sbr.rel (%p4792) target = $region64
      $region63: #{double_conv.3} parent=55 // pred_region
        %p4795 = scmp.lt.s32.totalorder %s23, 1
        %s4796 = scalar_select %p4795, %s23, 1
        %p4797 = scmp.lt.s32.totalorder %s24, 0
        %s4798 = scalar_select %p4797, %s24, 0
        %s4799 = sadd.s32 %s4798, %s4796
        %s4800 = smul.addr %s4799, 2
        %s4801 = scalar_lea.vmem %s5, %s4800
      $region64: #{double_conv.3} parent=55 // pred_fallthru
        _
    $region56: #{double_conv.3} parent=5 // pred_fallthru
      _
  $region6: #{double_conv.3} parent=0 // loop_footer
    %s16 = sadd.s32 1, %s12
  $region7: #{double_conv.3} parent=0 // loop_footer_branch
    %11 = sbr.rel target = $region3
  $region8: #{double_conv.3} parent=0 // loop_exit
    _

</llo_original>
